<compile_context>
chip_gen: v5e
topology: v5e:2x2
jax: 0.10.0
libtpu: 0.0.40
codegen_flags: <defaults>
</compile_context>

<pallas_src>
import functools

import jax
import jax.numpy as jnp
import numpy as np
from jax.experimental import pallas as pl
from jax.experimental.pallas import tpu as pltpu

H_IN, W_IN = 28, 28          # fc1 expects 9216 = 64*12*12 features -> 28x28 input (MNIST-like)
C0, C1, C2 = 1, 32, 64
H1, W1 = 26, 26              # after conv1 (3x3, stride 1, VALID)
H2, W2 = 24, 24              # after conv2 (3x3, stride 1, VALID)
HP, WP = 12, 12              # after 2x2 max pool
PIX2 = H2 * W2               # 576 conv2 output pixels per image
FEAT = C2 * HP * WP          # 9216
HID, OUT = 128, 10
FC1_TK = 1152                # K tile for streaming fc1 weight (9216 / 1152 = 8 grid steps)


# ---------------------------------------------------------------------------
# Kernels
# ---------------------------------------------------------------------------
def conv_block_kernel(x_ref, w1_ref, b1_ref, w2_ref, b2_ref, o_ref, *, bb):
    # x_ref:  (bb, 28, 28, 1) f32 | w1_ref: (9, 1, 32) f32 | b1_ref: (1, 32) f32
    # w2_ref: (9, 32, 64) bf16 (tap-major, cin, cout) | b2_ref: (1, 64) f32
    # o_ref:  (bb, 12, 12, 64) bf16
    # TODO(synk): the (...,28,1) input block keeps a 1-wide lane dim (padded input DMA);
    # squeezing it would need an in-kernel lane->sublane relayout, so it is left as-is.
    @pl.loop(0, bb)
    def _(b):
        x = x_ref[b]                                             # (28, 28, 1)
        # conv1: 3x3, single input channel -> 9 broadcast multiply-accumulates (VPU, f32).
        acc1 = jnp.zeros((H1, W1, C1), jnp.float32)
        for k in range(9):
            ki, kj = divmod(k, 3)
            acc1 = acc1 + x[ki:ki + H1, kj:kj + W1, :] * w1_ref[k]   # (26,26,1)*(1,32)
        y1 = jnp.maximum(acc1 + b1_ref[...], 0.0)                # (26, 26, 32), ReLU, f32

        # conv2: 9 per-tap im2col matmuls accumulated in f32; bf16 MXU operands.
        acc2 = jnp.zeros((PIX2, C2), jnp.float32)
        for k in range(9):
            ki, kj = divmod(k, 3)
            tap = y1[ki:ki + H2, kj:kj + W2, :].reshape(PIX2, C1).astype(jnp.bfloat16)
            acc2 = acc2 + jnp.dot(tap, w2_ref[k], preferred_element_type=jnp.float32)
        y2 = jnp.maximum(acc2 + b2_ref[...], 0.0)                # (576, 64), ReLU, f32

        # 2x2 max pool: H via a free leading-dim split + max; W via 12 pairwise column maxes
        # concatenated into one (12, 12, 64) tile -> a single dense store per image.
        y2 = y2.reshape(H2, W2, C2)                              # (24, 24, 64)
        hmax = y2.reshape(HP, 2, W2, C2).max(axis=1)             # (12, 24, 64)
        pooled = jnp.concatenate(
            [jnp.maximum(hmax[:, 2 * j:2 * j + 1, :], hmax[:, 2 * j + 1:2 * j + 2, :])
             for j in range(WP)], axis=1)                        # (12, 12, 64)
        o_ref[b] = pooled.astype(o_ref.dtype)                    # bf16 feature store


def mlp_head_kernel(x_ref, w1_ref, w2_ref, o_ref, acc_ref):
    # x_ref: (BM, TK) bf16 | w1_ref: (TK, 128) bf16 | w2_ref: (128, 10) f32
    # o_ref: (BM, 10) f32  | acc_ref: (BM, 128) f32 accumulator
    # TODO(synk): dropout1/dropout2 are inference-mode identities (no stochastic masking).
    k = pl.program_id(1)

    @pl.when(k == 0)
    def _():
        acc_ref[...] = jnp.zeros_like(acc_ref)

    # fc1 (bias-free, matches nn.Linear(bias=False)): bf16 x bf16 MXU matmul, f32 accumulation.
    acc_ref[...] += jnp.dot(x_ref[...], w1_ref[...], preferred_element_type=jnp.float32)

    @pl.when(k == pl.num_programs(1) - 1)
    def _():
        h = jnp.maximum(acc_ref[...], 0.0)                       # ReLU
        logits = jnp.dot(h, w2_ref[...], preferred_element_type=jnp.float32)   # fc2
        m = jnp.max(logits, axis=-1, keepdims=True)
        z = logits - m
        o_ref[...] = z - jnp.log(jnp.sum(jnp.exp(z), axis=-1, keepdims=True))


# ---------------------------------------------------------------------------
# Wrappers (pallas_call plumbing)
# ---------------------------------------------------------------------------
def conv_features(x_nhwc, w1, b1, w2, b2, bb):
    B = x_nhwc.shape[0]
    kernel = functools.partial(conv_block_kernel, bb=bb)
    return pl.pallas_call(
        kernel,
        out_shape=jax.ShapeDtypeStruct((B, HP, WP, C2), jnp.bfloat16),
        grid_spec=pltpu.PrefetchScalarGridSpec(
            num_scalar_prefetch=0,
            grid=(B // bb,),
            in_specs=[
                pl.BlockSpec((bb, H_IN, W_IN, C0), lambda i: (i, 0, 0, 0)),
                pl.BlockSpec((9, C0, C1), lambda i: (0, 0, 0)),
                pl.BlockSpec((1, C1), lambda i: (0, 0)),
                pl.BlockSpec((9, C1, C2), lambda i: (0, 0, 0)),
                pl.BlockSpec((1, C2), lambda i: (0, 0)),
            ],
            out_specs=pl.BlockSpec((bb, HP, WP, C2), lambda i: (i, 0, 0, 0)),
        ),
        # Batch blocks are independent -> "parallel" shards them across both TCs on v7x.
        compiler_params=pltpu.CompilerParams(dimension_semantics=("parallel",)),
    )(x_nhwc, w1, b1, w2, b2)


def mlp_head(x_flat_bf16, w1_bf16, w2):
    B = x_flat_bf16.shape[0]
    bm = _head_block(B)
    kt = FEAT // FC1_TK
    return pl.pallas_call(
        mlp_head_kernel,
        out_shape=jax.ShapeDtypeStruct((B, OUT), jnp.float32),
        grid_spec=pltpu.PrefetchScalarGridSpec(
            num_scalar_prefetch=0,
            grid=(B // bm, kt),
            in_specs=[
                pl.BlockSpec((bm, FC1_TK), lambda i, k: (i, k)),
                pl.BlockSpec((FC1_TK, HID), lambda i, k: (k, 0)),
                pl.BlockSpec((HID, OUT), lambda i, k: (0, 0)),
            ],
            out_specs=pl.BlockSpec((bm, OUT), lambda i, k: (i, 0)),
            scratch_shapes=[pltpu.VMEM((bm, HID), jnp.float32)],
        ),
        # Batch tiles independent ("parallel", megacore on v7x); K is a reduction carried in
        # the accumulator scratch ("arbitrary").
        compiler_params=pltpu.CompilerParams(
            dimension_semantics=("parallel", "arbitrary")),
    )(x_flat_bf16, w1_bf16, w2)


def _batch_block(B, cap=8):
    bb = min(cap, max(1, B // 2))      # keep >= 2 conv grid steps so v7x megacore has 2 shards
    while B % bb:
        bb -= 1
    return bb


def _head_block(B, cap=256):
    bm = min(B, cap)
    while B % bm:
        bm -= 1
    return bm


def prepare_params(params):
    """One-time host-side re-layout of torch-convention params into kernel layouts."""
    fc1 = params["fc1_wt"]                                  # (9216, 128), rows in (C,H,W) order
    # Permute rows to (H, W, C) flatten order so the kernel output can be flattened directly.
    fc1_hwc = fc1.reshape(C2, HP, WP, HID).transpose(1, 2, 0, 3).reshape(FEAT, HID)
    return {
        "conv1_w": params["conv1_w"].reshape(9, C0, C1),    # HWIO -> (tap, cin, cout)
        "conv1_b": params["conv1_b"].reshape(1, C1),
        "conv2_w": params["conv2_w"].reshape(9, C1, C2).astype(jnp.bfloat16),  # per-tap bf16
        "conv2_b": params["conv2_b"].reshape(1, C2),
        "fc1_wt": fc1_hwc.astype(jnp.bfloat16),             # bf16 storage halves weight DMA
        "fc2_wt": params["fc2_wt"],
    }


@jax.jit
def cnn_forward(x_nchw, kparams):
    B = x_nchw.shape[0]
    bb = _batch_block(B)
    x = jnp.transpose(x_nchw, (0, 2, 3, 1))                 # NCHW -> NHWC (B, 28, 28, 1)
    feats = conv_features(x, kparams["conv1_w"], kparams["conv1_b"],
                          kparams["conv2_w"], kparams["conv2_b"], bb)   # (B,12,12,64) bf16
    flat = feats.reshape(B, FEAT)                           # free (H,W,C)-order flatten
    return mlp_head(flat, kparams["fc1_wt"], kparams["fc2_wt"])


# ---------------------------------------------------------------------------
# Pure-JAX reference for validation (mirrors the kernel's bf16 quantization choices)
# ---------------------------------------------------------------------------
def cnn_reference(x_nchw, params):
    dn = ("NHWC", "HWIO", "NHWC")
    hp = jax.lax.Precision.HIGHEST
    x = jnp.transpose(x_nchw, (0, 2, 3, 1))
    y = jax.lax.conv_general_dilated(x, params["conv1_w"], (1, 1), "VALID",
                                     dimension_numbers=dn, precision=hp)
    y = jax.nn.relu(y + params["conv1_b"])
    y = y.astype(jnp.bfloat16).astype(jnp.float32)          # conv2 activations quantized bf16
    w2 = params["conv2_w"].astype(jnp.bfloat16).astype(jnp.float32)
    y = jax.lax.conv_general_dilated(y, w2, (1, 1), "VALID",
                                     dimension_numbers=dn, precision=hp)
    y = jax.nn.relu(y + params["conv2_b"])
    y = jax.lax.reduce_window(y, -jnp.inf, jax.lax.max, (1, 2, 2, 1), (1, 2, 2, 1), "VALID")
    y = y.astype(jnp.bfloat16).astype(jnp.float32)          # bf16 feature storage
    y = jnp.transpose(y, (0, 3, 1, 2)).reshape(x.shape[0], -1)   # torch flatten order (C,H,W)
    w1 = params["fc1_wt"].astype(jnp.bfloat16).astype(jnp.float32)
    h = jax.nn.relu(jnp.dot(y, w1, precision=hp))
    return jax.nn.log_softmax(jnp.dot(h, params["fc2_wt"], precision=hp), axis=-1)


if __name__ == "__main__":
    key = jax.random.PRNGKey(0)
    kx, k1, k2, k3, k4, k5, k6 = jax.random.split(key, 7)

    def uinit(k, shape, fan_in):
        bound = 1.0 / float(np.sqrt(fan_in))
        return jax.random.uniform(k, shape, jnp.float32, -bound, bound)

    params = {
        "conv1_w": uinit(k1, (3, 3, C0, C1), 3 * 3 * C0),   # HWIO
        "conv1_b": uinit(k2, (C1,), 3 * 3 * C0),
        "conv2_w": uinit(k3, (3, 3, C1, C2), 3 * 3 * C1),   # HWIO
        "conv2_b": uinit(k4, (C2,), 3 * 3 * C1),
        "fc1_wt": uinit(k5, (FEAT, HID), FEAT),             # == torch fc1.weight.T (CHW rows)
        "fc2_wt": uinit(k6, (HID, OUT), HID),               # == torch fc2.weight.T
    }
    kparams = prepare_params(params)

    # PyTorch-convention NCHW input; 28x28 is forced by fc1's 9216 input features.
    x = jax.random.normal(kx, (2, C0, H_IN, W_IN), jnp.float32)

    out = jax.block_until_ready(cnn_forward(x, kparams))
    ref = jax.block_until_ready(cnn_reference(x, params))
    assert out.shape == (2, OUT)
    np.testing.assert_allclose(np.asarray(out), np.asarray(ref), rtol=2e-3, atol=2e-3)
    print("KERNEL_OK")
</pallas_src>

<mosaic_0001>
module attributes {stable_mosaic.version = 11 : i64} {
  func.func @conv_block_kernel(%arg0: i32, %arg1: memref<1x28x28x1xf32, #tpu.memory_space<vmem>>, %arg2: memref<9x1x32xf32, #tpu.memory_space<vmem>>, %arg3: memref<1x32xf32, #tpu.memory_space<vmem>>, %arg4: memref<9x32x64xbf16, #tpu.memory_space<vmem>>, %arg5: memref<1x64xf32, #tpu.memory_space<vmem>>, %arg6: memref<1x12x12x64xbf16, #tpu.memory_space<vmem>>) attributes {dimension_semantics = [#tpu.dimension_semantics<parallel>], iteration_bounds = array<i64: 2>, scalar_prefetch = 0 : i64, scratch_operands = 0 : i64, tpu.core_type = #tpu.core_type<tc>, window_params = [{transform_indices = @transform_0, window_bounds = array<i64: 1, 28, 28, 1>}, {pipeline_mode = #tpu.pipeline_mode<synchronous>, transform_indices = @transform_1, window_bounds = array<i64: 9, 1, 32>}, {pipeline_mode = #tpu.pipeline_mode<synchronous>, transform_indices = @transform_2, window_bounds = array<i64: 1, 32>}, {pipeline_mode = #tpu.pipeline_mode<synchronous>, transform_indices = @transform_3, window_bounds = array<i64: 9, 32, 64>}, {pipeline_mode = #tpu.pipeline_mode<synchronous>, transform_indices = @transform_4, window_bounds = array<i64: 1, 64>}, {transform_indices = @transform_5, window_bounds = array<i64: 1, 12, 12, 64>}]} {
    %c0_i32 = arith.constant 0 : i32
    %c1_i32 = arith.constant 1 : i32
    %0 = arith.muli %c0_i32, %c1_i32 : i32
    %c0_i32_0 = arith.constant 0 : i32
    %1 = arith.addi %c0_i32_0, %0 : i32
    %2 = arith.index_cast %1 : i32 to index
    %c0 = arith.constant 0 : index
    %c0_1 = arith.constant 0 : index
    %c0_2 = arith.constant 0 : index
    %3 = vector.load %arg1[%2, %c0, %c0_1, %c0_2] : memref<1x28x28x1xf32, #tpu.memory_space<vmem>>, vector<1x28x28x1xf32>
    %4 = vector.shape_cast %3 : vector<1x28x28x1xf32> to vector<28x28x1xf32>
    %cst = arith.constant 0.000000e+00 : f32
    %5 = vector.broadcast %cst : f32 to vector<26x26x32xf32>
    %6 = vector.extract_strided_slice %4 {offsets = [0, 0, 0], sizes = [26, 26, 1], strides = [1, 1, 1]} : vector<28x28x1xf32> to vector<26x26x1xf32>
    %c0_3 = arith.constant 0 : index
    %c0_4 = arith.constant 0 : index
    %c0_5 = arith.constant 0 : index
    %7 = vector.load %arg2[%c0_3, %c0_4, %c0_5] : memref<9x1x32xf32, #tpu.memory_space<vmem>>, vector<1x1x32xf32>
    %8 = vector.shape_cast %7 : vector<1x1x32xf32> to vector<1x32xf32>
    %9 = vector.shape_cast %8 : vector<1x32xf32> to vector<1x1x32xf32>
    %10 = vector.broadcast %6 : vector<26x26x1xf32> to vector<26x26x32xf32>
    %11 = vector.broadcast %9 : vector<1x1x32xf32> to vector<26x26x32xf32>
    %12 = arith.mulf %10, %11 : vector<26x26x32xf32>
    %13 = arith.addf %5, %12 : vector<26x26x32xf32>
    %14 = vector.extract_strided_slice %4 {offsets = [0, 1, 0], sizes = [26, 26, 1], strides = [1, 1, 1]} : vector<28x28x1xf32> to vector<26x26x1xf32>
    %c1 = arith.constant 1 : index
    %c0_6 = arith.constant 0 : index
    %c0_7 = arith.constant 0 : index
    %15 = vector.load %arg2[%c1, %c0_6, %c0_7] : memref<9x1x32xf32, #tpu.memory_space<vmem>>, vector<1x1x32xf32>
    %16 = vector.shape_cast %15 : vector<1x1x32xf32> to vector<1x32xf32>
    %17 = vector.shape_cast %16 : vector<1x32xf32> to vector<1x1x32xf32>
    %18 = vector.broadcast %14 : vector<26x26x1xf32> to vector<26x26x32xf32>
    %19 = vector.broadcast %17 : vector<1x1x32xf32> to vector<26x26x32xf32>
    %20 = arith.mulf %18, %19 : vector<26x26x32xf32>
    %21 = arith.addf %13, %20 : vector<26x26x32xf32>
    %22 = vector.extract_strided_slice %4 {offsets = [0, 2, 0], sizes = [26, 26, 1], strides = [1, 1, 1]} : vector<28x28x1xf32> to vector<26x26x1xf32>
    %c2 = arith.constant 2 : index
    %c0_8 = arith.constant 0 : index
    %c0_9 = arith.constant 0 : index
    %23 = vector.load %arg2[%c2, %c0_8, %c0_9] : memref<9x1x32xf32, #tpu.memory_space<vmem>>, vector<1x1x32xf32>
    %24 = vector.shape_cast %23 : vector<1x1x32xf32> to vector<1x32xf32>
    %25 = vector.shape_cast %24 : vector<1x32xf32> to vector<1x1x32xf32>
    %26 = vector.broadcast %22 : vector<26x26x1xf32> to vector<26x26x32xf32>
    %27 = vector.broadcast %25 : vector<1x1x32xf32> to vector<26x26x32xf32>
    %28 = arith.mulf %26, %27 : vector<26x26x32xf32>
    %29 = arith.addf %21, %28 : vector<26x26x32xf32>
    %30 = vector.extract_strided_slice %4 {offsets = [1, 0, 0], sizes = [26, 26, 1], strides = [1, 1, 1]} : vector<28x28x1xf32> to vector<26x26x1xf32>
    %c3 = arith.constant 3 : index
    %c0_10 = arith.constant 0 : index
    %c0_11 = arith.constant 0 : index
    %31 = vector.load %arg2[%c3, %c0_10, %c0_11] : memref<9x1x32xf32, #tpu.memory_space<vmem>>, vector<1x1x32xf32>
    %32 = vector.shape_cast %31 : vector<1x1x32xf32> to vector<1x32xf32>
    %33 = vector.shape_cast %32 : vector<1x32xf32> to vector<1x1x32xf32>
    %34 = vector.broadcast %30 : vector<26x26x1xf32> to vector<26x26x32xf32>
    %35 = vector.broadcast %33 : vector<1x1x32xf32> to vector<26x26x32xf32>
    %36 = arith.mulf %34, %35 : vector<26x26x32xf32>
    %37 = arith.addf %29, %36 : vector<26x26x32xf32>
    %38 = vector.extract_strided_slice %4 {offsets = [1, 1, 0], sizes = [26, 26, 1], strides = [1, 1, 1]} : vector<28x28x1xf32> to vector<26x26x1xf32>
    %c4 = arith.constant 4 : index
    %c0_12 = arith.constant 0 : index
    %c0_13 = arith.constant 0 : index
    %39 = vector.load %arg2[%c4, %c0_12, %c0_13] : memref<9x1x32xf32, #tpu.memory_space<vmem>>, vector<1x1x32xf32>
    %40 = vector.shape_cast %39 : vector<1x1x32xf32> to vector<1x32xf32>
    %41 = vector.shape_cast %40 : vector<1x32xf32> to vector<1x1x32xf32>
    %42 = vector.broadcast %38 : vector<26x26x1xf32> to vector<26x26x32xf32>
    %43 = vector.broadcast %41 : vector<1x1x32xf32> to vector<26x26x32xf32>
    %44 = arith.mulf %42, %43 : vector<26x26x32xf32>
    %45 = arith.addf %37, %44 : vector<26x26x32xf32>
    %46 = vector.extract_strided_slice %4 {offsets = [1, 2, 0], sizes = [26, 26, 1], strides = [1, 1, 1]} : vector<28x28x1xf32> to vector<26x26x1xf32>
    %c5 = arith.constant 5 : index
    %c0_14 = arith.constant 0 : index
    %c0_15 = arith.constant 0 : index
    %47 = vector.load %arg2[%c5, %c0_14, %c0_15] : memref<9x1x32xf32, #tpu.memory_space<vmem>>, vector<1x1x32xf32>
    %48 = vector.shape_cast %47 : vector<1x1x32xf32> to vector<1x32xf32>
    %49 = vector.shape_cast %48 : vector<1x32xf32> to vector<1x1x32xf32>
    %50 = vector.broadcast %46 : vector<26x26x1xf32> to vector<26x26x32xf32>
    %51 = vector.broadcast %49 : vector<1x1x32xf32> to vector<26x26x32xf32>
    %52 = arith.mulf %50, %51 : vector<26x26x32xf32>
    %53 = arith.addf %45, %52 : vector<26x26x32xf32>
    %54 = vector.extract_strided_slice %4 {offsets = [2, 0, 0], sizes = [26, 26, 1], strides = [1, 1, 1]} : vector<28x28x1xf32> to vector<26x26x1xf32>
    %c6 = arith.constant 6 : index
    %c0_16 = arith.constant 0 : index
    %c0_17 = arith.constant 0 : index
    %55 = vector.load %arg2[%c6, %c0_16, %c0_17] : memref<9x1x32xf32, #tpu.memory_space<vmem>>, vector<1x1x32xf32>
    %56 = vector.shape_cast %55 : vector<1x1x32xf32> to vector<1x32xf32>
    %57 = vector.shape_cast %56 : vector<1x32xf32> to vector<1x1x32xf32>
    %58 = vector.broadcast %54 : vector<26x26x1xf32> to vector<26x26x32xf32>
    %59 = vector.broadcast %57 : vector<1x1x32xf32> to vector<26x26x32xf32>
    %60 = arith.mulf %58, %59 : vector<26x26x32xf32>
    %61 = arith.addf %53, %60 : vector<26x26x32xf32>
    %62 = vector.extract_strided_slice %4 {offsets = [2, 1, 0], sizes = [26, 26, 1], strides = [1, 1, 1]} : vector<28x28x1xf32> to vector<26x26x1xf32>
    %c7 = arith.constant 7 : index
    %c0_18 = arith.constant 0 : index
    %c0_19 = arith.constant 0 : index
    %63 = vector.load %arg2[%c7, %c0_18, %c0_19] : memref<9x1x32xf32, #tpu.memory_space<vmem>>, vector<1x1x32xf32>
    %64 = vector.shape_cast %63 : vector<1x1x32xf32> to vector<1x32xf32>
    %65 = vector.shape_cast %64 : vector<1x32xf32> to vector<1x1x32xf32>
    %66 = vector.broadcast %62 : vector<26x26x1xf32> to vector<26x26x32xf32>
    %67 = vector.broadcast %65 : vector<1x1x32xf32> to vector<26x26x32xf32>
    %68 = arith.mulf %66, %67 : vector<26x26x32xf32>
    %69 = arith.addf %61, %68 : vector<26x26x32xf32>
    %70 = vector.extract_strided_slice %4 {offsets = [2, 2, 0], sizes = [26, 26, 1], strides = [1, 1, 1]} : vector<28x28x1xf32> to vector<26x26x1xf32>
    %c8 = arith.constant 8 : index
    %c0_20 = arith.constant 0 : index
    %c0_21 = arith.constant 0 : index
    %71 = vector.load %arg2[%c8, %c0_20, %c0_21] : memref<9x1x32xf32, #tpu.memory_space<vmem>>, vector<1x1x32xf32>
    %72 = vector.shape_cast %71 : vector<1x1x32xf32> to vector<1x32xf32>
    %73 = vector.shape_cast %72 : vector<1x32xf32> to vector<1x1x32xf32>
    %74 = vector.broadcast %70 : vector<26x26x1xf32> to vector<26x26x32xf32>
    %75 = vector.broadcast %73 : vector<1x1x32xf32> to vector<26x26x32xf32>
    %76 = arith.mulf %74, %75 : vector<26x26x32xf32>
    %77 = arith.addf %69, %76 : vector<26x26x32xf32>
    %c0_22 = arith.constant 0 : index
    %c0_23 = arith.constant 0 : index
    %78 = vector.load %arg3[%c0_22, %c0_23] : memref<1x32xf32, #tpu.memory_space<vmem>>, vector<1x32xf32>
    %79 = vector.shape_cast %78 : vector<1x32xf32> to vector<1x1x32xf32>
    %80 = vector.broadcast %79 : vector<1x1x32xf32> to vector<26x26x32xf32>
    %81 = arith.addf %77, %80 : vector<26x26x32xf32>
    %cst_24 = arith.constant 0.000000e+00 : f32
    %82 = vector.broadcast %cst_24 : f32 to vector<26x26x32xf32>
    %83 = arith.maximumf %81, %82 : vector<26x26x32xf32>
    %cst_25 = arith.constant 0.000000e+00 : f32
    %84 = vector.broadcast %cst_25 : f32 to vector<576x64xf32>
    %85 = vector.extract_strided_slice %83 {offsets = [0, 0, 0], sizes = [24, 24, 32], strides = [1, 1, 1]} : vector<26x26x32xf32> to vector<24x24x32xf32>
    %86 = vector.shape_cast %85 : vector<24x24x32xf32> to vector<576x32xf32>
    %87 = arith.truncf %86 : vector<576x32xf32> to vector<576x32xbf16>
    %c0_26 = arith.constant 0 : index
    %c0_27 = arith.constant 0 : index
    %c0_28 = arith.constant 0 : index
    %88 = vector.load %arg4[%c0_26, %c0_27, %c0_28] : memref<9x32x64xbf16, #tpu.memory_space<vmem>>, vector<1x32x64xbf16>
    %89 = vector.shape_cast %88 : vector<1x32x64xbf16> to vector<32x64xbf16>
    %cst_29 = arith.constant dense<0.000000e+00> : vector<576x64xf32>
    %90 = tpu.matmul %87, %89, %cst_29 {dimension_numbers = #tpu.dot_dimension_numbers<[1], [0], [0], [1], [0, 0, 1, 1], [], []>} : vector<576x32xbf16>, vector<32x64xbf16>, vector<576x64xf32> -> vector<576x64xf32>
    %91 = arith.addf %84, %90 : vector<576x64xf32>
    %92 = vector.extract_strided_slice %83 {offsets = [0, 1, 0], sizes = [24, 24, 32], strides = [1, 1, 1]} : vector<26x26x32xf32> to vector<24x24x32xf32>
    %93 = vector.shape_cast %92 : vector<24x24x32xf32> to vector<576x32xf32>
    %94 = arith.truncf %93 : vector<576x32xf32> to vector<576x32xbf16>
    %c1_30 = arith.constant 1 : index
    %c0_31 = arith.constant 0 : index
    %c0_32 = arith.constant 0 : index
    %95 = vector.load %arg4[%c1_30, %c0_31, %c0_32] : memref<9x32x64xbf16, #tpu.memory_space<vmem>>, vector<1x32x64xbf16>
    %96 = vector.shape_cast %95 : vector<1x32x64xbf16> to vector<32x64xbf16>
    %cst_33 = arith.constant dense<0.000000e+00> : vector<576x64xf32>
    %97 = tpu.matmul %94, %96, %cst_33 {dimension_numbers = #tpu.dot_dimension_numbers<[1], [0], [0], [1], [0, 0, 1, 1], [], []>} : vector<576x32xbf16>, vector<32x64xbf16>, vector<576x64xf32> -> vector<576x64xf32>
    %98 = arith.addf %91, %97 : vector<576x64xf32>
    %99 = vector.extract_strided_slice %83 {offsets = [0, 2, 0], sizes = [24, 24, 32], strides = [1, 1, 1]} : vector<26x26x32xf32> to vector<24x24x32xf32>
    %100 = vector.shape_cast %99 : vector<24x24x32xf32> to vector<576x32xf32>
    %101 = arith.truncf %100 : vector<576x32xf32> to vector<576x32xbf16>
    %c2_34 = arith.constant 2 : index
    %c0_35 = arith.constant 0 : index
    %c0_36 = arith.constant 0 : index
    %102 = vector.load %arg4[%c2_34, %c0_35, %c0_36] : memref<9x32x64xbf16, #tpu.memory_space<vmem>>, vector<1x32x64xbf16>
    %103 = vector.shape_cast %102 : vector<1x32x64xbf16> to vector<32x64xbf16>
    %cst_37 = arith.constant dense<0.000000e+00> : vector<576x64xf32>
    %104 = tpu.matmul %101, %103, %cst_37 {dimension_numbers = #tpu.dot_dimension_numbers<[1], [0], [0], [1], [0, 0, 1, 1], [], []>} : vector<576x32xbf16>, vector<32x64xbf16>, vector<576x64xf32> -> vector<576x64xf32>
    %105 = arith.addf %98, %104 : vector<576x64xf32>
    %106 = vector.extract_strided_slice %83 {offsets = [1, 0, 0], sizes = [24, 24, 32], strides = [1, 1, 1]} : vector<26x26x32xf32> to vector<24x24x32xf32>
    %107 = vector.shape_cast %106 : vector<24x24x32xf32> to vector<576x32xf32>
    %108 = arith.truncf %107 : vector<576x32xf32> to vector<576x32xbf16>
    %c3_38 = arith.constant 3 : index
    %c0_39 = arith.constant 0 : index
    %c0_40 = arith.constant 0 : index
    %109 = vector.load %arg4[%c3_38, %c0_39, %c0_40] : memref<9x32x64xbf16, #tpu.memory_space<vmem>>, vector<1x32x64xbf16>
    %110 = vector.shape_cast %109 : vector<1x32x64xbf16> to vector<32x64xbf16>
    %cst_41 = arith.constant dense<0.000000e+00> : vector<576x64xf32>
    %111 = tpu.matmul %108, %110, %cst_41 {dimension_numbers = #tpu.dot_dimension_numbers<[1], [0], [0], [1], [0, 0, 1, 1], [], []>} : vector<576x32xbf16>, vector<32x64xbf16>, vector<576x64xf32> -> vector<576x64xf32>
    %112 = arith.addf %105, %111 : vector<576x64xf32>
    %113 = vector.extract_strided_slice %83 {offsets = [1, 1, 0], sizes = [24, 24, 32], strides = [1, 1, 1]} : vector<26x26x32xf32> to vector<24x24x32xf32>
    %114 = vector.shape_cast %113 : vector<24x24x32xf32> to vector<576x32xf32>
    %115 = arith.truncf %114 : vector<576x32xf32> to vector<576x32xbf16>
    %c4_42 = arith.constant 4 : index
    %c0_43 = arith.constant 0 : index
    %c0_44 = arith.constant 0 : index
    %116 = vector.load %arg4[%c4_42, %c0_43, %c0_44] : memref<9x32x64xbf16, #tpu.memory_space<vmem>>, vector<1x32x64xbf16>
    %117 = vector.shape_cast %116 : vector<1x32x64xbf16> to vector<32x64xbf16>
    %cst_45 = arith.constant dense<0.000000e+00> : vector<576x64xf32>
    %118 = tpu.matmul %115, %117, %cst_45 {dimension_numbers = #tpu.dot_dimension_numbers<[1], [0], [0], [1], [0, 0, 1, 1], [], []>} : vector<576x32xbf16>, vector<32x64xbf16>, vector<576x64xf32> -> vector<576x64xf32>
    %119 = arith.addf %112, %118 : vector<576x64xf32>
    %120 = vector.extract_strided_slice %83 {offsets = [1, 2, 0], sizes = [24, 24, 32], strides = [1, 1, 1]} : vector<26x26x32xf32> to vector<24x24x32xf32>
    %121 = vector.shape_cast %120 : vector<24x24x32xf32> to vector<576x32xf32>
    %122 = arith.truncf %121 : vector<576x32xf32> to vector<576x32xbf16>
    %c5_46 = arith.constant 5 : index
    %c0_47 = arith.constant 0 : index
    %c0_48 = arith.constant 0 : index
    %123 = vector.load %arg4[%c5_46, %c0_47, %c0_48] : memref<9x32x64xbf16, #tpu.memory_space<vmem>>, vector<1x32x64xbf16>
    %124 = vector.shape_cast %123 : vector<1x32x64xbf16> to vector<32x64xbf16>
    %cst_49 = arith.constant dense<0.000000e+00> : vector<576x64xf32>
    %125 = tpu.matmul %122, %124, %cst_49 {dimension_numbers = #tpu.dot_dimension_numbers<[1], [0], [0], [1], [0, 0, 1, 1], [], []>} : vector<576x32xbf16>, vector<32x64xbf16>, vector<576x64xf32> -> vector<576x64xf32>
    %126 = arith.addf %119, %125 : vector<576x64xf32>
    %127 = vector.extract_strided_slice %83 {offsets = [2, 0, 0], sizes = [24, 24, 32], strides = [1, 1, 1]} : vector<26x26x32xf32> to vector<24x24x32xf32>
    %128 = vector.shape_cast %127 : vector<24x24x32xf32> to vector<576x32xf32>
    %129 = arith.truncf %128 : vector<576x32xf32> to vector<576x32xbf16>
    %c6_50 = arith.constant 6 : index
    %c0_51 = arith.constant 0 : index
    %c0_52 = arith.constant 0 : index
    %130 = vector.load %arg4[%c6_50, %c0_51, %c0_52] : memref<9x32x64xbf16, #tpu.memory_space<vmem>>, vector<1x32x64xbf16>
    %131 = vector.shape_cast %130 : vector<1x32x64xbf16> to vector<32x64xbf16>
    %cst_53 = arith.constant dense<0.000000e+00> : vector<576x64xf32>
    %132 = tpu.matmul %129, %131, %cst_53 {dimension_numbers = #tpu.dot_dimension_numbers<[1], [0], [0], [1], [0, 0, 1, 1], [], []>} : vector<576x32xbf16>, vector<32x64xbf16>, vector<576x64xf32> -> vector<576x64xf32>
    %133 = arith.addf %126, %132 : vector<576x64xf32>
    %134 = vector.extract_strided_slice %83 {offsets = [2, 1, 0], sizes = [24, 24, 32], strides = [1, 1, 1]} : vector<26x26x32xf32> to vector<24x24x32xf32>
    %135 = vector.shape_cast %134 : vector<24x24x32xf32> to vector<576x32xf32>
    %136 = arith.truncf %135 : vector<576x32xf32> to vector<576x32xbf16>
    %c7_54 = arith.constant 7 : index
    %c0_55 = arith.constant 0 : index
    %c0_56 = arith.constant 0 : index
    %137 = vector.load %arg4[%c7_54, %c0_55, %c0_56] : memref<9x32x64xbf16, #tpu.memory_space<vmem>>, vector<1x32x64xbf16>
    %138 = vector.shape_cast %137 : vector<1x32x64xbf16> to vector<32x64xbf16>
    %cst_57 = arith.constant dense<0.000000e+00> : vector<576x64xf32>
    %139 = tpu.matmul %136, %138, %cst_57 {dimension_numbers = #tpu.dot_dimension_numbers<[1], [0], [0], [1], [0, 0, 1, 1], [], []>} : vector<576x32xbf16>, vector<32x64xbf16>, vector<576x64xf32> -> vector<576x64xf32>
    %140 = arith.addf %133, %139 : vector<576x64xf32>
    %141 = vector.extract_strided_slice %83 {offsets = [2, 2, 0], sizes = [24, 24, 32], strides = [1, 1, 1]} : vector<26x26x32xf32> to vector<24x24x32xf32>
    %142 = vector.shape_cast %141 : vector<24x24x32xf32> to vector<576x32xf32>
    %143 = arith.truncf %142 : vector<576x32xf32> to vector<576x32xbf16>
    %c8_58 = arith.constant 8 : index
    %c0_59 = arith.constant 0 : index
    %c0_60 = arith.constant 0 : index
    %144 = vector.load %arg4[%c8_58, %c0_59, %c0_60] : memref<9x32x64xbf16, #tpu.memory_space<vmem>>, vector<1x32x64xbf16>
    %145 = vector.shape_cast %144 : vector<1x32x64xbf16> to vector<32x64xbf16>
    %cst_61 = arith.constant dense<0.000000e+00> : vector<576x64xf32>
    %146 = tpu.matmul %143, %145, %cst_61 {dimension_numbers = #tpu.dot_dimension_numbers<[1], [0], [0], [1], [0, 0, 1, 1], [], []>} : vector<576x32xbf16>, vector<32x64xbf16>, vector<576x64xf32> -> vector<576x64xf32>
    %147 = arith.addf %140, %146 : vector<576x64xf32>
    %c0_62 = arith.constant 0 : index
    %c0_63 = arith.constant 0 : index
    %148 = vector.load %arg5[%c0_62, %c0_63] : memref<1x64xf32, #tpu.memory_space<vmem>>, vector<1x64xf32>
    %149 = vector.broadcast %148 : vector<1x64xf32> to vector<576x64xf32>
    %150 = arith.addf %147, %149 : vector<576x64xf32>
    %cst_64 = arith.constant 0.000000e+00 : f32
    %151 = vector.broadcast %cst_64 : f32 to vector<576x64xf32>
    %152 = arith.maximumf %150, %151 : vector<576x64xf32>
    %153 = vector.shape_cast %152 : vector<576x64xf32> to vector<24x24x64xf32>
    %154 = vector.shape_cast %153 : vector<24x24x64xf32> to vector<12x2x24x64xf32>
    %cst_65 = arith.constant dense<0xFF800000> : vector<12x24x64xf32>
    %155 = vector.multi_reduction <maximumf>, %154, %cst_65 [1] : vector<12x2x24x64xf32> to vector<12x24x64xf32>
    %156 = vector.extract_strided_slice %155 {offsets = [0, 0, 0], sizes = [12, 1, 64], strides = [1, 1, 1]} : vector<12x24x64xf32> to vector<12x1x64xf32>
    %157 = vector.extract_strided_slice %155 {offsets = [0, 1, 0], sizes = [12, 1, 64], strides = [1, 1, 1]} : vector<12x24x64xf32> to vector<12x1x64xf32>
    %158 = arith.maximumf %156, %157 : vector<12x1x64xf32>
    %159 = vector.extract_strided_slice %155 {offsets = [0, 2, 0], sizes = [12, 1, 64], strides = [1, 1, 1]} : vector<12x24x64xf32> to vector<12x1x64xf32>
    %160 = vector.extract_strided_slice %155 {offsets = [0, 3, 0], sizes = [12, 1, 64], strides = [1, 1, 1]} : vector<12x24x64xf32> to vector<12x1x64xf32>
    %161 = arith.maximumf %159, %160 : vector<12x1x64xf32>
    %162 = vector.extract_strided_slice %155 {offsets = [0, 4, 0], sizes = [12, 1, 64], strides = [1, 1, 1]} : vector<12x24x64xf32> to vector<12x1x64xf32>
    %163 = vector.extract_strided_slice %155 {offsets = [0, 5, 0], sizes = [12, 1, 64], strides = [1, 1, 1]} : vector<12x24x64xf32> to vector<12x1x64xf32>
    %164 = arith.maximumf %162, %163 : vector<12x1x64xf32>
    %165 = vector.extract_strided_slice %155 {offsets = [0, 6, 0], sizes = [12, 1, 64], strides = [1, 1, 1]} : vector<12x24x64xf32> to vector<12x1x64xf32>
    %166 = vector.extract_strided_slice %155 {offsets = [0, 7, 0], sizes = [12, 1, 64], strides = [1, 1, 1]} : vector<12x24x64xf32> to vector<12x1x64xf32>
    %167 = arith.maximumf %165, %166 : vector<12x1x64xf32>
    %168 = vector.extract_strided_slice %155 {offsets = [0, 8, 0], sizes = [12, 1, 64], strides = [1, 1, 1]} : vector<12x24x64xf32> to vector<12x1x64xf32>
    %169 = vector.extract_strided_slice %155 {offsets = [0, 9, 0], sizes = [12, 1, 64], strides = [1, 1, 1]} : vector<12x24x64xf32> to vector<12x1x64xf32>
    %170 = arith.maximumf %168, %169 : vector<12x1x64xf32>
    %171 = vector.extract_strided_slice %155 {offsets = [0, 10, 0], sizes = [12, 1, 64], strides = [1, 1, 1]} : vector<12x24x64xf32> to vector<12x1x64xf32>
    %172 = vector.extract_strided_slice %155 {offsets = [0, 11, 0], sizes = [12, 1, 64], strides = [1, 1, 1]} : vector<12x24x64xf32> to vector<12x1x64xf32>
    %173 = arith.maximumf %171, %172 : vector<12x1x64xf32>
    %174 = vector.extract_strided_slice %155 {offsets = [0, 12, 0], sizes = [12, 1, 64], strides = [1, 1, 1]} : vector<12x24x64xf32> to vector<12x1x64xf32>
    %175 = vector.extract_strided_slice %155 {offsets = [0, 13, 0], sizes = [12, 1, 64], strides = [1, 1, 1]} : vector<12x24x64xf32> to vector<12x1x64xf32>
    %176 = arith.maximumf %174, %175 : vector<12x1x64xf32>
    %177 = vector.extract_strided_slice %155 {offsets = [0, 14, 0], sizes = [12, 1, 64], strides = [1, 1, 1]} : vector<12x24x64xf32> to vector<12x1x64xf32>
    %178 = vector.extract_strided_slice %155 {offsets = [0, 15, 0], sizes = [12, 1, 64], strides = [1, 1, 1]} : vector<12x24x64xf32> to vector<12x1x64xf32>
    %179 = arith.maximumf %177, %178 : vector<12x1x64xf32>
    %180 = vector.extract_strided_slice %155 {offsets = [0, 16, 0], sizes = [12, 1, 64], strides = [1, 1, 1]} : vector<12x24x64xf32> to vector<12x1x64xf32>
    %181 = vector.extract_strided_slice %155 {offsets = [0, 17, 0], sizes = [12, 1, 64], strides = [1, 1, 1]} : vector<12x24x64xf32> to vector<12x1x64xf32>
    %182 = arith.maximumf %180, %181 : vector<12x1x64xf32>
    %183 = vector.extract_strided_slice %155 {offsets = [0, 18, 0], sizes = [12, 1, 64], strides = [1, 1, 1]} : vector<12x24x64xf32> to vector<12x1x64xf32>
    %184 = vector.extract_strided_slice %155 {offsets = [0, 19, 0], sizes = [12, 1, 64], strides = [1, 1, 1]} : vector<12x24x64xf32> to vector<12x1x64xf32>
    %185 = arith.maximumf %183, %184 : vector<12x1x64xf32>
    %186 = vector.extract_strided_slice %155 {offsets = [0, 20, 0], sizes = [12, 1, 64], strides = [1, 1, 1]} : vector<12x24x64xf32> to vector<12x1x64xf32>
    %187 = vector.extract_strided_slice %155 {offsets = [0, 21, 0], sizes = [12, 1, 64], strides = [1, 1, 1]} : vector<12x24x64xf32> to vector<12x1x64xf32>
    %188 = arith.maximumf %186, %187 : vector<12x1x64xf32>
    %189 = vector.extract_strided_slice %155 {offsets = [0, 22, 0], sizes = [12, 1, 64], strides = [1, 1, 1]} : vector<12x24x64xf32> to vector<12x1x64xf32>
    %190 = vector.extract_strided_slice %155 {offsets = [0, 23, 0], sizes = [12, 1, 64], strides = [1, 1, 1]} : vector<12x24x64xf32> to vector<12x1x64xf32>
    %191 = arith.maximumf %189, %190 : vector<12x1x64xf32>
    %192 = tpu.concatenate %158, %161, %164, %167, %170, %173, %176, %179, %182, %185, %188, %191 in 1 : vector<12x1x64xf32>, vector<12x1x64xf32>, vector<12x1x64xf32>, vector<12x1x64xf32>, vector<12x1x64xf32>, vector<12x1x64xf32>, vector<12x1x64xf32>, vector<12x1x64xf32>, vector<12x1x64xf32>, vector<12x1x64xf32>, vector<12x1x64xf32>, vector<12x1x64xf32> -> vector<12x12x64xf32>
    %193 = arith.truncf %192 : vector<12x12x64xf32> to vector<12x12x64xbf16>
    %194 = arith.index_cast %1 : i32 to index
    %c0_66 = arith.constant 0 : index
    %c0_67 = arith.constant 0 : index
    %c0_68 = arith.constant 0 : index
    %195 = vector.load %arg6[%194, %c0_66, %c0_67, %c0_68] : memref<1x12x12x64xbf16, #tpu.memory_space<vmem>>, vector<1x12x12x64xbf16>
    %196 = vector.shape_cast %195 : vector<1x12x12x64xbf16> to vector<12x12x64xbf16>
    %197 = vector.shape_cast %193 : vector<12x12x64xbf16> to vector<1x12x12x64xbf16>
    tpu.vector_store %arg6[%194, %c0_66, %c0_67, %c0_68], %197 {strides = array<i32>} : memref<1x12x12x64xbf16, #tpu.memory_space<vmem>>, vector<1x12x12x64xbf16>,
    %c1_i32_69 = arith.constant 1 : i32
    return
  }
  func.func @transform_0(%arg0: i32) -> (i32, i32, i32, i32) {
    %c0_i32 = arith.constant 0 : i32
    %c0_i32_0 = arith.constant 0 : i32
    %c0_i32_1 = arith.constant 0 : i32
    %c0_i32_2 = arith.constant 0 : i32
    return %arg0, %c0_i32, %c0_i32_0, %c0_i32_1 : i32, i32, i32, i32
  }
  func.func @transform_1(%arg0: i32) -> (i32, i32, i32) {
    %c0_i32 = arith.constant 0 : i32
    %c0_i32_0 = arith.constant 0 : i32
    %c0_i32_1 = arith.constant 0 : i32
    %c0_i32_2 = arith.constant 0 : i32
    return %c0_i32, %c0_i32_0, %c0_i32_1 : i32, i32, i32
  }
  func.func @transform_2(%arg0: i32) -> (i32, i32) {
    %c0_i32 = arith.constant 0 : i32
    %c0_i32_0 = arith.constant 0 : i32
    %c0_i32_1 = arith.constant 0 : i32
    return %c0_i32, %c0_i32_0 : i32, i32
  }
  func.func @transform_3(%arg0: i32) -> (i32, i32, i32) {
    %c0_i32 = arith.constant 0 : i32
    %c0_i32_0 = arith.constant 0 : i32
    %c0_i32_1 = arith.constant 0 : i32
    %c0_i32_2 = arith.constant 0 : i32
    return %c0_i32, %c0_i32_0, %c0_i32_1 : i32, i32, i32
  }
  func.func @transform_4(%arg0: i32) -> (i32, i32) {
    %c0_i32 = arith.constant 0 : i32
    %c0_i32_0 = arith.constant 0 : i32
    %c0_i32_1 = arith.constant 0 : i32
    return %c0_i32, %c0_i32_0 : i32, i32
  }
  func.func @transform_5(%arg0: i32) -> (i32, i32, i32, i32) {
    %c0_i32 = arith.constant 0 : i32
    %c0_i32_0 = arith.constant 0 : i32
    %c0_i32_1 = arith.constant 0 : i32
    %c0_i32_2 = arith.constant 0 : i32
    return %arg0, %c0_i32, %c0_i32_0, %c0_i32_1 : i32, i32, i32, i32
  }
}

module attributes {stable_mosaic.version = 11 : i64} {
  func.func @mlp_head_kernel(%arg0: i32, %arg1: i32, %arg2: memref<2x1152xbf16, #tpu.memory_space<vmem>>, %arg3: memref<1152x128xbf16, #tpu.memory_space<vmem>>, %arg4: memref<128x10xf32, #tpu.memory_space<vmem>>, %arg5: memref<2x10xf32, #tpu.memory_space<vmem>>, %arg6: memref<2x128xf32, #tpu.memory_space<vmem>>) attributes {dimension_semantics = [#tpu.dimension_semantics<parallel>, #tpu.dimension_semantics<arbitrary>], iteration_bounds = array<i64: 1, 8>, scalar_prefetch = 0 : i64, scratch_operands = 1 : i64, tpu.core_type = #tpu.core_type<tc>, window_params = [{transform_indices = @transform_0, window_bounds = array<i64: 2, 1152>}, {transform_indices = @transform_1, window_bounds = array<i64: 1152, 128>}, {pipeline_mode = #tpu.pipeline_mode<synchronous>, transform_indices = @transform_2, window_bounds = array<i64: 128, 10>}, {transform_indices = @transform_3, window_bounds = array<i64: 2, 10>}]} {
    %c0_i32 = arith.constant 0 : i32
    %0 = arith.cmpi eq, %arg1, %c0_i32 : i32
    %1 = arith.extui %0 : i1 to i32
    %c0_i32_0 = arith.constant 0 : i32
    %2 = arith.cmpi ne, %1, %c0_i32_0 : i32
    scf.if %2 {
      %cst_9 = arith.constant 0.000000e+00 : f32
      %12 = vector.broadcast %cst_9 : f32 to vector<2x128xf32>
      %c0_10 = arith.constant 0 : index
      %c0_11 = arith.constant 0 : index
      %13 = vector.load %arg6[%c0_10, %c0_11] : memref<2x128xf32, #tpu.memory_space<vmem>>, vector<2x128xf32>
      tpu.vector_store %arg6[%c0_10, %c0_11], %12 {strides = array<i32>} : memref<2x128xf32, #tpu.memory_space<vmem>>, vector<2x128xf32>,
    } else {
    }
    %c0 = arith.constant 0 : index
    %c0_1 = arith.constant 0 : index
    %3 = vector.load %arg6[%c0, %c0_1] : memref<2x128xf32, #tpu.memory_space<vmem>>, vector<2x128xf32>
    %c0_2 = arith.constant 0 : index
    %c0_3 = arith.constant 0 : index
    %4 = vector.load %arg2[%c0_2, %c0_3] : memref<2x1152xbf16, #tpu.memory_space<vmem>>, vector<2x1152xbf16>
    %c0_4 = arith.constant 0 : index
    %c0_5 = arith.constant 0 : index
    %5 = vector.load %arg3[%c0_4, %c0_5] : memref<1152x128xbf16, #tpu.memory_space<vmem>>, vector<1152x128xbf16>
    %cst = arith.constant dense<0.000000e+00> : vector<2x128xf32>
    %6 = tpu.matmul %4, %5, %cst {dimension_numbers = #tpu.dot_dimension_numbers<[1], [0], [0], [1], [0, 0, 1, 1], [], []>} : vector<2x1152xbf16>, vector<1152x128xbf16>, vector<2x128xf32> -> vector<2x128xf32>
    %7 = arith.addf %3, %6 : vector<2x128xf32>
    %c0_6 = arith.constant 0 : index
    %c0_7 = arith.constant 0 : index
    %8 = vector.load %arg6[%c0_6, %c0_7] : memref<2x128xf32, #tpu.memory_space<vmem>>, vector<2x128xf32>
    tpu.vector_store %arg6[%c0_6, %c0_7], %7 {strides = array<i32>} : memref<2x128xf32, #tpu.memory_space<vmem>>, vector<2x128xf32>,
    %c7_i32 = arith.constant 7 : i32
    %9 = arith.cmpi eq, %arg1, %c7_i32 : i32
    %10 = arith.extui %9 : i1 to i32
    %c0_i32_8 = arith.constant 0 : i32
    %11 = arith.cmpi ne, %10, %c0_i32_8 : i32
    scf.if %11 {
      %c0_9 = arith.constant 0 : index
      %c0_10 = arith.constant 0 : index
      %12 = vector.load %arg6[%c0_9, %c0_10] : memref<2x128xf32, #tpu.memory_space<vmem>>, vector<2x128xf32>
      %cst_11 = arith.constant 0.000000e+00 : f32
      %13 = vector.broadcast %cst_11 : f32 to vector<2x128xf32>
      %14 = arith.maximumf %12, %13 : vector<2x128xf32>
      %c0_12 = arith.constant 0 : index
      %c0_13 = arith.constant 0 : index
      %15 = vector.load %arg4[%c0_12, %c0_13] : memref<128x10xf32, #tpu.memory_space<vmem>>, vector<128x10xf32>
      %cst_14 = arith.constant dense<0.000000e+00> : vector<2x10xf32>
      %16 = tpu.matmul %14, %15, %cst_14 {dimension_numbers = #tpu.dot_dimension_numbers<[1], [0], [0], [1], [0, 0, 1, 1], [], []>} : vector<2x128xf32>, vector<128x10xf32>, vector<2x10xf32> -> vector<2x10xf32>
      %cst_15 = arith.constant dense<0xFF800000> : vector<2xf32>
      %17 = vector.multi_reduction <maximumf>, %16, %cst_15 [1] : vector<2x10xf32> to vector<2xf32>
      %18 = vector.shape_cast %17 : vector<2xf32> to vector<2x1xf32>
      %19 = vector.broadcast %18 : vector<2x1xf32> to vector<2x10xf32>
      %20 = arith.subf %16, %19 : vector<2x10xf32>
      %21 = math.exp %20 : vector<2x10xf32>
      %cst_16 = arith.constant dense<0.000000e+00> : vector<2xf32>
      %22 = vector.multi_reduction <add>, %21, %cst_16 [1] : vector<2x10xf32> to vector<2xf32>
      %23 = vector.shape_cast %22 : vector<2xf32> to vector<2x1xf32>
      %24 = math.log %23 : vector<2x1xf32>
      %25 = vector.broadcast %24 : vector<2x1xf32> to vector<2x10xf32>
      %26 = arith.subf %20, %25 : vector<2x10xf32>
      %c0_17 = arith.constant 0 : index
      %c0_18 = arith.constant 0 : index
      %27 = vector.load %arg5[%c0_17, %c0_18] : memref<2x10xf32, #tpu.memory_space<vmem>>, vector<2x10xf32>
      tpu.vector_store %arg5[%c0_17, %c0_18], %26 {strides = array<i32>} : memref<2x10xf32, #tpu.memory_space<vmem>>, vector<2x10xf32>,
    } else {
    }
    return
  }
  func.func @transform_0(%arg0: i32, %arg1: i32) -> (i32, i32) {
    %c0_i32 = arith.constant 0 : i32
    return %arg0, %arg1 : i32, i32
  }
  func.func @transform_1(%arg0: i32, %arg1: i32) -> (i32, i32) {
    %c0_i32 = arith.constant 0 : i32
    %c0_i32_0 = arith.constant 0 : i32
    return %arg1, %c0_i32 : i32, i32
  }
  func.func @transform_2(%arg0: i32, %arg1: i32) -> (i32, i32) {
    %c0_i32 = arith.constant 0 : i32
    %c0_i32_0 = arith.constant 0 : i32
    %c0_i32_1 = arith.constant 0 : i32
    return %c0_i32, %c0_i32_0 : i32, i32
  }
  func.func @transform_3(%arg0: i32, %arg1: i32) -> (i32, i32) {
    %c0_i32 = arith.constant 0 : i32
    %c0_i32_0 = arith.constant 0 : i32
    return %arg0, %c0_i32 : i32, i32
  }
}

</mosaic_0001>

<llo_original>
// kernel: cnn_forward.3
$region0: #{cnn_forward.3}
  #allocation0 [shape = 'u32[]', space=smem, size = 0x4, offset = 0x4, fixed_abs, tag = 'smem constant byte address 0x4 - core index']
  #allocation1 [shape = 'u32[72,128]{1,0:T(1,128)}', space=vmem, size = 0x9000, scoped, tag = 'internal scratch']
  #allocation2 [shape = 'f32[2,128]{1,0:T(2,128)}', space=vmem, size = 0x400, scoped, tag = 'scratch operand']
  %s0 = inlined_call_operand.vmem [shape: bf16[2,9216], index: 0, kind: input, shape index: {}]
  %s1 = inlined_call_operand.hbm [shape: bf16[9216,128], index: 1, kind: input, shape index: {}]
  %s2 = inlined_call_operand.vmem [shape: f32[128,10], index: 2, kind: input, shape index: {}]
  %s3 = inlined_call_operand.hbm [shape: f32[2,10], index: 3, kind: output, shape index: {}]
  %s4 = sld [smem:[#allocation0]]
  $region57: #{cnn_forward.3} parent=0
    _
  %s6 = ssub.s32 1, %s4
  %s7 = scalar_select 0, %s6, %s4
  $region1: #{cnn_forward.3} parent=0
    #allocation3 [shape = 'u8[589824]{0}', space=vmem, size = 0x90000, scoped, tag = 'input window, operand 1']
    #allocation4 [shape = 's32[2]{0}', space=sflag, size = 0x8, scoped, tag = 'scoped memory for cnn_forward.3']
    #allocation5 [shape = 's32[2]{0}', space=sflag, size = 0x8, scoped, tag = 'scoped memory for cnn_forward.3']
    #allocation6 [shape = 'u8[1024]{0}', space=vmem, size = 0x400, scoped, tag = 'output window, operand 0, single buffered']
    %8 = vsyncpa [#allocation4], 0
    %s9 = scalar_lea.sflag [#allocation4], 1
    %10 = vsyncpa %s9, 0
    %11 = vsyncpa [#allocation5], 0
    loop: start=0, step=1, limit=10
    $region2: #{cnn_forward.3} parent=1 // loop_pre_header
      _
    $region3: #{cnn_forward.3} parent=1 // loop_header
      %s13 = sphi 0, %s17
      %p14 = scmp.ge.s32.totalorder %s13, 10
      %s20 = sphi 0, %s32
      %s21 = sphi 0, %s28
      %s22 = sphi 0, %s20
      %s23 = sphi 0, %s21
      %s24 = sphi 0, %s22
      %s25 = sphi 0, %s23
      %s37 = sphi 0, %s39
      %s40 = sphi 0, %s37
      %s41 = sphi 0, %s40
      %s57 = sphi 0, %s41
      %s63 = sphi 0, %s65
      %s66 = sphi 0, %s63
      %s67 = sphi 0, %s66
      %s83 = sphi 0, %s67
      %s87 = sphi 0, %s87
      %s89 = sphi 0, %s87
      %s90 = sphi 0, %s89
      %s104 = sphi 0, %s90
      %s110 = sphi 0, %s112
      %s113 = sphi 0, %s110
      %s114 = sphi 0, %s113
      %s130 = sphi 0, %s114
    $region4: #{cnn_forward.3} parent=1 // loop_header_branch
      %16 = sbr.rel (%p14) target = $region8
    $region5: #{cnn_forward.3} parent=1 // loop_body
      %s18 = ssub.s32 %s13, 1
      %s19 = ssub.s32 %s13, 2
      %s26 = sadd.s32 1, %s21
      %p27 = scmp.ge.s32.totalorder %s26, 8
      %s28 = scalar_select %p27, 0, %s26
      %s29 = sadd.s32 1, %s20
      %s30 = scalar_select %p27, %s29, %s20
      %p31 = scmp.ge.s32.totalorder %s30, 1
      %s32 = scalar_select %p31, 0, %s30
      %s33 = ssub.s32 %s20, %s32
      %s34 = ssub.s32 %s21, %s28
      %s35 = sor.u32 %s33, %s34
      %p36 = scmp.eq.s32.totalorder %s35, 0
      %s38 = sadd.s32 %s37, 1
      %s39 = scalar_select %p36, %s37, %s38
      %p42 = pneg %p36
      %p43 = scmp.eq.s32.totalorder %s13, 7
      %p44 = por %p42, %p43
      %p45 = scmp.ne.s32.totalorder %s37, %s40
      %p46 = scmp.eq.s32.totalorder %s13, 0
      %p47 = por %p45, %p46
      %p48 = scmp.ne.s32.totalorder %s37, %s40
      %p49 = scmp.eq.s32.totalorder %s18, 7
      %p50 = por %p48, %p49
      %p51 = scmp.ne.s32.totalorder %s40, %s41
      %p52 = scmp.eq.s32.totalorder %s18, 0
      %p53 = por %p51, %p52
      %p54 = scmp.ne.s32.totalorder %s40, %s41
      %p55 = scmp.eq.s32.totalorder %s19, 7
      %p56 = por %p54, %p55
      %p58 = scmp.ne.s32.totalorder %s41, %s57
      %p59 = scmp.eq.s32.totalorder %s19, 0
      %p60 = por %p58, %p59
      %s61 = ssub.s32 %s21, %s28
      %p62 = scmp.eq.s32.totalorder %s61, 0
      %s64 = sadd.s32 %s63, 1
      %s65 = scalar_select %p62, %s63, %s64
      %p68 = pneg %p62
      %p69 = scmp.eq.s32.totalorder %s13, 7
      %p70 = por %p68, %p69
      %p71 = scmp.ne.s32.totalorder %s63, %s66
      %p72 = scmp.eq.s32.totalorder %s13, 0
      %p73 = por %p71, %p72
      %p74 = scmp.ne.s32.totalorder %s63, %s66
      %p75 = scmp.eq.s32.totalorder %s18, 7
      %p76 = por %p74, %p75
      %p77 = scmp.ne.s32.totalorder %s66, %s67
      %p78 = scmp.eq.s32.totalorder %s18, 0
      %p79 = por %p77, %p78
      %p80 = scmp.ne.s32.totalorder %s66, %s67
      %p81 = scmp.eq.s32.totalorder %s19, 7
      %p82 = por %p80, %p81
      %p84 = scmp.ne.s32.totalorder %s67, %s83
      %p85 = scmp.eq.s32.totalorder %s19, 0
      %p86 = por %p84, %p85
      %s88 = sadd.s32 %s87, 1
      %p91 = scmp.eq.s32.totalorder %s13, 7
      %p92 = scmp.ne.s32.totalorder %s87, %s89
      %p93 = scmp.eq.s32.totalorder %s13, 0
      %p94 = por %p92, %p93
      %p95 = scmp.ne.s32.totalorder %s87, %s89
      %p96 = scmp.eq.s32.totalorder %s18, 7
      %p97 = por %p95, %p96
      %p98 = scmp.ne.s32.totalorder %s89, %s90
      %p99 = scmp.eq.s32.totalorder %s18, 0
      %p100 = por %p98, %p99
      %p101 = scmp.ne.s32.totalorder %s89, %s90
      %p102 = scmp.eq.s32.totalorder %s19, 7
      %p103 = por %p101, %p102
      %p105 = scmp.ne.s32.totalorder %s90, %s104
      %p106 = scmp.eq.s32.totalorder %s19, 0
      %p107 = por %p105, %p106
      %s108 = ssub.s32 %s20, %s32
      %p109 = scmp.eq.s32.totalorder %s108, 0
      %s111 = sadd.s32 %s110, 1
      %s112 = scalar_select %p109, %s110, %s111
      %p115 = pneg %p109
      %p116 = scmp.eq.s32.totalorder %s13, 7
      %p117 = por %p115, %p116
      %p118 = scmp.ne.s32.totalorder %s110, %s113
      %p119 = scmp.eq.s32.totalorder %s13, 0
      %p120 = por %p118, %p119
      %p121 = scmp.ne.s32.totalorder %s110, %s113
      %p122 = scmp.eq.s32.totalorder %s18, 7
      %p123 = por %p121, %p122
      %p124 = scmp.ne.s32.totalorder %s113, %s114
      %p125 = scmp.eq.s32.totalorder %s18, 0
      %p126 = por %p124, %p125
      %p127 = scmp.ne.s32.totalorder %s113, %s114
      %p128 = scmp.eq.s32.totalorder %s19, 7
      %p129 = por %p127, %p128
      %p131 = scmp.ne.s32.totalorder %s114, %s130
      %p132 = scmp.eq.s32.totalorder %s19, 0
      %p133 = por %p131, %p132
      %p134 = scmp.le.s32.totalorder 1, %s13
      %p135 = scmp.lt.s32.totalorder %s13, 9
      %p136 = pnand %p134, %p135
      %p137 = pneg %p136
      // Predicated region
      $region9: #{cnn_forward.3} parent=5 // pred_check
        _
      $region10: #{cnn_forward.3} parent=5 // pred_check_branch
        %139 = sbr.rel (%p136) target = $region12
      $region11: #{cnn_forward.3} parent=5 // pred_region
        %s140 = ssub.s32 %s13, 1
        // Predicated region
        $region13: #{cnn_forward.3} parent=11 // pred_check
          %p141 = pneg %p100
        $region14: #{cnn_forward.3} parent=11 // pred_check_branch
          %143 = sbr.rel (%p141) target = $region16
        $region15: #{cnn_forward.3} parent=11 // pred_region
          _
        $region16: #{cnn_forward.3} parent=11 // pred_fallthru
          _
      $region12: #{cnn_forward.3} parent=5 // pred_fallthru
        _
      %p144 = scmp.lt.s32.totalorder %s13, 8
      // Predicated region
      $region17: #{cnn_forward.3} parent=5 // pred_check
        %p145 = pneg %p144
      $region18: #{cnn_forward.3} parent=5 // pred_check_branch
        %147 = sbr.rel (%p145) target = $region20
      $region19: #{cnn_forward.3} parent=5 // pred_region
        // Predicated region
        $region21: #{cnn_forward.3} parent=19 // pred_check
          %p148 = pneg %p47
        $region22: #{cnn_forward.3} parent=19 // pred_check_branch
          %150 = sbr.rel (%p148) target = $region24
        $region23: #{cnn_forward.3} parent=19 // pred_region
          %s151 = smul.u32 9, %s21
          %p152 = scmp.lt.s32.totalorder %s20, 0
          %s153 = scalar_select %p152, %s20, 0
          %p154 = scmp.lt.s32.totalorder %s151, 71
          %s155 = scalar_select %p154, %s151, 71
          %s156 = smul.addr %s153, 72
          %s157 = sadd.s32 %s155, %s156
          %s158 = scalar_lea.vmem %s0, %s157
          %s159 = smul.u32 9, %s21
        $region24: #{cnn_forward.3} parent=19 // pred_fallthru
          _
        // Predicated region
        $region25: #{cnn_forward.3} parent=19 // pred_check
          %p160 = pneg %p73
        $region26: #{cnn_forward.3} parent=19 // pred_check_branch
          %162 = sbr.rel (%p160) target = $region28
        $region27: #{cnn_forward.3} parent=19 // pred_region
          %s163 = sand.u32 %s63, 1
          %s164 = scalar_lea.sflag [#allocation4], %s163
          %s165 = sand.u32 %s63, 1
          %s166 = smul.addr %s165, 576
          %s167 = scalar_lea.vmem [#allocation3], %s166
          %s168 = smul.u32 144, %s21
          %170 = vsyncadd %s164, 0
          %s171 = smul.addr %s168, 4
          %s172 = scalar_lea.hbm %s1, %s171
          %s173 = sshll.u32 %s172, 4
          %s174 = int_to_ptr.hbm [resolvable:$true] %s173
          %s175 = sshll.u32 %s167, 4
          %s176 = int_to_ptr.vmem [resolvable:$true] %s175
          %181 = dma.hbm_to_vmem [thread:$0]  %s174, 9216, %s176, %s164, 64, 64, 4
        $region28: #{cnn_forward.3} parent=19 // pred_fallthru
          _
      $region20: #{cnn_forward.3} parent=5 // pred_fallthru
        _
      %p182 = scmp.le.s32.totalorder 1, %s13
      %p183 = scmp.lt.s32.totalorder %s13, 9
      %p184 = pnand %p182, %p183
      %p185 = pneg %p184
      // Predicated region
      $region29: #{cnn_forward.3} parent=5 // pred_check
        _
      $region30: #{cnn_forward.3} parent=5 // pred_check_branch
        %187 = sbr.rel (%p184) target = $region32
      $region31: #{cnn_forward.3} parent=5 // pred_region
        %s188 = ssub.s32 %s13, 1
        %s189 = sand.u32 %s66, 1
        %s190 = scalar_lea.sflag [#allocation4], %s189
        %s191 = sand.u32 %s66, 1
        %s192 = smul.addr %s191, 576
        %s193 = scalar_lea.vmem [#allocation3], %s192
        // Predicated region
        $region33: #{cnn_forward.3} parent=31 // pred_check
          %p194 = pneg %p79
        $region34: #{cnn_forward.3} parent=31 // pred_check_branch
          %196 = sbr.rel (%p194) target = $region36
        $region35: #{cnn_forward.3} parent=31 // pred_region
          %198 = dma.done %s190, 9216
        $region36: #{cnn_forward.3} parent=31 // pred_fallthru
          _
        %s199 = smul.u32 9, %s23
        %p200 = scmp.lt.s32.totalorder %s22, 0
        %s201 = scalar_select %p200, %s22, 0
        %p202 = scmp.lt.s32.totalorder %s199, 71
        %s203 = scalar_select %p202, %s199, 71
        %s204 = smul.addr %s201, 72
        %s205 = sadd.s32 %s203, %s204
        %s206 = scalar_lea.vmem %s0, %s205
        %p207 = pneg %p53
        %p208 = pneg %p50
        %s209 = sand.u32 %s66, 1
        %s210 = scalar_lea.sflag [#allocation4], %s209
        %s211 = sand.u32 %s66, 1
        %s212 = smul.addr %s211, 576
        %s213 = scalar_lea.vmem [#allocation3], %s212
        %p214 = pneg %p79
        %p215 = pneg %p76
        %p216 = pneg %p100
        %p217 = pneg %p97
        %p218 = pneg %p126
        %p219 = pneg %p123
        %s220 = smul.u32 9, %s23
        %p221 = scmp.lt.s32.totalorder %s22, 0
        %s222 = scalar_select %p221, %s22, 0
        %p223 = scmp.lt.s32.totalorder %s220, 71
        %s224 = scalar_select %p223, %s220, 71
        %s225 = smul.addr %s222, 72
        %s226 = sadd.s32 %s224, %s225
        %s227 = scalar_lea.vmem %s0, %s226
        %s228 = smul.u32 9, %s23
        %s229 = smul.u32 144, %s23
        %p230 = scmp.eq.s32.totalorder %s23, 0
        // Predicated region
        $region37: #{cnn_forward.3} parent=31 // pred_check
          %p231 = pneg %p230
        $region38: #{cnn_forward.3} parent=31 // pred_check_branch
          %233 = sbr.rel (%p231) target = $region40
        $region39: #{cnn_forward.3} parent=31 // pred_region
          %234 = vst [vmem:[#allocation2] sm:$0x3] 0.0
        $region40: #{cnn_forward.3} parent=31 // pred_fallthru
          _
        %v235 = vld [vmem:[#allocation2] sm:$0x3]
        %v236 = vld [vmem:[%s227] sm:$0xff]
        %v237 = vld [vmem:[%s227 + $0x8] sm:$0x1]
        %v238 = vld [vmem:[%s193] sm:$0xf]
        %v239 = vld [vmem:[%s193 + $0x4] sm:$0xf]
        %v240 = vld [vmem:[%s193 + $0x8] sm:$0xf]
        %v241 = vld [vmem:[%s193 + $0xc] sm:$0xf]
        %v242 = vld [vmem:[%s193 + $0x10] sm:$0xf]
        %v243 = vld [vmem:[%s193 + $0x14] sm:$0xf]
        %v244 = vld [vmem:[%s193 + $0x18] sm:$0xf]
        %v245 = vld [vmem:[%s193 + $0x1c] sm:$0xf]
        %v246 = vld [vmem:[%s193 + $0x20] sm:$0xf]
        %v247 = vld [vmem:[%s193 + $0x24] sm:$0xf]
        %v248 = vld [vmem:[%s193 + $0x28] sm:$0xf]
        %v249 = vld [vmem:[%s193 + $0x2c] sm:$0xf]
        %v250 = vld [vmem:[%s193 + $0x30] sm:$0xf]
        %v251 = vld [vmem:[%s193 + $0x34] sm:$0xf]
        %v252 = vld [vmem:[%s193 + $0x38] sm:$0xf]
        %v253 = vld [vmem:[%s193 + $0x3c] sm:$0xf]
        %v254 = vld [vmem:[%s193 + $0x40] sm:$0xf]
        %v255 = vld [vmem:[%s193 + $0x44] sm:$0xf]
        %v256 = vld [vmem:[%s193 + $0x48] sm:$0xf]
        %v257 = vld [vmem:[%s193 + $0x4c] sm:$0xf]
        %v258 = vld [vmem:[%s193 + $0x50] sm:$0xf]
        %v259 = vld [vmem:[%s193 + $0x54] sm:$0xf]
        %v260 = vld [vmem:[%s193 + $0x58] sm:$0xf]
        %v261 = vld [vmem:[%s193 + $0x5c] sm:$0xf]
        %v262 = vld [vmem:[%s193 + $0x60] sm:$0xf]
        %v263 = vld [vmem:[%s193 + $0x64] sm:$0xf]
        %v264 = vld [vmem:[%s193 + $0x68] sm:$0xf]
        %v265 = vld [vmem:[%s193 + $0x6c] sm:$0xf]
        %v266 = vld [vmem:[%s193 + $0x70] sm:$0xf]
        %v267 = vld [vmem:[%s193 + $0x74] sm:$0xf]
        %v268 = vld [vmem:[%s193 + $0x78] sm:$0xf]
        %v269 = vld [vmem:[%s193 + $0x7c] sm:$0xf]
        %v270 = vld [vmem:[%s193 + $0x80] sm:$0xf]
        %v271 = vld [vmem:[%s193 + $0x84] sm:$0xf]
        %v272 = vld [vmem:[%s193 + $0x88] sm:$0xf]
        %v273 = vld [vmem:[%s193 + $0x8c] sm:$0xf]
        %v274 = vld [vmem:[%s193 + $0x90] sm:$0xf]
        %v275 = vld [vmem:[%s193 + $0x94] sm:$0xf]
        %v276 = vld [vmem:[%s193 + $0x98] sm:$0xf]
        %v277 = vld [vmem:[%s193 + $0x9c] sm:$0xf]
        %v278 = vld [vmem:[%s193 + $0xa0] sm:$0xf]
        %v279 = vld [vmem:[%s193 + $0xa4] sm:$0xf]
        %v280 = vld [vmem:[%s193 + $0xa8] sm:$0xf]
        %v281 = vld [vmem:[%s193 + $0xac] sm:$0xf]
        %v282 = vld [vmem:[%s193 + $0xb0] sm:$0xf]
        %v283 = vld [vmem:[%s193 + $0xb4] sm:$0xf]
        %v284 = vld [vmem:[%s193 + $0xb8] sm:$0xf]
        %v285 = vld [vmem:[%s193 + $0xbc] sm:$0xf]
        %v286 = vld [vmem:[%s193 + $0xc0] sm:$0xf]
        %v287 = vld [vmem:[%s193 + $0xc4] sm:$0xf]
        %v288 = vld [vmem:[%s193 + $0xc8] sm:$0xf]
        %v289 = vld [vmem:[%s193 + $0xcc] sm:$0xf]
        %v290 = vld [vmem:[%s193 + $0xd0] sm:$0xf]
        %v291 = vld [vmem:[%s193 + $0xd4] sm:$0xf]
        %v292 = vld [vmem:[%s193 + $0xd8] sm:$0xf]
        %v293 = vld [vmem:[%s193 + $0xdc] sm:$0xf]
        %v294 = vld [vmem:[%s193 + $0xe0] sm:$0xf]
        %v295 = vld [vmem:[%s193 + $0xe4] sm:$0xf]
        %v296 = vld [vmem:[%s193 + $0xe8] sm:$0xf]
        %v297 = vld [vmem:[%s193 + $0xec] sm:$0xf]
        %v298 = vld [vmem:[%s193 + $0xf0] sm:$0xf]
        %v299 = vld [vmem:[%s193 + $0xf4] sm:$0xf]
        %v300 = vld [vmem:[%s193 + $0xf8] sm:$0xf]
        %v301 = vld [vmem:[%s193 + $0xfc] sm:$0xf]
        %v302 = vld [vmem:[%s193 + $0x100] sm:$0xf]
        %v303 = vld [vmem:[%s193 + $0x104] sm:$0xf]
        %v304 = vld [vmem:[%s193 + $0x108] sm:$0xf]
        %v305 = vld [vmem:[%s193 + $0x10c] sm:$0xf]
        %v306 = vld [vmem:[%s193 + $0x110] sm:$0xf]
        %v307 = vld [vmem:[%s193 + $0x114] sm:$0xf]
        %v308 = vld [vmem:[%s193 + $0x118] sm:$0xf]
        %v309 = vld [vmem:[%s193 + $0x11c] sm:$0xf]
        %v310 = vld [vmem:[%s193 + $0x120] sm:$0xf]
        %v311 = vld [vmem:[%s193 + $0x124] sm:$0xf]
        %v312 = vld [vmem:[%s193 + $0x128] sm:$0xf]
        %v313 = vld [vmem:[%s193 + $0x12c] sm:$0xf]
        %v314 = vld [vmem:[%s193 + $0x130] sm:$0xf]
        %v315 = vld [vmem:[%s193 + $0x134] sm:$0xf]
        %v316 = vld [vmem:[%s193 + $0x138] sm:$0xf]
        %v317 = vld [vmem:[%s193 + $0x13c] sm:$0xf]
        %v318 = vld [vmem:[%s193 + $0x140] sm:$0xf]
        %v319 = vld [vmem:[%s193 + $0x144] sm:$0xf]
        %v320 = vld [vmem:[%s193 + $0x148] sm:$0xf]
        %v321 = vld [vmem:[%s193 + $0x14c] sm:$0xf]
        %v322 = vld [vmem:[%s193 + $0x150] sm:$0xf]
        %v323 = vld [vmem:[%s193 + $0x154] sm:$0xf]
        %v324 = vld [vmem:[%s193 + $0x158] sm:$0xf]
        %v325 = vld [vmem:[%s193 + $0x15c] sm:$0xf]
        %v326 = vld [vmem:[%s193 + $0x160] sm:$0xf]
        %v327 = vld [vmem:[%s193 + $0x164] sm:$0xf]
        %v328 = vld [vmem:[%s193 + $0x168] sm:$0xf]
        %v329 = vld [vmem:[%s193 + $0x16c] sm:$0xf]
        %v330 = vld [vmem:[%s193 + $0x170] sm:$0xf]
        %v331 = vld [vmem:[%s193 + $0x174] sm:$0xf]
        %v332 = vld [vmem:[%s193 + $0x178] sm:$0xf]
        %v333 = vld [vmem:[%s193 + $0x17c] sm:$0xf]
        %v334 = vld [vmem:[%s193 + $0x180] sm:$0xf]
        %v335 = vld [vmem:[%s193 + $0x184] sm:$0xf]
        %v336 = vld [vmem:[%s193 + $0x188] sm:$0xf]
        %v337 = vld [vmem:[%s193 + $0x18c] sm:$0xf]
        %v338 = vld [vmem:[%s193 + $0x190] sm:$0xf]
        %v339 = vld [vmem:[%s193 + $0x194] sm:$0xf]
        %v340 = vld [vmem:[%s193 + $0x198] sm:$0xf]
        %v341 = vld [vmem:[%s193 + $0x19c] sm:$0xf]
        %v342 = vld [vmem:[%s193 + $0x1a0] sm:$0xf]
        %v343 = vld [vmem:[%s193 + $0x1a4] sm:$0xf]
        %v344 = vld [vmem:[%s193 + $0x1a8] sm:$0xf]
        %v345 = vld [vmem:[%s193 + $0x1ac] sm:$0xf]
        %v346 = vld [vmem:[%s193 + $0x1b0] sm:$0xf]
        %v347 = vld [vmem:[%s193 + $0x1b4] sm:$0xf]
        %v348 = vld [vmem:[%s193 + $0x1b8] sm:$0xf]
        %v349 = vld [vmem:[%s193 + $0x1bc] sm:$0xf]
        %v350 = vld [vmem:[%s193 + $0x1c0] sm:$0xf]
        %v351 = vld [vmem:[%s193 + $0x1c4] sm:$0xf]
        %v352 = vld [vmem:[%s193 + $0x1c8] sm:$0xf]
        %v353 = vld [vmem:[%s193 + $0x1cc] sm:$0xf]
        %v354 = vld [vmem:[%s193 + $0x1d0] sm:$0xf]
        %v355 = vld [vmem:[%s193 + $0x1d4] sm:$0xf]
        %v356 = vld [vmem:[%s193 + $0x1d8] sm:$0xf]
        %v357 = vld [vmem:[%s193 + $0x1dc] sm:$0xf]
        %v358 = vld [vmem:[%s193 + $0x1e0] sm:$0xf]
        %v359 = vld [vmem:[%s193 + $0x1e4] sm:$0xf]
        %v360 = vld [vmem:[%s193 + $0x1e8] sm:$0xf]
        %v361 = vld [vmem:[%s193 + $0x1ec] sm:$0xf]
        %v362 = vld [vmem:[%s193 + $0x1f0] sm:$0xf]
        %v363 = vld [vmem:[%s193 + $0x1f4] sm:$0xf]
        %v364 = vld [vmem:[%s193 + $0x1f8] sm:$0xf]
        %v365 = vld [vmem:[%s193 + $0x1fc] sm:$0xf]
        %v366 = vld [vmem:[%s193 + $0x200] sm:$0xf]
        %v367 = vld [vmem:[%s193 + $0x204] sm:$0xf]
        %v368 = vld [vmem:[%s193 + $0x208] sm:$0xf]
        %v369 = vld [vmem:[%s193 + $0x20c] sm:$0xf]
        %v370 = vld [vmem:[%s193 + $0x210] sm:$0xf]
        %v371 = vld [vmem:[%s193 + $0x214] sm:$0xf]
        %v372 = vld [vmem:[%s193 + $0x218] sm:$0xf]
        %v373 = vld [vmem:[%s193 + $0x21c] sm:$0xf]
        %v374 = vld [vmem:[%s193 + $0x220] sm:$0xf]
        %v375 = vld [vmem:[%s193 + $0x224] sm:$0xf]
        %v376 = vld [vmem:[%s193 + $0x228] sm:$0xf]
        %v377 = vld [vmem:[%s193 + $0x22c] sm:$0xf]
        %v378 = vld [vmem:[%s193 + $0x230] sm:$0xf]
        %v379 = vld [vmem:[%s193 + $0x234] sm:$0xf]
        %v380 = vld [vmem:[%s193 + $0x238] sm:$0xf]
        %v381 = vld [vmem:[%s193 + $0x23c] sm:$0xf]
        %383 = vst [vmem:[#allocation1] ss:$9 sm:$0xff] %v236
        %v384 = vld [vmem:[#allocation1] sm:$0xff]
        %v385 = vld [vmem:[#allocation1 + $0x9] sm:$0xff]
        %v386 = vld [vmem:[#allocation1 + $0x12] sm:$0xff]
        %v387 = vld [vmem:[#allocation1 + $0x1b] sm:$0xff]
        %v388 = vld [vmem:[#allocation1 + $0x24] sm:$0xff]
        %v389 = vld [vmem:[#allocation1 + $0x2d] sm:$0xff]
        %v390 = vld [vmem:[#allocation1 + $0x36] sm:$0xff]
        %v391 = vld [vmem:[#allocation1 + $0x3f] sm:$0xff]
        %393 = vst [vmem:[#allocation1] ss:$9 sm:$0xff] %v237
        %v394 = vld [vmem:[#allocation1] sm:$0xff]
        %v548 = vunpack.c.l.b16 %v238
        %v549 = vunpack.c.l.b16 %v239
        %v550 = vunpack.c.l.b16 %v240
        %v551 = vunpack.c.l.b16 %v241
        %v552 = vunpack.c.l.b16 %v242
        %v553 = vunpack.c.l.b16 %v243
        %v554 = vunpack.c.l.b16 %v244
        %v555 = vunpack.c.l.b16 %v245
        %v556 = vunpack.c.l.b16 %v246
        %v557 = vunpack.c.l.b16 %v247
        %v558 = vunpack.c.l.b16 %v248
        %v559 = vunpack.c.l.b16 %v249
        %v560 = vunpack.c.l.b16 %v250
        %v561 = vunpack.c.l.b16 %v251
        %v562 = vunpack.c.l.b16 %v252
        %v563 = vunpack.c.l.b16 %v253
        %v564 = vunpack.c.l.b16 %v254
        %v565 = vunpack.c.l.b16 %v255
        %v566 = vunpack.c.l.b16 %v256
        %v567 = vunpack.c.l.b16 %v257
        %v568 = vunpack.c.l.b16 %v258
        %v569 = vunpack.c.l.b16 %v259
        %v570 = vunpack.c.l.b16 %v260
        %v571 = vunpack.c.l.b16 %v261
        %v572 = vunpack.c.l.b16 %v262
        %v573 = vunpack.c.l.b16 %v263
        %v574 = vunpack.c.l.b16 %v264
        %v575 = vunpack.c.l.b16 %v265
        %v576 = vunpack.c.l.b16 %v266
        %v577 = vunpack.c.l.b16 %v267
        %v578 = vunpack.c.l.b16 %v268
        %v579 = vunpack.c.l.b16 %v269
        %v580 = vunpack.c.l.b16 %v270
        %v581 = vunpack.c.l.b16 %v271
        %v582 = vunpack.c.l.b16 %v272
        %v583 = vunpack.c.l.b16 %v273
        %v584 = vunpack.c.l.b16 %v274
        %v585 = vunpack.c.l.b16 %v275
        %v586 = vunpack.c.l.b16 %v276
        %v587 = vunpack.c.l.b16 %v277
        %v588 = vunpack.c.l.b16 %v278
        %v589 = vunpack.c.l.b16 %v279
        %v590 = vunpack.c.l.b16 %v280
        %v591 = vunpack.c.l.b16 %v281
        %v592 = vunpack.c.l.b16 %v282
        %v593 = vunpack.c.l.b16 %v283
        %v594 = vunpack.c.l.b16 %v284
        %v595 = vunpack.c.l.b16 %v285
        %v596 = vunpack.c.l.b16 %v286
        %v597 = vunpack.c.l.b16 %v287
        %v598 = vunpack.c.l.b16 %v288
        %v599 = vunpack.c.l.b16 %v289
        %v600 = vunpack.c.l.b16 %v290
        %v601 = vunpack.c.l.b16 %v291
        %v602 = vunpack.c.l.b16 %v292
        %v603 = vunpack.c.l.b16 %v293
        %v604 = vunpack.c.l.b16 %v294
        %v605 = vunpack.c.l.b16 %v295
        %v606 = vunpack.c.l.b16 %v296
        %v607 = vunpack.c.l.b16 %v297
        %v608 = vunpack.c.l.b16 %v298
        %v609 = vunpack.c.l.b16 %v299
        %v610 = vunpack.c.l.b16 %v300
        %v611 = vunpack.c.l.b16 %v301
        %v612 = vunpack.c.l.b16 %v302
        %v613 = vunpack.c.l.b16 %v303
        %v614 = vunpack.c.l.b16 %v304
        %v615 = vunpack.c.l.b16 %v305
        %v616 = vunpack.c.l.b16 %v306
        %v617 = vunpack.c.l.b16 %v307
        %v618 = vunpack.c.l.b16 %v308
        %v619 = vunpack.c.l.b16 %v309
        %v620 = vunpack.c.l.b16 %v310
        %v621 = vunpack.c.l.b16 %v311
        %v622 = vunpack.c.l.b16 %v312
        %v623 = vunpack.c.l.b16 %v313
        %v624 = vunpack.c.l.b16 %v314
        %v625 = vunpack.c.l.b16 %v315
        %v626 = vunpack.c.l.b16 %v316
        %v627 = vunpack.c.l.b16 %v317
        %v628 = vunpack.c.l.b16 %v318
        %v629 = vunpack.c.l.b16 %v319
        %v630 = vunpack.c.l.b16 %v320
        %v631 = vunpack.c.l.b16 %v321
        %v632 = vunpack.c.l.b16 %v322
        %v633 = vunpack.c.l.b16 %v323
        %v634 = vunpack.c.l.b16 %v324
        %v635 = vunpack.c.l.b16 %v325
        %v636 = vunpack.c.l.b16 %v326
        %v637 = vunpack.c.l.b16 %v327
        %v638 = vunpack.c.l.b16 %v328
        %v639 = vunpack.c.l.b16 %v329
        %v640 = vunpack.c.l.b16 %v330
        %v641 = vunpack.c.l.b16 %v331
        %v642 = vunpack.c.l.b16 %v332
        %v643 = vunpack.c.l.b16 %v333
        %v644 = vunpack.c.l.b16 %v334
        %v645 = vunpack.c.l.b16 %v335
        %v646 = vunpack.c.l.b16 %v336
        %v647 = vunpack.c.l.b16 %v337
        %v648 = vunpack.c.l.b16 %v338
        %v649 = vunpack.c.l.b16 %v339
        %v650 = vunpack.c.l.b16 %v340
        %v651 = vunpack.c.l.b16 %v341
        %v652 = vunpack.c.l.b16 %v342
        %v653 = vunpack.c.l.b16 %v343
        %v654 = vunpack.c.l.b16 %v344
        %v655 = vunpack.c.l.b16 %v345
        %v656 = vunpack.c.l.b16 %v346
        %v657 = vunpack.c.l.b16 %v347
        %v658 = vunpack.c.l.b16 %v348
        %v659 = vunpack.c.l.b16 %v349
        %v660 = vunpack.c.l.b16 %v350
        %v661 = vunpack.c.l.b16 %v351
        %v662 = vunpack.c.l.b16 %v352
        %v663 = vunpack.c.l.b16 %v353
        %v664 = vunpack.c.l.b16 %v354
        %v665 = vunpack.c.l.b16 %v355
        %v666 = vunpack.c.l.b16 %v356
        %v667 = vunpack.c.l.b16 %v357
        %v668 = vunpack.c.l.b16 %v358
        %v669 = vunpack.c.l.b16 %v359
        %v670 = vunpack.c.l.b16 %v360
        %v671 = vunpack.c.l.b16 %v361
        %v672 = vunpack.c.l.b16 %v362
        %v673 = vunpack.c.l.b16 %v363
        %v674 = vunpack.c.l.b16 %v364
        %v675 = vunpack.c.l.b16 %v365
        %v676 = vunpack.c.l.b16 %v366
        %v677 = vunpack.c.l.b16 %v367
        %v678 = vunpack.c.l.b16 %v368
        %v679 = vunpack.c.l.b16 %v369
        %v680 = vunpack.c.l.b16 %v370
        %v681 = vunpack.c.l.b16 %v371
        %v682 = vunpack.c.l.b16 %v372
        %v683 = vunpack.c.l.b16 %v373
        %v684 = vunpack.c.l.b16 %v374
        %v685 = vunpack.c.l.b16 %v375
        %v686 = vunpack.c.l.b16 %v376
        %v687 = vunpack.c.l.b16 %v377
        %v688 = vunpack.c.l.b16 %v378
        %v689 = vunpack.c.l.b16 %v379
        %v690 = vunpack.c.l.b16 %v380
        %v691 = vunpack.c.l.b16 %v381
        %v692 = vpack.c.b16 %v549, %v548
        %v693 = vpack.c.b16 %v551, %v550
        %v694 = vpack.c.b16 %v553, %v552
        %v695 = vpack.c.b16 %v555, %v554
        %v696 = vpack.c.b16 %v557, %v556
        %v697 = vpack.c.b16 %v559, %v558
        %v698 = vpack.c.b16 %v561, %v560
        %v699 = vpack.c.b16 %v563, %v562
        %v700 = vpack.c.b16 %v565, %v564
        %v701 = vpack.c.b16 %v567, %v566
        %v702 = vpack.c.b16 %v569, %v568
        %v703 = vpack.c.b16 %v571, %v570
        %v704 = vpack.c.b16 %v573, %v572
        %v705 = vpack.c.b16 %v575, %v574
        %v706 = vpack.c.b16 %v577, %v576
        %v707 = vpack.c.b16 %v579, %v578
        %v708 = vpack.c.b16 %v581, %v580
        %v709 = vpack.c.b16 %v583, %v582
        %v710 = vpack.c.b16 %v585, %v584
        %v711 = vpack.c.b16 %v587, %v586
        %v712 = vpack.c.b16 %v589, %v588
        %v713 = vpack.c.b16 %v591, %v590
        %v714 = vpack.c.b16 %v593, %v592
        %v715 = vpack.c.b16 %v595, %v594
        %v716 = vpack.c.b16 %v597, %v596
        %v717 = vpack.c.b16 %v599, %v598
        %v718 = vpack.c.b16 %v601, %v600
        %v719 = vpack.c.b16 %v603, %v602
        %v720 = vpack.c.b16 %v605, %v604
        %v721 = vpack.c.b16 %v607, %v606
        %v722 = vpack.c.b16 %v609, %v608
        %v723 = vpack.c.b16 %v611, %v610
        %v724 = vpack.c.b16 %v613, %v612
        %v725 = vpack.c.b16 %v615, %v614
        %v726 = vpack.c.b16 %v617, %v616
        %v727 = vpack.c.b16 %v619, %v618
        %v728 = vpack.c.b16 %v621, %v620
        %v729 = vpack.c.b16 %v623, %v622
        %v730 = vpack.c.b16 %v625, %v624
        %v731 = vpack.c.b16 %v627, %v626
        %v732 = vpack.c.b16 %v629, %v628
        %v733 = vpack.c.b16 %v631, %v630
        %v734 = vpack.c.b16 %v633, %v632
        %v735 = vpack.c.b16 %v635, %v634
        %v736 = vpack.c.b16 %v637, %v636
        %v737 = vpack.c.b16 %v639, %v638
        %v738 = vpack.c.b16 %v641, %v640
        %v739 = vpack.c.b16 %v643, %v642
        %v740 = vpack.c.b16 %v645, %v644
        %v741 = vpack.c.b16 %v647, %v646
        %v742 = vpack.c.b16 %v649, %v648
        %v743 = vpack.c.b16 %v651, %v650
        %v744 = vpack.c.b16 %v653, %v652
        %v745 = vpack.c.b16 %v655, %v654
        %v746 = vpack.c.b16 %v657, %v656
        %v747 = vpack.c.b16 %v659, %v658
        %v748 = vpack.c.b16 %v661, %v660
        %v749 = vpack.c.b16 %v663, %v662
        %v750 = vpack.c.b16 %v665, %v664
        %v751 = vpack.c.b16 %v667, %v666
        %v752 = vpack.c.b16 %v669, %v668
        %v753 = vpack.c.b16 %v671, %v670
        %v754 = vpack.c.b16 %v673, %v672
        %v755 = vpack.c.b16 %v675, %v674
        %v756 = vpack.c.b16 %v677, %v676
        %v757 = vpack.c.b16 %v679, %v678
        %v758 = vpack.c.b16 %v681, %v680
        %v759 = vpack.c.b16 %v683, %v682
        %v760 = vpack.c.b16 %v685, %v684
        %v761 = vpack.c.b16 %v687, %v686
        %v762 = vpack.c.b16 %v689, %v688
        %v763 = vpack.c.b16 %v691, %v690
        %836 = vmatpush.bf16.msra.mxu0 %v699
        %837 = vmatpush.bf16.msra.mxu0 %v698
        %838 = vmatpush.bf16.msra.mxu0 %v697
        %839 = vmatpush.bf16.msra.mxu0 %v696
        %840 = vmatpush.bf16.msra.mxu0 %v695
        %841 = vmatpush.bf16.msra.mxu0 %v694
        %842 = vmatpush.bf16.msra.mxu0 %v693
        %843 = vmatpush.bf16.msra.mxu0 %v692
        %844 = vmatmul.bf16.gmra.mxu0 %v384
        %v845 = vpop.f32.mrf.mxu0
        %v846 = vadd.f32 0.0, %v845
        %v847 = vpop.f32.mrf.mxu0
        %848 = vdwg.mxu0
        %849 = vmatpush.bf16.msra.mxu0 %v707
        %850 = vmatpush.bf16.msra.mxu0 %v706
        %851 = vmatpush.bf16.msra.mxu0 %v705
        %852 = vmatpush.bf16.msra.mxu0 %v704
        %853 = vmatpush.bf16.msra.mxu0 %v703
        %854 = vmatpush.bf16.msra.mxu0 %v702
        %855 = vmatpush.bf16.msra.mxu0 %v701
        %856 = vmatpush.bf16.msra.mxu0 %v700
        %857 = vmatmul.bf16.gmra.mxu0 %v385
        %v858 = vpop.f32.mrf.mxu0
        %v859 = vadd.f32 %v846, %v858
        %v860 = vpop.f32.mrf.mxu0
        %861 = vdwg.mxu0
        %862 = vmatpush.bf16.msra.mxu0 %v715
        %863 = vmatpush.bf16.msra.mxu0 %v714
        %864 = vmatpush.bf16.msra.mxu0 %v713
        %865 = vmatpush.bf16.msra.mxu0 %v712
        %866 = vmatpush.bf16.msra.mxu0 %v711
        %867 = vmatpush.bf16.msra.mxu0 %v710
        %868 = vmatpush.bf16.msra.mxu0 %v709
        %869 = vmatpush.bf16.msra.mxu0 %v708
        %870 = vmatmul.bf16.gmra.mxu0 %v386
        %v871 = vpop.f32.mrf.mxu0
        %v872 = vadd.f32 %v859, %v871
        %v873 = vpop.f32.mrf.mxu0
        %874 = vdwg.mxu0
        %875 = vmatpush.bf16.msra.mxu0 %v723
        %876 = vmatpush.bf16.msra.mxu0 %v722
        %877 = vmatpush.bf16.msra.mxu0 %v721
        %878 = vmatpush.bf16.msra.mxu0 %v720
        %879 = vmatpush.bf16.msra.mxu0 %v719
        %880 = vmatpush.bf16.msra.mxu0 %v718
        %881 = vmatpush.bf16.msra.mxu0 %v717
        %882 = vmatpush.bf16.msra.mxu0 %v716
        %883 = vmatmul.bf16.gmra.mxu0 %v387
        %v884 = vpop.f32.mrf.mxu0
        %v885 = vadd.f32 %v872, %v884
        %v886 = vpop.f32.mrf.mxu0
        %887 = vdwg.mxu0
        %888 = vmatpush.bf16.msra.mxu0 %v731
        %889 = vmatpush.bf16.msra.mxu0 %v730
        %890 = vmatpush.bf16.msra.mxu0 %v729
        %891 = vmatpush.bf16.msra.mxu0 %v728
        %892 = vmatpush.bf16.msra.mxu0 %v727
        %893 = vmatpush.bf16.msra.mxu0 %v726
        %894 = vmatpush.bf16.msra.mxu0 %v725
        %895 = vmatpush.bf16.msra.mxu0 %v724
        %896 = vmatmul.bf16.gmra.mxu0 %v388
        %v897 = vpop.f32.mrf.mxu0
        %v898 = vadd.f32 %v885, %v897
        %v899 = vpop.f32.mrf.mxu0
        %900 = vdwg.mxu0
        %901 = vmatpush.bf16.msra.mxu0 %v739
        %902 = vmatpush.bf16.msra.mxu0 %v738
        %903 = vmatpush.bf16.msra.mxu0 %v737
        %904 = vmatpush.bf16.msra.mxu0 %v736
        %905 = vmatpush.bf16.msra.mxu0 %v735
        %906 = vmatpush.bf16.msra.mxu0 %v734
        %907 = vmatpush.bf16.msra.mxu0 %v733
        %908 = vmatpush.bf16.msra.mxu0 %v732
        %909 = vmatmul.bf16.gmra.mxu0 %v389
        %v910 = vpop.f32.mrf.mxu0
        %v911 = vadd.f32 %v898, %v910
        %v912 = vpop.f32.mrf.mxu0
        %913 = vdwg.mxu0
        %914 = vmatpush.bf16.msra.mxu0 %v747
        %915 = vmatpush.bf16.msra.mxu0 %v746
        %916 = vmatpush.bf16.msra.mxu0 %v745
        %917 = vmatpush.bf16.msra.mxu0 %v744
        %918 = vmatpush.bf16.msra.mxu0 %v743
        %919 = vmatpush.bf16.msra.mxu0 %v742
        %920 = vmatpush.bf16.msra.mxu0 %v741
        %921 = vmatpush.bf16.msra.mxu0 %v740
        %922 = vmatmul.bf16.gmra.mxu0 %v390
        %v923 = vpop.f32.mrf.mxu0
        %v924 = vadd.f32 %v911, %v923
        %v925 = vpop.f32.mrf.mxu0
        %926 = vdwg.mxu0
        %927 = vmatpush.bf16.msra.mxu0 %v755
        %928 = vmatpush.bf16.msra.mxu0 %v754
        %929 = vmatpush.bf16.msra.mxu0 %v753
        %930 = vmatpush.bf16.msra.mxu0 %v752
        %931 = vmatpush.bf16.msra.mxu0 %v751
        %932 = vmatpush.bf16.msra.mxu0 %v750
        %933 = vmatpush.bf16.msra.mxu0 %v749
        %934 = vmatpush.bf16.msra.mxu0 %v748
        %935 = vmatmul.bf16.gmra.mxu0 %v391
        %v936 = vpop.f32.mrf.mxu0
        %v937 = vadd.f32 %v924, %v936
        %v938 = vpop.f32.mrf.mxu0
        %939 = vdwg.mxu0
        %940 = vmatpush.bf16.msra.mxu0 %v763
        %941 = vmatpush.bf16.msra.mxu0 %v762
        %942 = vmatpush.bf16.msra.mxu0 %v761
        %943 = vmatpush.bf16.msra.mxu0 %v760
        %944 = vmatpush.bf16.msra.mxu0 %v759
        %945 = vmatpush.bf16.msra.mxu0 %v758
        %946 = vmatpush.bf16.msra.mxu0 %v757
        %947 = vmatpush.bf16.msra.mxu0 %v756
        %948 = vmatmul.bf16.gmra.mxu0 %v394
        %v949 = vpop.f32.mrf.mxu0
        %v950 = vadd.f32 %v937, %v949
        %v951 = vpop.f32.mrf.mxu0
        %952 = vdwg.mxu0
        %v953 = vadd.f32 %v235, %v950
        %954 = vst [vmem:[#allocation2] sm:$0x3] %v953
        %p955 = scmp.eq.s32.totalorder %s23, 7
        // Predicated region
        $region41: #{cnn_forward.3} parent=31 // pred_check
          %p956 = pneg %p955
        $region42: #{cnn_forward.3} parent=31 // pred_check_branch
          %958 = sbr.rel (%p956) target = $region44
        $region43: #{cnn_forward.3} parent=31 // pred_region
          %v959 = vld [vmem:[#allocation2] sm:$0x3]
          %v960 = vmax.f32 %v959, 0.0
          %v961 = vld [vmem:[%s2] sm:$0xff]
          %v962 = vld [vmem:[%s2 + $0x8] sm:$0xff]
          %v963 = vld [vmem:[%s2 + $0x10] sm:$0xff]
          %v964 = vld [vmem:[%s2 + $0x18] sm:$0xff]
          %v965 = vld [vmem:[%s2 + $0x20] sm:$0xff]
          %v966 = vld [vmem:[%s2 + $0x28] sm:$0xff]
          %v967 = vld [vmem:[%s2 + $0x30] sm:$0xff]
          %v968 = vld [vmem:[%s2 + $0x38] sm:$0xff]
          %v969 = vld [vmem:[%s2 + $0x40] sm:$0xff]
          %v970 = vld [vmem:[%s2 + $0x48] sm:$0xff]
          %v971 = vld [vmem:[%s2 + $0x50] sm:$0xff]
          %v972 = vld [vmem:[%s2 + $0x58] sm:$0xff]
          %v973 = vld [vmem:[%s2 + $0x60] sm:$0xff]
          %v974 = vld [vmem:[%s2 + $0x68] sm:$0xff]
          %v975 = vld [vmem:[%s2 + $0x70] sm:$0xff]
          %v976 = vld [vmem:[%s2 + $0x78] sm:$0xff]
          %977 = vmatpush.msra.mxu0 %v976
          %978 = vmatpush.msra.mxu0 %v975
          %979 = vmatpush.msra.mxu0 %v974
          %980 = vmatpush.msra.mxu0 %v973
          %981 = vmatpush.msra.mxu0 %v972
          %982 = vmatpush.msra.mxu0 %v971
          %983 = vmatpush.msra.mxu0 %v970
          %984 = vmatpush.msra.mxu0 %v969
          %985 = vmatpush.msra.mxu0 %v968
          %986 = vmatpush.msra.mxu0 %v967
          %987 = vmatpush.msra.mxu0 %v966
          %988 = vmatpush.msra.mxu0 %v965
          %989 = vmatpush.msra.mxu0 %v964
          %990 = vmatpush.msra.mxu0 %v963
          %991 = vmatpush.msra.mxu0 %v962
          %992 = vmatpush.msra.mxu0 %v961
          %993 = vmatmul.f32.gmra.mxu0 %v960
          %v994 = vpop.f32.mrf.mxu0
          %v995 = vadd.f32 0.0, %v994
          %996 = vdwg.mxu0
          %vm997 = vcmask 74752
          %v998 = vsel %vm997, %v995, -inf
          %999 = vmax.xlane.f32.xlu0 %v998
          %v1000 = vpop.xlane.xlu0 %999
          %v1001 = vsub.f32 %v995, %v1000
          %v1002 = vmul.f32 %v1001, 1.442695
          %v1003 = vpow.pop %v1002
          %v1004 = vsel %vm997, %v1003, 0.0
          %1005 = vadd.xlane.f32.xlu0 %v1004
          %v1006 = vpop.xlane.xlu0 %1005
          %v1007 = vlog2.pop %v1006
          %v1008 = vmul.f32 %v1007, 0.6931472
          %v1009 = vsub.f32 %v1001, %v1008
          %1010 = vst.msk [vmem:[#allocation6] sm:$0x3] %vm997, %v1009
        $region44: #{cnn_forward.3} parent=31 // pred_fallthru
          _
        // Predicated region
        $region45: #{cnn_forward.3} parent=31 // pred_check
          %p1011 = pneg %p123
        $region46: #{cnn_forward.3} parent=31 // pred_check_branch
          %1013 = sbr.rel (%p1011) target = $region48
        $region47: #{cnn_forward.3} parent=31 // pred_region
          %1015 = vsyncadd [#allocation5], 0
          %s1016 = smul.addr %s22, 2
          %s1017 = scalar_lea.hbm %s3, %s1016
          %s1019 = sshll.u32 [#allocation6], 4
          %s1020 = int_to_ptr.vmem [resolvable:$true] %s1019
          %s1021 = sshll.u32 %s1017, 4
          %s1022 = int_to_ptr.hbm [resolvable:$true] %s1021
          %1024 = dma.vmem_to_hbm [thread:$0]  %s1020, 32, %s1022, [#allocation5]
        $region48: #{cnn_forward.3} parent=31 // pred_fallthru
          _
        // Predicated region
        $region49: #{cnn_forward.3} parent=31 // pred_check
          %p1025 = pneg %p123
        $region50: #{cnn_forward.3} parent=31 // pred_check_branch
          %1027 = sbr.rel (%p1025) target = $region52
        $region51: #{cnn_forward.3} parent=31 // pred_region
          %1029 = dma.done [#allocation5], 32
        $region52: #{cnn_forward.3} parent=31 // pred_fallthru
          _
      $region32: #{cnn_forward.3} parent=5 // pred_fallthru
        _
      %p1030 = scmp.le.s32.totalorder 2, %s13
      // Predicated region
      $region53: #{cnn_forward.3} parent=5 // pred_check
        %p1031 = pneg %p1030
      $region54: #{cnn_forward.3} parent=5 // pred_check_branch
        %1033 = sbr.rel (%p1031) target = $region56
      $region55: #{cnn_forward.3} parent=5 // pred_region
        %s1034 = ssub.s32 %s13, 2
      $region56: #{cnn_forward.3} parent=5 // pred_fallthru
        _
    $region6: #{cnn_forward.3} parent=1 // loop_footer
      %s17 = sadd.s32 1, %s13
    $region7: #{cnn_forward.3} parent=1 // loop_footer_branch
      %12 = sbr.rel target = $region3
    $region8: #{cnn_forward.3} parent=1 // loop_exit
      _
    %1035 = vsyncpa [#allocation4], 1
    %s1036 = scalar_lea.sflag [#allocation4], 1
    %1037 = vsyncpa %s1036, 1
    %1038 = vsyncpa [#allocation5], 1
    %s1039 = scalar_lea.sflag [#allocation5], 1
    %1040 = vsyncpa %s1039, 1

// kernel: cnn_forward.2
$region0: #{cnn_forward.2}
  #allocation0 [shape = 'u32[]', space=smem, size = 0x4, offset = 0x4, fixed_abs, tag = 'smem constant byte address 0x4 - core index']
  #allocation1 [shape = 'u32[72,128]{1,0:T(1,128)}', space=vmem, size = 0x9000, scoped, tag = 'internal scratch']
  %s0 = inlined_call_operand.vmem [shape: f32[2,28,28,1], index: 0, kind: input, shape index: {}]
  %s1 = inlined_call_operand.hbm [shape: f32[9,1,32], index: 1, kind: input, shape index: {}]
  %s2 = inlined_call_operand.hbm [shape: f32[1,32], index: 2, kind: input, shape index: {}]
  %s3 = inlined_call_operand.hbm [shape: bf16[9,32,64], index: 3, kind: input, shape index: {}]
  %s4 = inlined_call_operand.hbm [shape: f32[1,64], index: 4, kind: input, shape index: {}]
  %s5 = inlined_call_operand.vmem [shape: bf16[2,12,12,64], index: 5, kind: output, shape index: {}]
  %s6 = sld [smem:[#allocation0]]
  $region69: #{cnn_forward.2} parent=0
    _
  %s8 = ssub.s32 1, %s6
  %s9 = scalar_select 0, %s8, %s6
  $region1: #{cnn_forward.2} parent=0
    #allocation2 [shape = 'u8[4608]{0}', space=vmem, size = 0x1400, scoped, tag = 'input window, operand 1, single buffered']
    #allocation3 [shape = 's32[2]{0}', space=sflag, size = 0x8, scoped, tag = 'scoped memory for cnn_forward.2']
    #allocation4 [shape = 'u8[512]{0}', space=vmem, size = 0x400, scoped, tag = 'input window, operand 2, single buffered']
    #allocation5 [shape = 's32[1]{0}', space=sflag, size = 0x4, scoped, tag = 'scoped memory for cnn_forward.2']
    #allocation6 [shape = 'u8[73728]{0}', space=vmem, size = 0x12000, scoped, tag = 'input window, operand 3, single buffered']
    #allocation7 [shape = 'u8[512]{0}', space=vmem, size = 0x400, scoped, tag = 'input window, operand 4, single buffered']
    #allocation8 [shape = 's32[1]{0}', space=sflag, size = 0x4, scoped, tag = 'scoped memory for cnn_forward.2']
    %10 = vsyncpa [#allocation3], 0
    %11 = vsyncpa [#allocation5], 0
    %12 = vsyncpa [#allocation8], 0
    loop: start=0, step=1, limit=4
    $region2: #{cnn_forward.2} parent=1 // loop_pre_header
      _
    $region3: #{cnn_forward.2} parent=1 // loop_header
      %s14 = sphi 0, %s18
      %p15 = scmp.ge.s32.totalorder %s14, 4
      %s24 = sphi 0, %s26
      %s27 = sphi 0, %s24
      %s28 = sphi 0, %s27
      %s44 = sphi 0, %s28
      %s48 = sphi 0, %s48
      %s50 = sphi 0, %s48
      %s51 = sphi 0, %s50
      %s65 = sphi 0, %s51
      %s69 = sphi 0, %s69
      %s71 = sphi 0, %s69
      %s72 = sphi 0, %s71
      %s86 = sphi 0, %s72
      %s90 = sphi 0, %s90
      %s92 = sphi 0, %s90
      %s93 = sphi 0, %s92
      %s107 = sphi 0, %s93
      %s111 = sphi 0, %s111
      %s113 = sphi 0, %s111
      %s114 = sphi 0, %s113
      %s128 = sphi 0, %s114
      %s134 = sphi 0, %s136
      %s137 = sphi 0, %s134
      %s138 = sphi 0, %s137
      %s154 = sphi 0, %s138
    $region4: #{cnn_forward.2} parent=1 // loop_header_branch
      %17 = sbr.rel (%p15) target = $region8
    $region5: #{cnn_forward.2} parent=1 // loop_body
      %s19 = ssub.s32 %s14, 1
      %s20 = ssub.s32 %s14, 2
      %s21 = sadd.s32 %s14, 1
      %s22 = ssub.s32 %s14, %s21
      %p23 = scmp.eq.s32.totalorder %s22, 0
      %s25 = sadd.s32 %s24, 1
      %s26 = scalar_select %p23, %s24, %s25
      %p29 = pneg %p23
      %p30 = scmp.eq.s32.totalorder %s14, 1
      %p31 = por %p29, %p30
      %p32 = scmp.ne.s32.totalorder %s24, %s27
      %p33 = scmp.eq.s32.totalorder %s14, 0
      %p34 = por %p32, %p33
      %p35 = scmp.ne.s32.totalorder %s24, %s27
      %p36 = scmp.eq.s32.totalorder %s19, 1
      %p37 = por %p35, %p36
      %p38 = scmp.ne.s32.totalorder %s27, %s28
      %p39 = scmp.eq.s32.totalorder %s19, 0
      %p40 = por %p38, %p39
      %p41 = scmp.ne.s32.totalorder %s27, %s28
      %p42 = scmp.eq.s32.totalorder %s20, 1
      %p43 = por %p41, %p42
      %p45 = scmp.ne.s32.totalorder %s28, %s44
      %p46 = scmp.eq.s32.totalorder %s20, 0
      %p47 = por %p45, %p46
      %s49 = sadd.s32 %s48, 1
      %p52 = scmp.eq.s32.totalorder %s14, 1
      %p53 = scmp.ne.s32.totalorder %s48, %s50
      %p54 = scmp.eq.s32.totalorder %s14, 0
      %p55 = por %p53, %p54
      %p56 = scmp.ne.s32.totalorder %s48, %s50
      %p57 = scmp.eq.s32.totalorder %s19, 1
      %p58 = por %p56, %p57
      %p59 = scmp.ne.s32.totalorder %s50, %s51
      %p60 = scmp.eq.s32.totalorder %s19, 0
      %p61 = por %p59, %p60
      %p62 = scmp.ne.s32.totalorder %s50, %s51
      %p63 = scmp.eq.s32.totalorder %s20, 1
      %p64 = por %p62, %p63
      %p66 = scmp.ne.s32.totalorder %s51, %s65
      %p67 = scmp.eq.s32.totalorder %s20, 0
      %p68 = por %p66, %p67
      %s70 = sadd.s32 %s69, 1
      %p73 = scmp.eq.s32.totalorder %s14, 1
      %p74 = scmp.ne.s32.totalorder %s69, %s71
      %p75 = scmp.eq.s32.totalorder %s14, 0
      %p76 = por %p74, %p75
      %p77 = scmp.ne.s32.totalorder %s69, %s71
      %p78 = scmp.eq.s32.totalorder %s19, 1
      %p79 = por %p77, %p78
      %p80 = scmp.ne.s32.totalorder %s71, %s72
      %p81 = scmp.eq.s32.totalorder %s19, 0
      %p82 = por %p80, %p81
      %p83 = scmp.ne.s32.totalorder %s71, %s72
      %p84 = scmp.eq.s32.totalorder %s20, 1
      %p85 = por %p83, %p84
      %p87 = scmp.ne.s32.totalorder %s72, %s86
      %p88 = scmp.eq.s32.totalorder %s20, 0
      %p89 = por %p87, %p88
      %s91 = sadd.s32 %s90, 1
      %p94 = scmp.eq.s32.totalorder %s14, 1
      %p95 = scmp.ne.s32.totalorder %s90, %s92
      %p96 = scmp.eq.s32.totalorder %s14, 0
      %p97 = por %p95, %p96
      %p98 = scmp.ne.s32.totalorder %s90, %s92
      %p99 = scmp.eq.s32.totalorder %s19, 1
      %p100 = por %p98, %p99
      %p101 = scmp.ne.s32.totalorder %s92, %s93
      %p102 = scmp.eq.s32.totalorder %s19, 0
      %p103 = por %p101, %p102
      %p104 = scmp.ne.s32.totalorder %s92, %s93
      %p105 = scmp.eq.s32.totalorder %s20, 1
      %p106 = por %p104, %p105
      %p108 = scmp.ne.s32.totalorder %s93, %s107
      %p109 = scmp.eq.s32.totalorder %s20, 0
      %p110 = por %p108, %p109
      %s112 = sadd.s32 %s111, 1
      %p115 = scmp.eq.s32.totalorder %s14, 1
      %p116 = scmp.ne.s32.totalorder %s111, %s113
      %p117 = scmp.eq.s32.totalorder %s14, 0
      %p118 = por %p116, %p117
      %p119 = scmp.ne.s32.totalorder %s111, %s113
      %p120 = scmp.eq.s32.totalorder %s19, 1
      %p121 = por %p119, %p120
      %p122 = scmp.ne.s32.totalorder %s113, %s114
      %p123 = scmp.eq.s32.totalorder %s19, 0
      %p124 = por %p122, %p123
      %p125 = scmp.ne.s32.totalorder %s113, %s114
      %p126 = scmp.eq.s32.totalorder %s20, 1
      %p127 = por %p125, %p126
      %p129 = scmp.ne.s32.totalorder %s114, %s128
      %p130 = scmp.eq.s32.totalorder %s20, 0
      %p131 = por %p129, %p130
      %s132 = ssub.s32 %s14, %s21
      %p133 = scmp.eq.s32.totalorder %s132, 0
      %s135 = sadd.s32 %s134, 1
      %s136 = scalar_select %p133, %s134, %s135
      %p139 = pneg %p133
      %p140 = scmp.eq.s32.totalorder %s14, 1
      %p141 = por %p139, %p140
      %p142 = scmp.ne.s32.totalorder %s134, %s137
      %p143 = scmp.eq.s32.totalorder %s14, 0
      %p144 = por %p142, %p143
      %p145 = scmp.ne.s32.totalorder %s134, %s137
      %p146 = scmp.eq.s32.totalorder %s19, 1
      %p147 = por %p145, %p146
      %p148 = scmp.ne.s32.totalorder %s137, %s138
      %p149 = scmp.eq.s32.totalorder %s19, 0
      %p150 = por %p148, %p149
      %p151 = scmp.ne.s32.totalorder %s137, %s138
      %p152 = scmp.eq.s32.totalorder %s20, 1
      %p153 = por %p151, %p152
      %p155 = scmp.ne.s32.totalorder %s138, %s154
      %p156 = scmp.eq.s32.totalorder %s20, 0
      %p157 = por %p155, %p156
      %p158 = scmp.le.s32.totalorder 1, %s14
      %p159 = scmp.lt.s32.totalorder %s14, 3
      %p160 = pnand %p158, %p159
      %p161 = pneg %p160
      // Predicated region
      $region9: #{cnn_forward.2} parent=5 // pred_check
        _
      $region10: #{cnn_forward.2} parent=5 // pred_check_branch
        %163 = sbr.rel (%p160) target = $region12
      $region11: #{cnn_forward.2} parent=5 // pred_region
        %s164 = ssub.s32 %s14, 1
        // Predicated region
        $region13: #{cnn_forward.2} parent=11 // pred_check
          %p165 = pneg %p61
        $region14: #{cnn_forward.2} parent=11 // pred_check_branch
          %167 = sbr.rel (%p165) target = $region16
        $region15: #{cnn_forward.2} parent=11 // pred_region
          %169 = vsyncadd [#allocation3], 0
          %s170 = sshll.u32 %s1, 4
          %s171 = int_to_ptr.hbm [resolvable:$true] %s170
          %s172 = sshll.u32 [#allocation2], 4
          %s173 = int_to_ptr.vmem [resolvable:$true] %s172
          %178 = dma.hbm_to_vmem [thread:$0]  %s171, 144, %s173, [#allocation3], 16, 16, 1
        $region16: #{cnn_forward.2} parent=11 // pred_fallthru
          _
        // Predicated region
        $region17: #{cnn_forward.2} parent=11 // pred_check
          %p179 = pneg %p82
        $region18: #{cnn_forward.2} parent=11 // pred_check_branch
          %181 = sbr.rel (%p179) target = $region20
        $region19: #{cnn_forward.2} parent=11 // pred_region
          %183 = vsyncadd [#allocation5], 0
          %s185 = sshll.u32 %s2, 4
          %s186 = int_to_ptr.hbm [resolvable:$true] %s185
          %s187 = sshll.u32 [#allocation4], 4
          %s188 = int_to_ptr.vmem [resolvable:$true] %s187
          %190 = dma.hbm_to_vmem [thread:$0]  %s186, 16, %s188, [#allocation5]
        $region20: #{cnn_forward.2} parent=11 // pred_fallthru
          _
        // Predicated region
        $region21: #{cnn_forward.2} parent=11 // pred_check
          %p191 = pneg %p103
        $region22: #{cnn_forward.2} parent=11 // pred_check_branch
          %193 = sbr.rel (%p191) target = $region24
        $region23: #{cnn_forward.2} parent=11 // pred_region
          %195 = vsyncadd [#allocation5], 0
          %s196 = sshll.u32 %s3, 4
          %s197 = int_to_ptr.hbm [resolvable:$true] %s196
          %s198 = sshll.u32 [#allocation6], 4
          %s199 = int_to_ptr.vmem [resolvable:$true] %s198
          %204 = dma.hbm_to_vmem [thread:$0]  %s197, 2304, %s199, [#allocation5], 64, 64, 4
        $region24: #{cnn_forward.2} parent=11 // pred_fallthru
          _
        // Predicated region
        $region25: #{cnn_forward.2} parent=11 // pred_check
          %p205 = pneg %p124
        $region26: #{cnn_forward.2} parent=11 // pred_check_branch
          %207 = sbr.rel (%p205) target = $region28
        $region27: #{cnn_forward.2} parent=11 // pred_region
          %209 = vsyncadd [#allocation8], 0
          %s211 = sshll.u32 %s4, 4
          %s212 = int_to_ptr.hbm [resolvable:$true] %s211
          %s213 = sshll.u32 [#allocation7], 4
          %s214 = int_to_ptr.vmem [resolvable:$true] %s213
          %216 = dma.hbm_to_vmem [thread:$0]  %s212, 16, %s214, [#allocation8]
        $region28: #{cnn_forward.2} parent=11 // pred_fallthru
          _
      $region12: #{cnn_forward.2} parent=5 // pred_fallthru
        _
      %p217 = scmp.lt.s32.totalorder %s14, 2
      // Predicated region
      $region29: #{cnn_forward.2} parent=5 // pred_check
        %p218 = pneg %p217
      $region30: #{cnn_forward.2} parent=5 // pred_check_branch
        %220 = sbr.rel (%p218) target = $region32
      $region31: #{cnn_forward.2} parent=5 // pred_region
        // Predicated region
        $region33: #{cnn_forward.2} parent=31 // pred_check
          %p221 = pneg %p34
        $region34: #{cnn_forward.2} parent=31 // pred_check_branch
          %223 = sbr.rel (%p221) target = $region36
        $region35: #{cnn_forward.2} parent=31 // pred_region
          %p224 = scmp.lt.s32.totalorder %s14, 1
          %s225 = scalar_select %p224, %s14, 1
          %s226 = smul.addr %s225, 112
          %s227 = smul.addr %s226, 8
          %s228 = scalar_lea.vmem %s0, %s227
        $region36: #{cnn_forward.2} parent=31 // pred_fallthru
          _
      $region32: #{cnn_forward.2} parent=5 // pred_fallthru
        _
      %p229 = scmp.le.s32.totalorder 1, %s14
      %p230 = scmp.lt.s32.totalorder %s14, 3
      %p231 = pnand %p229, %p230
      %p232 = pneg %p231
      // Predicated region
      $region37: #{cnn_forward.2} parent=5 // pred_check
        _
      $region38: #{cnn_forward.2} parent=5 // pred_check_branch
        %234 = sbr.rel (%p231) target = $region40
      $region39: #{cnn_forward.2} parent=5 // pred_region
        %s235 = ssub.s32 %s14, 1
        // Predicated region
        $region41: #{cnn_forward.2} parent=39 // pred_check
          %p236 = pneg %p61
        $region42: #{cnn_forward.2} parent=39 // pred_check_branch
          %238 = sbr.rel (%p236) target = $region44
        $region43: #{cnn_forward.2} parent=39 // pred_region
          %240 = dma.done [#allocation3], 144
        $region44: #{cnn_forward.2} parent=39 // pred_fallthru
          _
        // Predicated region
        $region45: #{cnn_forward.2} parent=39 // pred_check
          %p241 = pneg %p82
        $region46: #{cnn_forward.2} parent=39 // pred_check_branch
          %243 = sbr.rel (%p241) target = $region48
        $region47: #{cnn_forward.2} parent=39 // pred_region
          %245 = dma.done [#allocation5], 16
        $region48: #{cnn_forward.2} parent=39 // pred_fallthru
          _
        // Predicated region
        $region49: #{cnn_forward.2} parent=39 // pred_check
          %p246 = pneg %p103
        $region50: #{cnn_forward.2} parent=39 // pred_check_branch
          %248 = sbr.rel (%p246) target = $region52
        $region51: #{cnn_forward.2} parent=39 // pred_region
          %250 = dma.done [#allocation5], 2304
        $region52: #{cnn_forward.2} parent=39 // pred_fallthru
          _
        // Predicated region
        $region53: #{cnn_forward.2} parent=39 // pred_check
          %p251 = pneg %p124
        $region54: #{cnn_forward.2} parent=39 // pred_check_branch
          %253 = sbr.rel (%p251) target = $region56
        $region55: #{cnn_forward.2} parent=39 // pred_region
          %255 = dma.done [#allocation8], 16
        $region56: #{cnn_forward.2} parent=39 // pred_fallthru
          _
        %p256 = scmp.lt.s32.totalorder %s19, 1
        %s257 = scalar_select %p256, %s19, 1
        %s258 = smul.addr %s257, 112
        %s259 = smul.addr %s258, 8
        %s260 = scalar_lea.vmem %s0, %s259
        %p261 = pneg %p40
        %p262 = pneg %p37
        %p263 = pneg %p61
        %p264 = pneg %p58
        %p265 = pneg %p82
        %p266 = pneg %p79
        %p267 = pneg %p103
        %p268 = pneg %p100
        %p269 = pneg %p124
        %p270 = pneg %p121
        %p271 = pneg %p150
        %p272 = pneg %p147
        %p273 = scmp.lt.s32.totalorder %s19, 1
        %s274 = scalar_select %p273, %s19, 1
        %s275 = smul.addr %s274, 24
        %s276 = smul.addr %s275, 4
        %s277 = scalar_lea.vmem %s5, %s276
        %p278 = scmp.lt.s32.totalorder %s19, 1
        %s279 = scalar_select %p278, %s19, 1
        %s280 = smul.addr %s279, 112
        %s281 = smul.addr %s280, 8
        %s282 = scalar_lea.vmem %s0, %s281
        %p283 = scmp.lt.s32.totalorder %s19, 1
        %s284 = scalar_select %p283, %s19, 1
        %s285 = smul.addr %s284, 24
        %s286 = smul.addr %s285, 4
        %s287 = scalar_lea.vmem %s5, %s286
        %v289 = vld [vmem:[%s282] sm:$0xff]
        %v290 = vld [vmem:[%s282 + $0x8] sm:$0xff]
        %v291 = vld [vmem:[%s282 + $0x10] sm:$0xff]
        %v292 = vld [vmem:[%s282 + $0x18] sm:$0xf]
        %v293 = vld [vmem:[%s282 + $0x20] sm:$0xff]
        %v294 = vld [vmem:[%s282 + $0x28] sm:$0xff]
        %v295 = vld [vmem:[%s282 + $0x30] sm:$0xff]
        %v296 = vld [vmem:[%s282 + $0x38] sm:$0xf]
        %v297 = vld [vmem:[%s282 + $0x40] sm:$0xff]
        %v298 = vld [vmem:[%s282 + $0x48] sm:$0xff]
        %v299 = vld [vmem:[%s282 + $0x50] sm:$0xff]
        %v300 = vld [vmem:[%s282 + $0x58] sm:$0xf]
        %v301 = vld [vmem:[%s282 + $0x60] sm:$0xff]
        %v302 = vld [vmem:[%s282 + $0x68] sm:$0xff]
        %v303 = vld [vmem:[%s282 + $0x70] sm:$0xff]
        %v304 = vld [vmem:[%s282 + $0x78] sm:$0xf]
        %v305 = vld [vmem:[%s282 + $0x80] sm:$0xff]
        %v306 = vld [vmem:[%s282 + $0x88] sm:$0xff]
        %v307 = vld [vmem:[%s282 + $0x90] sm:$0xff]
        %v308 = vld [vmem:[%s282 + $0x98] sm:$0xf]
        %v309 = vld [vmem:[%s282 + $0xa0] sm:$0xff]
        %v310 = vld [vmem:[%s282 + $0xa8] sm:$0xff]
        %v311 = vld [vmem:[%s282 + $0xb0] sm:$0xff]
        %v312 = vld [vmem:[%s282 + $0xb8] sm:$0xf]
        %v313 = vld [vmem:[%s282 + $0xc0] sm:$0xff]
        %v314 = vld [vmem:[%s282 + $0xc8] sm:$0xff]
        %v315 = vld [vmem:[%s282 + $0xd0] sm:$0xff]
        %v316 = vld [vmem:[%s282 + $0xd8] sm:$0xf]
        %v317 = vld [vmem:[%s282 + $0xe0] sm:$0xff]
        %v318 = vld [vmem:[%s282 + $0xe8] sm:$0xff]
        %v319 = vld [vmem:[%s282 + $0xf0] sm:$0xff]
        %v320 = vld [vmem:[%s282 + $0xf8] sm:$0xf]
        %v321 = vld [vmem:[%s282 + $0x100] sm:$0xff]
        %v322 = vld [vmem:[%s282 + $0x108] sm:$0xff]
        %v323 = vld [vmem:[%s282 + $0x110] sm:$0xff]
        %v324 = vld [vmem:[%s282 + $0x118] sm:$0xf]
        %v325 = vld [vmem:[%s282 + $0x120] sm:$0xff]
        %v326 = vld [vmem:[%s282 + $0x128] sm:$0xff]
        %v327 = vld [vmem:[%s282 + $0x130] sm:$0xff]
        %v328 = vld [vmem:[%s282 + $0x138] sm:$0xf]
        %v329 = vld [vmem:[%s282 + $0x140] sm:$0xff]
        %v330 = vld [vmem:[%s282 + $0x148] sm:$0xff]
        %v331 = vld [vmem:[%s282 + $0x150] sm:$0xff]
        %v332 = vld [vmem:[%s282 + $0x158] sm:$0xf]
        %v333 = vld [vmem:[%s282 + $0x160] sm:$0xff]
        %v334 = vld [vmem:[%s282 + $0x168] sm:$0xff]
        %v335 = vld [vmem:[%s282 + $0x170] sm:$0xff]
        %v336 = vld [vmem:[%s282 + $0x178] sm:$0xf]
        %v337 = vld [vmem:[%s282 + $0x180] sm:$0xff]
        %v338 = vld [vmem:[%s282 + $0x188] sm:$0xff]
        %v339 = vld [vmem:[%s282 + $0x190] sm:$0xff]
        %v340 = vld [vmem:[%s282 + $0x198] sm:$0xf]
        %v341 = vld [vmem:[%s282 + $0x1a0] sm:$0xff]
        %v342 = vld [vmem:[%s282 + $0x1a8] sm:$0xff]
        %v343 = vld [vmem:[%s282 + $0x1b0] sm:$0xff]
        %v344 = vld [vmem:[%s282 + $0x1b8] sm:$0xf]
        %v345 = vld [vmem:[%s282 + $0x1c0] sm:$0xff]
        %v346 = vld [vmem:[%s282 + $0x1c8] sm:$0xff]
        %v347 = vld [vmem:[%s282 + $0x1d0] sm:$0xff]
        %v348 = vld [vmem:[%s282 + $0x1d8] sm:$0xf]
        %v349 = vld [vmem:[%s282 + $0x1e0] sm:$0xff]
        %v350 = vld [vmem:[%s282 + $0x1e8] sm:$0xff]
        %v351 = vld [vmem:[%s282 + $0x1f0] sm:$0xff]
        %v352 = vld [vmem:[%s282 + $0x1f8] sm:$0xf]
        %v353 = vld [vmem:[%s282 + $0x200] sm:$0xff]
        %v354 = vld [vmem:[%s282 + $0x208] sm:$0xff]
        %v355 = vld [vmem:[%s282 + $0x210] sm:$0xff]
        %v356 = vld [vmem:[%s282 + $0x218] sm:$0xf]
        %v357 = vld [vmem:[%s282 + $0x220] sm:$0xff]
        %v358 = vld [vmem:[%s282 + $0x228] sm:$0xff]
        %v359 = vld [vmem:[%s282 + $0x230] sm:$0xff]
        %v360 = vld [vmem:[%s282 + $0x238] sm:$0xf]
        %v361 = vld [vmem:[%s282 + $0x240] sm:$0xff]
        %v362 = vld [vmem:[%s282 + $0x248] sm:$0xff]
        %v363 = vld [vmem:[%s282 + $0x250] sm:$0xff]
        %v364 = vld [vmem:[%s282 + $0x258] sm:$0xf]
        %v365 = vld [vmem:[%s282 + $0x260] sm:$0xff]
        %v366 = vld [vmem:[%s282 + $0x268] sm:$0xff]
        %v367 = vld [vmem:[%s282 + $0x270] sm:$0xff]
        %v368 = vld [vmem:[%s282 + $0x278] sm:$0xf]
        %v369 = vld [vmem:[%s282 + $0x280] sm:$0xff]
        %v370 = vld [vmem:[%s282 + $0x288] sm:$0xff]
        %v371 = vld [vmem:[%s282 + $0x290] sm:$0xff]
        %v372 = vld [vmem:[%s282 + $0x298] sm:$0xf]
        %v373 = vld [vmem:[%s282 + $0x2a0] sm:$0xff]
        %v374 = vld [vmem:[%s282 + $0x2a8] sm:$0xff]
        %v375 = vld [vmem:[%s282 + $0x2b0] sm:$0xff]
        %v376 = vld [vmem:[%s282 + $0x2b8] sm:$0xf]
        %v377 = vld [vmem:[%s282 + $0x2c0] sm:$0xff]
        %v378 = vld [vmem:[%s282 + $0x2c8] sm:$0xff]
        %v379 = vld [vmem:[%s282 + $0x2d0] sm:$0xff]
        %v380 = vld [vmem:[%s282 + $0x2d8] sm:$0xf]
        %v381 = vld [vmem:[%s282 + $0x2e0] sm:$0xff]
        %v382 = vld [vmem:[%s282 + $0x2e8] sm:$0xff]
        %v383 = vld [vmem:[%s282 + $0x2f0] sm:$0xff]
        %v384 = vld [vmem:[%s282 + $0x2f8] sm:$0xf]
        %v385 = vld [vmem:[%s282 + $0x300] sm:$0xff]
        %v386 = vld [vmem:[%s282 + $0x308] sm:$0xff]
        %v387 = vld [vmem:[%s282 + $0x310] sm:$0xff]
        %v388 = vld [vmem:[%s282 + $0x318] sm:$0xf]
        %v389 = vld [vmem:[%s282 + $0x320] sm:$0xff]
        %v390 = vld [vmem:[%s282 + $0x328] sm:$0xff]
        %v391 = vld [vmem:[%s282 + $0x330] sm:$0xff]
        %v392 = vld [vmem:[%s282 + $0x338] sm:$0xf]
        %v393 = vld [vmem:[%s282 + $0x340] sm:$0xff]
        %v394 = vld [vmem:[%s282 + $0x348] sm:$0xff]
        %v395 = vld [vmem:[%s282 + $0x350] sm:$0xff]
        %v396 = vld [vmem:[%s282 + $0x358] sm:$0xf]
        %v397 = vld [vmem:[%s282 + $0x360] sm:$0xff]
        %v398 = vld [vmem:[%s282 + $0x368] sm:$0xff]
        %v399 = vld [vmem:[%s282 + $0x370] sm:$0xff]
        %v400 = vld [vmem:[%s282 + $0x378] sm:$0xf]
        %v401 = vld [vmem:[#allocation2] sm:$0x1]
        %403 = vset.pattern.permute.xlu0 0
        %404 = vperm.xlu0 %403, %v289
        %v405 = vpop.permute.xlu0 %404
        %408 = vset.pattern.permute.xlu0 0
        %409 = vperm.xlu0 %408, %v290
        %v410 = vpop.permute.xlu0 %409
        %413 = vset.pattern.permute.xlu0 0
        %414 = vperm.xlu0 %413, %v291
        %v415 = vpop.permute.xlu0 %414
        %418 = vset.pattern.permute.xlu0 0
        %419 = vperm.xlu0 %418, %v292
        %v420 = vpop.permute.xlu0 %419
        %423 = vset.pattern.permute.xlu0 0
        %424 = vperm.xlu0 %423, %v293
        %v425 = vpop.permute.xlu0 %424
        %428 = vset.pattern.permute.xlu0 0
        %429 = vperm.xlu0 %428, %v294
        %v430 = vpop.permute.xlu0 %429
        %433 = vset.pattern.permute.xlu0 0
        %434 = vperm.xlu0 %433, %v295
        %v435 = vpop.permute.xlu0 %434
        %438 = vset.pattern.permute.xlu0 0
        %439 = vperm.xlu0 %438, %v296
        %v440 = vpop.permute.xlu0 %439
        %443 = vset.pattern.permute.xlu0 0
        %444 = vperm.xlu0 %443, %v297
        %v445 = vpop.permute.xlu0 %444
        %448 = vset.pattern.permute.xlu0 0
        %449 = vperm.xlu0 %448, %v298
        %v450 = vpop.permute.xlu0 %449
        %453 = vset.pattern.permute.xlu0 0
        %454 = vperm.xlu0 %453, %v299
        %v455 = vpop.permute.xlu0 %454
        %458 = vset.pattern.permute.xlu0 0
        %459 = vperm.xlu0 %458, %v300
        %v460 = vpop.permute.xlu0 %459
        %463 = vset.pattern.permute.xlu0 0
        %464 = vperm.xlu0 %463, %v301
        %v465 = vpop.permute.xlu0 %464
        %468 = vset.pattern.permute.xlu0 0
        %469 = vperm.xlu0 %468, %v302
        %v470 = vpop.permute.xlu0 %469
        %473 = vset.pattern.permute.xlu0 0
        %474 = vperm.xlu0 %473, %v303
        %v475 = vpop.permute.xlu0 %474
        %478 = vset.pattern.permute.xlu0 0
        %479 = vperm.xlu0 %478, %v304
        %v480 = vpop.permute.xlu0 %479
        %483 = vset.pattern.permute.xlu0 0
        %484 = vperm.xlu0 %483, %v305
        %v485 = vpop.permute.xlu0 %484
        %488 = vset.pattern.permute.xlu0 0
        %489 = vperm.xlu0 %488, %v306
        %v490 = vpop.permute.xlu0 %489
        %493 = vset.pattern.permute.xlu0 0
        %494 = vperm.xlu0 %493, %v307
        %v495 = vpop.permute.xlu0 %494
        %498 = vset.pattern.permute.xlu0 0
        %499 = vperm.xlu0 %498, %v308
        %v500 = vpop.permute.xlu0 %499
        %503 = vset.pattern.permute.xlu0 0
        %504 = vperm.xlu0 %503, %v309
        %v505 = vpop.permute.xlu0 %504
        %508 = vset.pattern.permute.xlu0 0
        %509 = vperm.xlu0 %508, %v310
        %v510 = vpop.permute.xlu0 %509
        %513 = vset.pattern.permute.xlu0 0
        %514 = vperm.xlu0 %513, %v311
        %v515 = vpop.permute.xlu0 %514
        %518 = vset.pattern.permute.xlu0 0
        %519 = vperm.xlu0 %518, %v312
        %v520 = vpop.permute.xlu0 %519
        %523 = vset.pattern.permute.xlu0 0
        %524 = vperm.xlu0 %523, %v313
        %v525 = vpop.permute.xlu0 %524
        %528 = vset.pattern.permute.xlu0 0
        %529 = vperm.xlu0 %528, %v314
        %v530 = vpop.permute.xlu0 %529
        %533 = vset.pattern.permute.xlu0 0
        %534 = vperm.xlu0 %533, %v315
        %v535 = vpop.permute.xlu0 %534
        %538 = vset.pattern.permute.xlu0 0
        %539 = vperm.xlu0 %538, %v316
        %v540 = vpop.permute.xlu0 %539
        %543 = vset.pattern.permute.xlu0 0
        %544 = vperm.xlu0 %543, %v317
        %v545 = vpop.permute.xlu0 %544
        %548 = vset.pattern.permute.xlu0 0
        %549 = vperm.xlu0 %548, %v318
        %v550 = vpop.permute.xlu0 %549
        %553 = vset.pattern.permute.xlu0 0
        %554 = vperm.xlu0 %553, %v319
        %v555 = vpop.permute.xlu0 %554
        %558 = vset.pattern.permute.xlu0 0
        %559 = vperm.xlu0 %558, %v320
        %v560 = vpop.permute.xlu0 %559
        %563 = vset.pattern.permute.xlu0 0
        %564 = vperm.xlu0 %563, %v321
        %v565 = vpop.permute.xlu0 %564
        %568 = vset.pattern.permute.xlu0 0
        %569 = vperm.xlu0 %568, %v322
        %v570 = vpop.permute.xlu0 %569
        %573 = vset.pattern.permute.xlu0 0
        %574 = vperm.xlu0 %573, %v323
        %v575 = vpop.permute.xlu0 %574
        %578 = vset.pattern.permute.xlu0 0
        %579 = vperm.xlu0 %578, %v324
        %v580 = vpop.permute.xlu0 %579
        %583 = vset.pattern.permute.xlu0 0
        %584 = vperm.xlu0 %583, %v325
        %v585 = vpop.permute.xlu0 %584
        %588 = vset.pattern.permute.xlu0 0
        %589 = vperm.xlu0 %588, %v326
        %v590 = vpop.permute.xlu0 %589
        %593 = vset.pattern.permute.xlu0 0
        %594 = vperm.xlu0 %593, %v327
        %v595 = vpop.permute.xlu0 %594
        %598 = vset.pattern.permute.xlu0 0
        %599 = vperm.xlu0 %598, %v328
        %v600 = vpop.permute.xlu0 %599
        %603 = vset.pattern.permute.xlu0 0
        %604 = vperm.xlu0 %603, %v329
        %v605 = vpop.permute.xlu0 %604
        %608 = vset.pattern.permute.xlu0 0
        %609 = vperm.xlu0 %608, %v330
        %v610 = vpop.permute.xlu0 %609
        %613 = vset.pattern.permute.xlu0 0
        %614 = vperm.xlu0 %613, %v331
        %v615 = vpop.permute.xlu0 %614
        %618 = vset.pattern.permute.xlu0 0
        %619 = vperm.xlu0 %618, %v332
        %v620 = vpop.permute.xlu0 %619
        %623 = vset.pattern.permute.xlu0 0
        %624 = vperm.xlu0 %623, %v333
        %v625 = vpop.permute.xlu0 %624
        %628 = vset.pattern.permute.xlu0 0
        %629 = vperm.xlu0 %628, %v334
        %v630 = vpop.permute.xlu0 %629
        %633 = vset.pattern.permute.xlu0 0
        %634 = vperm.xlu0 %633, %v335
        %v635 = vpop.permute.xlu0 %634
        %638 = vset.pattern.permute.xlu0 0
        %639 = vperm.xlu0 %638, %v336
        %v640 = vpop.permute.xlu0 %639
        %643 = vset.pattern.permute.xlu0 0
        %644 = vperm.xlu0 %643, %v337
        %v645 = vpop.permute.xlu0 %644
        %648 = vset.pattern.permute.xlu0 0
        %649 = vperm.xlu0 %648, %v338
        %v650 = vpop.permute.xlu0 %649
        %653 = vset.pattern.permute.xlu0 0
        %654 = vperm.xlu0 %653, %v339
        %v655 = vpop.permute.xlu0 %654
        %658 = vset.pattern.permute.xlu0 0
        %659 = vperm.xlu0 %658, %v340
        %v660 = vpop.permute.xlu0 %659
        %663 = vset.pattern.permute.xlu0 0
        %664 = vperm.xlu0 %663, %v341
        %v665 = vpop.permute.xlu0 %664
        %668 = vset.pattern.permute.xlu0 0
        %669 = vperm.xlu0 %668, %v342
        %v670 = vpop.permute.xlu0 %669
        %673 = vset.pattern.permute.xlu0 0
        %674 = vperm.xlu0 %673, %v343
        %v675 = vpop.permute.xlu0 %674
        %678 = vset.pattern.permute.xlu0 0
        %679 = vperm.xlu0 %678, %v344
        %v680 = vpop.permute.xlu0 %679
        %683 = vset.pattern.permute.xlu0 0
        %684 = vperm.xlu0 %683, %v345
        %v685 = vpop.permute.xlu0 %684
        %688 = vset.pattern.permute.xlu0 0
        %689 = vperm.xlu0 %688, %v346
        %v690 = vpop.permute.xlu0 %689
        %693 = vset.pattern.permute.xlu0 0
        %694 = vperm.xlu0 %693, %v347
        %v695 = vpop.permute.xlu0 %694
        %698 = vset.pattern.permute.xlu0 0
        %699 = vperm.xlu0 %698, %v348
        %v700 = vpop.permute.xlu0 %699
        %703 = vset.pattern.permute.xlu0 0
        %704 = vperm.xlu0 %703, %v349
        %v705 = vpop.permute.xlu0 %704
        %708 = vset.pattern.permute.xlu0 0
        %709 = vperm.xlu0 %708, %v350
        %v710 = vpop.permute.xlu0 %709
        %713 = vset.pattern.permute.xlu0 0
        %714 = vperm.xlu0 %713, %v351
        %v715 = vpop.permute.xlu0 %714
        %718 = vset.pattern.permute.xlu0 0
        %719 = vperm.xlu0 %718, %v352
        %v720 = vpop.permute.xlu0 %719
        %723 = vset.pattern.permute.xlu0 0
        %724 = vperm.xlu0 %723, %v353
        %v725 = vpop.permute.xlu0 %724
        %728 = vset.pattern.permute.xlu0 0
        %729 = vperm.xlu0 %728, %v354
        %v730 = vpop.permute.xlu0 %729
        %733 = vset.pattern.permute.xlu0 0
        %734 = vperm.xlu0 %733, %v355
        %v735 = vpop.permute.xlu0 %734
        %738 = vset.pattern.permute.xlu0 0
        %739 = vperm.xlu0 %738, %v356
        %v740 = vpop.permute.xlu0 %739
        %743 = vset.pattern.permute.xlu0 0
        %744 = vperm.xlu0 %743, %v357
        %v745 = vpop.permute.xlu0 %744
        %748 = vset.pattern.permute.xlu0 0
        %749 = vperm.xlu0 %748, %v358
        %v750 = vpop.permute.xlu0 %749
        %753 = vset.pattern.permute.xlu0 0
        %754 = vperm.xlu0 %753, %v359
        %v755 = vpop.permute.xlu0 %754
        %758 = vset.pattern.permute.xlu0 0
        %759 = vperm.xlu0 %758, %v360
        %v760 = vpop.permute.xlu0 %759
        %763 = vset.pattern.permute.xlu0 0
        %764 = vperm.xlu0 %763, %v361
        %v765 = vpop.permute.xlu0 %764
        %768 = vset.pattern.permute.xlu0 0
        %769 = vperm.xlu0 %768, %v362
        %v770 = vpop.permute.xlu0 %769
        %773 = vset.pattern.permute.xlu0 0
        %774 = vperm.xlu0 %773, %v363
        %v775 = vpop.permute.xlu0 %774
        %778 = vset.pattern.permute.xlu0 0
        %779 = vperm.xlu0 %778, %v364
        %v780 = vpop.permute.xlu0 %779
        %783 = vset.pattern.permute.xlu0 0
        %784 = vperm.xlu0 %783, %v365
        %v785 = vpop.permute.xlu0 %784
        %788 = vset.pattern.permute.xlu0 0
        %789 = vperm.xlu0 %788, %v366
        %v790 = vpop.permute.xlu0 %789
        %793 = vset.pattern.permute.xlu0 0
        %794 = vperm.xlu0 %793, %v367
        %v795 = vpop.permute.xlu0 %794
        %798 = vset.pattern.permute.xlu0 0
        %799 = vperm.xlu0 %798, %v368
        %v800 = vpop.permute.xlu0 %799
        %803 = vset.pattern.permute.xlu0 0
        %804 = vperm.xlu0 %803, %v369
        %v805 = vpop.permute.xlu0 %804
        %808 = vset.pattern.permute.xlu0 0
        %809 = vperm.xlu0 %808, %v370
        %v810 = vpop.permute.xlu0 %809
        %813 = vset.pattern.permute.xlu0 0
        %814 = vperm.xlu0 %813, %v371
        %v815 = vpop.permute.xlu0 %814
        %818 = vset.pattern.permute.xlu0 0
        %819 = vperm.xlu0 %818, %v372
        %v820 = vpop.permute.xlu0 %819
        %823 = vset.pattern.permute.xlu0 0
        %824 = vperm.xlu0 %823, %v373
        %v825 = vpop.permute.xlu0 %824
        %828 = vset.pattern.permute.xlu0 0
        %829 = vperm.xlu0 %828, %v374
        %v830 = vpop.permute.xlu0 %829
        %833 = vset.pattern.permute.xlu0 0
        %834 = vperm.xlu0 %833, %v375
        %v835 = vpop.permute.xlu0 %834
        %838 = vset.pattern.permute.xlu0 0
        %839 = vperm.xlu0 %838, %v376
        %v840 = vpop.permute.xlu0 %839
        %843 = vset.pattern.permute.xlu0 0
        %844 = vperm.xlu0 %843, %v377
        %v845 = vpop.permute.xlu0 %844
        %848 = vset.pattern.permute.xlu0 0
        %849 = vperm.xlu0 %848, %v378
        %v850 = vpop.permute.xlu0 %849
        %853 = vset.pattern.permute.xlu0 0
        %854 = vperm.xlu0 %853, %v379
        %v855 = vpop.permute.xlu0 %854
        %858 = vset.pattern.permute.xlu0 0
        %859 = vperm.xlu0 %858, %v380
        %v860 = vpop.permute.xlu0 %859
        %863 = vset.pattern.permute.xlu0 0
        %864 = vperm.xlu0 %863, %v381
        %v865 = vpop.permute.xlu0 %864
        %868 = vset.pattern.permute.xlu0 0
        %869 = vperm.xlu0 %868, %v382
        %v870 = vpop.permute.xlu0 %869
        %873 = vset.pattern.permute.xlu0 0
        %874 = vperm.xlu0 %873, %v383
        %v875 = vpop.permute.xlu0 %874
        %878 = vset.pattern.permute.xlu0 0
        %879 = vperm.xlu0 %878, %v384
        %v880 = vpop.permute.xlu0 %879
        %883 = vset.pattern.permute.xlu0 0
        %884 = vperm.xlu0 %883, %v385
        %v885 = vpop.permute.xlu0 %884
        %888 = vset.pattern.permute.xlu0 0
        %889 = vperm.xlu0 %888, %v386
        %v890 = vpop.permute.xlu0 %889
        %893 = vset.pattern.permute.xlu0 0
        %894 = vperm.xlu0 %893, %v387
        %v895 = vpop.permute.xlu0 %894
        %898 = vset.pattern.permute.xlu0 0
        %899 = vperm.xlu0 %898, %v388
        %v900 = vpop.permute.xlu0 %899
        %903 = vset.pattern.permute.xlu0 0
        %904 = vperm.xlu0 %903, %v389
        %v905 = vpop.permute.xlu0 %904
        %908 = vset.pattern.permute.xlu0 0
        %909 = vperm.xlu0 %908, %v390
        %v910 = vpop.permute.xlu0 %909
        %913 = vset.pattern.permute.xlu0 0
        %914 = vperm.xlu0 %913, %v391
        %v915 = vpop.permute.xlu0 %914
        %918 = vset.pattern.permute.xlu0 0
        %919 = vperm.xlu0 %918, %v392
        %v920 = vpop.permute.xlu0 %919
        %v923 = vperm.slane %v401, 0
        %v925 = vmul.f32 %v405, %v923
        %v926 = vmul.f32 %v410, %v923
        %v927 = vmul.f32 %v415, %v923
        %v928 = vmul.f32 %v420, %v923
        %v929 = vmul.f32 %v425, %v923
        %v930 = vmul.f32 %v430, %v923
        %v931 = vmul.f32 %v435, %v923
        %v932 = vmul.f32 %v440, %v923
        %v933 = vmul.f32 %v445, %v923
        %v934 = vmul.f32 %v450, %v923
        %v935 = vmul.f32 %v455, %v923
        %v936 = vmul.f32 %v460, %v923
        %v937 = vmul.f32 %v465, %v923
        %v938 = vmul.f32 %v470, %v923
        %v939 = vmul.f32 %v475, %v923
        %v940 = vmul.f32 %v480, %v923
        %v941 = vmul.f32 %v485, %v923
        %v942 = vmul.f32 %v490, %v923
        %v943 = vmul.f32 %v495, %v923
        %v944 = vmul.f32 %v500, %v923
        %v945 = vmul.f32 %v505, %v923
        %v946 = vmul.f32 %v510, %v923
        %v947 = vmul.f32 %v515, %v923
        %v948 = vmul.f32 %v520, %v923
        %v949 = vmul.f32 %v525, %v923
        %v950 = vmul.f32 %v530, %v923
        %v951 = vmul.f32 %v535, %v923
        %v952 = vmul.f32 %v540, %v923
        %v953 = vmul.f32 %v545, %v923
        %v954 = vmul.f32 %v550, %v923
        %v955 = vmul.f32 %v555, %v923
        %v956 = vmul.f32 %v560, %v923
        %v957 = vmul.f32 %v565, %v923
        %v958 = vmul.f32 %v570, %v923
        %v959 = vmul.f32 %v575, %v923
        %v960 = vmul.f32 %v580, %v923
        %v961 = vmul.f32 %v585, %v923
        %v962 = vmul.f32 %v590, %v923
        %v963 = vmul.f32 %v595, %v923
        %v964 = vmul.f32 %v600, %v923
        %v965 = vmul.f32 %v605, %v923
        %v966 = vmul.f32 %v610, %v923
        %v967 = vmul.f32 %v615, %v923
        %v968 = vmul.f32 %v620, %v923
        %v969 = vmul.f32 %v625, %v923
        %v970 = vmul.f32 %v630, %v923
        %v971 = vmul.f32 %v635, %v923
        %v972 = vmul.f32 %v640, %v923
        %v973 = vmul.f32 %v645, %v923
        %v974 = vmul.f32 %v650, %v923
        %v975 = vmul.f32 %v655, %v923
        %v976 = vmul.f32 %v660, %v923
        %v977 = vmul.f32 %v665, %v923
        %v978 = vmul.f32 %v670, %v923
        %v979 = vmul.f32 %v675, %v923
        %v980 = vmul.f32 %v680, %v923
        %v981 = vmul.f32 %v685, %v923
        %v982 = vmul.f32 %v690, %v923
        %v983 = vmul.f32 %v695, %v923
        %v984 = vmul.f32 %v700, %v923
        %v985 = vmul.f32 %v705, %v923
        %v986 = vmul.f32 %v710, %v923
        %v987 = vmul.f32 %v715, %v923
        %v988 = vmul.f32 %v720, %v923
        %v989 = vmul.f32 %v725, %v923
        %v990 = vmul.f32 %v730, %v923
        %v991 = vmul.f32 %v735, %v923
        %v992 = vmul.f32 %v740, %v923
        %v993 = vmul.f32 %v745, %v923
        %v994 = vmul.f32 %v750, %v923
        %v995 = vmul.f32 %v755, %v923
        %v996 = vmul.f32 %v760, %v923
        %v997 = vmul.f32 %v765, %v923
        %v998 = vmul.f32 %v770, %v923
        %v999 = vmul.f32 %v775, %v923
        %v1000 = vmul.f32 %v780, %v923
        %v1001 = vmul.f32 %v785, %v923
        %v1002 = vmul.f32 %v790, %v923
        %v1003 = vmul.f32 %v795, %v923
        %v1004 = vmul.f32 %v800, %v923
        %v1005 = vmul.f32 %v805, %v923
        %v1006 = vmul.f32 %v810, %v923
        %v1007 = vmul.f32 %v815, %v923
        %v1008 = vmul.f32 %v820, %v923
        %v1009 = vmul.f32 %v825, %v923
        %v1010 = vmul.f32 %v830, %v923
        %v1011 = vmul.f32 %v835, %v923
        %v1012 = vmul.f32 %v840, %v923
        %v1013 = vmul.f32 %v845, %v923
        %v1014 = vmul.f32 %v850, %v923
        %v1015 = vmul.f32 %v855, %v923
        %v1016 = vmul.f32 %v860, %v923
        %v1017 = vmul.f32 %v865, %v923
        %v1018 = vmul.f32 %v870, %v923
        %v1019 = vmul.f32 %v875, %v923
        %v1020 = vmul.f32 %v880, %v923
        %v1021 = vmul.f32 %v885, %v923
        %v1022 = vmul.f32 %v890, %v923
        %v1023 = vmul.f32 %v895, %v923
        %v1024 = vmul.f32 %v900, %v923
        %v1025 = vmul.f32 %v905, %v923
        %v1026 = vmul.f32 %v910, %v923
        %v1027 = vmul.f32 %v915, %v923
        %v1028 = vmul.f32 %v920, %v923
        %v1029 = vadd.f32 %v925, 0.0
        %v1030 = vadd.f32 %v926, 0.0
        %v1031 = vadd.f32 %v927, 0.0
        %v1032 = vadd.f32 %v928, 0.0
        %v1033 = vadd.f32 %v929, 0.0
        %v1034 = vadd.f32 %v930, 0.0
        %v1035 = vadd.f32 %v931, 0.0
        %v1036 = vadd.f32 %v932, 0.0
        %v1037 = vadd.f32 %v933, 0.0
        %v1038 = vadd.f32 %v934, 0.0
        %v1039 = vadd.f32 %v935, 0.0
        %v1040 = vadd.f32 %v936, 0.0
        %v1041 = vadd.f32 %v937, 0.0
        %v1042 = vadd.f32 %v938, 0.0
        %v1043 = vadd.f32 %v939, 0.0
        %v1044 = vadd.f32 %v940, 0.0
        %v1045 = vadd.f32 %v941, 0.0
        %v1046 = vadd.f32 %v942, 0.0
        %v1047 = vadd.f32 %v943, 0.0
        %v1048 = vadd.f32 %v944, 0.0
        %v1049 = vadd.f32 %v945, 0.0
        %v1050 = vadd.f32 %v946, 0.0
        %v1051 = vadd.f32 %v947, 0.0
        %v1052 = vadd.f32 %v948, 0.0
        %v1053 = vadd.f32 %v949, 0.0
        %v1054 = vadd.f32 %v950, 0.0
        %v1055 = vadd.f32 %v951, 0.0
        %v1056 = vadd.f32 %v952, 0.0
        %v1057 = vadd.f32 %v953, 0.0
        %v1058 = vadd.f32 %v954, 0.0
        %v1059 = vadd.f32 %v955, 0.0
        %v1060 = vadd.f32 %v956, 0.0
        %v1061 = vadd.f32 %v957, 0.0
        %v1062 = vadd.f32 %v958, 0.0
        %v1063 = vadd.f32 %v959, 0.0
        %v1064 = vadd.f32 %v960, 0.0
        %v1065 = vadd.f32 %v961, 0.0
        %v1066 = vadd.f32 %v962, 0.0
        %v1067 = vadd.f32 %v963, 0.0
        %v1068 = vadd.f32 %v964, 0.0
        %v1069 = vadd.f32 %v965, 0.0
        %v1070 = vadd.f32 %v966, 0.0
        %v1071 = vadd.f32 %v967, 0.0
        %v1072 = vadd.f32 %v968, 0.0
        %v1073 = vadd.f32 %v969, 0.0
        %v1074 = vadd.f32 %v970, 0.0
        %v1075 = vadd.f32 %v971, 0.0
        %v1076 = vadd.f32 %v972, 0.0
        %v1077 = vadd.f32 %v973, 0.0
        %v1078 = vadd.f32 %v974, 0.0
        %v1079 = vadd.f32 %v975, 0.0
        %v1080 = vadd.f32 %v976, 0.0
        %v1081 = vadd.f32 %v977, 0.0
        %v1082 = vadd.f32 %v978, 0.0
        %v1083 = vadd.f32 %v979, 0.0
        %v1084 = vadd.f32 %v980, 0.0
        %v1085 = vadd.f32 %v981, 0.0
        %v1086 = vadd.f32 %v982, 0.0
        %v1087 = vadd.f32 %v983, 0.0
        %v1088 = vadd.f32 %v984, 0.0
        %v1089 = vadd.f32 %v985, 0.0
        %v1090 = vadd.f32 %v986, 0.0
        %v1091 = vadd.f32 %v987, 0.0
        %v1092 = vadd.f32 %v988, 0.0
        %v1093 = vadd.f32 %v989, 0.0
        %v1094 = vadd.f32 %v990, 0.0
        %v1095 = vadd.f32 %v991, 0.0
        %v1096 = vadd.f32 %v992, 0.0
        %v1097 = vadd.f32 %v993, 0.0
        %v1098 = vadd.f32 %v994, 0.0
        %v1099 = vadd.f32 %v995, 0.0
        %v1100 = vadd.f32 %v996, 0.0
        %v1101 = vadd.f32 %v997, 0.0
        %v1102 = vadd.f32 %v998, 0.0
        %v1103 = vadd.f32 %v999, 0.0
        %v1104 = vadd.f32 %v1000, 0.0
        %v1105 = vadd.f32 %v1001, 0.0
        %v1106 = vadd.f32 %v1002, 0.0
        %v1107 = vadd.f32 %v1003, 0.0
        %v1108 = vadd.f32 %v1004, 0.0
        %v1109 = vadd.f32 %v1005, 0.0
        %v1110 = vadd.f32 %v1006, 0.0
        %v1111 = vadd.f32 %v1007, 0.0
        %v1112 = vadd.f32 %v1008, 0.0
        %v1113 = vadd.f32 %v1009, 0.0
        %v1114 = vadd.f32 %v1010, 0.0
        %v1115 = vadd.f32 %v1011, 0.0
        %v1116 = vadd.f32 %v1012, 0.0
        %v1117 = vadd.f32 %v1013, 0.0
        %v1118 = vadd.f32 %v1014, 0.0
        %v1119 = vadd.f32 %v1015, 0.0
        %v1120 = vadd.f32 %v1016, 0.0
        %v1121 = vadd.f32 %v1017, 0.0
        %v1122 = vadd.f32 %v1018, 0.0
        %v1123 = vadd.f32 %v1019, 0.0
        %v1124 = vadd.f32 %v1020, 0.0
        %v1125 = vadd.f32 %v1021, 0.0
        %v1126 = vadd.f32 %v1022, 0.0
        %v1127 = vadd.f32 %v1023, 0.0
        %v1128 = vadd.f32 %v1024, 0.0
        %v1129 = vadd.f32 %v1025, 0.0
        %v1130 = vadd.f32 %v1026, 0.0
        %v1131 = vadd.f32 %v1027, 0.0
        %v1132 = vadd.f32 %v1028, 0.0
        %s1133 = scalar_lea.vmem [#allocation2], 1
        %v1134 = vld [vmem:[%s1133] sm:$0x1]
        %v1136 = vperm.slane %v1134, 0
        %v1138 = vmul.f32 %v405, %v1136
        %v1139 = vmul.f32 %v410, %v1136
        %v1140 = vmul.f32 %v415, %v1136
        %v1141 = vmul.f32 %v420, %v1136
        %v1142 = vmul.f32 %v425, %v1136
        %v1143 = vmul.f32 %v430, %v1136
        %v1144 = vmul.f32 %v435, %v1136
        %v1145 = vmul.f32 %v440, %v1136
        %v1146 = vmul.f32 %v445, %v1136
        %v1147 = vmul.f32 %v450, %v1136
        %v1148 = vmul.f32 %v455, %v1136
        %v1149 = vmul.f32 %v460, %v1136
        %v1150 = vmul.f32 %v465, %v1136
        %v1151 = vmul.f32 %v470, %v1136
        %v1152 = vmul.f32 %v475, %v1136
        %v1153 = vmul.f32 %v480, %v1136
        %v1154 = vmul.f32 %v485, %v1136
        %v1155 = vmul.f32 %v490, %v1136
        %v1156 = vmul.f32 %v495, %v1136
        %v1157 = vmul.f32 %v500, %v1136
        %v1158 = vmul.f32 %v505, %v1136
        %v1159 = vmul.f32 %v510, %v1136
        %v1160 = vmul.f32 %v515, %v1136
        %v1161 = vmul.f32 %v520, %v1136
        %v1162 = vmul.f32 %v525, %v1136
        %v1163 = vmul.f32 %v530, %v1136
        %v1164 = vmul.f32 %v535, %v1136
        %v1165 = vmul.f32 %v540, %v1136
        %v1166 = vmul.f32 %v545, %v1136
        %v1167 = vmul.f32 %v550, %v1136
        %v1168 = vmul.f32 %v555, %v1136
        %v1169 = vmul.f32 %v560, %v1136
        %v1170 = vmul.f32 %v565, %v1136
        %v1171 = vmul.f32 %v570, %v1136
        %v1172 = vmul.f32 %v575, %v1136
        %v1173 = vmul.f32 %v580, %v1136
        %v1174 = vmul.f32 %v585, %v1136
        %v1175 = vmul.f32 %v590, %v1136
        %v1176 = vmul.f32 %v595, %v1136
        %v1177 = vmul.f32 %v600, %v1136
        %v1178 = vmul.f32 %v605, %v1136
        %v1179 = vmul.f32 %v610, %v1136
        %v1180 = vmul.f32 %v615, %v1136
        %v1181 = vmul.f32 %v620, %v1136
        %v1182 = vmul.f32 %v625, %v1136
        %v1183 = vmul.f32 %v630, %v1136
        %v1184 = vmul.f32 %v635, %v1136
        %v1185 = vmul.f32 %v640, %v1136
        %v1186 = vmul.f32 %v645, %v1136
        %v1187 = vmul.f32 %v650, %v1136
        %v1188 = vmul.f32 %v655, %v1136
        %v1189 = vmul.f32 %v660, %v1136
        %v1190 = vmul.f32 %v665, %v1136
        %v1191 = vmul.f32 %v670, %v1136
        %v1192 = vmul.f32 %v675, %v1136
        %v1193 = vmul.f32 %v680, %v1136
        %v1194 = vmul.f32 %v685, %v1136
        %v1195 = vmul.f32 %v690, %v1136
        %v1196 = vmul.f32 %v695, %v1136
        %v1197 = vmul.f32 %v700, %v1136
        %v1198 = vmul.f32 %v705, %v1136
        %v1199 = vmul.f32 %v710, %v1136
        %v1200 = vmul.f32 %v715, %v1136
        %v1201 = vmul.f32 %v720, %v1136
        %v1202 = vmul.f32 %v725, %v1136
        %v1203 = vmul.f32 %v730, %v1136
        %v1204 = vmul.f32 %v735, %v1136
        %v1205 = vmul.f32 %v740, %v1136
        %v1206 = vmul.f32 %v745, %v1136
        %v1207 = vmul.f32 %v750, %v1136
        %v1208 = vmul.f32 %v755, %v1136
        %v1209 = vmul.f32 %v760, %v1136
        %v1210 = vmul.f32 %v765, %v1136
        %v1211 = vmul.f32 %v770, %v1136
        %v1212 = vmul.f32 %v775, %v1136
        %v1213 = vmul.f32 %v780, %v1136
        %v1214 = vmul.f32 %v785, %v1136
        %v1215 = vmul.f32 %v790, %v1136
        %v1216 = vmul.f32 %v795, %v1136
        %v1217 = vmul.f32 %v800, %v1136
        %v1218 = vmul.f32 %v805, %v1136
        %v1219 = vmul.f32 %v810, %v1136
        %v1220 = vmul.f32 %v815, %v1136
        %v1221 = vmul.f32 %v820, %v1136
        %v1222 = vmul.f32 %v825, %v1136
        %v1223 = vmul.f32 %v830, %v1136
        %v1224 = vmul.f32 %v835, %v1136
        %v1225 = vmul.f32 %v840, %v1136
        %v1226 = vmul.f32 %v845, %v1136
        %v1227 = vmul.f32 %v850, %v1136
        %v1228 = vmul.f32 %v855, %v1136
        %v1229 = vmul.f32 %v860, %v1136
        %v1230 = vmul.f32 %v865, %v1136
        %v1231 = vmul.f32 %v870, %v1136
        %v1232 = vmul.f32 %v875, %v1136
        %v1233 = vmul.f32 %v880, %v1136
        %v1234 = vmul.f32 %v885, %v1136
        %v1235 = vmul.f32 %v890, %v1136
        %v1236 = vmul.f32 %v895, %v1136
        %v1237 = vmul.f32 %v900, %v1136
        %v1238 = vmul.f32 %v905, %v1136
        %v1239 = vmul.f32 %v910, %v1136
        %v1240 = vmul.f32 %v915, %v1136
        %v1241 = vmul.f32 %v920, %v1136
        %vm1346 = vcmask 1046528
        %v1347 = vrot.slane %v1138, 1
        %v1348 = vrot.slane %v1139, 1
        %v1349 = vsel %vm1346, %v1347, %v1348
        %v1350 = vrot.slane %v1140, 1
        %v1351 = vsel %vm1346, %v1348, %v1350
        %v1352 = vrot.slane %v1141, 1
        %v1353 = vsel %vm1346, %v1350, %v1352
        %v1354 = vrot.slane %v1142, 1
        %v1355 = vrot.slane %v1143, 1
        %v1356 = vsel %vm1346, %v1354, %v1355
        %v1357 = vrot.slane %v1144, 1
        %v1358 = vsel %vm1346, %v1355, %v1357
        %v1359 = vrot.slane %v1145, 1
        %v1360 = vsel %vm1346, %v1357, %v1359
        %v1361 = vrot.slane %v1146, 1
        %v1362 = vrot.slane %v1147, 1
        %v1363 = vsel %vm1346, %v1361, %v1362
        %v1364 = vrot.slane %v1148, 1
        %v1365 = vsel %vm1346, %v1362, %v1364
        %v1366 = vrot.slane %v1149, 1
        %v1367 = vsel %vm1346, %v1364, %v1366
        %v1368 = vrot.slane %v1150, 1
        %v1369 = vrot.slane %v1151, 1
        %v1370 = vsel %vm1346, %v1368, %v1369
        %v1371 = vrot.slane %v1152, 1
        %v1372 = vsel %vm1346, %v1369, %v1371
        %v1373 = vrot.slane %v1153, 1
        %v1374 = vsel %vm1346, %v1371, %v1373
        %v1375 = vrot.slane %v1154, 1
        %v1376 = vrot.slane %v1155, 1
        %v1377 = vsel %vm1346, %v1375, %v1376
        %v1378 = vrot.slane %v1156, 1
        %v1379 = vsel %vm1346, %v1376, %v1378
        %v1380 = vrot.slane %v1157, 1
        %v1381 = vsel %vm1346, %v1378, %v1380
        %v1382 = vrot.slane %v1158, 1
        %v1383 = vrot.slane %v1159, 1
        %v1384 = vsel %vm1346, %v1382, %v1383
        %v1385 = vrot.slane %v1160, 1
        %v1386 = vsel %vm1346, %v1383, %v1385
        %v1387 = vrot.slane %v1161, 1
        %v1388 = vsel %vm1346, %v1385, %v1387
        %v1389 = vrot.slane %v1162, 1
        %v1390 = vrot.slane %v1163, 1
        %v1391 = vsel %vm1346, %v1389, %v1390
        %v1392 = vrot.slane %v1164, 1
        %v1393 = vsel %vm1346, %v1390, %v1392
        %v1394 = vrot.slane %v1165, 1
        %v1395 = vsel %vm1346, %v1392, %v1394
        %v1396 = vrot.slane %v1166, 1
        %v1397 = vrot.slane %v1167, 1
        %v1398 = vsel %vm1346, %v1396, %v1397
        %v1399 = vrot.slane %v1168, 1
        %v1400 = vsel %vm1346, %v1397, %v1399
        %v1401 = vrot.slane %v1169, 1
        %v1402 = vsel %vm1346, %v1399, %v1401
        %v1403 = vrot.slane %v1170, 1
        %v1404 = vrot.slane %v1171, 1
        %v1405 = vsel %vm1346, %v1403, %v1404
        %v1406 = vrot.slane %v1172, 1
        %v1407 = vsel %vm1346, %v1404, %v1406
        %v1408 = vrot.slane %v1173, 1
        %v1409 = vsel %vm1346, %v1406, %v1408
        %v1410 = vrot.slane %v1174, 1
        %v1411 = vrot.slane %v1175, 1
        %v1412 = vsel %vm1346, %v1410, %v1411
        %v1413 = vrot.slane %v1176, 1
        %v1414 = vsel %vm1346, %v1411, %v1413
        %v1415 = vrot.slane %v1177, 1
        %v1416 = vsel %vm1346, %v1413, %v1415
        %v1417 = vrot.slane %v1178, 1
        %v1418 = vrot.slane %v1179, 1
        %v1419 = vsel %vm1346, %v1417, %v1418
        %v1420 = vrot.slane %v1180, 1
        %v1421 = vsel %vm1346, %v1418, %v1420
        %v1422 = vrot.slane %v1181, 1
        %v1423 = vsel %vm1346, %v1420, %v1422
        %v1424 = vrot.slane %v1182, 1
        %v1425 = vrot.slane %v1183, 1
        %v1426 = vsel %vm1346, %v1424, %v1425
        %v1427 = vrot.slane %v1184, 1
        %v1428 = vsel %vm1346, %v1425, %v1427
        %v1429 = vrot.slane %v1185, 1
        %v1430 = vsel %vm1346, %v1427, %v1429
        %v1431 = vrot.slane %v1186, 1
        %v1432 = vrot.slane %v1187, 1
        %v1433 = vsel %vm1346, %v1431, %v1432
        %v1434 = vrot.slane %v1188, 1
        %v1435 = vsel %vm1346, %v1432, %v1434
        %v1436 = vrot.slane %v1189, 1
        %v1437 = vsel %vm1346, %v1434, %v1436
        %v1438 = vrot.slane %v1190, 1
        %v1439 = vrot.slane %v1191, 1
        %v1440 = vsel %vm1346, %v1438, %v1439
        %v1441 = vrot.slane %v1192, 1
        %v1442 = vsel %vm1346, %v1439, %v1441
        %v1443 = vrot.slane %v1193, 1
        %v1444 = vsel %vm1346, %v1441, %v1443
        %v1445 = vrot.slane %v1194, 1
        %v1446 = vrot.slane %v1195, 1
        %v1447 = vsel %vm1346, %v1445, %v1446
        %v1448 = vrot.slane %v1196, 1
        %v1449 = vsel %vm1346, %v1446, %v1448
        %v1450 = vrot.slane %v1197, 1
        %v1451 = vsel %vm1346, %v1448, %v1450
        %v1452 = vrot.slane %v1198, 1
        %v1453 = vrot.slane %v1199, 1
        %v1454 = vsel %vm1346, %v1452, %v1453
        %v1455 = vrot.slane %v1200, 1
        %v1456 = vsel %vm1346, %v1453, %v1455
        %v1457 = vrot.slane %v1201, 1
        %v1458 = vsel %vm1346, %v1455, %v1457
        %v1459 = vrot.slane %v1202, 1
        %v1460 = vrot.slane %v1203, 1
        %v1461 = vsel %vm1346, %v1459, %v1460
        %v1462 = vrot.slane %v1204, 1
        %v1463 = vsel %vm1346, %v1460, %v1462
        %v1464 = vrot.slane %v1205, 1
        %v1465 = vsel %vm1346, %v1462, %v1464
        %v1466 = vrot.slane %v1206, 1
        %v1467 = vrot.slane %v1207, 1
        %v1468 = vsel %vm1346, %v1466, %v1467
        %v1469 = vrot.slane %v1208, 1
        %v1470 = vsel %vm1346, %v1467, %v1469
        %v1471 = vrot.slane %v1209, 1
        %v1472 = vsel %vm1346, %v1469, %v1471
        %v1473 = vrot.slane %v1210, 1
        %v1474 = vrot.slane %v1211, 1
        %v1475 = vsel %vm1346, %v1473, %v1474
        %v1476 = vrot.slane %v1212, 1
        %v1477 = vsel %vm1346, %v1474, %v1476
        %v1478 = vrot.slane %v1213, 1
        %v1479 = vsel %vm1346, %v1476, %v1478
        %v1480 = vrot.slane %v1214, 1
        %v1481 = vrot.slane %v1215, 1
        %v1482 = vsel %vm1346, %v1480, %v1481
        %v1483 = vrot.slane %v1216, 1
        %v1484 = vsel %vm1346, %v1481, %v1483
        %v1485 = vrot.slane %v1217, 1
        %v1486 = vsel %vm1346, %v1483, %v1485
        %v1487 = vrot.slane %v1218, 1
        %v1488 = vrot.slane %v1219, 1
        %v1489 = vsel %vm1346, %v1487, %v1488
        %v1490 = vrot.slane %v1220, 1
        %v1491 = vsel %vm1346, %v1488, %v1490
        %v1492 = vrot.slane %v1221, 1
        %v1493 = vsel %vm1346, %v1490, %v1492
        %v1494 = vrot.slane %v1222, 1
        %v1495 = vrot.slane %v1223, 1
        %v1496 = vsel %vm1346, %v1494, %v1495
        %v1497 = vrot.slane %v1224, 1
        %v1498 = vsel %vm1346, %v1495, %v1497
        %v1499 = vrot.slane %v1225, 1
        %v1500 = vsel %vm1346, %v1497, %v1499
        %v1501 = vrot.slane %v1226, 1
        %v1502 = vrot.slane %v1227, 1
        %v1503 = vsel %vm1346, %v1501, %v1502
        %v1504 = vrot.slane %v1228, 1
        %v1505 = vsel %vm1346, %v1502, %v1504
        %v1506 = vrot.slane %v1229, 1
        %v1507 = vsel %vm1346, %v1504, %v1506
        %v1508 = vrot.slane %v1230, 1
        %v1509 = vrot.slane %v1231, 1
        %v1510 = vsel %vm1346, %v1508, %v1509
        %v1511 = vrot.slane %v1232, 1
        %v1512 = vsel %vm1346, %v1509, %v1511
        %v1513 = vrot.slane %v1233, 1
        %v1514 = vsel %vm1346, %v1511, %v1513
        %v1515 = vrot.slane %v1234, 1
        %v1516 = vrot.slane %v1235, 1
        %v1517 = vsel %vm1346, %v1515, %v1516
        %v1518 = vrot.slane %v1236, 1
        %v1519 = vsel %vm1346, %v1516, %v1518
        %v1520 = vrot.slane %v1237, 1
        %v1521 = vsel %vm1346, %v1518, %v1520
        %v1522 = vrot.slane %v1238, 1
        %v1523 = vrot.slane %v1239, 1
        %v1524 = vsel %vm1346, %v1522, %v1523
        %v1525 = vrot.slane %v1240, 1
        %v1526 = vsel %vm1346, %v1523, %v1525
        %v1527 = vrot.slane %v1241, 1
        %v1528 = vsel %vm1346, %v1525, %v1527
        %v1633 = vadd.f32 %v1029, %v1349
        %v1634 = vadd.f32 %v1030, %v1351
        %v1635 = vadd.f32 %v1031, %v1353
        %v1636 = vadd.f32 %v1032, %v1352
        %v1637 = vadd.f32 %v1033, %v1356
        %v1638 = vadd.f32 %v1034, %v1358
        %v1639 = vadd.f32 %v1035, %v1360
        %v1640 = vadd.f32 %v1036, %v1359
        %v1641 = vadd.f32 %v1037, %v1363
        %v1642 = vadd.f32 %v1038, %v1365
        %v1643 = vadd.f32 %v1039, %v1367
        %v1644 = vadd.f32 %v1040, %v1366
        %v1645 = vadd.f32 %v1041, %v1370
        %v1646 = vadd.f32 %v1042, %v1372
        %v1647 = vadd.f32 %v1043, %v1374
        %v1648 = vadd.f32 %v1044, %v1373
        %v1649 = vadd.f32 %v1045, %v1377
        %v1650 = vadd.f32 %v1046, %v1379
        %v1651 = vadd.f32 %v1047, %v1381
        %v1652 = vadd.f32 %v1048, %v1380
        %v1653 = vadd.f32 %v1049, %v1384
        %v1654 = vadd.f32 %v1050, %v1386
        %v1655 = vadd.f32 %v1051, %v1388
        %v1656 = vadd.f32 %v1052, %v1387
        %v1657 = vadd.f32 %v1053, %v1391
        %v1658 = vadd.f32 %v1054, %v1393
        %v1659 = vadd.f32 %v1055, %v1395
        %v1660 = vadd.f32 %v1056, %v1394
        %v1661 = vadd.f32 %v1057, %v1398
        %v1662 = vadd.f32 %v1058, %v1400
        %v1663 = vadd.f32 %v1059, %v1402
        %v1664 = vadd.f32 %v1060, %v1401
        %v1665 = vadd.f32 %v1061, %v1405
        %v1666 = vadd.f32 %v1062, %v1407
        %v1667 = vadd.f32 %v1063, %v1409
        %v1668 = vadd.f32 %v1064, %v1408
        %v1669 = vadd.f32 %v1065, %v1412
        %v1670 = vadd.f32 %v1066, %v1414
        %v1671 = vadd.f32 %v1067, %v1416
        %v1672 = vadd.f32 %v1068, %v1415
        %v1673 = vadd.f32 %v1069, %v1419
        %v1674 = vadd.f32 %v1070, %v1421
        %v1675 = vadd.f32 %v1071, %v1423
        %v1676 = vadd.f32 %v1072, %v1422
        %v1677 = vadd.f32 %v1073, %v1426
        %v1678 = vadd.f32 %v1074, %v1428
        %v1679 = vadd.f32 %v1075, %v1430
        %v1680 = vadd.f32 %v1076, %v1429
        %v1681 = vadd.f32 %v1077, %v1433
        %v1682 = vadd.f32 %v1078, %v1435
        %v1683 = vadd.f32 %v1079, %v1437
        %v1684 = vadd.f32 %v1080, %v1436
        %v1685 = vadd.f32 %v1081, %v1440
        %v1686 = vadd.f32 %v1082, %v1442
        %v1687 = vadd.f32 %v1083, %v1444
        %v1688 = vadd.f32 %v1084, %v1443
        %v1689 = vadd.f32 %v1085, %v1447
        %v1690 = vadd.f32 %v1086, %v1449
        %v1691 = vadd.f32 %v1087, %v1451
        %v1692 = vadd.f32 %v1088, %v1450
        %v1693 = vadd.f32 %v1089, %v1454
        %v1694 = vadd.f32 %v1090, %v1456
        %v1695 = vadd.f32 %v1091, %v1458
        %v1696 = vadd.f32 %v1092, %v1457
        %v1697 = vadd.f32 %v1093, %v1461
        %v1698 = vadd.f32 %v1094, %v1463
        %v1699 = vadd.f32 %v1095, %v1465
        %v1700 = vadd.f32 %v1096, %v1464
        %v1701 = vadd.f32 %v1097, %v1468
        %v1702 = vadd.f32 %v1098, %v1470
        %v1703 = vadd.f32 %v1099, %v1472
        %v1704 = vadd.f32 %v1100, %v1471
        %v1705 = vadd.f32 %v1101, %v1475
        %v1706 = vadd.f32 %v1102, %v1477
        %v1707 = vadd.f32 %v1103, %v1479
        %v1708 = vadd.f32 %v1104, %v1478
        %v1709 = vadd.f32 %v1105, %v1482
        %v1710 = vadd.f32 %v1106, %v1484
        %v1711 = vadd.f32 %v1107, %v1486
        %v1712 = vadd.f32 %v1108, %v1485
        %v1713 = vadd.f32 %v1109, %v1489
        %v1714 = vadd.f32 %v1110, %v1491
        %v1715 = vadd.f32 %v1111, %v1493
        %v1716 = vadd.f32 %v1112, %v1492
        %v1717 = vadd.f32 %v1113, %v1496
        %v1718 = vadd.f32 %v1114, %v1498
        %v1719 = vadd.f32 %v1115, %v1500
        %v1720 = vadd.f32 %v1116, %v1499
        %v1721 = vadd.f32 %v1117, %v1503
        %v1722 = vadd.f32 %v1118, %v1505
        %v1723 = vadd.f32 %v1119, %v1507
        %v1724 = vadd.f32 %v1120, %v1506
        %v1725 = vadd.f32 %v1121, %v1510
        %v1726 = vadd.f32 %v1122, %v1512
        %v1727 = vadd.f32 %v1123, %v1514
        %v1728 = vadd.f32 %v1124, %v1513
        %v1729 = vadd.f32 %v1125, %v1517
        %v1730 = vadd.f32 %v1126, %v1519
        %v1731 = vadd.f32 %v1127, %v1521
        %v1732 = vadd.f32 %v1128, %v1520
        %v1733 = vadd.f32 %v1129, %v1524
        %v1734 = vadd.f32 %v1130, %v1526
        %v1735 = vadd.f32 %v1131, %v1528
        %v1736 = vadd.f32 %v1132, %v1527
        %s1737 = scalar_lea.vmem [#allocation2], 2
        %v1738 = vld [vmem:[%s1737] sm:$0x1]
        %v1740 = vperm.slane %v1738, 0
        %v1742 = vmul.f32 %v405, %v1740
        %v1743 = vmul.f32 %v410, %v1740
        %v1744 = vmul.f32 %v415, %v1740
        %v1745 = vmul.f32 %v420, %v1740
        %v1746 = vmul.f32 %v425, %v1740
        %v1747 = vmul.f32 %v430, %v1740
        %v1748 = vmul.f32 %v435, %v1740
        %v1749 = vmul.f32 %v440, %v1740
        %v1750 = vmul.f32 %v445, %v1740
        %v1751 = vmul.f32 %v450, %v1740
        %v1752 = vmul.f32 %v455, %v1740
        %v1753 = vmul.f32 %v460, %v1740
        %v1754 = vmul.f32 %v465, %v1740
        %v1755 = vmul.f32 %v470, %v1740
        %v1756 = vmul.f32 %v475, %v1740
        %v1757 = vmul.f32 %v480, %v1740
        %v1758 = vmul.f32 %v485, %v1740
        %v1759 = vmul.f32 %v490, %v1740
        %v1760 = vmul.f32 %v495, %v1740
        %v1761 = vmul.f32 %v500, %v1740
        %v1762 = vmul.f32 %v505, %v1740
        %v1763 = vmul.f32 %v510, %v1740
        %v1764 = vmul.f32 %v515, %v1740
        %v1765 = vmul.f32 %v520, %v1740
        %v1766 = vmul.f32 %v525, %v1740
        %v1767 = vmul.f32 %v530, %v1740
        %v1768 = vmul.f32 %v535, %v1740
        %v1769 = vmul.f32 %v540, %v1740
        %v1770 = vmul.f32 %v545, %v1740
        %v1771 = vmul.f32 %v550, %v1740
        %v1772 = vmul.f32 %v555, %v1740
        %v1773 = vmul.f32 %v560, %v1740
        %v1774 = vmul.f32 %v565, %v1740
        %v1775 = vmul.f32 %v570, %v1740
        %v1776 = vmul.f32 %v575, %v1740
        %v1777 = vmul.f32 %v580, %v1740
        %v1778 = vmul.f32 %v585, %v1740
        %v1779 = vmul.f32 %v590, %v1740
        %v1780 = vmul.f32 %v595, %v1740
        %v1781 = vmul.f32 %v600, %v1740
        %v1782 = vmul.f32 %v605, %v1740
        %v1783 = vmul.f32 %v610, %v1740
        %v1784 = vmul.f32 %v615, %v1740
        %v1785 = vmul.f32 %v620, %v1740
        %v1786 = vmul.f32 %v625, %v1740
        %v1787 = vmul.f32 %v630, %v1740
        %v1788 = vmul.f32 %v635, %v1740
        %v1789 = vmul.f32 %v640, %v1740
        %v1790 = vmul.f32 %v645, %v1740
        %v1791 = vmul.f32 %v650, %v1740
        %v1792 = vmul.f32 %v655, %v1740
        %v1793 = vmul.f32 %v660, %v1740
        %v1794 = vmul.f32 %v665, %v1740
        %v1795 = vmul.f32 %v670, %v1740
        %v1796 = vmul.f32 %v675, %v1740
        %v1797 = vmul.f32 %v680, %v1740
        %v1798 = vmul.f32 %v685, %v1740
        %v1799 = vmul.f32 %v690, %v1740
        %v1800 = vmul.f32 %v695, %v1740
        %v1801 = vmul.f32 %v700, %v1740
        %v1802 = vmul.f32 %v705, %v1740
        %v1803 = vmul.f32 %v710, %v1740
        %v1804 = vmul.f32 %v715, %v1740
        %v1805 = vmul.f32 %v720, %v1740
        %v1806 = vmul.f32 %v725, %v1740
        %v1807 = vmul.f32 %v730, %v1740
        %v1808 = vmul.f32 %v735, %v1740
        %v1809 = vmul.f32 %v740, %v1740
        %v1810 = vmul.f32 %v745, %v1740
        %v1811 = vmul.f32 %v750, %v1740
        %v1812 = vmul.f32 %v755, %v1740
        %v1813 = vmul.f32 %v760, %v1740
        %v1814 = vmul.f32 %v765, %v1740
        %v1815 = vmul.f32 %v770, %v1740
        %v1816 = vmul.f32 %v775, %v1740
        %v1817 = vmul.f32 %v780, %v1740
        %v1818 = vmul.f32 %v785, %v1740
        %v1819 = vmul.f32 %v790, %v1740
        %v1820 = vmul.f32 %v795, %v1740
        %v1821 = vmul.f32 %v800, %v1740
        %v1822 = vmul.f32 %v805, %v1740
        %v1823 = vmul.f32 %v810, %v1740
        %v1824 = vmul.f32 %v815, %v1740
        %v1825 = vmul.f32 %v820, %v1740
        %v1826 = vmul.f32 %v825, %v1740
        %v1827 = vmul.f32 %v830, %v1740
        %v1828 = vmul.f32 %v835, %v1740
        %v1829 = vmul.f32 %v840, %v1740
        %v1830 = vmul.f32 %v845, %v1740
        %v1831 = vmul.f32 %v850, %v1740
        %v1832 = vmul.f32 %v855, %v1740
        %v1833 = vmul.f32 %v860, %v1740
        %v1834 = vmul.f32 %v865, %v1740
        %v1835 = vmul.f32 %v870, %v1740
        %v1836 = vmul.f32 %v875, %v1740
        %v1837 = vmul.f32 %v880, %v1740
        %v1838 = vmul.f32 %v885, %v1740
        %v1839 = vmul.f32 %v890, %v1740
        %v1840 = vmul.f32 %v895, %v1740
        %v1841 = vmul.f32 %v900, %v1740
        %v1842 = vmul.f32 %v905, %v1740
        %v1843 = vmul.f32 %v910, %v1740
        %v1844 = vmul.f32 %v915, %v1740
        %v1845 = vmul.f32 %v920, %v1740
        %vm1950 = vcmask 1045504
        %v1951 = vrot.slane %v1742, 2
        %v1952 = vrot.slane %v1743, 2
        %v1953 = vsel %vm1950, %v1951, %v1952
        %v1954 = vrot.slane %v1744, 2
        %v1955 = vsel %vm1950, %v1952, %v1954
        %v1956 = vrot.slane %v1745, 2
        %v1957 = vsel %vm1950, %v1954, %v1956
        %v1958 = vrot.slane %v1746, 2
        %v1959 = vrot.slane %v1747, 2
        %v1960 = vsel %vm1950, %v1958, %v1959
        %v1961 = vrot.slane %v1748, 2
        %v1962 = vsel %vm1950, %v1959, %v1961
        %v1963 = vrot.slane %v1749, 2
        %v1964 = vsel %vm1950, %v1961, %v1963
        %v1965 = vrot.slane %v1750, 2
        %v1966 = vrot.slane %v1751, 2
        %v1967 = vsel %vm1950, %v1965, %v1966
        %v1968 = vrot.slane %v1752, 2
        %v1969 = vsel %vm1950, %v1966, %v1968
        %v1970 = vrot.slane %v1753, 2
        %v1971 = vsel %vm1950, %v1968, %v1970
        %v1972 = vrot.slane %v1754, 2
        %v1973 = vrot.slane %v1755, 2
        %v1974 = vsel %vm1950, %v1972, %v1973
        %v1975 = vrot.slane %v1756, 2
        %v1976 = vsel %vm1950, %v1973, %v1975
        %v1977 = vrot.slane %v1757, 2
        %v1978 = vsel %vm1950, %v1975, %v1977
        %v1979 = vrot.slane %v1758, 2
        %v1980 = vrot.slane %v1759, 2
        %v1981 = vsel %vm1950, %v1979, %v1980
        %v1982 = vrot.slane %v1760, 2
        %v1983 = vsel %vm1950, %v1980, %v1982
        %v1984 = vrot.slane %v1761, 2
        %v1985 = vsel %vm1950, %v1982, %v1984
        %v1986 = vrot.slane %v1762, 2
        %v1987 = vrot.slane %v1763, 2
        %v1988 = vsel %vm1950, %v1986, %v1987
        %v1989 = vrot.slane %v1764, 2
        %v1990 = vsel %vm1950, %v1987, %v1989
        %v1991 = vrot.slane %v1765, 2
        %v1992 = vsel %vm1950, %v1989, %v1991
        %v1993 = vrot.slane %v1766, 2
        %v1994 = vrot.slane %v1767, 2
        %v1995 = vsel %vm1950, %v1993, %v1994
        %v1996 = vrot.slane %v1768, 2
        %v1997 = vsel %vm1950, %v1994, %v1996
        %v1998 = vrot.slane %v1769, 2
        %v1999 = vsel %vm1950, %v1996, %v1998
        %v2000 = vrot.slane %v1770, 2
        %v2001 = vrot.slane %v1771, 2
        %v2002 = vsel %vm1950, %v2000, %v2001
        %v2003 = vrot.slane %v1772, 2
        %v2004 = vsel %vm1950, %v2001, %v2003
        %v2005 = vrot.slane %v1773, 2
        %v2006 = vsel %vm1950, %v2003, %v2005
        %v2007 = vrot.slane %v1774, 2
        %v2008 = vrot.slane %v1775, 2
        %v2009 = vsel %vm1950, %v2007, %v2008
        %v2010 = vrot.slane %v1776, 2
        %v2011 = vsel %vm1950, %v2008, %v2010
        %v2012 = vrot.slane %v1777, 2
        %v2013 = vsel %vm1950, %v2010, %v2012
        %v2014 = vrot.slane %v1778, 2
        %v2015 = vrot.slane %v1779, 2
        %v2016 = vsel %vm1950, %v2014, %v2015
        %v2017 = vrot.slane %v1780, 2
        %v2018 = vsel %vm1950, %v2015, %v2017
        %v2019 = vrot.slane %v1781, 2
        %v2020 = vsel %vm1950, %v2017, %v2019
        %v2021 = vrot.slane %v1782, 2
        %v2022 = vrot.slane %v1783, 2
        %v2023 = vsel %vm1950, %v2021, %v2022
        %v2024 = vrot.slane %v1784, 2
        %v2025 = vsel %vm1950, %v2022, %v2024
        %v2026 = vrot.slane %v1785, 2
        %v2027 = vsel %vm1950, %v2024, %v2026
        %v2028 = vrot.slane %v1786, 2
        %v2029 = vrot.slane %v1787, 2
        %v2030 = vsel %vm1950, %v2028, %v2029
        %v2031 = vrot.slane %v1788, 2
        %v2032 = vsel %vm1950, %v2029, %v2031
        %v2033 = vrot.slane %v1789, 2
        %v2034 = vsel %vm1950, %v2031, %v2033
        %v2035 = vrot.slane %v1790, 2
        %v2036 = vrot.slane %v1791, 2
        %v2037 = vsel %vm1950, %v2035, %v2036
        %v2038 = vrot.slane %v1792, 2
        %v2039 = vsel %vm1950, %v2036, %v2038
        %v2040 = vrot.slane %v1793, 2
        %v2041 = vsel %vm1950, %v2038, %v2040
        %v2042 = vrot.slane %v1794, 2
        %v2043 = vrot.slane %v1795, 2
        %v2044 = vsel %vm1950, %v2042, %v2043
        %v2045 = vrot.slane %v1796, 2
        %v2046 = vsel %vm1950, %v2043, %v2045
        %v2047 = vrot.slane %v1797, 2
        %v2048 = vsel %vm1950, %v2045, %v2047
        %v2049 = vrot.slane %v1798, 2
        %v2050 = vrot.slane %v1799, 2
        %v2051 = vsel %vm1950, %v2049, %v2050
        %v2052 = vrot.slane %v1800, 2
        %v2053 = vsel %vm1950, %v2050, %v2052
        %v2054 = vrot.slane %v1801, 2
        %v2055 = vsel %vm1950, %v2052, %v2054
        %v2056 = vrot.slane %v1802, 2
        %v2057 = vrot.slane %v1803, 2
        %v2058 = vsel %vm1950, %v2056, %v2057
        %v2059 = vrot.slane %v1804, 2
        %v2060 = vsel %vm1950, %v2057, %v2059
        %v2061 = vrot.slane %v1805, 2
        %v2062 = vsel %vm1950, %v2059, %v2061
        %v2063 = vrot.slane %v1806, 2
        %v2064 = vrot.slane %v1807, 2
        %v2065 = vsel %vm1950, %v2063, %v2064
        %v2066 = vrot.slane %v1808, 2
        %v2067 = vsel %vm1950, %v2064, %v2066
        %v2068 = vrot.slane %v1809, 2
        %v2069 = vsel %vm1950, %v2066, %v2068
        %v2070 = vrot.slane %v1810, 2
        %v2071 = vrot.slane %v1811, 2
        %v2072 = vsel %vm1950, %v2070, %v2071
        %v2073 = vrot.slane %v1812, 2
        %v2074 = vsel %vm1950, %v2071, %v2073
        %v2075 = vrot.slane %v1813, 2
        %v2076 = vsel %vm1950, %v2073, %v2075
        %v2077 = vrot.slane %v1814, 2
        %v2078 = vrot.slane %v1815, 2
        %v2079 = vsel %vm1950, %v2077, %v2078
        %v2080 = vrot.slane %v1816, 2
        %v2081 = vsel %vm1950, %v2078, %v2080
        %v2082 = vrot.slane %v1817, 2
        %v2083 = vsel %vm1950, %v2080, %v2082
        %v2084 = vrot.slane %v1818, 2
        %v2085 = vrot.slane %v1819, 2
        %v2086 = vsel %vm1950, %v2084, %v2085
        %v2087 = vrot.slane %v1820, 2
        %v2088 = vsel %vm1950, %v2085, %v2087
        %v2089 = vrot.slane %v1821, 2
        %v2090 = vsel %vm1950, %v2087, %v2089
        %v2091 = vrot.slane %v1822, 2
        %v2092 = vrot.slane %v1823, 2
        %v2093 = vsel %vm1950, %v2091, %v2092
        %v2094 = vrot.slane %v1824, 2
        %v2095 = vsel %vm1950, %v2092, %v2094
        %v2096 = vrot.slane %v1825, 2
        %v2097 = vsel %vm1950, %v2094, %v2096
        %v2098 = vrot.slane %v1826, 2
        %v2099 = vrot.slane %v1827, 2
        %v2100 = vsel %vm1950, %v2098, %v2099
        %v2101 = vrot.slane %v1828, 2
        %v2102 = vsel %vm1950, %v2099, %v2101
        %v2103 = vrot.slane %v1829, 2
        %v2104 = vsel %vm1950, %v2101, %v2103
        %v2105 = vrot.slane %v1830, 2
        %v2106 = vrot.slane %v1831, 2
        %v2107 = vsel %vm1950, %v2105, %v2106
        %v2108 = vrot.slane %v1832, 2
        %v2109 = vsel %vm1950, %v2106, %v2108
        %v2110 = vrot.slane %v1833, 2
        %v2111 = vsel %vm1950, %v2108, %v2110
        %v2112 = vrot.slane %v1834, 2
        %v2113 = vrot.slane %v1835, 2
        %v2114 = vsel %vm1950, %v2112, %v2113
        %v2115 = vrot.slane %v1836, 2
        %v2116 = vsel %vm1950, %v2113, %v2115
        %v2117 = vrot.slane %v1837, 2
        %v2118 = vsel %vm1950, %v2115, %v2117
        %v2119 = vrot.slane %v1838, 2
        %v2120 = vrot.slane %v1839, 2
        %v2121 = vsel %vm1950, %v2119, %v2120
        %v2122 = vrot.slane %v1840, 2
        %v2123 = vsel %vm1950, %v2120, %v2122
        %v2124 = vrot.slane %v1841, 2
        %v2125 = vsel %vm1950, %v2122, %v2124
        %v2126 = vrot.slane %v1842, 2
        %v2127 = vrot.slane %v1843, 2
        %v2128 = vsel %vm1950, %v2126, %v2127
        %v2129 = vrot.slane %v1844, 2
        %v2130 = vsel %vm1950, %v2127, %v2129
        %v2131 = vrot.slane %v1845, 2
        %v2132 = vsel %vm1950, %v2129, %v2131
        %v2237 = vadd.f32 %v1633, %v1953
        %v2238 = vadd.f32 %v1634, %v1955
        %v2239 = vadd.f32 %v1635, %v1957
        %v2240 = vadd.f32 %v1636, %v1956
        %v2241 = vadd.f32 %v1637, %v1960
        %v2242 = vadd.f32 %v1638, %v1962
        %v2243 = vadd.f32 %v1639, %v1964
        %v2244 = vadd.f32 %v1640, %v1963
        %v2245 = vadd.f32 %v1641, %v1967
        %v2246 = vadd.f32 %v1642, %v1969
        %v2247 = vadd.f32 %v1643, %v1971
        %v2248 = vadd.f32 %v1644, %v1970
        %v2249 = vadd.f32 %v1645, %v1974
        %v2250 = vadd.f32 %v1646, %v1976
        %v2251 = vadd.f32 %v1647, %v1978
        %v2252 = vadd.f32 %v1648, %v1977
        %v2253 = vadd.f32 %v1649, %v1981
        %v2254 = vadd.f32 %v1650, %v1983
        %v2255 = vadd.f32 %v1651, %v1985
        %v2256 = vadd.f32 %v1652, %v1984
        %v2257 = vadd.f32 %v1653, %v1988
        %v2258 = vadd.f32 %v1654, %v1990
        %v2259 = vadd.f32 %v1655, %v1992
        %v2260 = vadd.f32 %v1656, %v1991
        %v2261 = vadd.f32 %v1657, %v1995
        %v2262 = vadd.f32 %v1658, %v1997
        %v2263 = vadd.f32 %v1659, %v1999
        %v2264 = vadd.f32 %v1660, %v1998
        %v2265 = vadd.f32 %v1661, %v2002
        %v2266 = vadd.f32 %v1662, %v2004
        %v2267 = vadd.f32 %v1663, %v2006
        %v2268 = vadd.f32 %v1664, %v2005
        %v2269 = vadd.f32 %v1665, %v2009
        %v2270 = vadd.f32 %v1666, %v2011
        %v2271 = vadd.f32 %v1667, %v2013
        %v2272 = vadd.f32 %v1668, %v2012
        %v2273 = vadd.f32 %v1669, %v2016
        %v2274 = vadd.f32 %v1670, %v2018
        %v2275 = vadd.f32 %v1671, %v2020
        %v2276 = vadd.f32 %v1672, %v2019
        %v2277 = vadd.f32 %v1673, %v2023
        %v2278 = vadd.f32 %v1674, %v2025
        %v2279 = vadd.f32 %v1675, %v2027
        %v2280 = vadd.f32 %v1676, %v2026
        %v2281 = vadd.f32 %v1677, %v2030
        %v2282 = vadd.f32 %v1678, %v2032
        %v2283 = vadd.f32 %v1679, %v2034
        %v2284 = vadd.f32 %v1680, %v2033
        %v2285 = vadd.f32 %v1681, %v2037
        %v2286 = vadd.f32 %v1682, %v2039
        %v2287 = vadd.f32 %v1683, %v2041
        %v2288 = vadd.f32 %v1684, %v2040
        %v2289 = vadd.f32 %v1685, %v2044
        %v2290 = vadd.f32 %v1686, %v2046
        %v2291 = vadd.f32 %v1687, %v2048
        %v2292 = vadd.f32 %v1688, %v2047
        %v2293 = vadd.f32 %v1689, %v2051
        %v2294 = vadd.f32 %v1690, %v2053
        %v2295 = vadd.f32 %v1691, %v2055
        %v2296 = vadd.f32 %v1692, %v2054
        %v2297 = vadd.f32 %v1693, %v2058
        %v2298 = vadd.f32 %v1694, %v2060
        %v2299 = vadd.f32 %v1695, %v2062
        %v2300 = vadd.f32 %v1696, %v2061
        %v2301 = vadd.f32 %v1697, %v2065
        %v2302 = vadd.f32 %v1698, %v2067
        %v2303 = vadd.f32 %v1699, %v2069
        %v2304 = vadd.f32 %v1700, %v2068
        %v2305 = vadd.f32 %v1701, %v2072
        %v2306 = vadd.f32 %v1702, %v2074
        %v2307 = vadd.f32 %v1703, %v2076
        %v2308 = vadd.f32 %v1704, %v2075
        %v2309 = vadd.f32 %v1705, %v2079
        %v2310 = vadd.f32 %v1706, %v2081
        %v2311 = vadd.f32 %v1707, %v2083
        %v2312 = vadd.f32 %v1708, %v2082
        %v2313 = vadd.f32 %v1709, %v2086
        %v2314 = vadd.f32 %v1710, %v2088
        %v2315 = vadd.f32 %v1711, %v2090
        %v2316 = vadd.f32 %v1712, %v2089
        %v2317 = vadd.f32 %v1713, %v2093
        %v2318 = vadd.f32 %v1714, %v2095
        %v2319 = vadd.f32 %v1715, %v2097
        %v2320 = vadd.f32 %v1716, %v2096
        %v2321 = vadd.f32 %v1717, %v2100
        %v2322 = vadd.f32 %v1718, %v2102
        %v2323 = vadd.f32 %v1719, %v2104
        %v2324 = vadd.f32 %v1720, %v2103
        %v2325 = vadd.f32 %v1721, %v2107
        %v2326 = vadd.f32 %v1722, %v2109
        %v2327 = vadd.f32 %v1723, %v2111
        %v2328 = vadd.f32 %v1724, %v2110
        %v2329 = vadd.f32 %v1725, %v2114
        %v2330 = vadd.f32 %v1726, %v2116
        %v2331 = vadd.f32 %v1727, %v2118
        %v2332 = vadd.f32 %v1728, %v2117
        %v2333 = vadd.f32 %v1729, %v2121
        %v2334 = vadd.f32 %v1730, %v2123
        %v2335 = vadd.f32 %v1731, %v2125
        %v2336 = vadd.f32 %v1732, %v2124
        %v2337 = vadd.f32 %v1733, %v2128
        %v2338 = vadd.f32 %v1734, %v2130
        %v2339 = vadd.f32 %v1735, %v2132
        %v2340 = vadd.f32 %v1736, %v2131
        %s2341 = scalar_lea.vmem [#allocation2], 3
        %v2342 = vld [vmem:[%s2341] sm:$0x1]
        %2344 = vset.pattern.permute.xlu0 0
        %2345 = vperm.xlu0 %2344, %v393
        %v2346 = vpop.permute.xlu0 %2345
        %2349 = vset.pattern.permute.xlu0 0
        %2350 = vperm.xlu0 %2349, %v394
        %v2351 = vpop.permute.xlu0 %2350
        %2354 = vset.pattern.permute.xlu0 0
        %2355 = vperm.xlu0 %2354, %v395
        %v2356 = vpop.permute.xlu0 %2355
        %2359 = vset.pattern.permute.xlu0 0
        %2360 = vperm.xlu0 %2359, %v396
        %v2361 = vpop.permute.xlu0 %2360
        %v2364 = vperm.slane %v2342, 0
        %v2366 = vmul.f32 %v425, %v2364
        %v2367 = vmul.f32 %v430, %v2364
        %v2368 = vmul.f32 %v435, %v2364
        %v2369 = vmul.f32 %v440, %v2364
        %v2370 = vmul.f32 %v445, %v2364
        %v2371 = vmul.f32 %v450, %v2364
        %v2372 = vmul.f32 %v455, %v2364
        %v2373 = vmul.f32 %v460, %v2364
        %v2374 = vmul.f32 %v465, %v2364
        %v2375 = vmul.f32 %v470, %v2364
        %v2376 = vmul.f32 %v475, %v2364
        %v2377 = vmul.f32 %v480, %v2364
        %v2378 = vmul.f32 %v485, %v2364
        %v2379 = vmul.f32 %v490, %v2364
        %v2380 = vmul.f32 %v495, %v2364
        %v2381 = vmul.f32 %v500, %v2364
        %v2382 = vmul.f32 %v505, %v2364
        %v2383 = vmul.f32 %v510, %v2364
        %v2384 = vmul.f32 %v515, %v2364
        %v2385 = vmul.f32 %v520, %v2364
        %v2386 = vmul.f32 %v525, %v2364
        %v2387 = vmul.f32 %v530, %v2364
        %v2388 = vmul.f32 %v535, %v2364
        %v2389 = vmul.f32 %v540, %v2364
        %v2390 = vmul.f32 %v545, %v2364
        %v2391 = vmul.f32 %v550, %v2364
        %v2392 = vmul.f32 %v555, %v2364
        %v2393 = vmul.f32 %v560, %v2364
        %v2394 = vmul.f32 %v565, %v2364
        %v2395 = vmul.f32 %v570, %v2364
        %v2396 = vmul.f32 %v575, %v2364
        %v2397 = vmul.f32 %v580, %v2364
        %v2398 = vmul.f32 %v585, %v2364
        %v2399 = vmul.f32 %v590, %v2364
        %v2400 = vmul.f32 %v595, %v2364
        %v2401 = vmul.f32 %v600, %v2364
        %v2402 = vmul.f32 %v605, %v2364
        %v2403 = vmul.f32 %v610, %v2364
        %v2404 = vmul.f32 %v615, %v2364
        %v2405 = vmul.f32 %v620, %v2364
        %v2406 = vmul.f32 %v625, %v2364
        %v2407 = vmul.f32 %v630, %v2364
        %v2408 = vmul.f32 %v635, %v2364
        %v2409 = vmul.f32 %v640, %v2364
        %v2410 = vmul.f32 %v645, %v2364
        %v2411 = vmul.f32 %v650, %v2364
        %v2412 = vmul.f32 %v655, %v2364
        %v2413 = vmul.f32 %v660, %v2364
        %v2414 = vmul.f32 %v665, %v2364
        %v2415 = vmul.f32 %v670, %v2364
        %v2416 = vmul.f32 %v675, %v2364
        %v2417 = vmul.f32 %v680, %v2364
        %v2418 = vmul.f32 %v685, %v2364
        %v2419 = vmul.f32 %v690, %v2364
        %v2420 = vmul.f32 %v695, %v2364
        %v2421 = vmul.f32 %v700, %v2364
        %v2422 = vmul.f32 %v705, %v2364
        %v2423 = vmul.f32 %v710, %v2364
        %v2424 = vmul.f32 %v715, %v2364
        %v2425 = vmul.f32 %v720, %v2364
        %v2426 = vmul.f32 %v725, %v2364
        %v2427 = vmul.f32 %v730, %v2364
        %v2428 = vmul.f32 %v735, %v2364
        %v2429 = vmul.f32 %v740, %v2364
        %v2430 = vmul.f32 %v745, %v2364
        %v2431 = vmul.f32 %v750, %v2364
        %v2432 = vmul.f32 %v755, %v2364
        %v2433 = vmul.f32 %v760, %v2364
        %v2434 = vmul.f32 %v765, %v2364
        %v2435 = vmul.f32 %v770, %v2364
        %v2436 = vmul.f32 %v775, %v2364
        %v2437 = vmul.f32 %v780, %v2364
        %v2438 = vmul.f32 %v785, %v2364
        %v2439 = vmul.f32 %v790, %v2364
        %v2440 = vmul.f32 %v795, %v2364
        %v2441 = vmul.f32 %v800, %v2364
        %v2442 = vmul.f32 %v805, %v2364
        %v2443 = vmul.f32 %v810, %v2364
        %v2444 = vmul.f32 %v815, %v2364
        %v2445 = vmul.f32 %v820, %v2364
        %v2446 = vmul.f32 %v825, %v2364
        %v2447 = vmul.f32 %v830, %v2364
        %v2448 = vmul.f32 %v835, %v2364
        %v2449 = vmul.f32 %v840, %v2364
        %v2450 = vmul.f32 %v845, %v2364
        %v2451 = vmul.f32 %v850, %v2364
        %v2452 = vmul.f32 %v855, %v2364
        %v2453 = vmul.f32 %v860, %v2364
        %v2454 = vmul.f32 %v865, %v2364
        %v2455 = vmul.f32 %v870, %v2364
        %v2456 = vmul.f32 %v875, %v2364
        %v2457 = vmul.f32 %v880, %v2364
        %v2458 = vmul.f32 %v885, %v2364
        %v2459 = vmul.f32 %v890, %v2364
        %v2460 = vmul.f32 %v895, %v2364
        %v2461 = vmul.f32 %v900, %v2364
        %v2462 = vmul.f32 %v905, %v2364
        %v2463 = vmul.f32 %v910, %v2364
        %v2464 = vmul.f32 %v915, %v2364
        %v2465 = vmul.f32 %v920, %v2364
        %v2466 = vmul.f32 %v2346, %v2364
        %v2467 = vmul.f32 %v2351, %v2364
        %v2468 = vmul.f32 %v2356, %v2364
        %v2469 = vmul.f32 %v2361, %v2364
        %v2470 = vadd.f32 %v2237, %v2366
        %v2471 = vadd.f32 %v2238, %v2367
        %v2472 = vadd.f32 %v2239, %v2368
        %v2473 = vadd.f32 %v2240, %v2369
        %v2474 = vadd.f32 %v2241, %v2370
        %v2475 = vadd.f32 %v2242, %v2371
        %v2476 = vadd.f32 %v2243, %v2372
        %v2477 = vadd.f32 %v2244, %v2373
        %v2478 = vadd.f32 %v2245, %v2374
        %v2479 = vadd.f32 %v2246, %v2375
        %v2480 = vadd.f32 %v2247, %v2376
        %v2481 = vadd.f32 %v2248, %v2377
        %v2482 = vadd.f32 %v2249, %v2378
        %v2483 = vadd.f32 %v2250, %v2379
        %v2484 = vadd.f32 %v2251, %v2380
        %v2485 = vadd.f32 %v2252, %v2381
        %v2486 = vadd.f32 %v2253, %v2382
        %v2487 = vadd.f32 %v2254, %v2383
        %v2488 = vadd.f32 %v2255, %v2384
        %v2489 = vadd.f32 %v2256, %v2385
        %v2490 = vadd.f32 %v2257, %v2386
        %v2491 = vadd.f32 %v2258, %v2387
        %v2492 = vadd.f32 %v2259, %v2388
        %v2493 = vadd.f32 %v2260, %v2389
        %v2494 = vadd.f32 %v2261, %v2390
        %v2495 = vadd.f32 %v2262, %v2391
        %v2496 = vadd.f32 %v2263, %v2392
        %v2497 = vadd.f32 %v2264, %v2393
        %v2498 = vadd.f32 %v2265, %v2394
        %v2499 = vadd.f32 %v2266, %v2395
        %v2500 = vadd.f32 %v2267, %v2396
        %v2501 = vadd.f32 %v2268, %v2397
        %v2502 = vadd.f32 %v2269, %v2398
        %v2503 = vadd.f32 %v2270, %v2399
        %v2504 = vadd.f32 %v2271, %v2400
        %v2505 = vadd.f32 %v2272, %v2401
        %v2506 = vadd.f32 %v2273, %v2402
        %v2507 = vadd.f32 %v2274, %v2403
        %v2508 = vadd.f32 %v2275, %v2404
        %v2509 = vadd.f32 %v2276, %v2405
        %v2510 = vadd.f32 %v2277, %v2406
        %v2511 = vadd.f32 %v2278, %v2407
        %v2512 = vadd.f32 %v2279, %v2408
        %v2513 = vadd.f32 %v2280, %v2409
        %v2514 = vadd.f32 %v2281, %v2410
        %v2515 = vadd.f32 %v2282, %v2411
        %v2516 = vadd.f32 %v2283, %v2412
        %v2517 = vadd.f32 %v2284, %v2413
        %v2518 = vadd.f32 %v2285, %v2414
        %v2519 = vadd.f32 %v2286, %v2415
        %v2520 = vadd.f32 %v2287, %v2416
        %v2521 = vadd.f32 %v2288, %v2417
        %v2522 = vadd.f32 %v2289, %v2418
        %v2523 = vadd.f32 %v2290, %v2419
        %v2524 = vadd.f32 %v2291, %v2420
        %v2525 = vadd.f32 %v2292, %v2421
        %v2526 = vadd.f32 %v2293, %v2422
        %v2527 = vadd.f32 %v2294, %v2423
        %v2528 = vadd.f32 %v2295, %v2424
        %v2529 = vadd.f32 %v2296, %v2425
        %v2530 = vadd.f32 %v2297, %v2426
        %v2531 = vadd.f32 %v2298, %v2427
        %v2532 = vadd.f32 %v2299, %v2428
        %v2533 = vadd.f32 %v2300, %v2429
        %v2534 = vadd.f32 %v2301, %v2430
        %v2535 = vadd.f32 %v2302, %v2431
        %v2536 = vadd.f32 %v2303, %v2432
        %v2537 = vadd.f32 %v2304, %v2433
        %v2538 = vadd.f32 %v2305, %v2434
        %v2539 = vadd.f32 %v2306, %v2435
        %v2540 = vadd.f32 %v2307, %v2436
        %v2541 = vadd.f32 %v2308, %v2437
        %v2542 = vadd.f32 %v2309, %v2438
        %v2543 = vadd.f32 %v2310, %v2439
        %v2544 = vadd.f32 %v2311, %v2440
        %v2545 = vadd.f32 %v2312, %v2441
        %v2546 = vadd.f32 %v2313, %v2442
        %v2547 = vadd.f32 %v2314, %v2443
        %v2548 = vadd.f32 %v2315, %v2444
        %v2549 = vadd.f32 %v2316, %v2445
        %v2550 = vadd.f32 %v2317, %v2446
        %v2551 = vadd.f32 %v2318, %v2447
        %v2552 = vadd.f32 %v2319, %v2448
        %v2553 = vadd.f32 %v2320, %v2449
        %v2554 = vadd.f32 %v2321, %v2450
        %v2555 = vadd.f32 %v2322, %v2451
        %v2556 = vadd.f32 %v2323, %v2452
        %v2557 = vadd.f32 %v2324, %v2453
        %v2558 = vadd.f32 %v2325, %v2454
        %v2559 = vadd.f32 %v2326, %v2455
        %v2560 = vadd.f32 %v2327, %v2456
        %v2561 = vadd.f32 %v2328, %v2457
        %v2562 = vadd.f32 %v2329, %v2458
        %v2563 = vadd.f32 %v2330, %v2459
        %v2564 = vadd.f32 %v2331, %v2460
        %v2565 = vadd.f32 %v2332, %v2461
        %v2566 = vadd.f32 %v2333, %v2462
        %v2567 = vadd.f32 %v2334, %v2463
        %v2568 = vadd.f32 %v2335, %v2464
        %v2569 = vadd.f32 %v2336, %v2465
        %v2570 = vadd.f32 %v2337, %v2466
        %v2571 = vadd.f32 %v2338, %v2467
        %v2572 = vadd.f32 %v2339, %v2468
        %v2573 = vadd.f32 %v2340, %v2469
        %s2574 = scalar_lea.vmem [#allocation2], 4
        %v2575 = vld [vmem:[%s2574] sm:$0x1]
        %v2577 = vperm.slane %v2575, 0
        %v2579 = vmul.f32 %v425, %v2577
        %v2580 = vmul.f32 %v430, %v2577
        %v2581 = vmul.f32 %v435, %v2577
        %v2582 = vmul.f32 %v440, %v2577
        %v2583 = vmul.f32 %v445, %v2577
        %v2584 = vmul.f32 %v450, %v2577
        %v2585 = vmul.f32 %v455, %v2577
        %v2586 = vmul.f32 %v460, %v2577
        %v2587 = vmul.f32 %v465, %v2577
        %v2588 = vmul.f32 %v470, %v2577
        %v2589 = vmul.f32 %v475, %v2577
        %v2590 = vmul.f32 %v480, %v2577
        %v2591 = vmul.f32 %v485, %v2577
        %v2592 = vmul.f32 %v490, %v2577
        %v2593 = vmul.f32 %v495, %v2577
        %v2594 = vmul.f32 %v500, %v2577
        %v2595 = vmul.f32 %v505, %v2577
        %v2596 = vmul.f32 %v510, %v2577
        %v2597 = vmul.f32 %v515, %v2577
        %v2598 = vmul.f32 %v520, %v2577
        %v2599 = vmul.f32 %v525, %v2577
        %v2600 = vmul.f32 %v530, %v2577
        %v2601 = vmul.f32 %v535, %v2577
        %v2602 = vmul.f32 %v540, %v2577
        %v2603 = vmul.f32 %v545, %v2577
        %v2604 = vmul.f32 %v550, %v2577
        %v2605 = vmul.f32 %v555, %v2577
        %v2606 = vmul.f32 %v560, %v2577
        %v2607 = vmul.f32 %v565, %v2577
        %v2608 = vmul.f32 %v570, %v2577
        %v2609 = vmul.f32 %v575, %v2577
        %v2610 = vmul.f32 %v580, %v2577
        %v2611 = vmul.f32 %v585, %v2577
        %v2612 = vmul.f32 %v590, %v2577
        %v2613 = vmul.f32 %v595, %v2577
        %v2614 = vmul.f32 %v600, %v2577
        %v2615 = vmul.f32 %v605, %v2577
        %v2616 = vmul.f32 %v610, %v2577
        %v2617 = vmul.f32 %v615, %v2577
        %v2618 = vmul.f32 %v620, %v2577
        %v2619 = vmul.f32 %v625, %v2577
        %v2620 = vmul.f32 %v630, %v2577
        %v2621 = vmul.f32 %v635, %v2577
        %v2622 = vmul.f32 %v640, %v2577
        %v2623 = vmul.f32 %v645, %v2577
        %v2624 = vmul.f32 %v650, %v2577
        %v2625 = vmul.f32 %v655, %v2577
        %v2626 = vmul.f32 %v660, %v2577
        %v2627 = vmul.f32 %v665, %v2577
        %v2628 = vmul.f32 %v670, %v2577
        %v2629 = vmul.f32 %v675, %v2577
        %v2630 = vmul.f32 %v680, %v2577
        %v2631 = vmul.f32 %v685, %v2577
        %v2632 = vmul.f32 %v690, %v2577
        %v2633 = vmul.f32 %v695, %v2577
        %v2634 = vmul.f32 %v700, %v2577
        %v2635 = vmul.f32 %v705, %v2577
        %v2636 = vmul.f32 %v710, %v2577
        %v2637 = vmul.f32 %v715, %v2577
        %v2638 = vmul.f32 %v720, %v2577
        %v2639 = vmul.f32 %v725, %v2577
        %v2640 = vmul.f32 %v730, %v2577
        %v2641 = vmul.f32 %v735, %v2577
        %v2642 = vmul.f32 %v740, %v2577
        %v2643 = vmul.f32 %v745, %v2577
        %v2644 = vmul.f32 %v750, %v2577
        %v2645 = vmul.f32 %v755, %v2577
        %v2646 = vmul.f32 %v760, %v2577
        %v2647 = vmul.f32 %v765, %v2577
        %v2648 = vmul.f32 %v770, %v2577
        %v2649 = vmul.f32 %v775, %v2577
        %v2650 = vmul.f32 %v780, %v2577
        %v2651 = vmul.f32 %v785, %v2577
        %v2652 = vmul.f32 %v790, %v2577
        %v2653 = vmul.f32 %v795, %v2577
        %v2654 = vmul.f32 %v800, %v2577
        %v2655 = vmul.f32 %v805, %v2577
        %v2656 = vmul.f32 %v810, %v2577
        %v2657 = vmul.f32 %v815, %v2577
        %v2658 = vmul.f32 %v820, %v2577
        %v2659 = vmul.f32 %v825, %v2577
        %v2660 = vmul.f32 %v830, %v2577
        %v2661 = vmul.f32 %v835, %v2577
        %v2662 = vmul.f32 %v840, %v2577
        %v2663 = vmul.f32 %v845, %v2577
        %v2664 = vmul.f32 %v850, %v2577
        %v2665 = vmul.f32 %v855, %v2577
        %v2666 = vmul.f32 %v860, %v2577
        %v2667 = vmul.f32 %v865, %v2577
        %v2668 = vmul.f32 %v870, %v2577
        %v2669 = vmul.f32 %v875, %v2577
        %v2670 = vmul.f32 %v880, %v2577
        %v2671 = vmul.f32 %v885, %v2577
        %v2672 = vmul.f32 %v890, %v2577
        %v2673 = vmul.f32 %v895, %v2577
        %v2674 = vmul.f32 %v900, %v2577
        %v2675 = vmul.f32 %v905, %v2577
        %v2676 = vmul.f32 %v910, %v2577
        %v2677 = vmul.f32 %v915, %v2577
        %v2678 = vmul.f32 %v920, %v2577
        %v2679 = vmul.f32 %v2346, %v2577
        %v2680 = vmul.f32 %v2351, %v2577
        %v2681 = vmul.f32 %v2356, %v2577
        %v2682 = vmul.f32 %v2361, %v2577
        %v2787 = vrot.slane %v2579, 1
        %v2788 = vrot.slane %v2580, 1
        %v2789 = vsel %vm1346, %v2787, %v2788
        %v2790 = vrot.slane %v2581, 1
        %v2791 = vsel %vm1346, %v2788, %v2790
        %v2792 = vrot.slane %v2582, 1
        %v2793 = vsel %vm1346, %v2790, %v2792
        %v2794 = vrot.slane %v2583, 1
        %v2795 = vrot.slane %v2584, 1
        %v2796 = vsel %vm1346, %v2794, %v2795
        %v2797 = vrot.slane %v2585, 1
        %v2798 = vsel %vm1346, %v2795, %v2797
        %v2799 = vrot.slane %v2586, 1
        %v2800 = vsel %vm1346, %v2797, %v2799
        %v2801 = vrot.slane %v2587, 1
        %v2802 = vrot.slane %v2588, 1
        %v2803 = vsel %vm1346, %v2801, %v2802
        %v2804 = vrot.slane %v2589, 1
        %v2805 = vsel %vm1346, %v2802, %v2804
        %v2806 = vrot.slane %v2590, 1
        %v2807 = vsel %vm1346, %v2804, %v2806
        %v2808 = vrot.slane %v2591, 1
        %v2809 = vrot.slane %v2592, 1
        %v2810 = vsel %vm1346, %v2808, %v2809
        %v2811 = vrot.slane %v2593, 1
        %v2812 = vsel %vm1346, %v2809, %v2811
        %v2813 = vrot.slane %v2594, 1
        %v2814 = vsel %vm1346, %v2811, %v2813
        %v2815 = vrot.slane %v2595, 1
        %v2816 = vrot.slane %v2596, 1
        %v2817 = vsel %vm1346, %v2815, %v2816
        %v2818 = vrot.slane %v2597, 1
        %v2819 = vsel %vm1346, %v2816, %v2818
        %v2820 = vrot.slane %v2598, 1
        %v2821 = vsel %vm1346, %v2818, %v2820
        %v2822 = vrot.slane %v2599, 1
        %v2823 = vrot.slane %v2600, 1
        %v2824 = vsel %vm1346, %v2822, %v2823
        %v2825 = vrot.slane %v2601, 1
        %v2826 = vsel %vm1346, %v2823, %v2825
        %v2827 = vrot.slane %v2602, 1
        %v2828 = vsel %vm1346, %v2825, %v2827
        %v2829 = vrot.slane %v2603, 1
        %v2830 = vrot.slane %v2604, 1
        %v2831 = vsel %vm1346, %v2829, %v2830
        %v2832 = vrot.slane %v2605, 1
        %v2833 = vsel %vm1346, %v2830, %v2832
        %v2834 = vrot.slane %v2606, 1
        %v2835 = vsel %vm1346, %v2832, %v2834
        %v2836 = vrot.slane %v2607, 1
        %v2837 = vrot.slane %v2608, 1
        %v2838 = vsel %vm1346, %v2836, %v2837
        %v2839 = vrot.slane %v2609, 1
        %v2840 = vsel %vm1346, %v2837, %v2839
        %v2841 = vrot.slane %v2610, 1
        %v2842 = vsel %vm1346, %v2839, %v2841
        %v2843 = vrot.slane %v2611, 1
        %v2844 = vrot.slane %v2612, 1
        %v2845 = vsel %vm1346, %v2843, %v2844
        %v2846 = vrot.slane %v2613, 1
        %v2847 = vsel %vm1346, %v2844, %v2846
        %v2848 = vrot.slane %v2614, 1
        %v2849 = vsel %vm1346, %v2846, %v2848
        %v2850 = vrot.slane %v2615, 1
        %v2851 = vrot.slane %v2616, 1
        %v2852 = vsel %vm1346, %v2850, %v2851
        %v2853 = vrot.slane %v2617, 1
        %v2854 = vsel %vm1346, %v2851, %v2853
        %v2855 = vrot.slane %v2618, 1
        %v2856 = vsel %vm1346, %v2853, %v2855
        %v2857 = vrot.slane %v2619, 1
        %v2858 = vrot.slane %v2620, 1
        %v2859 = vsel %vm1346, %v2857, %v2858
        %v2860 = vrot.slane %v2621, 1
        %v2861 = vsel %vm1346, %v2858, %v2860
        %v2862 = vrot.slane %v2622, 1
        %v2863 = vsel %vm1346, %v2860, %v2862
        %v2864 = vrot.slane %v2623, 1
        %v2865 = vrot.slane %v2624, 1
        %v2866 = vsel %vm1346, %v2864, %v2865
        %v2867 = vrot.slane %v2625, 1
        %v2868 = vsel %vm1346, %v2865, %v2867
        %v2869 = vrot.slane %v2626, 1
        %v2870 = vsel %vm1346, %v2867, %v2869
        %v2871 = vrot.slane %v2627, 1
        %v2872 = vrot.slane %v2628, 1
        %v2873 = vsel %vm1346, %v2871, %v2872
        %v2874 = vrot.slane %v2629, 1
        %v2875 = vsel %vm1346, %v2872, %v2874
        %v2876 = vrot.slane %v2630, 1
        %v2877 = vsel %vm1346, %v2874, %v2876
        %v2878 = vrot.slane %v2631, 1
        %v2879 = vrot.slane %v2632, 1
        %v2880 = vsel %vm1346, %v2878, %v2879
        %v2881 = vrot.slane %v2633, 1
        %v2882 = vsel %vm1346, %v2879, %v2881
        %v2883 = vrot.slane %v2634, 1
        %v2884 = vsel %vm1346, %v2881, %v2883
        %v2885 = vrot.slane %v2635, 1
        %v2886 = vrot.slane %v2636, 1
        %v2887 = vsel %vm1346, %v2885, %v2886
        %v2888 = vrot.slane %v2637, 1
        %v2889 = vsel %vm1346, %v2886, %v2888
        %v2890 = vrot.slane %v2638, 1
        %v2891 = vsel %vm1346, %v2888, %v2890
        %v2892 = vrot.slane %v2639, 1
        %v2893 = vrot.slane %v2640, 1
        %v2894 = vsel %vm1346, %v2892, %v2893
        %v2895 = vrot.slane %v2641, 1
        %v2896 = vsel %vm1346, %v2893, %v2895
        %v2897 = vrot.slane %v2642, 1
        %v2898 = vsel %vm1346, %v2895, %v2897
        %v2899 = vrot.slane %v2643, 1
        %v2900 = vrot.slane %v2644, 1
        %v2901 = vsel %vm1346, %v2899, %v2900
        %v2902 = vrot.slane %v2645, 1
        %v2903 = vsel %vm1346, %v2900, %v2902
        %v2904 = vrot.slane %v2646, 1
        %v2905 = vsel %vm1346, %v2902, %v2904
        %v2906 = vrot.slane %v2647, 1
        %v2907 = vrot.slane %v2648, 1
        %v2908 = vsel %vm1346, %v2906, %v2907
        %v2909 = vrot.slane %v2649, 1
        %v2910 = vsel %vm1346, %v2907, %v2909
        %v2911 = vrot.slane %v2650, 1
        %v2912 = vsel %vm1346, %v2909, %v2911
        %v2913 = vrot.slane %v2651, 1
        %v2914 = vrot.slane %v2652, 1
        %v2915 = vsel %vm1346, %v2913, %v2914
        %v2916 = vrot.slane %v2653, 1
        %v2917 = vsel %vm1346, %v2914, %v2916
        %v2918 = vrot.slane %v2654, 1
        %v2919 = vsel %vm1346, %v2916, %v2918
        %v2920 = vrot.slane %v2655, 1
        %v2921 = vrot.slane %v2656, 1
        %v2922 = vsel %vm1346, %v2920, %v2921
        %v2923 = vrot.slane %v2657, 1
        %v2924 = vsel %vm1346, %v2921, %v2923
        %v2925 = vrot.slane %v2658, 1
        %v2926 = vsel %vm1346, %v2923, %v2925
        %v2927 = vrot.slane %v2659, 1
        %v2928 = vrot.slane %v2660, 1
        %v2929 = vsel %vm1346, %v2927, %v2928
        %v2930 = vrot.slane %v2661, 1
        %v2931 = vsel %vm1346, %v2928, %v2930
        %v2932 = vrot.slane %v2662, 1
        %v2933 = vsel %vm1346, %v2930, %v2932
        %v2934 = vrot.slane %v2663, 1
        %v2935 = vrot.slane %v2664, 1
        %v2936 = vsel %vm1346, %v2934, %v2935
        %v2937 = vrot.slane %v2665, 1
        %v2938 = vsel %vm1346, %v2935, %v2937
        %v2939 = vrot.slane %v2666, 1
        %v2940 = vsel %vm1346, %v2937, %v2939
        %v2941 = vrot.slane %v2667, 1
        %v2942 = vrot.slane %v2668, 1
        %v2943 = vsel %vm1346, %v2941, %v2942
        %v2944 = vrot.slane %v2669, 1
        %v2945 = vsel %vm1346, %v2942, %v2944
        %v2946 = vrot.slane %v2670, 1
        %v2947 = vsel %vm1346, %v2944, %v2946
        %v2948 = vrot.slane %v2671, 1
        %v2949 = vrot.slane %v2672, 1
        %v2950 = vsel %vm1346, %v2948, %v2949
        %v2951 = vrot.slane %v2673, 1
        %v2952 = vsel %vm1346, %v2949, %v2951
        %v2953 = vrot.slane %v2674, 1
        %v2954 = vsel %vm1346, %v2951, %v2953
        %v2955 = vrot.slane %v2675, 1
        %v2956 = vrot.slane %v2676, 1
        %v2957 = vsel %vm1346, %v2955, %v2956
        %v2958 = vrot.slane %v2677, 1
        %v2959 = vsel %vm1346, %v2956, %v2958
        %v2960 = vrot.slane %v2678, 1
        %v2961 = vsel %vm1346, %v2958, %v2960
        %v2962 = vrot.slane %v2679, 1
        %v2963 = vrot.slane %v2680, 1
        %v2964 = vsel %vm1346, %v2962, %v2963
        %v2965 = vrot.slane %v2681, 1
        %v2966 = vsel %vm1346, %v2963, %v2965
        %v2967 = vrot.slane %v2682, 1
        %v2968 = vsel %vm1346, %v2965, %v2967
        %v3073 = vadd.f32 %v2470, %v2789
        %v3074 = vadd.f32 %v2471, %v2791
        %v3075 = vadd.f32 %v2472, %v2793
        %v3076 = vadd.f32 %v2473, %v2792
        %v3077 = vadd.f32 %v2474, %v2796
        %v3078 = vadd.f32 %v2475, %v2798
        %v3079 = vadd.f32 %v2476, %v2800
        %v3080 = vadd.f32 %v2477, %v2799
        %v3081 = vadd.f32 %v2478, %v2803
        %v3082 = vadd.f32 %v2479, %v2805
        %v3083 = vadd.f32 %v2480, %v2807
        %v3084 = vadd.f32 %v2481, %v2806
        %v3085 = vadd.f32 %v2482, %v2810
        %v3086 = vadd.f32 %v2483, %v2812
        %v3087 = vadd.f32 %v2484, %v2814
        %v3088 = vadd.f32 %v2485, %v2813
        %v3089 = vadd.f32 %v2486, %v2817
        %v3090 = vadd.f32 %v2487, %v2819
        %v3091 = vadd.f32 %v2488, %v2821
        %v3092 = vadd.f32 %v2489, %v2820
        %v3093 = vadd.f32 %v2490, %v2824
        %v3094 = vadd.f32 %v2491, %v2826
        %v3095 = vadd.f32 %v2492, %v2828
        %v3096 = vadd.f32 %v2493, %v2827
        %v3097 = vadd.f32 %v2494, %v2831
        %v3098 = vadd.f32 %v2495, %v2833
        %v3099 = vadd.f32 %v2496, %v2835
        %v3100 = vadd.f32 %v2497, %v2834
        %v3101 = vadd.f32 %v2498, %v2838
        %v3102 = vadd.f32 %v2499, %v2840
        %v3103 = vadd.f32 %v2500, %v2842
        %v3104 = vadd.f32 %v2501, %v2841
        %v3105 = vadd.f32 %v2502, %v2845
        %v3106 = vadd.f32 %v2503, %v2847
        %v3107 = vadd.f32 %v2504, %v2849
        %v3108 = vadd.f32 %v2505, %v2848
        %v3109 = vadd.f32 %v2506, %v2852
        %v3110 = vadd.f32 %v2507, %v2854
        %v3111 = vadd.f32 %v2508, %v2856
        %v3112 = vadd.f32 %v2509, %v2855
        %v3113 = vadd.f32 %v2510, %v2859
        %v3114 = vadd.f32 %v2511, %v2861
        %v3115 = vadd.f32 %v2512, %v2863
        %v3116 = vadd.f32 %v2513, %v2862
        %v3117 = vadd.f32 %v2514, %v2866
        %v3118 = vadd.f32 %v2515, %v2868
        %v3119 = vadd.f32 %v2516, %v2870
        %v3120 = vadd.f32 %v2517, %v2869
        %v3121 = vadd.f32 %v2518, %v2873
        %v3122 = vadd.f32 %v2519, %v2875
        %v3123 = vadd.f32 %v2520, %v2877
        %v3124 = vadd.f32 %v2521, %v2876
        %v3125 = vadd.f32 %v2522, %v2880
        %v3126 = vadd.f32 %v2523, %v2882
        %v3127 = vadd.f32 %v2524, %v2884
        %v3128 = vadd.f32 %v2525, %v2883
        %v3129 = vadd.f32 %v2526, %v2887
        %v3130 = vadd.f32 %v2527, %v2889
        %v3131 = vadd.f32 %v2528, %v2891
        %v3132 = vadd.f32 %v2529, %v2890
        %v3133 = vadd.f32 %v2530, %v2894
        %v3134 = vadd.f32 %v2531, %v2896
        %v3135 = vadd.f32 %v2532, %v2898
        %v3136 = vadd.f32 %v2533, %v2897
        %v3137 = vadd.f32 %v2534, %v2901
        %v3138 = vadd.f32 %v2535, %v2903
        %v3139 = vadd.f32 %v2536, %v2905
        %v3140 = vadd.f32 %v2537, %v2904
        %v3141 = vadd.f32 %v2538, %v2908
        %v3142 = vadd.f32 %v2539, %v2910
        %v3143 = vadd.f32 %v2540, %v2912
        %v3144 = vadd.f32 %v2541, %v2911
        %v3145 = vadd.f32 %v2542, %v2915
        %v3146 = vadd.f32 %v2543, %v2917
        %v3147 = vadd.f32 %v2544, %v2919
        %v3148 = vadd.f32 %v2545, %v2918
        %v3149 = vadd.f32 %v2546, %v2922
        %v3150 = vadd.f32 %v2547, %v2924
        %v3151 = vadd.f32 %v2548, %v2926
        %v3152 = vadd.f32 %v2549, %v2925
        %v3153 = vadd.f32 %v2550, %v2929
        %v3154 = vadd.f32 %v2551, %v2931
        %v3155 = vadd.f32 %v2552, %v2933
        %v3156 = vadd.f32 %v2553, %v2932
        %v3157 = vadd.f32 %v2554, %v2936
        %v3158 = vadd.f32 %v2555, %v2938
        %v3159 = vadd.f32 %v2556, %v2940
        %v3160 = vadd.f32 %v2557, %v2939
        %v3161 = vadd.f32 %v2558, %v2943
        %v3162 = vadd.f32 %v2559, %v2945
        %v3163 = vadd.f32 %v2560, %v2947
        %v3164 = vadd.f32 %v2561, %v2946
        %v3165 = vadd.f32 %v2562, %v2950
        %v3166 = vadd.f32 %v2563, %v2952
        %v3167 = vadd.f32 %v2564, %v2954
        %v3168 = vadd.f32 %v2565, %v2953
        %v3169 = vadd.f32 %v2566, %v2957
        %v3170 = vadd.f32 %v2567, %v2959
        %v3171 = vadd.f32 %v2568, %v2961
        %v3172 = vadd.f32 %v2569, %v2960
        %v3173 = vadd.f32 %v2570, %v2964
        %v3174 = vadd.f32 %v2571, %v2966
        %v3175 = vadd.f32 %v2572, %v2968
        %v3176 = vadd.f32 %v2573, %v2967
        %s3177 = scalar_lea.vmem [#allocation2], 5
        %v3178 = vld [vmem:[%s3177] sm:$0x1]
        %v3180 = vperm.slane %v3178, 0
        %v3182 = vmul.f32 %v425, %v3180
        %v3183 = vmul.f32 %v430, %v3180
        %v3184 = vmul.f32 %v435, %v3180
        %v3185 = vmul.f32 %v440, %v3180
        %v3186 = vmul.f32 %v445, %v3180
        %v3187 = vmul.f32 %v450, %v3180
        %v3188 = vmul.f32 %v455, %v3180
        %v3189 = vmul.f32 %v460, %v3180
        %v3190 = vmul.f32 %v465, %v3180
        %v3191 = vmul.f32 %v470, %v3180
        %v3192 = vmul.f32 %v475, %v3180
        %v3193 = vmul.f32 %v480, %v3180
        %v3194 = vmul.f32 %v485, %v3180
        %v3195 = vmul.f32 %v490, %v3180
        %v3196 = vmul.f32 %v495, %v3180
        %v3197 = vmul.f32 %v500, %v3180
        %v3198 = vmul.f32 %v505, %v3180
        %v3199 = vmul.f32 %v510, %v3180
        %v3200 = vmul.f32 %v515, %v3180
        %v3201 = vmul.f32 %v520, %v3180
        %v3202 = vmul.f32 %v525, %v3180
        %v3203 = vmul.f32 %v530, %v3180
        %v3204 = vmul.f32 %v535, %v3180
        %v3205 = vmul.f32 %v540, %v3180
        %v3206 = vmul.f32 %v545, %v3180
        %v3207 = vmul.f32 %v550, %v3180
        %v3208 = vmul.f32 %v555, %v3180
        %v3209 = vmul.f32 %v560, %v3180
        %v3210 = vmul.f32 %v565, %v3180
        %v3211 = vmul.f32 %v570, %v3180
        %v3212 = vmul.f32 %v575, %v3180
        %v3213 = vmul.f32 %v580, %v3180
        %v3214 = vmul.f32 %v585, %v3180
        %v3215 = vmul.f32 %v590, %v3180
        %v3216 = vmul.f32 %v595, %v3180
        %v3217 = vmul.f32 %v600, %v3180
        %v3218 = vmul.f32 %v605, %v3180
        %v3219 = vmul.f32 %v610, %v3180
        %v3220 = vmul.f32 %v615, %v3180
        %v3221 = vmul.f32 %v620, %v3180
        %v3222 = vmul.f32 %v625, %v3180
        %v3223 = vmul.f32 %v630, %v3180
        %v3224 = vmul.f32 %v635, %v3180
        %v3225 = vmul.f32 %v640, %v3180
        %v3226 = vmul.f32 %v645, %v3180
        %v3227 = vmul.f32 %v650, %v3180
        %v3228 = vmul.f32 %v655, %v3180
        %v3229 = vmul.f32 %v660, %v3180
        %v3230 = vmul.f32 %v665, %v3180
        %v3231 = vmul.f32 %v670, %v3180
        %v3232 = vmul.f32 %v675, %v3180
        %v3233 = vmul.f32 %v680, %v3180
        %v3234 = vmul.f32 %v685, %v3180
        %v3235 = vmul.f32 %v690, %v3180
        %v3236 = vmul.f32 %v695, %v3180
        %v3237 = vmul.f32 %v700, %v3180
        %v3238 = vmul.f32 %v705, %v3180
        %v3239 = vmul.f32 %v710, %v3180
        %v3240 = vmul.f32 %v715, %v3180
        %v3241 = vmul.f32 %v720, %v3180
        %v3242 = vmul.f32 %v725, %v3180
        %v3243 = vmul.f32 %v730, %v3180
        %v3244 = vmul.f32 %v735, %v3180
        %v3245 = vmul.f32 %v740, %v3180
        %v3246 = vmul.f32 %v745, %v3180
        %v3247 = vmul.f32 %v750, %v3180
        %v3248 = vmul.f32 %v755, %v3180
        %v3249 = vmul.f32 %v760, %v3180
        %v3250 = vmul.f32 %v765, %v3180
        %v3251 = vmul.f32 %v770, %v3180
        %v3252 = vmul.f32 %v775, %v3180
        %v3253 = vmul.f32 %v780, %v3180
        %v3254 = vmul.f32 %v785, %v3180
        %v3255 = vmul.f32 %v790, %v3180
        %v3256 = vmul.f32 %v795, %v3180
        %v3257 = vmul.f32 %v800, %v3180
        %v3258 = vmul.f32 %v805, %v3180
        %v3259 = vmul.f32 %v810, %v3180
        %v3260 = vmul.f32 %v815, %v3180
        %v3261 = vmul.f32 %v820, %v3180
        %v3262 = vmul.f32 %v825, %v3180
        %v3263 = vmul.f32 %v830, %v3180
        %v3264 = vmul.f32 %v835, %v3180
        %v3265 = vmul.f32 %v840, %v3180
        %v3266 = vmul.f32 %v845, %v3180
        %v3267 = vmul.f32 %v850, %v3180
        %v3268 = vmul.f32 %v855, %v3180
        %v3269 = vmul.f32 %v860, %v3180
        %v3270 = vmul.f32 %v865, %v3180
        %v3271 = vmul.f32 %v870, %v3180
        %v3272 = vmul.f32 %v875, %v3180
        %v3273 = vmul.f32 %v880, %v3180
        %v3274 = vmul.f32 %v885, %v3180
        %v3275 = vmul.f32 %v890, %v3180
        %v3276 = vmul.f32 %v895, %v3180
        %v3277 = vmul.f32 %v900, %v3180
        %v3278 = vmul.f32 %v905, %v3180
        %v3279 = vmul.f32 %v910, %v3180
        %v3280 = vmul.f32 %v915, %v3180
        %v3281 = vmul.f32 %v920, %v3180
        %v3282 = vmul.f32 %v2346, %v3180
        %v3283 = vmul.f32 %v2351, %v3180
        %v3284 = vmul.f32 %v2356, %v3180
        %v3285 = vmul.f32 %v2361, %v3180
        %v3390 = vrot.slane %v3182, 2
        %v3391 = vrot.slane %v3183, 2
        %v3392 = vsel %vm1950, %v3390, %v3391
        %v3393 = vrot.slane %v3184, 2
        %v3394 = vsel %vm1950, %v3391, %v3393
        %v3395 = vrot.slane %v3185, 2
        %v3396 = vsel %vm1950, %v3393, %v3395
        %v3397 = vrot.slane %v3186, 2
        %v3398 = vrot.slane %v3187, 2
        %v3399 = vsel %vm1950, %v3397, %v3398
        %v3400 = vrot.slane %v3188, 2
        %v3401 = vsel %vm1950, %v3398, %v3400
        %v3402 = vrot.slane %v3189, 2
        %v3403 = vsel %vm1950, %v3400, %v3402
        %v3404 = vrot.slane %v3190, 2
        %v3405 = vrot.slane %v3191, 2
        %v3406 = vsel %vm1950, %v3404, %v3405
        %v3407 = vrot.slane %v3192, 2
        %v3408 = vsel %vm1950, %v3405, %v3407
        %v3409 = vrot.slane %v3193, 2
        %v3410 = vsel %vm1950, %v3407, %v3409
        %v3411 = vrot.slane %v3194, 2
        %v3412 = vrot.slane %v3195, 2
        %v3413 = vsel %vm1950, %v3411, %v3412
        %v3414 = vrot.slane %v3196, 2
        %v3415 = vsel %vm1950, %v3412, %v3414
        %v3416 = vrot.slane %v3197, 2
        %v3417 = vsel %vm1950, %v3414, %v3416
        %v3418 = vrot.slane %v3198, 2
        %v3419 = vrot.slane %v3199, 2
        %v3420 = vsel %vm1950, %v3418, %v3419
        %v3421 = vrot.slane %v3200, 2
        %v3422 = vsel %vm1950, %v3419, %v3421
        %v3423 = vrot.slane %v3201, 2
        %v3424 = vsel %vm1950, %v3421, %v3423
        %v3425 = vrot.slane %v3202, 2
        %v3426 = vrot.slane %v3203, 2
        %v3427 = vsel %vm1950, %v3425, %v3426
        %v3428 = vrot.slane %v3204, 2
        %v3429 = vsel %vm1950, %v3426, %v3428
        %v3430 = vrot.slane %v3205, 2
        %v3431 = vsel %vm1950, %v3428, %v3430
        %v3432 = vrot.slane %v3206, 2
        %v3433 = vrot.slane %v3207, 2
        %v3434 = vsel %vm1950, %v3432, %v3433
        %v3435 = vrot.slane %v3208, 2
        %v3436 = vsel %vm1950, %v3433, %v3435
        %v3437 = vrot.slane %v3209, 2
        %v3438 = vsel %vm1950, %v3435, %v3437
        %v3439 = vrot.slane %v3210, 2
        %v3440 = vrot.slane %v3211, 2
        %v3441 = vsel %vm1950, %v3439, %v3440
        %v3442 = vrot.slane %v3212, 2
        %v3443 = vsel %vm1950, %v3440, %v3442
        %v3444 = vrot.slane %v3213, 2
        %v3445 = vsel %vm1950, %v3442, %v3444
        %v3446 = vrot.slane %v3214, 2
        %v3447 = vrot.slane %v3215, 2
        %v3448 = vsel %vm1950, %v3446, %v3447
        %v3449 = vrot.slane %v3216, 2
        %v3450 = vsel %vm1950, %v3447, %v3449
        %v3451 = vrot.slane %v3217, 2
        %v3452 = vsel %vm1950, %v3449, %v3451
        %v3453 = vrot.slane %v3218, 2
        %v3454 = vrot.slane %v3219, 2
        %v3455 = vsel %vm1950, %v3453, %v3454
        %v3456 = vrot.slane %v3220, 2
        %v3457 = vsel %vm1950, %v3454, %v3456
        %v3458 = vrot.slane %v3221, 2
        %v3459 = vsel %vm1950, %v3456, %v3458
        %v3460 = vrot.slane %v3222, 2
        %v3461 = vrot.slane %v3223, 2
        %v3462 = vsel %vm1950, %v3460, %v3461
        %v3463 = vrot.slane %v3224, 2
        %v3464 = vsel %vm1950, %v3461, %v3463
        %v3465 = vrot.slane %v3225, 2
        %v3466 = vsel %vm1950, %v3463, %v3465
        %v3467 = vrot.slane %v3226, 2
        %v3468 = vrot.slane %v3227, 2
        %v3469 = vsel %vm1950, %v3467, %v3468
        %v3470 = vrot.slane %v3228, 2
        %v3471 = vsel %vm1950, %v3468, %v3470
        %v3472 = vrot.slane %v3229, 2
        %v3473 = vsel %vm1950, %v3470, %v3472
        %v3474 = vrot.slane %v3230, 2
        %v3475 = vrot.slane %v3231, 2
        %v3476 = vsel %vm1950, %v3474, %v3475
        %v3477 = vrot.slane %v3232, 2
        %v3478 = vsel %vm1950, %v3475, %v3477
        %v3479 = vrot.slane %v3233, 2
        %v3480 = vsel %vm1950, %v3477, %v3479
        %v3481 = vrot.slane %v3234, 2
        %v3482 = vrot.slane %v3235, 2
        %v3483 = vsel %vm1950, %v3481, %v3482
        %v3484 = vrot.slane %v3236, 2
        %v3485 = vsel %vm1950, %v3482, %v3484
        %v3486 = vrot.slane %v3237, 2
        %v3487 = vsel %vm1950, %v3484, %v3486
        %v3488 = vrot.slane %v3238, 2
        %v3489 = vrot.slane %v3239, 2
        %v3490 = vsel %vm1950, %v3488, %v3489
        %v3491 = vrot.slane %v3240, 2
        %v3492 = vsel %vm1950, %v3489, %v3491
        %v3493 = vrot.slane %v3241, 2
        %v3494 = vsel %vm1950, %v3491, %v3493
        %v3495 = vrot.slane %v3242, 2
        %v3496 = vrot.slane %v3243, 2
        %v3497 = vsel %vm1950, %v3495, %v3496
        %v3498 = vrot.slane %v3244, 2
        %v3499 = vsel %vm1950, %v3496, %v3498
        %v3500 = vrot.slane %v3245, 2
        %v3501 = vsel %vm1950, %v3498, %v3500
        %v3502 = vrot.slane %v3246, 2
        %v3503 = vrot.slane %v3247, 2
        %v3504 = vsel %vm1950, %v3502, %v3503
        %v3505 = vrot.slane %v3248, 2
        %v3506 = vsel %vm1950, %v3503, %v3505
        %v3507 = vrot.slane %v3249, 2
        %v3508 = vsel %vm1950, %v3505, %v3507
        %v3509 = vrot.slane %v3250, 2
        %v3510 = vrot.slane %v3251, 2
        %v3511 = vsel %vm1950, %v3509, %v3510
        %v3512 = vrot.slane %v3252, 2
        %v3513 = vsel %vm1950, %v3510, %v3512
        %v3514 = vrot.slane %v3253, 2
        %v3515 = vsel %vm1950, %v3512, %v3514
        %v3516 = vrot.slane %v3254, 2
        %v3517 = vrot.slane %v3255, 2
        %v3518 = vsel %vm1950, %v3516, %v3517
        %v3519 = vrot.slane %v3256, 2
        %v3520 = vsel %vm1950, %v3517, %v3519
        %v3521 = vrot.slane %v3257, 2
        %v3522 = vsel %vm1950, %v3519, %v3521
        %v3523 = vrot.slane %v3258, 2
        %v3524 = vrot.slane %v3259, 2
        %v3525 = vsel %vm1950, %v3523, %v3524
        %v3526 = vrot.slane %v3260, 2
        %v3527 = vsel %vm1950, %v3524, %v3526
        %v3528 = vrot.slane %v3261, 2
        %v3529 = vsel %vm1950, %v3526, %v3528
        %v3530 = vrot.slane %v3262, 2
        %v3531 = vrot.slane %v3263, 2
        %v3532 = vsel %vm1950, %v3530, %v3531
        %v3533 = vrot.slane %v3264, 2
        %v3534 = vsel %vm1950, %v3531, %v3533
        %v3535 = vrot.slane %v3265, 2
        %v3536 = vsel %vm1950, %v3533, %v3535
        %v3537 = vrot.slane %v3266, 2
        %v3538 = vrot.slane %v3267, 2
        %v3539 = vsel %vm1950, %v3537, %v3538
        %v3540 = vrot.slane %v3268, 2
        %v3541 = vsel %vm1950, %v3538, %v3540
        %v3542 = vrot.slane %v3269, 2
        %v3543 = vsel %vm1950, %v3540, %v3542
        %v3544 = vrot.slane %v3270, 2
        %v3545 = vrot.slane %v3271, 2
        %v3546 = vsel %vm1950, %v3544, %v3545
        %v3547 = vrot.slane %v3272, 2
        %v3548 = vsel %vm1950, %v3545, %v3547
        %v3549 = vrot.slane %v3273, 2
        %v3550 = vsel %vm1950, %v3547, %v3549
        %v3551 = vrot.slane %v3274, 2
        %v3552 = vrot.slane %v3275, 2
        %v3553 = vsel %vm1950, %v3551, %v3552
        %v3554 = vrot.slane %v3276, 2
        %v3555 = vsel %vm1950, %v3552, %v3554
        %v3556 = vrot.slane %v3277, 2
        %v3557 = vsel %vm1950, %v3554, %v3556
        %v3558 = vrot.slane %v3278, 2
        %v3559 = vrot.slane %v3279, 2
        %v3560 = vsel %vm1950, %v3558, %v3559
        %v3561 = vrot.slane %v3280, 2
        %v3562 = vsel %vm1950, %v3559, %v3561
        %v3563 = vrot.slane %v3281, 2
        %v3564 = vsel %vm1950, %v3561, %v3563
        %v3565 = vrot.slane %v3282, 2
        %v3566 = vrot.slane %v3283, 2
        %v3567 = vsel %vm1950, %v3565, %v3566
        %v3568 = vrot.slane %v3284, 2
        %v3569 = vsel %vm1950, %v3566, %v3568
        %v3570 = vrot.slane %v3285, 2
        %v3571 = vsel %vm1950, %v3568, %v3570
        %v3676 = vadd.f32 %v3073, %v3392
        %v3677 = vadd.f32 %v3074, %v3394
        %v3678 = vadd.f32 %v3075, %v3396
        %v3679 = vadd.f32 %v3076, %v3395
        %v3680 = vadd.f32 %v3077, %v3399
        %v3681 = vadd.f32 %v3078, %v3401
        %v3682 = vadd.f32 %v3079, %v3403
        %v3683 = vadd.f32 %v3080, %v3402
        %v3684 = vadd.f32 %v3081, %v3406
        %v3685 = vadd.f32 %v3082, %v3408
        %v3686 = vadd.f32 %v3083, %v3410
        %v3687 = vadd.f32 %v3084, %v3409
        %v3688 = vadd.f32 %v3085, %v3413
        %v3689 = vadd.f32 %v3086, %v3415
        %v3690 = vadd.f32 %v3087, %v3417
        %v3691 = vadd.f32 %v3088, %v3416
        %v3692 = vadd.f32 %v3089, %v3420
        %v3693 = vadd.f32 %v3090, %v3422
        %v3694 = vadd.f32 %v3091, %v3424
        %v3695 = vadd.f32 %v3092, %v3423
        %v3696 = vadd.f32 %v3093, %v3427
        %v3697 = vadd.f32 %v3094, %v3429
        %v3698 = vadd.f32 %v3095, %v3431
        %v3699 = vadd.f32 %v3096, %v3430
        %v3700 = vadd.f32 %v3097, %v3434
        %v3701 = vadd.f32 %v3098, %v3436
        %v3702 = vadd.f32 %v3099, %v3438
        %v3703 = vadd.f32 %v3100, %v3437
        %v3704 = vadd.f32 %v3101, %v3441
        %v3705 = vadd.f32 %v3102, %v3443
        %v3706 = vadd.f32 %v3103, %v3445
        %v3707 = vadd.f32 %v3104, %v3444
        %v3708 = vadd.f32 %v3105, %v3448
        %v3709 = vadd.f32 %v3106, %v3450
        %v3710 = vadd.f32 %v3107, %v3452
        %v3711 = vadd.f32 %v3108, %v3451
        %v3712 = vadd.f32 %v3109, %v3455
        %v3713 = vadd.f32 %v3110, %v3457
        %v3714 = vadd.f32 %v3111, %v3459
        %v3715 = vadd.f32 %v3112, %v3458
        %v3716 = vadd.f32 %v3113, %v3462
        %v3717 = vadd.f32 %v3114, %v3464
        %v3718 = vadd.f32 %v3115, %v3466
        %v3719 = vadd.f32 %v3116, %v3465
        %v3720 = vadd.f32 %v3117, %v3469
        %v3721 = vadd.f32 %v3118, %v3471
        %v3722 = vadd.f32 %v3119, %v3473
        %v3723 = vadd.f32 %v3120, %v3472
        %v3724 = vadd.f32 %v3121, %v3476
        %v3725 = vadd.f32 %v3122, %v3478
        %v3726 = vadd.f32 %v3123, %v3480
        %v3727 = vadd.f32 %v3124, %v3479
        %v3728 = vadd.f32 %v3125, %v3483
        %v3729 = vadd.f32 %v3126, %v3485
        %v3730 = vadd.f32 %v3127, %v3487
        %v3731 = vadd.f32 %v3128, %v3486
        %v3732 = vadd.f32 %v3129, %v3490
        %v3733 = vadd.f32 %v3130, %v3492
        %v3734 = vadd.f32 %v3131, %v3494
        %v3735 = vadd.f32 %v3132, %v3493
        %v3736 = vadd.f32 %v3133, %v3497
        %v3737 = vadd.f32 %v3134, %v3499
        %v3738 = vadd.f32 %v3135, %v3501
        %v3739 = vadd.f32 %v3136, %v3500
        %v3740 = vadd.f32 %v3137, %v3504
        %v3741 = vadd.f32 %v3138, %v3506
        %v3742 = vadd.f32 %v3139, %v3508
        %v3743 = vadd.f32 %v3140, %v3507
        %v3744 = vadd.f32 %v3141, %v3511
        %v3745 = vadd.f32 %v3142, %v3513
        %v3746 = vadd.f32 %v3143, %v3515
        %v3747 = vadd.f32 %v3144, %v3514
        %v3748 = vadd.f32 %v3145, %v3518
        %v3749 = vadd.f32 %v3146, %v3520
        %v3750 = vadd.f32 %v3147, %v3522
        %v3751 = vadd.f32 %v3148, %v3521
        %v3752 = vadd.f32 %v3149, %v3525
        %v3753 = vadd.f32 %v3150, %v3527
        %v3754 = vadd.f32 %v3151, %v3529
        %v3755 = vadd.f32 %v3152, %v3528
        %v3756 = vadd.f32 %v3153, %v3532
        %v3757 = vadd.f32 %v3154, %v3534
        %v3758 = vadd.f32 %v3155, %v3536
        %v3759 = vadd.f32 %v3156, %v3535
        %v3760 = vadd.f32 %v3157, %v3539
        %v3761 = vadd.f32 %v3158, %v3541
        %v3762 = vadd.f32 %v3159, %v3543
        %v3763 = vadd.f32 %v3160, %v3542
        %v3764 = vadd.f32 %v3161, %v3546
        %v3765 = vadd.f32 %v3162, %v3548
        %v3766 = vadd.f32 %v3163, %v3550
        %v3767 = vadd.f32 %v3164, %v3549
        %v3768 = vadd.f32 %v3165, %v3553
        %v3769 = vadd.f32 %v3166, %v3555
        %v3770 = vadd.f32 %v3167, %v3557
        %v3771 = vadd.f32 %v3168, %v3556
        %v3772 = vadd.f32 %v3169, %v3560
        %v3773 = vadd.f32 %v3170, %v3562
        %v3774 = vadd.f32 %v3171, %v3564
        %v3775 = vadd.f32 %v3172, %v3563
        %v3776 = vadd.f32 %v3173, %v3567
        %v3777 = vadd.f32 %v3174, %v3569
        %v3778 = vadd.f32 %v3175, %v3571
        %v3779 = vadd.f32 %v3176, %v3570
        %s3780 = scalar_lea.vmem [#allocation2], 6
        %v3781 = vld [vmem:[%s3780] sm:$0x1]
        %3783 = vset.pattern.permute.xlu0 0
        %3784 = vperm.xlu0 %3783, %v397
        %v3785 = vpop.permute.xlu0 %3784
        %3788 = vset.pattern.permute.xlu0 0
        %3789 = vperm.xlu0 %3788, %v398
        %v3790 = vpop.permute.xlu0 %3789
        %3793 = vset.pattern.permute.xlu0 0
        %3794 = vperm.xlu0 %3793, %v399
        %v3795 = vpop.permute.xlu0 %3794
        %3798 = vset.pattern.permute.xlu0 0
        %3799 = vperm.xlu0 %3798, %v400
        %v3800 = vpop.permute.xlu0 %3799
        %v3803 = vperm.slane %v3781, 0
        %v3805 = vmul.f32 %v445, %v3803
        %v3806 = vmul.f32 %v450, %v3803
        %v3807 = vmul.f32 %v455, %v3803
        %v3808 = vmul.f32 %v460, %v3803
        %v3809 = vmul.f32 %v465, %v3803
        %v3810 = vmul.f32 %v470, %v3803
        %v3811 = vmul.f32 %v475, %v3803
        %v3812 = vmul.f32 %v480, %v3803
        %v3813 = vmul.f32 %v485, %v3803
        %v3814 = vmul.f32 %v490, %v3803
        %v3815 = vmul.f32 %v495, %v3803
        %v3816 = vmul.f32 %v500, %v3803
        %v3817 = vmul.f32 %v505, %v3803
        %v3818 = vmul.f32 %v510, %v3803
        %v3819 = vmul.f32 %v515, %v3803
        %v3820 = vmul.f32 %v520, %v3803
        %v3821 = vmul.f32 %v525, %v3803
        %v3822 = vmul.f32 %v530, %v3803
        %v3823 = vmul.f32 %v535, %v3803
        %v3824 = vmul.f32 %v540, %v3803
        %v3825 = vmul.f32 %v545, %v3803
        %v3826 = vmul.f32 %v550, %v3803
        %v3827 = vmul.f32 %v555, %v3803
        %v3828 = vmul.f32 %v560, %v3803
        %v3829 = vmul.f32 %v565, %v3803
        %v3830 = vmul.f32 %v570, %v3803
        %v3831 = vmul.f32 %v575, %v3803
        %v3832 = vmul.f32 %v580, %v3803
        %v3833 = vmul.f32 %v585, %v3803
        %v3834 = vmul.f32 %v590, %v3803
        %v3835 = vmul.f32 %v595, %v3803
        %v3836 = vmul.f32 %v600, %v3803
        %v3837 = vmul.f32 %v605, %v3803
        %v3838 = vmul.f32 %v610, %v3803
        %v3839 = vmul.f32 %v615, %v3803
        %v3840 = vmul.f32 %v620, %v3803
        %v3841 = vmul.f32 %v625, %v3803
        %v3842 = vmul.f32 %v630, %v3803
        %v3843 = vmul.f32 %v635, %v3803
        %v3844 = vmul.f32 %v640, %v3803
        %v3845 = vmul.f32 %v645, %v3803
        %v3846 = vmul.f32 %v650, %v3803
        %v3847 = vmul.f32 %v655, %v3803
        %v3848 = vmul.f32 %v660, %v3803
        %v3849 = vmul.f32 %v665, %v3803
        %v3850 = vmul.f32 %v670, %v3803
        %v3851 = vmul.f32 %v675, %v3803
        %v3852 = vmul.f32 %v680, %v3803
        %v3853 = vmul.f32 %v685, %v3803
        %v3854 = vmul.f32 %v690, %v3803
        %v3855 = vmul.f32 %v695, %v3803
        %v3856 = vmul.f32 %v700, %v3803
        %v3857 = vmul.f32 %v705, %v3803
        %v3858 = vmul.f32 %v710, %v3803
        %v3859 = vmul.f32 %v715, %v3803
        %v3860 = vmul.f32 %v720, %v3803
        %v3861 = vmul.f32 %v725, %v3803
        %v3862 = vmul.f32 %v730, %v3803
        %v3863 = vmul.f32 %v735, %v3803
        %v3864 = vmul.f32 %v740, %v3803
        %v3865 = vmul.f32 %v745, %v3803
        %v3866 = vmul.f32 %v750, %v3803
        %v3867 = vmul.f32 %v755, %v3803
        %v3868 = vmul.f32 %v760, %v3803
        %v3869 = vmul.f32 %v765, %v3803
        %v3870 = vmul.f32 %v770, %v3803
        %v3871 = vmul.f32 %v775, %v3803
        %v3872 = vmul.f32 %v780, %v3803
        %v3873 = vmul.f32 %v785, %v3803
        %v3874 = vmul.f32 %v790, %v3803
        %v3875 = vmul.f32 %v795, %v3803
        %v3876 = vmul.f32 %v800, %v3803
        %v3877 = vmul.f32 %v805, %v3803
        %v3878 = vmul.f32 %v810, %v3803
        %v3879 = vmul.f32 %v815, %v3803
        %v3880 = vmul.f32 %v820, %v3803
        %v3881 = vmul.f32 %v825, %v3803
        %v3882 = vmul.f32 %v830, %v3803
        %v3883 = vmul.f32 %v835, %v3803
        %v3884 = vmul.f32 %v840, %v3803
        %v3885 = vmul.f32 %v845, %v3803
        %v3886 = vmul.f32 %v850, %v3803
        %v3887 = vmul.f32 %v855, %v3803
        %v3888 = vmul.f32 %v860, %v3803
        %v3889 = vmul.f32 %v865, %v3803
        %v3890 = vmul.f32 %v870, %v3803
        %v3891 = vmul.f32 %v875, %v3803
        %v3892 = vmul.f32 %v880, %v3803
        %v3893 = vmul.f32 %v885, %v3803
        %v3894 = vmul.f32 %v890, %v3803
        %v3895 = vmul.f32 %v895, %v3803
        %v3896 = vmul.f32 %v900, %v3803
        %v3897 = vmul.f32 %v905, %v3803
        %v3898 = vmul.f32 %v910, %v3803
        %v3899 = vmul.f32 %v915, %v3803
        %v3900 = vmul.f32 %v920, %v3803
        %v3901 = vmul.f32 %v2346, %v3803
        %v3902 = vmul.f32 %v2351, %v3803
        %v3903 = vmul.f32 %v2356, %v3803
        %v3904 = vmul.f32 %v2361, %v3803
        %v3905 = vmul.f32 %v3785, %v3803
        %v3906 = vmul.f32 %v3790, %v3803
        %v3907 = vmul.f32 %v3795, %v3803
        %v3908 = vmul.f32 %v3800, %v3803
        %v3909 = vadd.f32 %v3676, %v3805
        %v3910 = vadd.f32 %v3677, %v3806
        %v3911 = vadd.f32 %v3678, %v3807
        %v3912 = vadd.f32 %v3679, %v3808
        %v3913 = vadd.f32 %v3680, %v3809
        %v3914 = vadd.f32 %v3681, %v3810
        %v3915 = vadd.f32 %v3682, %v3811
        %v3916 = vadd.f32 %v3683, %v3812
        %v3917 = vadd.f32 %v3684, %v3813
        %v3918 = vadd.f32 %v3685, %v3814
        %v3919 = vadd.f32 %v3686, %v3815
        %v3920 = vadd.f32 %v3687, %v3816
        %v3921 = vadd.f32 %v3688, %v3817
        %v3922 = vadd.f32 %v3689, %v3818
        %v3923 = vadd.f32 %v3690, %v3819
        %v3924 = vadd.f32 %v3691, %v3820
        %v3925 = vadd.f32 %v3692, %v3821
        %v3926 = vadd.f32 %v3693, %v3822
        %v3927 = vadd.f32 %v3694, %v3823
        %v3928 = vadd.f32 %v3695, %v3824
        %v3929 = vadd.f32 %v3696, %v3825
        %v3930 = vadd.f32 %v3697, %v3826
        %v3931 = vadd.f32 %v3698, %v3827
        %v3932 = vadd.f32 %v3699, %v3828
        %v3933 = vadd.f32 %v3700, %v3829
        %v3934 = vadd.f32 %v3701, %v3830
        %v3935 = vadd.f32 %v3702, %v3831
        %v3936 = vadd.f32 %v3703, %v3832
        %v3937 = vadd.f32 %v3704, %v3833
        %v3938 = vadd.f32 %v3705, %v3834
        %v3939 = vadd.f32 %v3706, %v3835
        %v3940 = vadd.f32 %v3707, %v3836
        %v3941 = vadd.f32 %v3708, %v3837
        %v3942 = vadd.f32 %v3709, %v3838
        %v3943 = vadd.f32 %v3710, %v3839
        %v3944 = vadd.f32 %v3711, %v3840
        %v3945 = vadd.f32 %v3712, %v3841
        %v3946 = vadd.f32 %v3713, %v3842
        %v3947 = vadd.f32 %v3714, %v3843
        %v3948 = vadd.f32 %v3715, %v3844
        %v3949 = vadd.f32 %v3716, %v3845
        %v3950 = vadd.f32 %v3717, %v3846
        %v3951 = vadd.f32 %v3718, %v3847
        %v3952 = vadd.f32 %v3719, %v3848
        %v3953 = vadd.f32 %v3720, %v3849
        %v3954 = vadd.f32 %v3721, %v3850
        %v3955 = vadd.f32 %v3722, %v3851
        %v3956 = vadd.f32 %v3723, %v3852
        %v3957 = vadd.f32 %v3724, %v3853
        %v3958 = vadd.f32 %v3725, %v3854
        %v3959 = vadd.f32 %v3726, %v3855
        %v3960 = vadd.f32 %v3727, %v3856
        %v3961 = vadd.f32 %v3728, %v3857
        %v3962 = vadd.f32 %v3729, %v3858
        %v3963 = vadd.f32 %v3730, %v3859
        %v3964 = vadd.f32 %v3731, %v3860
        %v3965 = vadd.f32 %v3732, %v3861
        %v3966 = vadd.f32 %v3733, %v3862
        %v3967 = vadd.f32 %v3734, %v3863
        %v3968 = vadd.f32 %v3735, %v3864
        %v3969 = vadd.f32 %v3736, %v3865
        %v3970 = vadd.f32 %v3737, %v3866
        %v3971 = vadd.f32 %v3738, %v3867
        %v3972 = vadd.f32 %v3739, %v3868
        %v3973 = vadd.f32 %v3740, %v3869
        %v3974 = vadd.f32 %v3741, %v3870
        %v3975 = vadd.f32 %v3742, %v3871
        %v3976 = vadd.f32 %v3743, %v3872
        %v3977 = vadd.f32 %v3744, %v3873
        %v3978 = vadd.f32 %v3745, %v3874
        %v3979 = vadd.f32 %v3746, %v3875
        %v3980 = vadd.f32 %v3747, %v3876
        %v3981 = vadd.f32 %v3748, %v3877
        %v3982 = vadd.f32 %v3749, %v3878
        %v3983 = vadd.f32 %v3750, %v3879
        %v3984 = vadd.f32 %v3751, %v3880
        %v3985 = vadd.f32 %v3752, %v3881
        %v3986 = vadd.f32 %v3753, %v3882
        %v3987 = vadd.f32 %v3754, %v3883
        %v3988 = vadd.f32 %v3755, %v3884
        %v3989 = vadd.f32 %v3756, %v3885
        %v3990 = vadd.f32 %v3757, %v3886
        %v3991 = vadd.f32 %v3758, %v3887
        %v3992 = vadd.f32 %v3759, %v3888
        %v3993 = vadd.f32 %v3760, %v3889
        %v3994 = vadd.f32 %v3761, %v3890
        %v3995 = vadd.f32 %v3762, %v3891
        %v3996 = vadd.f32 %v3763, %v3892
        %v3997 = vadd.f32 %v3764, %v3893
        %v3998 = vadd.f32 %v3765, %v3894
        %v3999 = vadd.f32 %v3766, %v3895
        %v4000 = vadd.f32 %v3767, %v3896
        %v4001 = vadd.f32 %v3768, %v3897
        %v4002 = vadd.f32 %v3769, %v3898
        %v4003 = vadd.f32 %v3770, %v3899
        %v4004 = vadd.f32 %v3771, %v3900
        %v4005 = vadd.f32 %v3772, %v3901
        %v4006 = vadd.f32 %v3773, %v3902
        %v4007 = vadd.f32 %v3774, %v3903
        %v4008 = vadd.f32 %v3775, %v3904
        %v4009 = vadd.f32 %v3776, %v3905
        %v4010 = vadd.f32 %v3777, %v3906
        %v4011 = vadd.f32 %v3778, %v3907
        %v4012 = vadd.f32 %v3779, %v3908
        %s4013 = scalar_lea.vmem [#allocation2], 7
        %v4014 = vld [vmem:[%s4013] sm:$0x1]
        %v4016 = vperm.slane %v4014, 0
        %v4018 = vmul.f32 %v445, %v4016
        %v4019 = vmul.f32 %v450, %v4016
        %v4020 = vmul.f32 %v455, %v4016
        %v4021 = vmul.f32 %v460, %v4016
        %v4022 = vmul.f32 %v465, %v4016
        %v4023 = vmul.f32 %v470, %v4016
        %v4024 = vmul.f32 %v475, %v4016
        %v4025 = vmul.f32 %v480, %v4016
        %v4026 = vmul.f32 %v485, %v4016
        %v4027 = vmul.f32 %v490, %v4016
        %v4028 = vmul.f32 %v495, %v4016
        %v4029 = vmul.f32 %v500, %v4016
        %v4030 = vmul.f32 %v505, %v4016
        %v4031 = vmul.f32 %v510, %v4016
        %v4032 = vmul.f32 %v515, %v4016
        %v4033 = vmul.f32 %v520, %v4016
        %v4034 = vmul.f32 %v525, %v4016
        %v4035 = vmul.f32 %v530, %v4016
        %v4036 = vmul.f32 %v535, %v4016
        %v4037 = vmul.f32 %v540, %v4016
        %v4038 = vmul.f32 %v545, %v4016
        %v4039 = vmul.f32 %v550, %v4016
        %v4040 = vmul.f32 %v555, %v4016
        %v4041 = vmul.f32 %v560, %v4016
        %v4042 = vmul.f32 %v565, %v4016
        %v4043 = vmul.f32 %v570, %v4016
        %v4044 = vmul.f32 %v575, %v4016
        %v4045 = vmul.f32 %v580, %v4016
        %v4046 = vmul.f32 %v585, %v4016
        %v4047 = vmul.f32 %v590, %v4016
        %v4048 = vmul.f32 %v595, %v4016
        %v4049 = vmul.f32 %v600, %v4016
        %v4050 = vmul.f32 %v605, %v4016
        %v4051 = vmul.f32 %v610, %v4016
        %v4052 = vmul.f32 %v615, %v4016
        %v4053 = vmul.f32 %v620, %v4016
        %v4054 = vmul.f32 %v625, %v4016
        %v4055 = vmul.f32 %v630, %v4016
        %v4056 = vmul.f32 %v635, %v4016
        %v4057 = vmul.f32 %v640, %v4016
        %v4058 = vmul.f32 %v645, %v4016
        %v4059 = vmul.f32 %v650, %v4016
        %v4060 = vmul.f32 %v655, %v4016
        %v4061 = vmul.f32 %v660, %v4016
        %v4062 = vmul.f32 %v665, %v4016
        %v4063 = vmul.f32 %v670, %v4016
        %v4064 = vmul.f32 %v675, %v4016
        %v4065 = vmul.f32 %v680, %v4016
        %v4066 = vmul.f32 %v685, %v4016
        %v4067 = vmul.f32 %v690, %v4016
        %v4068 = vmul.f32 %v695, %v4016
        %v4069 = vmul.f32 %v700, %v4016
        %v4070 = vmul.f32 %v705, %v4016
        %v4071 = vmul.f32 %v710, %v4016
        %v4072 = vmul.f32 %v715, %v4016
        %v4073 = vmul.f32 %v720, %v4016
        %v4074 = vmul.f32 %v725, %v4016
        %v4075 = vmul.f32 %v730, %v4016
        %v4076 = vmul.f32 %v735, %v4016
        %v4077 = vmul.f32 %v740, %v4016
        %v4078 = vmul.f32 %v745, %v4016
        %v4079 = vmul.f32 %v750, %v4016
        %v4080 = vmul.f32 %v755, %v4016
        %v4081 = vmul.f32 %v760, %v4016
        %v4082 = vmul.f32 %v765, %v4016
        %v4083 = vmul.f32 %v770, %v4016
        %v4084 = vmul.f32 %v775, %v4016
        %v4085 = vmul.f32 %v780, %v4016
        %v4086 = vmul.f32 %v785, %v4016
        %v4087 = vmul.f32 %v790, %v4016
        %v4088 = vmul.f32 %v795, %v4016
        %v4089 = vmul.f32 %v800, %v4016
        %v4090 = vmul.f32 %v805, %v4016
        %v4091 = vmul.f32 %v810, %v4016
        %v4092 = vmul.f32 %v815, %v4016
        %v4093 = vmul.f32 %v820, %v4016
        %v4094 = vmul.f32 %v825, %v4016
        %v4095 = vmul.f32 %v830, %v4016
        %v4096 = vmul.f32 %v835, %v4016
        %v4097 = vmul.f32 %v840, %v4016
        %v4098 = vmul.f32 %v845, %v4016
        %v4099 = vmul.f32 %v850, %v4016
        %v4100 = vmul.f32 %v855, %v4016
        %v4101 = vmul.f32 %v860, %v4016
        %v4102 = vmul.f32 %v865, %v4016
        %v4103 = vmul.f32 %v870, %v4016
        %v4104 = vmul.f32 %v875, %v4016
        %v4105 = vmul.f32 %v880, %v4016
        %v4106 = vmul.f32 %v885, %v4016
        %v4107 = vmul.f32 %v890, %v4016
        %v4108 = vmul.f32 %v895, %v4016
        %v4109 = vmul.f32 %v900, %v4016
        %v4110 = vmul.f32 %v905, %v4016
        %v4111 = vmul.f32 %v910, %v4016
        %v4112 = vmul.f32 %v915, %v4016
        %v4113 = vmul.f32 %v920, %v4016
        %v4114 = vmul.f32 %v2346, %v4016
        %v4115 = vmul.f32 %v2351, %v4016
        %v4116 = vmul.f32 %v2356, %v4016
        %v4117 = vmul.f32 %v2361, %v4016
        %v4118 = vmul.f32 %v3785, %v4016
        %v4119 = vmul.f32 %v3790, %v4016
        %v4120 = vmul.f32 %v3795, %v4016
        %v4121 = vmul.f32 %v3800, %v4016
        %v4226 = vrot.slane %v4018, 1
        %v4227 = vrot.slane %v4019, 1
        %v4228 = vsel %vm1346, %v4226, %v4227
        %v4229 = vrot.slane %v4020, 1
        %v4230 = vsel %vm1346, %v4227, %v4229
        %v4231 = vrot.slane %v4021, 1
        %v4232 = vsel %vm1346, %v4229, %v4231
        %v4233 = vrot.slane %v4022, 1
        %v4234 = vrot.slane %v4023, 1
        %v4235 = vsel %vm1346, %v4233, %v4234
        %v4236 = vrot.slane %v4024, 1
        %v4237 = vsel %vm1346, %v4234, %v4236
        %v4238 = vrot.slane %v4025, 1
        %v4239 = vsel %vm1346, %v4236, %v4238
        %v4240 = vrot.slane %v4026, 1
        %v4241 = vrot.slane %v4027, 1
        %v4242 = vsel %vm1346, %v4240, %v4241
        %v4243 = vrot.slane %v4028, 1
        %v4244 = vsel %vm1346, %v4241, %v4243
        %v4245 = vrot.slane %v4029, 1
        %v4246 = vsel %vm1346, %v4243, %v4245
        %v4247 = vrot.slane %v4030, 1
        %v4248 = vrot.slane %v4031, 1
        %v4249 = vsel %vm1346, %v4247, %v4248
        %v4250 = vrot.slane %v4032, 1
        %v4251 = vsel %vm1346, %v4248, %v4250
        %v4252 = vrot.slane %v4033, 1
        %v4253 = vsel %vm1346, %v4250, %v4252
        %v4254 = vrot.slane %v4034, 1
        %v4255 = vrot.slane %v4035, 1
        %v4256 = vsel %vm1346, %v4254, %v4255
        %v4257 = vrot.slane %v4036, 1
        %v4258 = vsel %vm1346, %v4255, %v4257
        %v4259 = vrot.slane %v4037, 1
        %v4260 = vsel %vm1346, %v4257, %v4259
        %v4261 = vrot.slane %v4038, 1
        %v4262 = vrot.slane %v4039, 1
        %v4263 = vsel %vm1346, %v4261, %v4262
        %v4264 = vrot.slane %v4040, 1
        %v4265 = vsel %vm1346, %v4262, %v4264
        %v4266 = vrot.slane %v4041, 1
        %v4267 = vsel %vm1346, %v4264, %v4266
        %v4268 = vrot.slane %v4042, 1
        %v4269 = vrot.slane %v4043, 1
        %v4270 = vsel %vm1346, %v4268, %v4269
        %v4271 = vrot.slane %v4044, 1
        %v4272 = vsel %vm1346, %v4269, %v4271
        %v4273 = vrot.slane %v4045, 1
        %v4274 = vsel %vm1346, %v4271, %v4273
        %v4275 = vrot.slane %v4046, 1
        %v4276 = vrot.slane %v4047, 1
        %v4277 = vsel %vm1346, %v4275, %v4276
        %v4278 = vrot.slane %v4048, 1
        %v4279 = vsel %vm1346, %v4276, %v4278
        %v4280 = vrot.slane %v4049, 1
        %v4281 = vsel %vm1346, %v4278, %v4280
        %v4282 = vrot.slane %v4050, 1
        %v4283 = vrot.slane %v4051, 1
        %v4284 = vsel %vm1346, %v4282, %v4283
        %v4285 = vrot.slane %v4052, 1
        %v4286 = vsel %vm1346, %v4283, %v4285
        %v4287 = vrot.slane %v4053, 1
        %v4288 = vsel %vm1346, %v4285, %v4287
        %v4289 = vrot.slane %v4054, 1
        %v4290 = vrot.slane %v4055, 1
        %v4291 = vsel %vm1346, %v4289, %v4290
        %v4292 = vrot.slane %v4056, 1
        %v4293 = vsel %vm1346, %v4290, %v4292
        %v4294 = vrot.slane %v4057, 1
        %v4295 = vsel %vm1346, %v4292, %v4294
        %v4296 = vrot.slane %v4058, 1
        %v4297 = vrot.slane %v4059, 1
        %v4298 = vsel %vm1346, %v4296, %v4297
        %v4299 = vrot.slane %v4060, 1
        %v4300 = vsel %vm1346, %v4297, %v4299
        %v4301 = vrot.slane %v4061, 1
        %v4302 = vsel %vm1346, %v4299, %v4301
        %v4303 = vrot.slane %v4062, 1
        %v4304 = vrot.slane %v4063, 1
        %v4305 = vsel %vm1346, %v4303, %v4304
        %v4306 = vrot.slane %v4064, 1
        %v4307 = vsel %vm1346, %v4304, %v4306
        %v4308 = vrot.slane %v4065, 1
        %v4309 = vsel %vm1346, %v4306, %v4308
        %v4310 = vrot.slane %v4066, 1
        %v4311 = vrot.slane %v4067, 1
        %v4312 = vsel %vm1346, %v4310, %v4311
        %v4313 = vrot.slane %v4068, 1
        %v4314 = vsel %vm1346, %v4311, %v4313
        %v4315 = vrot.slane %v4069, 1
        %v4316 = vsel %vm1346, %v4313, %v4315
        %v4317 = vrot.slane %v4070, 1
        %v4318 = vrot.slane %v4071, 1
        %v4319 = vsel %vm1346, %v4317, %v4318
        %v4320 = vrot.slane %v4072, 1
        %v4321 = vsel %vm1346, %v4318, %v4320
        %v4322 = vrot.slane %v4073, 1
        %v4323 = vsel %vm1346, %v4320, %v4322
        %v4324 = vrot.slane %v4074, 1
        %v4325 = vrot.slane %v4075, 1
        %v4326 = vsel %vm1346, %v4324, %v4325
        %v4327 = vrot.slane %v4076, 1
        %v4328 = vsel %vm1346, %v4325, %v4327
        %v4329 = vrot.slane %v4077, 1
        %v4330 = vsel %vm1346, %v4327, %v4329
        %v4331 = vrot.slane %v4078, 1
        %v4332 = vrot.slane %v4079, 1
        %v4333 = vsel %vm1346, %v4331, %v4332
        %v4334 = vrot.slane %v4080, 1
        %v4335 = vsel %vm1346, %v4332, %v4334
        %v4336 = vrot.slane %v4081, 1
        %v4337 = vsel %vm1346, %v4334, %v4336
        %v4338 = vrot.slane %v4082, 1
        %v4339 = vrot.slane %v4083, 1
        %v4340 = vsel %vm1346, %v4338, %v4339
        %v4341 = vrot.slane %v4084, 1
        %v4342 = vsel %vm1346, %v4339, %v4341
        %v4343 = vrot.slane %v4085, 1
        %v4344 = vsel %vm1346, %v4341, %v4343
        %v4345 = vrot.slane %v4086, 1
        %v4346 = vrot.slane %v4087, 1
        %v4347 = vsel %vm1346, %v4345, %v4346
        %v4348 = vrot.slane %v4088, 1
        %v4349 = vsel %vm1346, %v4346, %v4348
        %v4350 = vrot.slane %v4089, 1
        %v4351 = vsel %vm1346, %v4348, %v4350
        %v4352 = vrot.slane %v4090, 1
        %v4353 = vrot.slane %v4091, 1
        %v4354 = vsel %vm1346, %v4352, %v4353
        %v4355 = vrot.slane %v4092, 1
        %v4356 = vsel %vm1346, %v4353, %v4355
        %v4357 = vrot.slane %v4093, 1
        %v4358 = vsel %vm1346, %v4355, %v4357
        %v4359 = vrot.slane %v4094, 1
        %v4360 = vrot.slane %v4095, 1
        %v4361 = vsel %vm1346, %v4359, %v4360
        %v4362 = vrot.slane %v4096, 1
        %v4363 = vsel %vm1346, %v4360, %v4362
        %v4364 = vrot.slane %v4097, 1
        %v4365 = vsel %vm1346, %v4362, %v4364
        %v4366 = vrot.slane %v4098, 1
        %v4367 = vrot.slane %v4099, 1
        %v4368 = vsel %vm1346, %v4366, %v4367
        %v4369 = vrot.slane %v4100, 1
        %v4370 = vsel %vm1346, %v4367, %v4369
        %v4371 = vrot.slane %v4101, 1
        %v4372 = vsel %vm1346, %v4369, %v4371
        %v4373 = vrot.slane %v4102, 1
        %v4374 = vrot.slane %v4103, 1
        %v4375 = vsel %vm1346, %v4373, %v4374
        %v4376 = vrot.slane %v4104, 1
        %v4377 = vsel %vm1346, %v4374, %v4376
        %v4378 = vrot.slane %v4105, 1
        %v4379 = vsel %vm1346, %v4376, %v4378
        %v4380 = vrot.slane %v4106, 1
        %v4381 = vrot.slane %v4107, 1
        %v4382 = vsel %vm1346, %v4380, %v4381
        %v4383 = vrot.slane %v4108, 1
        %v4384 = vsel %vm1346, %v4381, %v4383
        %v4385 = vrot.slane %v4109, 1
        %v4386 = vsel %vm1346, %v4383, %v4385
        %v4387 = vrot.slane %v4110, 1
        %v4388 = vrot.slane %v4111, 1
        %v4389 = vsel %vm1346, %v4387, %v4388
        %v4390 = vrot.slane %v4112, 1
        %v4391 = vsel %vm1346, %v4388, %v4390
        %v4392 = vrot.slane %v4113, 1
        %v4393 = vsel %vm1346, %v4390, %v4392
        %v4394 = vrot.slane %v4114, 1
        %v4395 = vrot.slane %v4115, 1
        %v4396 = vsel %vm1346, %v4394, %v4395
        %v4397 = vrot.slane %v4116, 1
        %v4398 = vsel %vm1346, %v4395, %v4397
        %v4399 = vrot.slane %v4117, 1
        %v4400 = vsel %vm1346, %v4397, %v4399
        %v4401 = vrot.slane %v4118, 1
        %v4402 = vrot.slane %v4119, 1
        %v4403 = vsel %vm1346, %v4401, %v4402
        %v4404 = vrot.slane %v4120, 1
        %v4405 = vsel %vm1346, %v4402, %v4404
        %v4406 = vrot.slane %v4121, 1
        %v4407 = vsel %vm1346, %v4404, %v4406
        %v4512 = vadd.f32 %v3909, %v4228
        %v4513 = vadd.f32 %v3910, %v4230
        %v4514 = vadd.f32 %v3911, %v4232
        %v4515 = vadd.f32 %v3912, %v4231
        %v4516 = vadd.f32 %v3913, %v4235
        %v4517 = vadd.f32 %v3914, %v4237
        %v4518 = vadd.f32 %v3915, %v4239
        %v4519 = vadd.f32 %v3916, %v4238
        %v4520 = vadd.f32 %v3917, %v4242
        %v4521 = vadd.f32 %v3918, %v4244
        %v4522 = vadd.f32 %v3919, %v4246
        %v4523 = vadd.f32 %v3920, %v4245
        %v4524 = vadd.f32 %v3921, %v4249
        %v4525 = vadd.f32 %v3922, %v4251
        %v4526 = vadd.f32 %v3923, %v4253
        %v4527 = vadd.f32 %v3924, %v4252
        %v4528 = vadd.f32 %v3925, %v4256
        %v4529 = vadd.f32 %v3926, %v4258
        %v4530 = vadd.f32 %v3927, %v4260
        %v4531 = vadd.f32 %v3928, %v4259
        %v4532 = vadd.f32 %v3929, %v4263
        %v4533 = vadd.f32 %v3930, %v4265
        %v4534 = vadd.f32 %v3931, %v4267
        %v4535 = vadd.f32 %v3932, %v4266
        %v4536 = vadd.f32 %v3933, %v4270
        %v4537 = vadd.f32 %v3934, %v4272
        %v4538 = vadd.f32 %v3935, %v4274
        %v4539 = vadd.f32 %v3936, %v4273
        %v4540 = vadd.f32 %v3937, %v4277
        %v4541 = vadd.f32 %v3938, %v4279
        %v4542 = vadd.f32 %v3939, %v4281
        %v4543 = vadd.f32 %v3940, %v4280
        %v4544 = vadd.f32 %v3941, %v4284
        %v4545 = vadd.f32 %v3942, %v4286
        %v4546 = vadd.f32 %v3943, %v4288
        %v4547 = vadd.f32 %v3944, %v4287
        %v4548 = vadd.f32 %v3945, %v4291
        %v4549 = vadd.f32 %v3946, %v4293
        %v4550 = vadd.f32 %v3947, %v4295
        %v4551 = vadd.f32 %v3948, %v4294
        %v4552 = vadd.f32 %v3949, %v4298
        %v4553 = vadd.f32 %v3950, %v4300
        %v4554 = vadd.f32 %v3951, %v4302
        %v4555 = vadd.f32 %v3952, %v4301
        %v4556 = vadd.f32 %v3953, %v4305
        %v4557 = vadd.f32 %v3954, %v4307
        %v4558 = vadd.f32 %v3955, %v4309
        %v4559 = vadd.f32 %v3956, %v4308
        %v4560 = vadd.f32 %v3957, %v4312
        %v4561 = vadd.f32 %v3958, %v4314
        %v4562 = vadd.f32 %v3959, %v4316
        %v4563 = vadd.f32 %v3960, %v4315
        %v4564 = vadd.f32 %v3961, %v4319
        %v4565 = vadd.f32 %v3962, %v4321
        %v4566 = vadd.f32 %v3963, %v4323
        %v4567 = vadd.f32 %v3964, %v4322
        %v4568 = vadd.f32 %v3965, %v4326
        %v4569 = vadd.f32 %v3966, %v4328
        %v4570 = vadd.f32 %v3967, %v4330
        %v4571 = vadd.f32 %v3968, %v4329
        %v4572 = vadd.f32 %v3969, %v4333
        %v4573 = vadd.f32 %v3970, %v4335
        %v4574 = vadd.f32 %v3971, %v4337
        %v4575 = vadd.f32 %v3972, %v4336
        %v4576 = vadd.f32 %v3973, %v4340
        %v4577 = vadd.f32 %v3974, %v4342
        %v4578 = vadd.f32 %v3975, %v4344
        %v4579 = vadd.f32 %v3976, %v4343
        %v4580 = vadd.f32 %v3977, %v4347
        %v4581 = vadd.f32 %v3978, %v4349
        %v4582 = vadd.f32 %v3979, %v4351
        %v4583 = vadd.f32 %v3980, %v4350
        %v4584 = vadd.f32 %v3981, %v4354
        %v4585 = vadd.f32 %v3982, %v4356
        %v4586 = vadd.f32 %v3983, %v4358
        %v4587 = vadd.f32 %v3984, %v4357
        %v4588 = vadd.f32 %v3985, %v4361
        %v4589 = vadd.f32 %v3986, %v4363
        %v4590 = vadd.f32 %v3987, %v4365
        %v4591 = vadd.f32 %v3988, %v4364
        %v4592 = vadd.f32 %v3989, %v4368
        %v4593 = vadd.f32 %v3990, %v4370
        %v4594 = vadd.f32 %v3991, %v4372
        %v4595 = vadd.f32 %v3992, %v4371
        %v4596 = vadd.f32 %v3993, %v4375
        %v4597 = vadd.f32 %v3994, %v4377
        %v4598 = vadd.f32 %v3995, %v4379
        %v4599 = vadd.f32 %v3996, %v4378
        %v4600 = vadd.f32 %v3997, %v4382
        %v4601 = vadd.f32 %v3998, %v4384
        %v4602 = vadd.f32 %v3999, %v4386
        %v4603 = vadd.f32 %v4000, %v4385
        %v4604 = vadd.f32 %v4001, %v4389
        %v4605 = vadd.f32 %v4002, %v4391
        %v4606 = vadd.f32 %v4003, %v4393
        %v4607 = vadd.f32 %v4004, %v4392
        %v4608 = vadd.f32 %v4005, %v4396
        %v4609 = vadd.f32 %v4006, %v4398
        %v4610 = vadd.f32 %v4007, %v4400
        %v4611 = vadd.f32 %v4008, %v4399
        %v4612 = vadd.f32 %v4009, %v4403
        %v4613 = vadd.f32 %v4010, %v4405
        %v4614 = vadd.f32 %v4011, %v4407
        %v4615 = vadd.f32 %v4012, %v4406
        %s4616 = scalar_lea.vmem [#allocation2], 8
        %v4617 = vld [vmem:[%s4616] sm:$0x1]
        %v4619 = vperm.slane %v4617, 0
        %v4621 = vmul.f32 %v445, %v4619
        %v4622 = vmul.f32 %v450, %v4619
        %v4623 = vmul.f32 %v455, %v4619
        %v4624 = vmul.f32 %v460, %v4619
        %v4625 = vmul.f32 %v465, %v4619
        %v4626 = vmul.f32 %v470, %v4619
        %v4627 = vmul.f32 %v475, %v4619
        %v4628 = vmul.f32 %v480, %v4619
        %v4629 = vmul.f32 %v485, %v4619
        %v4630 = vmul.f32 %v490, %v4619
        %v4631 = vmul.f32 %v495, %v4619
        %v4632 = vmul.f32 %v500, %v4619
        %v4633 = vmul.f32 %v505, %v4619
        %v4634 = vmul.f32 %v510, %v4619
        %v4635 = vmul.f32 %v515, %v4619
        %v4636 = vmul.f32 %v520, %v4619
        %v4637 = vmul.f32 %v525, %v4619
        %v4638 = vmul.f32 %v530, %v4619
        %v4639 = vmul.f32 %v535, %v4619
        %v4640 = vmul.f32 %v540, %v4619
        %v4641 = vmul.f32 %v545, %v4619
        %v4642 = vmul.f32 %v550, %v4619
        %v4643 = vmul.f32 %v555, %v4619
        %v4644 = vmul.f32 %v560, %v4619
        %v4645 = vmul.f32 %v565, %v4619
        %v4646 = vmul.f32 %v570, %v4619
        %v4647 = vmul.f32 %v575, %v4619
        %v4648 = vmul.f32 %v580, %v4619
        %v4649 = vmul.f32 %v585, %v4619
        %v4650 = vmul.f32 %v590, %v4619
        %v4651 = vmul.f32 %v595, %v4619
        %v4652 = vmul.f32 %v600, %v4619
        %v4653 = vmul.f32 %v605, %v4619
        %v4654 = vmul.f32 %v610, %v4619
        %v4655 = vmul.f32 %v615, %v4619
        %v4656 = vmul.f32 %v620, %v4619
        %v4657 = vmul.f32 %v625, %v4619
        %v4658 = vmul.f32 %v630, %v4619
        %v4659 = vmul.f32 %v635, %v4619
        %v4660 = vmul.f32 %v640, %v4619
        %v4661 = vmul.f32 %v645, %v4619
        %v4662 = vmul.f32 %v650, %v4619
        %v4663 = vmul.f32 %v655, %v4619
        %v4664 = vmul.f32 %v660, %v4619
        %v4665 = vmul.f32 %v665, %v4619
        %v4666 = vmul.f32 %v670, %v4619
        %v4667 = vmul.f32 %v675, %v4619
        %v4668 = vmul.f32 %v680, %v4619
        %v4669 = vmul.f32 %v685, %v4619
        %v4670 = vmul.f32 %v690, %v4619
        %v4671 = vmul.f32 %v695, %v4619
        %v4672 = vmul.f32 %v700, %v4619
        %v4673 = vmul.f32 %v705, %v4619
        %v4674 = vmul.f32 %v710, %v4619
        %v4675 = vmul.f32 %v715, %v4619
        %v4676 = vmul.f32 %v720, %v4619
        %v4677 = vmul.f32 %v725, %v4619
        %v4678 = vmul.f32 %v730, %v4619
        %v4679 = vmul.f32 %v735, %v4619
        %v4680 = vmul.f32 %v740, %v4619
        %v4681 = vmul.f32 %v745, %v4619
        %v4682 = vmul.f32 %v750, %v4619
        %v4683 = vmul.f32 %v755, %v4619
        %v4684 = vmul.f32 %v760, %v4619
        %v4685 = vmul.f32 %v765, %v4619
        %v4686 = vmul.f32 %v770, %v4619
        %v4687 = vmul.f32 %v775, %v4619
        %v4688 = vmul.f32 %v780, %v4619
        %v4689 = vmul.f32 %v785, %v4619
        %v4690 = vmul.f32 %v790, %v4619
        %v4691 = vmul.f32 %v795, %v4619
        %v4692 = vmul.f32 %v800, %v4619
        %v4693 = vmul.f32 %v805, %v4619
        %v4694 = vmul.f32 %v810, %v4619
        %v4695 = vmul.f32 %v815, %v4619
        %v4696 = vmul.f32 %v820, %v4619
        %v4697 = vmul.f32 %v825, %v4619
        %v4698 = vmul.f32 %v830, %v4619
        %v4699 = vmul.f32 %v835, %v4619
        %v4700 = vmul.f32 %v840, %v4619
        %v4701 = vmul.f32 %v845, %v4619
        %v4702 = vmul.f32 %v850, %v4619
        %v4703 = vmul.f32 %v855, %v4619
        %v4704 = vmul.f32 %v860, %v4619
        %v4705 = vmul.f32 %v865, %v4619
        %v4706 = vmul.f32 %v870, %v4619
        %v4707 = vmul.f32 %v875, %v4619
        %v4708 = vmul.f32 %v880, %v4619
        %v4709 = vmul.f32 %v885, %v4619
        %v4710 = vmul.f32 %v890, %v4619
        %v4711 = vmul.f32 %v895, %v4619
        %v4712 = vmul.f32 %v900, %v4619
        %v4713 = vmul.f32 %v905, %v4619
        %v4714 = vmul.f32 %v910, %v4619
        %v4715 = vmul.f32 %v915, %v4619
        %v4716 = vmul.f32 %v920, %v4619
        %v4717 = vmul.f32 %v2346, %v4619
        %v4718 = vmul.f32 %v2351, %v4619
        %v4719 = vmul.f32 %v2356, %v4619
        %v4720 = vmul.f32 %v2361, %v4619
        %v4721 = vmul.f32 %v3785, %v4619
        %v4722 = vmul.f32 %v3790, %v4619
        %v4723 = vmul.f32 %v3795, %v4619
        %v4724 = vmul.f32 %v3800, %v4619
        %v4829 = vrot.slane %v4621, 2
        %v4830 = vrot.slane %v4622, 2
        %v4831 = vsel %vm1950, %v4829, %v4830
        %v4832 = vrot.slane %v4623, 2
        %v4833 = vsel %vm1950, %v4830, %v4832
        %v4834 = vrot.slane %v4624, 2
        %v4835 = vsel %vm1950, %v4832, %v4834
        %v4836 = vrot.slane %v4625, 2
        %v4837 = vrot.slane %v4626, 2
        %v4838 = vsel %vm1950, %v4836, %v4837
        %v4839 = vrot.slane %v4627, 2
        %v4840 = vsel %vm1950, %v4837, %v4839
        %v4841 = vrot.slane %v4628, 2
        %v4842 = vsel %vm1950, %v4839, %v4841
        %v4843 = vrot.slane %v4629, 2
        %v4844 = vrot.slane %v4630, 2
        %v4845 = vsel %vm1950, %v4843, %v4844
        %v4846 = vrot.slane %v4631, 2
        %v4847 = vsel %vm1950, %v4844, %v4846
        %v4848 = vrot.slane %v4632, 2
        %v4849 = vsel %vm1950, %v4846, %v4848
        %v4850 = vrot.slane %v4633, 2
        %v4851 = vrot.slane %v4634, 2
        %v4852 = vsel %vm1950, %v4850, %v4851
        %v4853 = vrot.slane %v4635, 2
        %v4854 = vsel %vm1950, %v4851, %v4853
        %v4855 = vrot.slane %v4636, 2
        %v4856 = vsel %vm1950, %v4853, %v4855
        %v4857 = vrot.slane %v4637, 2
        %v4858 = vrot.slane %v4638, 2
        %v4859 = vsel %vm1950, %v4857, %v4858
        %v4860 = vrot.slane %v4639, 2
        %v4861 = vsel %vm1950, %v4858, %v4860
        %v4862 = vrot.slane %v4640, 2
        %v4863 = vsel %vm1950, %v4860, %v4862
        %v4864 = vrot.slane %v4641, 2
        %v4865 = vrot.slane %v4642, 2
        %v4866 = vsel %vm1950, %v4864, %v4865
        %v4867 = vrot.slane %v4643, 2
        %v4868 = vsel %vm1950, %v4865, %v4867
        %v4869 = vrot.slane %v4644, 2
        %v4870 = vsel %vm1950, %v4867, %v4869
        %v4871 = vrot.slane %v4645, 2
        %v4872 = vrot.slane %v4646, 2
        %v4873 = vsel %vm1950, %v4871, %v4872
        %v4874 = vrot.slane %v4647, 2
        %v4875 = vsel %vm1950, %v4872, %v4874
        %v4876 = vrot.slane %v4648, 2
        %v4877 = vsel %vm1950, %v4874, %v4876
        %v4878 = vrot.slane %v4649, 2
        %v4879 = vrot.slane %v4650, 2
        %v4880 = vsel %vm1950, %v4878, %v4879
        %v4881 = vrot.slane %v4651, 2
        %v4882 = vsel %vm1950, %v4879, %v4881
        %v4883 = vrot.slane %v4652, 2
        %v4884 = vsel %vm1950, %v4881, %v4883
        %v4885 = vrot.slane %v4653, 2
        %v4886 = vrot.slane %v4654, 2
        %v4887 = vsel %vm1950, %v4885, %v4886
        %v4888 = vrot.slane %v4655, 2
        %v4889 = vsel %vm1950, %v4886, %v4888
        %v4890 = vrot.slane %v4656, 2
        %v4891 = vsel %vm1950, %v4888, %v4890
        %v4892 = vrot.slane %v4657, 2
        %v4893 = vrot.slane %v4658, 2
        %v4894 = vsel %vm1950, %v4892, %v4893
        %v4895 = vrot.slane %v4659, 2
        %v4896 = vsel %vm1950, %v4893, %v4895
        %v4897 = vrot.slane %v4660, 2
        %v4898 = vsel %vm1950, %v4895, %v4897
        %v4899 = vrot.slane %v4661, 2
        %v4900 = vrot.slane %v4662, 2
        %v4901 = vsel %vm1950, %v4899, %v4900
        %v4902 = vrot.slane %v4663, 2
        %v4903 = vsel %vm1950, %v4900, %v4902
        %v4904 = vrot.slane %v4664, 2
        %v4905 = vsel %vm1950, %v4902, %v4904
        %v4906 = vrot.slane %v4665, 2
        %v4907 = vrot.slane %v4666, 2
        %v4908 = vsel %vm1950, %v4906, %v4907
        %v4909 = vrot.slane %v4667, 2
        %v4910 = vsel %vm1950, %v4907, %v4909
        %v4911 = vrot.slane %v4668, 2
        %v4912 = vsel %vm1950, %v4909, %v4911
        %v4913 = vrot.slane %v4669, 2
        %v4914 = vrot.slane %v4670, 2
        %v4915 = vsel %vm1950, %v4913, %v4914
        %v4916 = vrot.slane %v4671, 2
        %v4917 = vsel %vm1950, %v4914, %v4916
        %v4918 = vrot.slane %v4672, 2
        %v4919 = vsel %vm1950, %v4916, %v4918
        %v4920 = vrot.slane %v4673, 2
        %v4921 = vrot.slane %v4674, 2
        %v4922 = vsel %vm1950, %v4920, %v4921
        %v4923 = vrot.slane %v4675, 2
        %v4924 = vsel %vm1950, %v4921, %v4923
        %v4925 = vrot.slane %v4676, 2
        %v4926 = vsel %vm1950, %v4923, %v4925
        %v4927 = vrot.slane %v4677, 2
        %v4928 = vrot.slane %v4678, 2
        %v4929 = vsel %vm1950, %v4927, %v4928
        %v4930 = vrot.slane %v4679, 2
        %v4931 = vsel %vm1950, %v4928, %v4930
        %v4932 = vrot.slane %v4680, 2
        %v4933 = vsel %vm1950, %v4930, %v4932
        %v4934 = vrot.slane %v4681, 2
        %v4935 = vrot.slane %v4682, 2
        %v4936 = vsel %vm1950, %v4934, %v4935
        %v4937 = vrot.slane %v4683, 2
        %v4938 = vsel %vm1950, %v4935, %v4937
        %v4939 = vrot.slane %v4684, 2
        %v4940 = vsel %vm1950, %v4937, %v4939
        %v4941 = vrot.slane %v4685, 2
        %v4942 = vrot.slane %v4686, 2
        %v4943 = vsel %vm1950, %v4941, %v4942
        %v4944 = vrot.slane %v4687, 2
        %v4945 = vsel %vm1950, %v4942, %v4944
        %v4946 = vrot.slane %v4688, 2
        %v4947 = vsel %vm1950, %v4944, %v4946
        %v4948 = vrot.slane %v4689, 2
        %v4949 = vrot.slane %v4690, 2
        %v4950 = vsel %vm1950, %v4948, %v4949
        %v4951 = vrot.slane %v4691, 2
        %v4952 = vsel %vm1950, %v4949, %v4951
        %v4953 = vrot.slane %v4692, 2
        %v4954 = vsel %vm1950, %v4951, %v4953
        %v4955 = vrot.slane %v4693, 2
        %v4956 = vrot.slane %v4694, 2
        %v4957 = vsel %vm1950, %v4955, %v4956
        %v4958 = vrot.slane %v4695, 2
        %v4959 = vsel %vm1950, %v4956, %v4958
        %v4960 = vrot.slane %v4696, 2
        %v4961 = vsel %vm1950, %v4958, %v4960
        %v4962 = vrot.slane %v4697, 2
        %v4963 = vrot.slane %v4698, 2
        %v4964 = vsel %vm1950, %v4962, %v4963
        %v4965 = vrot.slane %v4699, 2
        %v4966 = vsel %vm1950, %v4963, %v4965
        %v4967 = vrot.slane %v4700, 2
        %v4968 = vsel %vm1950, %v4965, %v4967
        %v4969 = vrot.slane %v4701, 2
        %v4970 = vrot.slane %v4702, 2
        %v4971 = vsel %vm1950, %v4969, %v4970
        %v4972 = vrot.slane %v4703, 2
        %v4973 = vsel %vm1950, %v4970, %v4972
        %v4974 = vrot.slane %v4704, 2
        %v4975 = vsel %vm1950, %v4972, %v4974
        %v4976 = vrot.slane %v4705, 2
        %v4977 = vrot.slane %v4706, 2
        %v4978 = vsel %vm1950, %v4976, %v4977
        %v4979 = vrot.slane %v4707, 2
        %v4980 = vsel %vm1950, %v4977, %v4979
        %v4981 = vrot.slane %v4708, 2
        %v4982 = vsel %vm1950, %v4979, %v4981
        %v4983 = vrot.slane %v4709, 2
        %v4984 = vrot.slane %v4710, 2
        %v4985 = vsel %vm1950, %v4983, %v4984
        %v4986 = vrot.slane %v4711, 2
        %v4987 = vsel %vm1950, %v4984, %v4986
        %v4988 = vrot.slane %v4712, 2
        %v4989 = vsel %vm1950, %v4986, %v4988
        %v4990 = vrot.slane %v4713, 2
        %v4991 = vrot.slane %v4714, 2
        %v4992 = vsel %vm1950, %v4990, %v4991
        %v4993 = vrot.slane %v4715, 2
        %v4994 = vsel %vm1950, %v4991, %v4993
        %v4995 = vrot.slane %v4716, 2
        %v4996 = vsel %vm1950, %v4993, %v4995
        %v4997 = vrot.slane %v4717, 2
        %v4998 = vrot.slane %v4718, 2
        %v4999 = vsel %vm1950, %v4997, %v4998
        %v5000 = vrot.slane %v4719, 2
        %v5001 = vsel %vm1950, %v4998, %v5000
        %v5002 = vrot.slane %v4720, 2
        %v5003 = vsel %vm1950, %v5000, %v5002
        %v5004 = vrot.slane %v4721, 2
        %v5005 = vrot.slane %v4722, 2
        %v5006 = vsel %vm1950, %v5004, %v5005
        %v5007 = vrot.slane %v4723, 2
        %v5008 = vsel %vm1950, %v5005, %v5007
        %v5009 = vrot.slane %v4724, 2
        %v5010 = vsel %vm1950, %v5007, %v5009
        %v5115 = vadd.f32 %v4512, %v4831
        %v5116 = vadd.f32 %v4513, %v4833
        %v5117 = vadd.f32 %v4514, %v4835
        %v5118 = vadd.f32 %v4515, %v4834
        %v5119 = vadd.f32 %v4516, %v4838
        %v5120 = vadd.f32 %v4517, %v4840
        %v5121 = vadd.f32 %v4518, %v4842
        %v5122 = vadd.f32 %v4519, %v4841
        %v5123 = vadd.f32 %v4520, %v4845
        %v5124 = vadd.f32 %v4521, %v4847
        %v5125 = vadd.f32 %v4522, %v4849
        %v5126 = vadd.f32 %v4523, %v4848
        %v5127 = vadd.f32 %v4524, %v4852
        %v5128 = vadd.f32 %v4525, %v4854
        %v5129 = vadd.f32 %v4526, %v4856
        %v5130 = vadd.f32 %v4527, %v4855
        %v5131 = vadd.f32 %v4528, %v4859
        %v5132 = vadd.f32 %v4529, %v4861
        %v5133 = vadd.f32 %v4530, %v4863
        %v5134 = vadd.f32 %v4531, %v4862
        %v5135 = vadd.f32 %v4532, %v4866
        %v5136 = vadd.f32 %v4533, %v4868
        %v5137 = vadd.f32 %v4534, %v4870
        %v5138 = vadd.f32 %v4535, %v4869
        %v5139 = vadd.f32 %v4536, %v4873
        %v5140 = vadd.f32 %v4537, %v4875
        %v5141 = vadd.f32 %v4538, %v4877
        %v5142 = vadd.f32 %v4539, %v4876
        %v5143 = vadd.f32 %v4540, %v4880
        %v5144 = vadd.f32 %v4541, %v4882
        %v5145 = vadd.f32 %v4542, %v4884
        %v5146 = vadd.f32 %v4543, %v4883
        %v5147 = vadd.f32 %v4544, %v4887
        %v5148 = vadd.f32 %v4545, %v4889
        %v5149 = vadd.f32 %v4546, %v4891
        %v5150 = vadd.f32 %v4547, %v4890
        %v5151 = vadd.f32 %v4548, %v4894
        %v5152 = vadd.f32 %v4549, %v4896
        %v5153 = vadd.f32 %v4550, %v4898
        %v5154 = vadd.f32 %v4551, %v4897
        %v5155 = vadd.f32 %v4552, %v4901
        %v5156 = vadd.f32 %v4553, %v4903
        %v5157 = vadd.f32 %v4554, %v4905
        %v5158 = vadd.f32 %v4555, %v4904
        %v5159 = vadd.f32 %v4556, %v4908
        %v5160 = vadd.f32 %v4557, %v4910
        %v5161 = vadd.f32 %v4558, %v4912
        %v5162 = vadd.f32 %v4559, %v4911
        %v5163 = vadd.f32 %v4560, %v4915
        %v5164 = vadd.f32 %v4561, %v4917
        %v5165 = vadd.f32 %v4562, %v4919
        %v5166 = vadd.f32 %v4563, %v4918
        %v5167 = vadd.f32 %v4564, %v4922
        %v5168 = vadd.f32 %v4565, %v4924
        %v5169 = vadd.f32 %v4566, %v4926
        %v5170 = vadd.f32 %v4567, %v4925
        %v5171 = vadd.f32 %v4568, %v4929
        %v5172 = vadd.f32 %v4569, %v4931
        %v5173 = vadd.f32 %v4570, %v4933
        %v5174 = vadd.f32 %v4571, %v4932
        %v5175 = vadd.f32 %v4572, %v4936
        %v5176 = vadd.f32 %v4573, %v4938
        %v5177 = vadd.f32 %v4574, %v4940
        %v5178 = vadd.f32 %v4575, %v4939
        %v5179 = vadd.f32 %v4576, %v4943
        %v5180 = vadd.f32 %v4577, %v4945
        %v5181 = vadd.f32 %v4578, %v4947
        %v5182 = vadd.f32 %v4579, %v4946
        %v5183 = vadd.f32 %v4580, %v4950
        %v5184 = vadd.f32 %v4581, %v4952
        %v5185 = vadd.f32 %v4582, %v4954
        %v5186 = vadd.f32 %v4583, %v4953
        %v5187 = vadd.f32 %v4584, %v4957
        %v5188 = vadd.f32 %v4585, %v4959
        %v5189 = vadd.f32 %v4586, %v4961
        %v5190 = vadd.f32 %v4587, %v4960
        %v5191 = vadd.f32 %v4588, %v4964
        %v5192 = vadd.f32 %v4589, %v4966
        %v5193 = vadd.f32 %v4590, %v4968
        %v5194 = vadd.f32 %v4591, %v4967
        %v5195 = vadd.f32 %v4592, %v4971
        %v5196 = vadd.f32 %v4593, %v4973
        %v5197 = vadd.f32 %v4594, %v4975
        %v5198 = vadd.f32 %v4595, %v4974
        %v5199 = vadd.f32 %v4596, %v4978
        %v5200 = vadd.f32 %v4597, %v4980
        %v5201 = vadd.f32 %v4598, %v4982
        %v5202 = vadd.f32 %v4599, %v4981
        %v5203 = vadd.f32 %v4600, %v4985
        %v5204 = vadd.f32 %v4601, %v4987
        %v5205 = vadd.f32 %v4602, %v4989
        %v5206 = vadd.f32 %v4603, %v4988
        %v5207 = vadd.f32 %v4604, %v4992
        %v5208 = vadd.f32 %v4605, %v4994
        %v5209 = vadd.f32 %v4606, %v4996
        %v5210 = vadd.f32 %v4607, %v4995
        %v5211 = vadd.f32 %v4608, %v4999
        %v5212 = vadd.f32 %v4609, %v5001
        %v5213 = vadd.f32 %v4610, %v5003
        %v5214 = vadd.f32 %v4611, %v5002
        %v5215 = vadd.f32 %v4612, %v5006
        %v5216 = vadd.f32 %v4613, %v5008
        %v5217 = vadd.f32 %v4614, %v5010
        %v5218 = vadd.f32 %v4615, %v5009
        %v5219 = vld [vmem:[#allocation4] sm:$0x1]
        %v5221 = vperm.slane %v5219, 0
        %v5223 = vadd.f32 %v5115, %v5221
        %v5224 = vadd.f32 %v5116, %v5221
        %v5225 = vadd.f32 %v5117, %v5221
        %v5226 = vadd.f32 %v5118, %v5221
        %v5227 = vadd.f32 %v5119, %v5221
        %v5228 = vadd.f32 %v5120, %v5221
        %v5229 = vadd.f32 %v5121, %v5221
        %v5230 = vadd.f32 %v5122, %v5221
        %v5231 = vadd.f32 %v5123, %v5221
        %v5232 = vadd.f32 %v5124, %v5221
        %v5233 = vadd.f32 %v5125, %v5221
        %v5234 = vadd.f32 %v5126, %v5221
        %v5235 = vadd.f32 %v5127, %v5221
        %v5236 = vadd.f32 %v5128, %v5221
        %v5237 = vadd.f32 %v5129, %v5221
        %v5238 = vadd.f32 %v5130, %v5221
        %v5239 = vadd.f32 %v5131, %v5221
        %v5240 = vadd.f32 %v5132, %v5221
        %v5241 = vadd.f32 %v5133, %v5221
        %v5242 = vadd.f32 %v5134, %v5221
        %v5243 = vadd.f32 %v5135, %v5221
        %v5244 = vadd.f32 %v5136, %v5221
        %v5245 = vadd.f32 %v5137, %v5221
        %v5246 = vadd.f32 %v5138, %v5221
        %v5247 = vadd.f32 %v5139, %v5221
        %v5248 = vadd.f32 %v5140, %v5221
        %v5249 = vadd.f32 %v5141, %v5221
        %v5250 = vadd.f32 %v5142, %v5221
        %v5251 = vadd.f32 %v5143, %v5221
        %v5252 = vadd.f32 %v5144, %v5221
        %v5253 = vadd.f32 %v5145, %v5221
        %v5254 = vadd.f32 %v5146, %v5221
        %v5255 = vadd.f32 %v5147, %v5221
        %v5256 = vadd.f32 %v5148, %v5221
        %v5257 = vadd.f32 %v5149, %v5221
        %v5258 = vadd.f32 %v5150, %v5221
        %v5259 = vadd.f32 %v5151, %v5221
        %v5260 = vadd.f32 %v5152, %v5221
        %v5261 = vadd.f32 %v5153, %v5221
        %v5262 = vadd.f32 %v5154, %v5221
        %v5263 = vadd.f32 %v5155, %v5221
        %v5264 = vadd.f32 %v5156, %v5221
        %v5265 = vadd.f32 %v5157, %v5221
        %v5266 = vadd.f32 %v5158, %v5221
        %v5267 = vadd.f32 %v5159, %v5221
        %v5268 = vadd.f32 %v5160, %v5221
        %v5269 = vadd.f32 %v5161, %v5221
        %v5270 = vadd.f32 %v5162, %v5221
        %v5271 = vadd.f32 %v5163, %v5221
        %v5272 = vadd.f32 %v5164, %v5221
        %v5273 = vadd.f32 %v5165, %v5221
        %v5274 = vadd.f32 %v5166, %v5221
        %v5275 = vadd.f32 %v5167, %v5221
        %v5276 = vadd.f32 %v5168, %v5221
        %v5277 = vadd.f32 %v5169, %v5221
        %v5278 = vadd.f32 %v5170, %v5221
        %v5279 = vadd.f32 %v5171, %v5221
        %v5280 = vadd.f32 %v5172, %v5221
        %v5281 = vadd.f32 %v5173, %v5221
        %v5282 = vadd.f32 %v5174, %v5221
        %v5283 = vadd.f32 %v5175, %v5221
        %v5284 = vadd.f32 %v5176, %v5221
        %v5285 = vadd.f32 %v5177, %v5221
        %v5286 = vadd.f32 %v5178, %v5221
        %v5287 = vadd.f32 %v5179, %v5221
        %v5288 = vadd.f32 %v5180, %v5221
        %v5289 = vadd.f32 %v5181, %v5221
        %v5290 = vadd.f32 %v5182, %v5221
        %v5291 = vadd.f32 %v5183, %v5221
        %v5292 = vadd.f32 %v5184, %v5221
        %v5293 = vadd.f32 %v5185, %v5221
        %v5294 = vadd.f32 %v5186, %v5221
        %v5295 = vadd.f32 %v5187, %v5221
        %v5296 = vadd.f32 %v5188, %v5221
        %v5297 = vadd.f32 %v5189, %v5221
        %v5298 = vadd.f32 %v5190, %v5221
        %v5299 = vadd.f32 %v5191, %v5221
        %v5300 = vadd.f32 %v5192, %v5221
        %v5301 = vadd.f32 %v5193, %v5221
        %v5302 = vadd.f32 %v5194, %v5221
        %v5303 = vadd.f32 %v5195, %v5221
        %v5304 = vadd.f32 %v5196, %v5221
        %v5305 = vadd.f32 %v5197, %v5221
        %v5306 = vadd.f32 %v5198, %v5221
        %v5307 = vadd.f32 %v5199, %v5221
        %v5308 = vadd.f32 %v5200, %v5221
        %v5309 = vadd.f32 %v5201, %v5221
        %v5310 = vadd.f32 %v5202, %v5221
        %v5311 = vadd.f32 %v5203, %v5221
        %v5312 = vadd.f32 %v5204, %v5221
        %v5313 = vadd.f32 %v5205, %v5221
        %v5314 = vadd.f32 %v5206, %v5221
        %v5315 = vadd.f32 %v5207, %v5221
        %v5316 = vadd.f32 %v5208, %v5221
        %v5317 = vadd.f32 %v5209, %v5221
        %v5318 = vadd.f32 %v5210, %v5221
        %v5319 = vadd.f32 %v5211, %v5221
        %v5320 = vadd.f32 %v5212, %v5221
        %v5321 = vadd.f32 %v5213, %v5221
        %v5322 = vadd.f32 %v5214, %v5221
        %v5323 = vadd.f32 %v5215, %v5221
        %v5324 = vadd.f32 %v5216, %v5221
        %v5325 = vadd.f32 %v5217, %v5221
        %v5326 = vadd.f32 %v5218, %v5221
        %v5327 = vmax.f32 %v5223, 0.0
        %v5328 = vmax.f32 %v5224, 0.0
        %v5329 = vmax.f32 %v5225, 0.0
        %v5330 = vmax.f32 %v5226, 0.0
        %v5331 = vmax.f32 %v5227, 0.0
        %v5332 = vmax.f32 %v5228, 0.0
        %v5333 = vmax.f32 %v5229, 0.0
        %v5334 = vmax.f32 %v5230, 0.0
        %v5335 = vmax.f32 %v5231, 0.0
        %v5336 = vmax.f32 %v5232, 0.0
        %v5337 = vmax.f32 %v5233, 0.0
        %v5338 = vmax.f32 %v5234, 0.0
        %v5339 = vmax.f32 %v5235, 0.0
        %v5340 = vmax.f32 %v5236, 0.0
        %v5341 = vmax.f32 %v5237, 0.0
        %v5342 = vmax.f32 %v5238, 0.0
        %v5343 = vmax.f32 %v5239, 0.0
        %v5344 = vmax.f32 %v5240, 0.0
        %v5345 = vmax.f32 %v5241, 0.0
        %v5346 = vmax.f32 %v5242, 0.0
        %v5347 = vmax.f32 %v5243, 0.0
        %v5348 = vmax.f32 %v5244, 0.0
        %v5349 = vmax.f32 %v5245, 0.0
        %v5350 = vmax.f32 %v5246, 0.0
        %v5351 = vmax.f32 %v5247, 0.0
        %v5352 = vmax.f32 %v5248, 0.0
        %v5353 = vmax.f32 %v5249, 0.0
        %v5354 = vmax.f32 %v5250, 0.0
        %v5355 = vmax.f32 %v5251, 0.0
        %v5356 = vmax.f32 %v5252, 0.0
        %v5357 = vmax.f32 %v5253, 0.0
        %v5358 = vmax.f32 %v5254, 0.0
        %v5359 = vmax.f32 %v5255, 0.0
        %v5360 = vmax.f32 %v5256, 0.0
        %v5361 = vmax.f32 %v5257, 0.0
        %v5362 = vmax.f32 %v5258, 0.0
        %v5363 = vmax.f32 %v5259, 0.0
        %v5364 = vmax.f32 %v5260, 0.0
        %v5365 = vmax.f32 %v5261, 0.0
        %v5366 = vmax.f32 %v5262, 0.0
        %v5367 = vmax.f32 %v5263, 0.0
        %v5368 = vmax.f32 %v5264, 0.0
        %v5369 = vmax.f32 %v5265, 0.0
        %v5370 = vmax.f32 %v5266, 0.0
        %v5371 = vmax.f32 %v5267, 0.0
        %v5372 = vmax.f32 %v5268, 0.0
        %v5373 = vmax.f32 %v5269, 0.0
        %v5374 = vmax.f32 %v5270, 0.0
        %v5375 = vmax.f32 %v5271, 0.0
        %v5376 = vmax.f32 %v5272, 0.0
        %v5377 = vmax.f32 %v5273, 0.0
        %v5378 = vmax.f32 %v5274, 0.0
        %v5379 = vmax.f32 %v5275, 0.0
        %v5380 = vmax.f32 %v5276, 0.0
        %v5381 = vmax.f32 %v5277, 0.0
        %v5382 = vmax.f32 %v5278, 0.0
        %v5383 = vmax.f32 %v5279, 0.0
        %v5384 = vmax.f32 %v5280, 0.0
        %v5385 = vmax.f32 %v5281, 0.0
        %v5386 = vmax.f32 %v5282, 0.0
        %v5387 = vmax.f32 %v5283, 0.0
        %v5388 = vmax.f32 %v5284, 0.0
        %v5389 = vmax.f32 %v5285, 0.0
        %v5390 = vmax.f32 %v5286, 0.0
        %v5391 = vmax.f32 %v5287, 0.0
        %v5392 = vmax.f32 %v5288, 0.0
        %v5393 = vmax.f32 %v5289, 0.0
        %v5394 = vmax.f32 %v5290, 0.0
        %v5395 = vmax.f32 %v5291, 0.0
        %v5396 = vmax.f32 %v5292, 0.0
        %v5397 = vmax.f32 %v5293, 0.0
        %v5398 = vmax.f32 %v5294, 0.0
        %v5399 = vmax.f32 %v5295, 0.0
        %v5400 = vmax.f32 %v5296, 0.0
        %v5401 = vmax.f32 %v5297, 0.0
        %v5402 = vmax.f32 %v5298, 0.0
        %v5403 = vmax.f32 %v5299, 0.0
        %v5404 = vmax.f32 %v5300, 0.0
        %v5405 = vmax.f32 %v5301, 0.0
        %v5406 = vmax.f32 %v5302, 0.0
        %v5407 = vmax.f32 %v5303, 0.0
        %v5408 = vmax.f32 %v5304, 0.0
        %v5409 = vmax.f32 %v5305, 0.0
        %v5410 = vmax.f32 %v5306, 0.0
        %v5411 = vmax.f32 %v5307, 0.0
        %v5412 = vmax.f32 %v5308, 0.0
        %v5413 = vmax.f32 %v5309, 0.0
        %v5414 = vmax.f32 %v5310, 0.0
        %v5415 = vmax.f32 %v5311, 0.0
        %v5416 = vmax.f32 %v5312, 0.0
        %v5417 = vmax.f32 %v5313, 0.0
        %v5418 = vmax.f32 %v5314, 0.0
        %v5419 = vmax.f32 %v5315, 0.0
        %v5420 = vmax.f32 %v5316, 0.0
        %v5421 = vmax.f32 %v5317, 0.0
        %v5422 = vmax.f32 %v5318, 0.0
        %v5423 = vmax.f32 %v5319, 0.0
        %v5424 = vmax.f32 %v5320, 0.0
        %v5425 = vmax.f32 %v5321, 0.0
        %v5426 = vmax.f32 %v5322, 0.0
        %v5427 = vmax.f32 %v5323, 0.0
        %v5428 = vmax.f32 %v5324, 0.0
        %v5429 = vmax.f32 %v5325, 0.0
        %v5430 = vmax.f32 %v5326, 0.0
        %v5431 = vpack.c.bf16 %v5328, %v5327
        %v5432 = vpack.c.bf16 %v5331, %v5329
        %v5433 = vpack.c.bf16 %v5333, %v5332
        %v5434 = vpack.c.bf16 %v5336, %v5335
        %v5435 = vpack.c.bf16 %v5339, %v5337
        %v5436 = vpack.c.bf16 %v5341, %v5340
        %v5437 = vpack.c.bf16 %v5344, %v5343
        %v5438 = vpack.c.bf16 %v5347, %v5345
        %v5439 = vpack.c.bf16 %v5349, %v5348
        %v5440 = vpack.c.bf16 %v5352, %v5351
        %v5441 = vpack.c.bf16 %v5355, %v5353
        %v5442 = vpack.c.bf16 %v5357, %v5356
        %v5443 = vpack.c.bf16 %v5360, %v5359
        %v5444 = vpack.c.bf16 %v5363, %v5361
        %v5445 = vpack.c.bf16 %v5365, %v5364
        %v5446 = vpack.c.bf16 %v5368, %v5367
        %v5447 = vpack.c.bf16 %v5371, %v5369
        %v5448 = vpack.c.bf16 %v5373, %v5372
        %v5449 = vpack.c.bf16 %v5376, %v5375
        %v5450 = vpack.c.bf16 %v5379, %v5377
        %v5451 = vpack.c.bf16 %v5381, %v5380
        %v5452 = vpack.c.bf16 %v5384, %v5383
        %v5453 = vpack.c.bf16 %v5387, %v5385
        %v5454 = vpack.c.bf16 %v5389, %v5388
        %v5455 = vpack.c.bf16 %v5392, %v5391
        %v5456 = vpack.c.bf16 %v5395, %v5393
        %v5457 = vpack.c.bf16 %v5397, %v5396
        %v5458 = vpack.c.bf16 %v5400, %v5399
        %v5459 = vpack.c.bf16 %v5403, %v5401
        %v5460 = vpack.c.bf16 %v5405, %v5404
        %v5461 = vpack.c.bf16 %v5408, %v5407
        %v5462 = vpack.c.bf16 %v5411, %v5409
        %v5463 = vpack.c.bf16 %v5413, %v5412
        %v5464 = vpack.c.bf16 %v5416, %v5415
        %v5465 = vpack.c.bf16 %v5419, %v5417
        %v5466 = vpack.c.bf16 %v5421, %v5420
        %v5467 = vld [vmem:[#allocation6] sm:$0xf]
        %v5468 = vld [vmem:[#allocation6 + $0x4] sm:$0xf]
        %v5469 = vld [vmem:[#allocation6 + $0x8] sm:$0xf]
        %v5470 = vld [vmem:[#allocation6 + $0xc] sm:$0xf]
        %v5567 = vrot.slane %v5327, 1
        %v5568 = vrot.slane %v5328, 1
        %v5569 = vsel %vm1346, %v5567, %v5568
        %v5570 = vrot.slane %v5329, 1
        %v5571 = vsel %vm1346, %v5568, %v5570
        %v5572 = vrot.slane %v5330, 1
        %v5573 = vsel %vm1346, %v5570, %v5572
        %v5574 = vrot.slane %v5331, 1
        %v5575 = vrot.slane %v5332, 1
        %v5576 = vsel %vm1346, %v5574, %v5575
        %v5577 = vrot.slane %v5333, 1
        %v5578 = vsel %vm1346, %v5575, %v5577
        %v5579 = vrot.slane %v5334, 1
        %v5580 = vsel %vm1346, %v5577, %v5579
        %v5581 = vrot.slane %v5335, 1
        %v5582 = vrot.slane %v5336, 1
        %v5583 = vsel %vm1346, %v5581, %v5582
        %v5584 = vrot.slane %v5337, 1
        %v5585 = vsel %vm1346, %v5582, %v5584
        %v5586 = vrot.slane %v5338, 1
        %v5587 = vsel %vm1346, %v5584, %v5586
        %v5588 = vrot.slane %v5339, 1
        %v5589 = vrot.slane %v5340, 1
        %v5590 = vsel %vm1346, %v5588, %v5589
        %v5591 = vrot.slane %v5341, 1
        %v5592 = vsel %vm1346, %v5589, %v5591
        %v5593 = vrot.slane %v5342, 1
        %v5594 = vsel %vm1346, %v5591, %v5593
        %v5595 = vrot.slane %v5343, 1
        %v5596 = vrot.slane %v5344, 1
        %v5597 = vsel %vm1346, %v5595, %v5596
        %v5598 = vrot.slane %v5345, 1
        %v5599 = vsel %vm1346, %v5596, %v5598
        %v5600 = vrot.slane %v5346, 1
        %v5601 = vsel %vm1346, %v5598, %v5600
        %v5602 = vrot.slane %v5347, 1
        %v5603 = vrot.slane %v5348, 1
        %v5604 = vsel %vm1346, %v5602, %v5603
        %v5605 = vrot.slane %v5349, 1
        %v5606 = vsel %vm1346, %v5603, %v5605
        %v5607 = vrot.slane %v5350, 1
        %v5608 = vsel %vm1346, %v5605, %v5607
        %v5609 = vrot.slane %v5351, 1
        %v5610 = vrot.slane %v5352, 1
        %v5611 = vsel %vm1346, %v5609, %v5610
        %v5612 = vrot.slane %v5353, 1
        %v5613 = vsel %vm1346, %v5610, %v5612
        %v5614 = vrot.slane %v5354, 1
        %v5615 = vsel %vm1346, %v5612, %v5614
        %v5616 = vrot.slane %v5355, 1
        %v5617 = vrot.slane %v5356, 1
        %v5618 = vsel %vm1346, %v5616, %v5617
        %v5619 = vrot.slane %v5357, 1
        %v5620 = vsel %vm1346, %v5617, %v5619
        %v5621 = vrot.slane %v5358, 1
        %v5622 = vsel %vm1346, %v5619, %v5621
        %v5623 = vrot.slane %v5359, 1
        %v5624 = vrot.slane %v5360, 1
        %v5625 = vsel %vm1346, %v5623, %v5624
        %v5626 = vrot.slane %v5361, 1
        %v5627 = vsel %vm1346, %v5624, %v5626
        %v5628 = vrot.slane %v5362, 1
        %v5629 = vsel %vm1346, %v5626, %v5628
        %v5630 = vrot.slane %v5363, 1
        %v5631 = vrot.slane %v5364, 1
        %v5632 = vsel %vm1346, %v5630, %v5631
        %v5633 = vrot.slane %v5365, 1
        %v5634 = vsel %vm1346, %v5631, %v5633
        %v5635 = vrot.slane %v5366, 1
        %v5636 = vsel %vm1346, %v5633, %v5635
        %v5637 = vrot.slane %v5367, 1
        %v5638 = vrot.slane %v5368, 1
        %v5639 = vsel %vm1346, %v5637, %v5638
        %v5640 = vrot.slane %v5369, 1
        %v5641 = vsel %vm1346, %v5638, %v5640
        %v5642 = vrot.slane %v5370, 1
        %v5643 = vsel %vm1346, %v5640, %v5642
        %v5644 = vrot.slane %v5371, 1
        %v5645 = vrot.slane %v5372, 1
        %v5646 = vsel %vm1346, %v5644, %v5645
        %v5647 = vrot.slane %v5373, 1
        %v5648 = vsel %vm1346, %v5645, %v5647
        %v5649 = vrot.slane %v5374, 1
        %v5650 = vsel %vm1346, %v5647, %v5649
        %v5651 = vrot.slane %v5375, 1
        %v5652 = vrot.slane %v5376, 1
        %v5653 = vsel %vm1346, %v5651, %v5652
        %v5654 = vrot.slane %v5377, 1
        %v5655 = vsel %vm1346, %v5652, %v5654
        %v5656 = vrot.slane %v5378, 1
        %v5657 = vsel %vm1346, %v5654, %v5656
        %v5658 = vrot.slane %v5379, 1
        %v5659 = vrot.slane %v5380, 1
        %v5660 = vsel %vm1346, %v5658, %v5659
        %v5661 = vrot.slane %v5381, 1
        %v5662 = vsel %vm1346, %v5659, %v5661
        %v5663 = vrot.slane %v5382, 1
        %v5664 = vsel %vm1346, %v5661, %v5663
        %v5665 = vrot.slane %v5383, 1
        %v5666 = vrot.slane %v5384, 1
        %v5667 = vsel %vm1346, %v5665, %v5666
        %v5668 = vrot.slane %v5385, 1
        %v5669 = vsel %vm1346, %v5666, %v5668
        %v5670 = vrot.slane %v5386, 1
        %v5671 = vsel %vm1346, %v5668, %v5670
        %v5672 = vrot.slane %v5387, 1
        %v5673 = vrot.slane %v5388, 1
        %v5674 = vsel %vm1346, %v5672, %v5673
        %v5675 = vrot.slane %v5389, 1
        %v5676 = vsel %vm1346, %v5673, %v5675
        %v5677 = vrot.slane %v5390, 1
        %v5678 = vsel %vm1346, %v5675, %v5677
        %v5679 = vrot.slane %v5391, 1
        %v5680 = vrot.slane %v5392, 1
        %v5681 = vsel %vm1346, %v5679, %v5680
        %v5682 = vrot.slane %v5393, 1
        %v5683 = vsel %vm1346, %v5680, %v5682
        %v5684 = vrot.slane %v5394, 1
        %v5685 = vsel %vm1346, %v5682, %v5684
        %v5686 = vrot.slane %v5395, 1
        %v5687 = vrot.slane %v5396, 1
        %v5688 = vsel %vm1346, %v5686, %v5687
        %v5689 = vrot.slane %v5397, 1
        %v5690 = vsel %vm1346, %v5687, %v5689
        %v5691 = vrot.slane %v5398, 1
        %v5692 = vsel %vm1346, %v5689, %v5691
        %v5693 = vrot.slane %v5399, 1
        %v5694 = vrot.slane %v5400, 1
        %v5695 = vsel %vm1346, %v5693, %v5694
        %v5696 = vrot.slane %v5401, 1
        %v5697 = vsel %vm1346, %v5694, %v5696
        %v5698 = vrot.slane %v5402, 1
        %v5699 = vsel %vm1346, %v5696, %v5698
        %v5700 = vrot.slane %v5403, 1
        %v5701 = vrot.slane %v5404, 1
        %v5702 = vsel %vm1346, %v5700, %v5701
        %v5703 = vrot.slane %v5405, 1
        %v5704 = vsel %vm1346, %v5701, %v5703
        %v5705 = vrot.slane %v5406, 1
        %v5706 = vsel %vm1346, %v5703, %v5705
        %v5707 = vrot.slane %v5407, 1
        %v5708 = vrot.slane %v5408, 1
        %v5709 = vsel %vm1346, %v5707, %v5708
        %v5710 = vrot.slane %v5409, 1
        %v5711 = vsel %vm1346, %v5708, %v5710
        %v5712 = vrot.slane %v5410, 1
        %v5713 = vsel %vm1346, %v5710, %v5712
        %v5714 = vrot.slane %v5411, 1
        %v5715 = vrot.slane %v5412, 1
        %v5716 = vsel %vm1346, %v5714, %v5715
        %v5717 = vrot.slane %v5413, 1
        %v5718 = vsel %vm1346, %v5715, %v5717
        %v5719 = vrot.slane %v5414, 1
        %v5720 = vsel %vm1346, %v5717, %v5719
        %v5721 = vrot.slane %v5415, 1
        %v5722 = vrot.slane %v5416, 1
        %v5723 = vsel %vm1346, %v5721, %v5722
        %v5724 = vrot.slane %v5417, 1
        %v5725 = vsel %vm1346, %v5722, %v5724
        %v5726 = vrot.slane %v5418, 1
        %v5727 = vsel %vm1346, %v5724, %v5726
        %v5728 = vrot.slane %v5419, 1
        %v5729 = vrot.slane %v5420, 1
        %v5730 = vsel %vm1346, %v5728, %v5729
        %v5731 = vrot.slane %v5421, 1
        %v5732 = vsel %vm1346, %v5729, %v5731
        %v5733 = vrot.slane %v5422, 1
        %v5734 = vsel %vm1346, %v5731, %v5733
        %v5807 = vpack.c.bf16 %v5571, %v5569
        %v5808 = vpack.c.bf16 %v5576, %v5573
        %v5809 = vpack.c.bf16 %v5580, %v5578
        %v5810 = vpack.c.bf16 %v5585, %v5583
        %v5811 = vpack.c.bf16 %v5590, %v5587
        %v5812 = vpack.c.bf16 %v5594, %v5592
        %v5813 = vpack.c.bf16 %v5599, %v5597
        %v5814 = vpack.c.bf16 %v5604, %v5601
        %v5815 = vpack.c.bf16 %v5608, %v5606
        %v5816 = vpack.c.bf16 %v5613, %v5611
        %v5817 = vpack.c.bf16 %v5618, %v5615
        %v5818 = vpack.c.bf16 %v5622, %v5620
        %v5819 = vpack.c.bf16 %v5627, %v5625
        %v5820 = vpack.c.bf16 %v5632, %v5629
        %v5821 = vpack.c.bf16 %v5636, %v5634
        %v5822 = vpack.c.bf16 %v5641, %v5639
        %v5823 = vpack.c.bf16 %v5646, %v5643
        %v5824 = vpack.c.bf16 %v5650, %v5648
        %v5825 = vpack.c.bf16 %v5655, %v5653
        %v5826 = vpack.c.bf16 %v5660, %v5657
        %v5827 = vpack.c.bf16 %v5664, %v5662
        %v5828 = vpack.c.bf16 %v5669, %v5667
        %v5829 = vpack.c.bf16 %v5674, %v5671
        %v5830 = vpack.c.bf16 %v5678, %v5676
        %v5831 = vpack.c.bf16 %v5683, %v5681
        %v5832 = vpack.c.bf16 %v5688, %v5685
        %v5833 = vpack.c.bf16 %v5692, %v5690
        %v5834 = vpack.c.bf16 %v5697, %v5695
        %v5835 = vpack.c.bf16 %v5702, %v5699
        %v5836 = vpack.c.bf16 %v5706, %v5704
        %v5837 = vpack.c.bf16 %v5711, %v5709
        %v5838 = vpack.c.bf16 %v5716, %v5713
        %v5839 = vpack.c.bf16 %v5720, %v5718
        %v5840 = vpack.c.bf16 %v5725, %v5723
        %v5841 = vpack.c.bf16 %v5730, %v5727
        %v5842 = vpack.c.bf16 %v5734, %v5732
        %s5843 = scalar_lea.vmem [#allocation6], 16
        %v5844 = vld [vmem:[%s5843] sm:$0xf]
        %v5845 = vld [vmem:[%s5843 + $0x4] sm:$0xf]
        %v5846 = vld [vmem:[%s5843 + $0x8] sm:$0xf]
        %v5847 = vld [vmem:[%s5843 + $0xc] sm:$0xf]
        %v5852 = vunpack.c.l.b16 %v5844
        %v5853 = vunpack.c.l.b16 %v5845
        %v5854 = vunpack.c.l.b16 %v5846
        %v5855 = vunpack.c.l.b16 %v5847
        %v5856 = vpack.c.b16 %v5853, %v5852
        %v5857 = vpack.c.b16 %v5855, %v5854
        %vm5860 = vcmask 261120
        %v5862 = vsel %vm5860, %v5807, 0
        %v5865 = vsel %vm5860, %v5808, 0
        %v5868 = vsel %vm5860, %v5809, 0
        %v5871 = vsel %vm5860, %v5810, 0
        %v5874 = vsel %vm5860, %v5811, 0
        %v5877 = vsel %vm5860, %v5812, 0
        %v5880 = vsel %vm5860, %v5813, 0
        %v5883 = vsel %vm5860, %v5814, 0
        %v5886 = vsel %vm5860, %v5815, 0
        %v5889 = vsel %vm5860, %v5816, 0
        %v5892 = vsel %vm5860, %v5817, 0
        %v5895 = vsel %vm5860, %v5818, 0
        %v5898 = vsel %vm5860, %v5819, 0
        %v5901 = vsel %vm5860, %v5820, 0
        %v5904 = vsel %vm5860, %v5821, 0
        %v5907 = vsel %vm5860, %v5822, 0
        %v5910 = vsel %vm5860, %v5823, 0
        %v5913 = vsel %vm5860, %v5824, 0
        %v5916 = vsel %vm5860, %v5825, 0
        %v5919 = vsel %vm5860, %v5826, 0
        %v5922 = vsel %vm5860, %v5827, 0
        %v5925 = vsel %vm5860, %v5828, 0
        %v5928 = vsel %vm5860, %v5829, 0
        %v5931 = vsel %vm5860, %v5830, 0
        %v5934 = vsel %vm5860, %v5831, 0
        %v5937 = vsel %vm5860, %v5832, 0
        %v5940 = vsel %vm5860, %v5833, 0
        %v5943 = vsel %vm5860, %v5834, 0
        %v5946 = vsel %vm5860, %v5835, 0
        %v5949 = vsel %vm5860, %v5836, 0
        %v5952 = vsel %vm5860, %v5837, 0
        %v5955 = vsel %vm5860, %v5838, 0
        %v5958 = vsel %vm5860, %v5839, 0
        %v5961 = vsel %vm5860, %v5840, 0
        %v5964 = vsel %vm5860, %v5841, 0
        %v5967 = vsel %vm5860, %v5842, 0
        %5969 = vmatpush.bf16.msra.mxu0 0
        %5970 = vmatpush.bf16.msra.mxu0 0
        %5971 = vmatpush.bf16.msra.mxu0 0
        %5972 = vmatpush.bf16.msra.mxu0 0
        %5973 = vmatpush.bf16.msra.mxu0 0
        %5974 = vmatpush.bf16.msra.mxu0 0
        %5975 = vmatpush.bf16.msra.mxu0 %v5857
        %5976 = vmatpush.bf16.msra.mxu0 %v5856
        %5977 = vmatmul.bf16.gmra.mxu0 %v5862
        %v5978 = vpop.f32.mrf.mxu0
        %v5979 = vadd.f32 0.0, %v5978
        %v5980 = vpop.f32.mrf.mxu0
        %v5981 = vadd.f32 0.0, %v5980
        %5982 = vmatmul.bf16.gmra.mxu0 %v5865
        %v5983 = vpop.f32.mrf.mxu0
        %v5984 = vadd.f32 0.0, %v5983
        %v5985 = vpop.f32.mrf.mxu0
        %v5986 = vadd.f32 0.0, %v5985
        %5987 = vmatmul.bf16.gmra.mxu0 %v5868
        %v5988 = vpop.f32.mrf.mxu0
        %v5989 = vadd.f32 0.0, %v5988
        %v5990 = vpop.f32.mrf.mxu0
        %v5991 = vadd.f32 0.0, %v5990
        %5992 = vmatmul.bf16.gmra.mxu0 %v5871
        %v5993 = vpop.f32.mrf.mxu0
        %v5994 = vadd.f32 0.0, %v5993
        %v5995 = vpop.f32.mrf.mxu0
        %v5996 = vadd.f32 0.0, %v5995
        %5997 = vmatmul.bf16.gmra.mxu0 %v5874
        %v5998 = vpop.f32.mrf.mxu0
        %v5999 = vadd.f32 0.0, %v5998
        %v6000 = vpop.f32.mrf.mxu0
        %v6001 = vadd.f32 0.0, %v6000
        %6002 = vmatmul.bf16.gmra.mxu0 %v5877
        %v6003 = vpop.f32.mrf.mxu0
        %v6004 = vadd.f32 0.0, %v6003
        %v6005 = vpop.f32.mrf.mxu0
        %v6006 = vadd.f32 0.0, %v6005
        %6007 = vmatmul.bf16.gmra.mxu0 %v5880
        %v6008 = vpop.f32.mrf.mxu0
        %v6009 = vadd.f32 0.0, %v6008
        %v6010 = vpop.f32.mrf.mxu0
        %v6011 = vadd.f32 0.0, %v6010
        %6012 = vmatmul.bf16.gmra.mxu0 %v5883
        %v6013 = vpop.f32.mrf.mxu0
        %v6014 = vadd.f32 0.0, %v6013
        %v6015 = vpop.f32.mrf.mxu0
        %v6016 = vadd.f32 0.0, %v6015
        %6017 = vmatmul.bf16.gmra.mxu0 %v5886
        %v6018 = vpop.f32.mrf.mxu0
        %v6019 = vadd.f32 0.0, %v6018
        %v6020 = vpop.f32.mrf.mxu0
        %v6021 = vadd.f32 0.0, %v6020
        %6022 = vmatmul.bf16.gmra.mxu0 %v5889
        %v6023 = vpop.f32.mrf.mxu0
        %v6024 = vadd.f32 0.0, %v6023
        %v6025 = vpop.f32.mrf.mxu0
        %v6026 = vadd.f32 0.0, %v6025
        %6027 = vmatmul.bf16.gmra.mxu0 %v5892
        %v6028 = vpop.f32.mrf.mxu0
        %v6029 = vadd.f32 0.0, %v6028
        %v6030 = vpop.f32.mrf.mxu0
        %v6031 = vadd.f32 0.0, %v6030
        %6032 = vmatmul.bf16.gmra.mxu0 %v5895
        %v6033 = vpop.f32.mrf.mxu0
        %v6034 = vadd.f32 0.0, %v6033
        %v6035 = vpop.f32.mrf.mxu0
        %v6036 = vadd.f32 0.0, %v6035
        %6037 = vmatmul.bf16.gmra.mxu0 %v5898
        %v6038 = vpop.f32.mrf.mxu0
        %v6039 = vadd.f32 0.0, %v6038
        %v6040 = vpop.f32.mrf.mxu0
        %v6041 = vadd.f32 0.0, %v6040
        %6042 = vmatmul.bf16.gmra.mxu0 %v5901
        %v6043 = vpop.f32.mrf.mxu0
        %v6044 = vadd.f32 0.0, %v6043
        %v6045 = vpop.f32.mrf.mxu0
        %v6046 = vadd.f32 0.0, %v6045
        %6047 = vmatmul.bf16.gmra.mxu0 %v5904
        %v6048 = vpop.f32.mrf.mxu0
        %v6049 = vadd.f32 0.0, %v6048
        %v6050 = vpop.f32.mrf.mxu0
        %v6051 = vadd.f32 0.0, %v6050
        %6052 = vmatmul.bf16.gmra.mxu0 %v5907
        %v6053 = vpop.f32.mrf.mxu0
        %v6054 = vadd.f32 0.0, %v6053
        %v6055 = vpop.f32.mrf.mxu0
        %v6056 = vadd.f32 0.0, %v6055
        %6057 = vmatmul.bf16.gmra.mxu0 %v5910
        %v6058 = vpop.f32.mrf.mxu0
        %v6059 = vadd.f32 0.0, %v6058
        %v6060 = vpop.f32.mrf.mxu0
        %v6061 = vadd.f32 0.0, %v6060
        %6062 = vmatmul.bf16.gmra.mxu0 %v5913
        %v6063 = vpop.f32.mrf.mxu0
        %v6064 = vadd.f32 0.0, %v6063
        %v6065 = vpop.f32.mrf.mxu0
        %v6066 = vadd.f32 0.0, %v6065
        %6067 = vmatmul.bf16.gmra.mxu0 %v5916
        %v6068 = vpop.f32.mrf.mxu0
        %v6069 = vadd.f32 0.0, %v6068
        %v6070 = vpop.f32.mrf.mxu0
        %v6071 = vadd.f32 0.0, %v6070
        %6072 = vmatmul.bf16.gmra.mxu0 %v5919
        %v6073 = vpop.f32.mrf.mxu0
        %v6074 = vadd.f32 0.0, %v6073
        %v6075 = vpop.f32.mrf.mxu0
        %v6076 = vadd.f32 0.0, %v6075
        %6077 = vmatmul.bf16.gmra.mxu0 %v5922
        %v6078 = vpop.f32.mrf.mxu0
        %v6079 = vadd.f32 0.0, %v6078
        %v6080 = vpop.f32.mrf.mxu0
        %v6081 = vadd.f32 0.0, %v6080
        %6082 = vmatmul.bf16.gmra.mxu0 %v5925
        %v6083 = vpop.f32.mrf.mxu0
        %v6084 = vadd.f32 0.0, %v6083
        %v6085 = vpop.f32.mrf.mxu0
        %v6086 = vadd.f32 0.0, %v6085
        %6087 = vmatmul.bf16.gmra.mxu0 %v5928
        %v6088 = vpop.f32.mrf.mxu0
        %v6089 = vadd.f32 0.0, %v6088
        %v6090 = vpop.f32.mrf.mxu0
        %v6091 = vadd.f32 0.0, %v6090
        %6092 = vmatmul.bf16.gmra.mxu0 %v5931
        %v6093 = vpop.f32.mrf.mxu0
        %v6094 = vadd.f32 0.0, %v6093
        %v6095 = vpop.f32.mrf.mxu0
        %v6096 = vadd.f32 0.0, %v6095
        %6097 = vmatmul.bf16.gmra.mxu0 %v5934
        %v6098 = vpop.f32.mrf.mxu0
        %v6099 = vadd.f32 0.0, %v6098
        %v6100 = vpop.f32.mrf.mxu0
        %v6101 = vadd.f32 0.0, %v6100
        %6102 = vmatmul.bf16.gmra.mxu0 %v5937
        %v6103 = vpop.f32.mrf.mxu0
        %v6104 = vadd.f32 0.0, %v6103
        %v6105 = vpop.f32.mrf.mxu0
        %v6106 = vadd.f32 0.0, %v6105
        %6107 = vmatmul.bf16.gmra.mxu0 %v5940
        %v6108 = vpop.f32.mrf.mxu0
        %v6109 = vadd.f32 0.0, %v6108
        %v6110 = vpop.f32.mrf.mxu0
        %v6111 = vadd.f32 0.0, %v6110
        %6112 = vmatmul.bf16.gmra.mxu0 %v5943
        %v6113 = vpop.f32.mrf.mxu0
        %v6114 = vadd.f32 0.0, %v6113
        %v6115 = vpop.f32.mrf.mxu0
        %v6116 = vadd.f32 0.0, %v6115
        %6117 = vmatmul.bf16.gmra.mxu0 %v5946
        %v6118 = vpop.f32.mrf.mxu0
        %v6119 = vadd.f32 0.0, %v6118
        %v6120 = vpop.f32.mrf.mxu0
        %v6121 = vadd.f32 0.0, %v6120
        %6122 = vmatmul.bf16.gmra.mxu0 %v5949
        %v6123 = vpop.f32.mrf.mxu0
        %v6124 = vadd.f32 0.0, %v6123
        %v6125 = vpop.f32.mrf.mxu0
        %v6126 = vadd.f32 0.0, %v6125
        %6127 = vmatmul.bf16.gmra.mxu0 %v5952
        %v6128 = vpop.f32.mrf.mxu0
        %v6129 = vadd.f32 0.0, %v6128
        %v6130 = vpop.f32.mrf.mxu0
        %v6131 = vadd.f32 0.0, %v6130
        %6132 = vmatmul.bf16.gmra.mxu0 %v5955
        %v6133 = vpop.f32.mrf.mxu0
        %v6134 = vadd.f32 0.0, %v6133
        %v6135 = vpop.f32.mrf.mxu0
        %v6136 = vadd.f32 0.0, %v6135
        %6137 = vmatmul.bf16.gmra.mxu0 %v5958
        %v6138 = vpop.f32.mrf.mxu0
        %v6139 = vadd.f32 0.0, %v6138
        %v6140 = vpop.f32.mrf.mxu0
        %v6141 = vadd.f32 0.0, %v6140
        %6142 = vmatmul.bf16.gmra.mxu0 %v5961
        %v6143 = vpop.f32.mrf.mxu0
        %v6144 = vadd.f32 0.0, %v6143
        %v6145 = vpop.f32.mrf.mxu0
        %v6146 = vadd.f32 0.0, %v6145
        %6147 = vmatmul.bf16.gmra.mxu0 %v5964
        %v6148 = vpop.f32.mrf.mxu0
        %v6149 = vadd.f32 0.0, %v6148
        %v6150 = vpop.f32.mrf.mxu0
        %v6151 = vadd.f32 0.0, %v6150
        %6152 = vmatmul.bf16.gmra.mxu0 %v5967
        %v6153 = vpop.f32.mrf.mxu0
        %v6154 = vadd.f32 0.0, %v6153
        %v6155 = vpop.f32.mrf.mxu0
        %v6156 = vadd.f32 0.0, %v6155
        %6157 = vdwg.mxu0
        %v6162 = vunpack.c.l.b16 %v5467
        %v6163 = vunpack.c.l.b16 %v5468
        %v6164 = vunpack.c.l.b16 %v5469
        %v6165 = vunpack.c.l.b16 %v5470
        %v6166 = vpack.c.b16 %v6163, %v6162
        %v6167 = vpack.c.b16 %v6165, %v6164
        %v6171 = vsel %vm5860, %v5431, 0
        %v6174 = vsel %vm5860, %v5432, 0
        %v6177 = vsel %vm5860, %v5433, 0
        %v6180 = vsel %vm5860, %v5434, 0
        %v6183 = vsel %vm5860, %v5435, 0
        %v6186 = vsel %vm5860, %v5436, 0
        %v6189 = vsel %vm5860, %v5437, 0
        %v6192 = vsel %vm5860, %v5438, 0
        %v6195 = vsel %vm5860, %v5439, 0
        %v6198 = vsel %vm5860, %v5440, 0
        %v6201 = vsel %vm5860, %v5441, 0
        %v6204 = vsel %vm5860, %v5442, 0
        %v6207 = vsel %vm5860, %v5443, 0
        %v6210 = vsel %vm5860, %v5444, 0
        %v6213 = vsel %vm5860, %v5445, 0
        %v6216 = vsel %vm5860, %v5446, 0
        %v6219 = vsel %vm5860, %v5447, 0
        %v6222 = vsel %vm5860, %v5448, 0
        %v6225 = vsel %vm5860, %v5449, 0
        %v6228 = vsel %vm5860, %v5450, 0
        %v6231 = vsel %vm5860, %v5451, 0
        %v6234 = vsel %vm5860, %v5452, 0
        %v6237 = vsel %vm5860, %v5453, 0
        %v6240 = vsel %vm5860, %v5454, 0
        %v6243 = vsel %vm5860, %v5455, 0
        %v6246 = vsel %vm5860, %v5456, 0
        %v6249 = vsel %vm5860, %v5457, 0
        %v6252 = vsel %vm5860, %v5458, 0
        %v6255 = vsel %vm5860, %v5459, 0
        %v6258 = vsel %vm5860, %v5460, 0
        %v6261 = vsel %vm5860, %v5461, 0
        %v6264 = vsel %vm5860, %v5462, 0
        %v6267 = vsel %vm5860, %v5463, 0
        %v6270 = vsel %vm5860, %v5464, 0
        %v6273 = vsel %vm5860, %v5465, 0
        %v6276 = vsel %vm5860, %v5466, 0
        %6278 = vmatpush.bf16.msra.mxu0 0
        %6279 = vmatpush.bf16.msra.mxu0 0
        %6280 = vmatpush.bf16.msra.mxu0 0
        %6281 = vmatpush.bf16.msra.mxu0 0
        %6282 = vmatpush.bf16.msra.mxu0 0
        %6283 = vmatpush.bf16.msra.mxu0 0
        %6284 = vmatpush.bf16.msra.mxu0 %v6167
        %6285 = vmatpush.bf16.msra.mxu0 %v6166
        %6286 = vmatmul.bf16.gmra.mxu0 %v6171
        %v6287 = vpop.f32.mrf.mxu0
        %v6288 = vadd.f32 %v5979, %v6287
        %v6289 = vpop.f32.mrf.mxu0
        %v6290 = vadd.f32 %v5981, %v6289
        %6291 = vmatmul.bf16.gmra.mxu0 %v6174
        %v6292 = vpop.f32.mrf.mxu0
        %v6293 = vadd.f32 %v5984, %v6292
        %v6294 = vpop.f32.mrf.mxu0
        %v6295 = vadd.f32 %v5986, %v6294
        %6296 = vmatmul.bf16.gmra.mxu0 %v6177
        %v6297 = vpop.f32.mrf.mxu0
        %v6298 = vadd.f32 %v5989, %v6297
        %v6299 = vpop.f32.mrf.mxu0
        %v6300 = vadd.f32 %v5991, %v6299
        %6301 = vmatmul.bf16.gmra.mxu0 %v6180
        %v6302 = vpop.f32.mrf.mxu0
        %v6303 = vadd.f32 %v5994, %v6302
        %v6304 = vpop.f32.mrf.mxu0
        %v6305 = vadd.f32 %v5996, %v6304
        %6306 = vmatmul.bf16.gmra.mxu0 %v6183
        %v6307 = vpop.f32.mrf.mxu0
        %v6308 = vadd.f32 %v5999, %v6307
        %v6309 = vpop.f32.mrf.mxu0
        %v6310 = vadd.f32 %v6001, %v6309
        %6311 = vmatmul.bf16.gmra.mxu0 %v6186
        %v6312 = vpop.f32.mrf.mxu0
        %v6313 = vadd.f32 %v6004, %v6312
        %v6314 = vpop.f32.mrf.mxu0
        %v6315 = vadd.f32 %v6006, %v6314
        %6316 = vmatmul.bf16.gmra.mxu0 %v6189
        %v6317 = vpop.f32.mrf.mxu0
        %v6318 = vadd.f32 %v6009, %v6317
        %v6319 = vpop.f32.mrf.mxu0
        %v6320 = vadd.f32 %v6011, %v6319
        %6321 = vmatmul.bf16.gmra.mxu0 %v6192
        %v6322 = vpop.f32.mrf.mxu0
        %v6323 = vadd.f32 %v6014, %v6322
        %v6324 = vpop.f32.mrf.mxu0
        %v6325 = vadd.f32 %v6016, %v6324
        %6326 = vmatmul.bf16.gmra.mxu0 %v6195
        %v6327 = vpop.f32.mrf.mxu0
        %v6328 = vadd.f32 %v6019, %v6327
        %v6329 = vpop.f32.mrf.mxu0
        %v6330 = vadd.f32 %v6021, %v6329
        %6331 = vmatmul.bf16.gmra.mxu0 %v6198
        %v6332 = vpop.f32.mrf.mxu0
        %v6333 = vadd.f32 %v6024, %v6332
        %v6334 = vpop.f32.mrf.mxu0
        %v6335 = vadd.f32 %v6026, %v6334
        %6336 = vmatmul.bf16.gmra.mxu0 %v6201
        %v6337 = vpop.f32.mrf.mxu0
        %v6338 = vadd.f32 %v6029, %v6337
        %v6339 = vpop.f32.mrf.mxu0
        %v6340 = vadd.f32 %v6031, %v6339
        %6341 = vmatmul.bf16.gmra.mxu0 %v6204
        %v6342 = vpop.f32.mrf.mxu0
        %v6343 = vadd.f32 %v6034, %v6342
        %v6344 = vpop.f32.mrf.mxu0
        %v6345 = vadd.f32 %v6036, %v6344
        %6346 = vmatmul.bf16.gmra.mxu0 %v6207
        %v6347 = vpop.f32.mrf.mxu0
        %v6348 = vadd.f32 %v6039, %v6347
        %v6349 = vpop.f32.mrf.mxu0
        %v6350 = vadd.f32 %v6041, %v6349
        %6351 = vmatmul.bf16.gmra.mxu0 %v6210
        %v6352 = vpop.f32.mrf.mxu0
        %v6353 = vadd.f32 %v6044, %v6352
        %v6354 = vpop.f32.mrf.mxu0
        %v6355 = vadd.f32 %v6046, %v6354
        %6356 = vmatmul.bf16.gmra.mxu0 %v6213
        %v6357 = vpop.f32.mrf.mxu0
        %v6358 = vadd.f32 %v6049, %v6357
        %v6359 = vpop.f32.mrf.mxu0
        %v6360 = vadd.f32 %v6051, %v6359
        %6361 = vmatmul.bf16.gmra.mxu0 %v6216
        %v6362 = vpop.f32.mrf.mxu0
        %v6363 = vadd.f32 %v6054, %v6362
        %v6364 = vpop.f32.mrf.mxu0
        %v6365 = vadd.f32 %v6056, %v6364
        %6366 = vmatmul.bf16.gmra.mxu0 %v6219
        %v6367 = vpop.f32.mrf.mxu0
        %v6368 = vadd.f32 %v6059, %v6367
        %v6369 = vpop.f32.mrf.mxu0
        %v6370 = vadd.f32 %v6061, %v6369
        %6371 = vmatmul.bf16.gmra.mxu0 %v6222
        %v6372 = vpop.f32.mrf.mxu0
        %v6373 = vadd.f32 %v6064, %v6372
        %v6374 = vpop.f32.mrf.mxu0
        %v6375 = vadd.f32 %v6066, %v6374
        %6376 = vmatmul.bf16.gmra.mxu0 %v6225
        %v6377 = vpop.f32.mrf.mxu0
        %v6378 = vadd.f32 %v6069, %v6377
        %v6379 = vpop.f32.mrf.mxu0
        %v6380 = vadd.f32 %v6071, %v6379
        %6381 = vmatmul.bf16.gmra.mxu0 %v6228
        %v6382 = vpop.f32.mrf.mxu0
        %v6383 = vadd.f32 %v6074, %v6382
        %v6384 = vpop.f32.mrf.mxu0
        %v6385 = vadd.f32 %v6076, %v6384
        %6386 = vmatmul.bf16.gmra.mxu0 %v6231
        %v6387 = vpop.f32.mrf.mxu0
        %v6388 = vadd.f32 %v6079, %v6387
        %v6389 = vpop.f32.mrf.mxu0
        %v6390 = vadd.f32 %v6081, %v6389
        %6391 = vmatmul.bf16.gmra.mxu0 %v6234
        %v6392 = vpop.f32.mrf.mxu0
        %v6393 = vadd.f32 %v6084, %v6392
        %v6394 = vpop.f32.mrf.mxu0
        %v6395 = vadd.f32 %v6086, %v6394
        %6396 = vmatmul.bf16.gmra.mxu0 %v6237
        %v6397 = vpop.f32.mrf.mxu0
        %v6398 = vadd.f32 %v6089, %v6397
        %v6399 = vpop.f32.mrf.mxu0
        %v6400 = vadd.f32 %v6091, %v6399
        %6401 = vmatmul.bf16.gmra.mxu0 %v6240
        %v6402 = vpop.f32.mrf.mxu0
        %v6403 = vadd.f32 %v6094, %v6402
        %v6404 = vpop.f32.mrf.mxu0
        %v6405 = vadd.f32 %v6096, %v6404
        %6406 = vmatmul.bf16.gmra.mxu0 %v6243
        %v6407 = vpop.f32.mrf.mxu0
        %v6408 = vadd.f32 %v6099, %v6407
        %v6409 = vpop.f32.mrf.mxu0
        %v6410 = vadd.f32 %v6101, %v6409
        %6411 = vmatmul.bf16.gmra.mxu0 %v6246
        %v6412 = vpop.f32.mrf.mxu0
        %v6413 = vadd.f32 %v6104, %v6412
        %v6414 = vpop.f32.mrf.mxu0
        %v6415 = vadd.f32 %v6106, %v6414
        %6416 = vmatmul.bf16.gmra.mxu0 %v6249
        %v6417 = vpop.f32.mrf.mxu0
        %v6418 = vadd.f32 %v6109, %v6417
        %v6419 = vpop.f32.mrf.mxu0
        %v6420 = vadd.f32 %v6111, %v6419
        %6421 = vmatmul.bf16.gmra.mxu0 %v6252
        %v6422 = vpop.f32.mrf.mxu0
        %v6423 = vadd.f32 %v6114, %v6422
        %v6424 = vpop.f32.mrf.mxu0
        %v6425 = vadd.f32 %v6116, %v6424
        %6426 = vmatmul.bf16.gmra.mxu0 %v6255
        %v6427 = vpop.f32.mrf.mxu0
        %v6428 = vadd.f32 %v6119, %v6427
        %v6429 = vpop.f32.mrf.mxu0
        %v6430 = vadd.f32 %v6121, %v6429
        %6431 = vmatmul.bf16.gmra.mxu0 %v6258
        %v6432 = vpop.f32.mrf.mxu0
        %v6433 = vadd.f32 %v6124, %v6432
        %v6434 = vpop.f32.mrf.mxu0
        %v6435 = vadd.f32 %v6126, %v6434
        %6436 = vmatmul.bf16.gmra.mxu0 %v6261
        %v6437 = vpop.f32.mrf.mxu0
        %v6438 = vadd.f32 %v6129, %v6437
        %v6439 = vpop.f32.mrf.mxu0
        %v6440 = vadd.f32 %v6131, %v6439
        %6441 = vmatmul.bf16.gmra.mxu0 %v6264
        %v6442 = vpop.f32.mrf.mxu0
        %v6443 = vadd.f32 %v6134, %v6442
        %v6444 = vpop.f32.mrf.mxu0
        %v6445 = vadd.f32 %v6136, %v6444
        %6446 = vmatmul.bf16.gmra.mxu0 %v6267
        %v6447 = vpop.f32.mrf.mxu0
        %v6448 = vadd.f32 %v6139, %v6447
        %v6449 = vpop.f32.mrf.mxu0
        %v6450 = vadd.f32 %v6141, %v6449
        %6451 = vmatmul.bf16.gmra.mxu0 %v6270
        %v6452 = vpop.f32.mrf.mxu0
        %v6453 = vadd.f32 %v6144, %v6452
        %v6454 = vpop.f32.mrf.mxu0
        %v6455 = vadd.f32 %v6146, %v6454
        %6456 = vmatmul.bf16.gmra.mxu0 %v6273
        %v6457 = vpop.f32.mrf.mxu0
        %v6458 = vadd.f32 %v6149, %v6457
        %v6459 = vpop.f32.mrf.mxu0
        %v6460 = vadd.f32 %v6151, %v6459
        %6461 = vmatmul.bf16.gmra.mxu0 %v6276
        %v6462 = vpop.f32.mrf.mxu0
        %v6463 = vadd.f32 %v6154, %v6462
        %v6464 = vpop.f32.mrf.mxu0
        %v6465 = vadd.f32 %v6156, %v6464
        %6466 = vdwg.mxu0
        %v6467 = vrot.slane %v5327, 2
        %v6468 = vrot.slane %v5328, 2
        %v6469 = vsel %vm1950, %v6467, %v6468
        %v6470 = vrot.slane %v5329, 2
        %v6471 = vsel %vm1950, %v6468, %v6470
        %v6472 = vrot.slane %v5330, 2
        %v6473 = vsel %vm1950, %v6470, %v6472
        %v6474 = vrot.slane %v5331, 2
        %v6475 = vrot.slane %v5332, 2
        %v6476 = vsel %vm1950, %v6474, %v6475
        %v6477 = vrot.slane %v5333, 2
        %v6478 = vsel %vm1950, %v6475, %v6477
        %v6479 = vrot.slane %v5334, 2
        %v6480 = vsel %vm1950, %v6477, %v6479
        %v6481 = vrot.slane %v5335, 2
        %v6482 = vrot.slane %v5336, 2
        %v6483 = vsel %vm1950, %v6481, %v6482
        %v6484 = vrot.slane %v5337, 2
        %v6485 = vsel %vm1950, %v6482, %v6484
        %v6486 = vrot.slane %v5338, 2
        %v6487 = vsel %vm1950, %v6484, %v6486
        %v6488 = vrot.slane %v5339, 2
        %v6489 = vrot.slane %v5340, 2
        %v6490 = vsel %vm1950, %v6488, %v6489
        %v6491 = vrot.slane %v5341, 2
        %v6492 = vsel %vm1950, %v6489, %v6491
        %v6493 = vrot.slane %v5342, 2
        %v6494 = vsel %vm1950, %v6491, %v6493
        %v6495 = vrot.slane %v5343, 2
        %v6496 = vrot.slane %v5344, 2
        %v6497 = vsel %vm1950, %v6495, %v6496
        %v6498 = vrot.slane %v5345, 2
        %v6499 = vsel %vm1950, %v6496, %v6498
        %v6500 = vrot.slane %v5346, 2
        %v6501 = vsel %vm1950, %v6498, %v6500
        %v6502 = vrot.slane %v5347, 2
        %v6503 = vrot.slane %v5348, 2
        %v6504 = vsel %vm1950, %v6502, %v6503
        %v6505 = vrot.slane %v5349, 2
        %v6506 = vsel %vm1950, %v6503, %v6505
        %v6507 = vrot.slane %v5350, 2
        %v6508 = vsel %vm1950, %v6505, %v6507
        %v6509 = vrot.slane %v5351, 2
        %v6510 = vrot.slane %v5352, 2
        %v6511 = vsel %vm1950, %v6509, %v6510
        %v6512 = vrot.slane %v5353, 2
        %v6513 = vsel %vm1950, %v6510, %v6512
        %v6514 = vrot.slane %v5354, 2
        %v6515 = vsel %vm1950, %v6512, %v6514
        %v6516 = vrot.slane %v5355, 2
        %v6517 = vrot.slane %v5356, 2
        %v6518 = vsel %vm1950, %v6516, %v6517
        %v6519 = vrot.slane %v5357, 2
        %v6520 = vsel %vm1950, %v6517, %v6519
        %v6521 = vrot.slane %v5358, 2
        %v6522 = vsel %vm1950, %v6519, %v6521
        %v6523 = vrot.slane %v5359, 2
        %v6524 = vrot.slane %v5360, 2
        %v6525 = vsel %vm1950, %v6523, %v6524
        %v6526 = vrot.slane %v5361, 2
        %v6527 = vsel %vm1950, %v6524, %v6526
        %v6528 = vrot.slane %v5362, 2
        %v6529 = vsel %vm1950, %v6526, %v6528
        %v6530 = vrot.slane %v5363, 2
        %v6531 = vrot.slane %v5364, 2
        %v6532 = vsel %vm1950, %v6530, %v6531
        %v6533 = vrot.slane %v5365, 2
        %v6534 = vsel %vm1950, %v6531, %v6533
        %v6535 = vrot.slane %v5366, 2
        %v6536 = vsel %vm1950, %v6533, %v6535
        %v6537 = vrot.slane %v5367, 2
        %v6538 = vrot.slane %v5368, 2
        %v6539 = vsel %vm1950, %v6537, %v6538
        %v6540 = vrot.slane %v5369, 2
        %v6541 = vsel %vm1950, %v6538, %v6540
        %v6542 = vrot.slane %v5370, 2
        %v6543 = vsel %vm1950, %v6540, %v6542
        %v6544 = vrot.slane %v5371, 2
        %v6545 = vrot.slane %v5372, 2
        %v6546 = vsel %vm1950, %v6544, %v6545
        %v6547 = vrot.slane %v5373, 2
        %v6548 = vsel %vm1950, %v6545, %v6547
        %v6549 = vrot.slane %v5374, 2
        %v6550 = vsel %vm1950, %v6547, %v6549
        %v6551 = vrot.slane %v5375, 2
        %v6552 = vrot.slane %v5376, 2
        %v6553 = vsel %vm1950, %v6551, %v6552
        %v6554 = vrot.slane %v5377, 2
        %v6555 = vsel %vm1950, %v6552, %v6554
        %v6556 = vrot.slane %v5378, 2
        %v6557 = vsel %vm1950, %v6554, %v6556
        %v6558 = vrot.slane %v5379, 2
        %v6559 = vrot.slane %v5380, 2
        %v6560 = vsel %vm1950, %v6558, %v6559
        %v6561 = vrot.slane %v5381, 2
        %v6562 = vsel %vm1950, %v6559, %v6561
        %v6563 = vrot.slane %v5382, 2
        %v6564 = vsel %vm1950, %v6561, %v6563
        %v6565 = vrot.slane %v5383, 2
        %v6566 = vrot.slane %v5384, 2
        %v6567 = vsel %vm1950, %v6565, %v6566
        %v6568 = vrot.slane %v5385, 2
        %v6569 = vsel %vm1950, %v6566, %v6568
        %v6570 = vrot.slane %v5386, 2
        %v6571 = vsel %vm1950, %v6568, %v6570
        %v6572 = vrot.slane %v5387, 2
        %v6573 = vrot.slane %v5388, 2
        %v6574 = vsel %vm1950, %v6572, %v6573
        %v6575 = vrot.slane %v5389, 2
        %v6576 = vsel %vm1950, %v6573, %v6575
        %v6577 = vrot.slane %v5390, 2
        %v6578 = vsel %vm1950, %v6575, %v6577
        %v6579 = vrot.slane %v5391, 2
        %v6580 = vrot.slane %v5392, 2
        %v6581 = vsel %vm1950, %v6579, %v6580
        %v6582 = vrot.slane %v5393, 2
        %v6583 = vsel %vm1950, %v6580, %v6582
        %v6584 = vrot.slane %v5394, 2
        %v6585 = vsel %vm1950, %v6582, %v6584
        %v6586 = vrot.slane %v5395, 2
        %v6587 = vrot.slane %v5396, 2
        %v6588 = vsel %vm1950, %v6586, %v6587
        %v6589 = vrot.slane %v5397, 2
        %v6590 = vsel %vm1950, %v6587, %v6589
        %v6591 = vrot.slane %v5398, 2
        %v6592 = vsel %vm1950, %v6589, %v6591
        %v6593 = vrot.slane %v5399, 2
        %v6594 = vrot.slane %v5400, 2
        %v6595 = vsel %vm1950, %v6593, %v6594
        %v6596 = vrot.slane %v5401, 2
        %v6597 = vsel %vm1950, %v6594, %v6596
        %v6598 = vrot.slane %v5402, 2
        %v6599 = vsel %vm1950, %v6596, %v6598
        %v6600 = vrot.slane %v5403, 2
        %v6601 = vrot.slane %v5404, 2
        %v6602 = vsel %vm1950, %v6600, %v6601
        %v6603 = vrot.slane %v5405, 2
        %v6604 = vsel %vm1950, %v6601, %v6603
        %v6605 = vrot.slane %v5406, 2
        %v6606 = vsel %vm1950, %v6603, %v6605
        %v6607 = vrot.slane %v5407, 2
        %v6608 = vrot.slane %v5408, 2
        %v6609 = vsel %vm1950, %v6607, %v6608
        %v6610 = vrot.slane %v5409, 2
        %v6611 = vsel %vm1950, %v6608, %v6610
        %v6612 = vrot.slane %v5410, 2
        %v6613 = vsel %vm1950, %v6610, %v6612
        %v6614 = vrot.slane %v5411, 2
        %v6615 = vrot.slane %v5412, 2
        %v6616 = vsel %vm1950, %v6614, %v6615
        %v6617 = vrot.slane %v5413, 2
        %v6618 = vsel %vm1950, %v6615, %v6617
        %v6619 = vrot.slane %v5414, 2
        %v6620 = vsel %vm1950, %v6617, %v6619
        %v6621 = vrot.slane %v5415, 2
        %v6622 = vrot.slane %v5416, 2
        %v6623 = vsel %vm1950, %v6621, %v6622
        %v6624 = vrot.slane %v5417, 2
        %v6625 = vsel %vm1950, %v6622, %v6624
        %v6626 = vrot.slane %v5418, 2
        %v6627 = vsel %vm1950, %v6624, %v6626
        %v6628 = vrot.slane %v5419, 2
        %v6629 = vrot.slane %v5420, 2
        %v6630 = vsel %vm1950, %v6628, %v6629
        %v6631 = vrot.slane %v5421, 2
        %v6632 = vsel %vm1950, %v6629, %v6631
        %v6633 = vrot.slane %v5422, 2
        %v6634 = vsel %vm1950, %v6631, %v6633
        %v6707 = vpack.c.bf16 %v6471, %v6469
        %v6708 = vpack.c.bf16 %v6476, %v6473
        %v6709 = vpack.c.bf16 %v6480, %v6478
        %v6710 = vpack.c.bf16 %v6485, %v6483
        %v6711 = vpack.c.bf16 %v6490, %v6487
        %v6712 = vpack.c.bf16 %v6494, %v6492
        %v6713 = vpack.c.bf16 %v6499, %v6497
        %v6714 = vpack.c.bf16 %v6504, %v6501
        %v6715 = vpack.c.bf16 %v6508, %v6506
        %v6716 = vpack.c.bf16 %v6513, %v6511
        %v6717 = vpack.c.bf16 %v6518, %v6515
        %v6718 = vpack.c.bf16 %v6522, %v6520
        %v6719 = vpack.c.bf16 %v6527, %v6525
        %v6720 = vpack.c.bf16 %v6532, %v6529
        %v6721 = vpack.c.bf16 %v6536, %v6534
        %v6722 = vpack.c.bf16 %v6541, %v6539
        %v6723 = vpack.c.bf16 %v6546, %v6543
        %v6724 = vpack.c.bf16 %v6550, %v6548
        %v6725 = vpack.c.bf16 %v6555, %v6553
        %v6726 = vpack.c.bf16 %v6560, %v6557
        %v6727 = vpack.c.bf16 %v6564, %v6562
        %v6728 = vpack.c.bf16 %v6569, %v6567
        %v6729 = vpack.c.bf16 %v6574, %v6571
        %v6730 = vpack.c.bf16 %v6578, %v6576
        %v6731 = vpack.c.bf16 %v6583, %v6581
        %v6732 = vpack.c.bf16 %v6588, %v6585
        %v6733 = vpack.c.bf16 %v6592, %v6590
        %v6734 = vpack.c.bf16 %v6597, %v6595
        %v6735 = vpack.c.bf16 %v6602, %v6599
        %v6736 = vpack.c.bf16 %v6606, %v6604
        %v6737 = vpack.c.bf16 %v6611, %v6609
        %v6738 = vpack.c.bf16 %v6616, %v6613
        %v6739 = vpack.c.bf16 %v6620, %v6618
        %v6740 = vpack.c.bf16 %v6625, %v6623
        %v6741 = vpack.c.bf16 %v6630, %v6627
        %v6742 = vpack.c.bf16 %v6634, %v6632
        %s6743 = scalar_lea.vmem [#allocation6], 32
        %v6744 = vld [vmem:[%s6743] sm:$0xf]
        %v6745 = vld [vmem:[%s6743 + $0x4] sm:$0xf]
        %v6746 = vld [vmem:[%s6743 + $0x8] sm:$0xf]
        %v6747 = vld [vmem:[%s6743 + $0xc] sm:$0xf]
        %v6752 = vunpack.c.l.b16 %v6744
        %v6753 = vunpack.c.l.b16 %v6745
        %v6754 = vunpack.c.l.b16 %v6746
        %v6755 = vunpack.c.l.b16 %v6747
        %v6756 = vpack.c.b16 %v6753, %v6752
        %v6757 = vpack.c.b16 %v6755, %v6754
        %v6761 = vsel %vm5860, %v6707, 0
        %v6764 = vsel %vm5860, %v6708, 0
        %v6767 = vsel %vm5860, %v6709, 0
        %v6770 = vsel %vm5860, %v6710, 0
        %v6773 = vsel %vm5860, %v6711, 0
        %v6776 = vsel %vm5860, %v6712, 0
        %v6779 = vsel %vm5860, %v6713, 0
        %v6782 = vsel %vm5860, %v6714, 0
        %v6785 = vsel %vm5860, %v6715, 0
        %v6788 = vsel %vm5860, %v6716, 0
        %v6791 = vsel %vm5860, %v6717, 0
        %v6794 = vsel %vm5860, %v6718, 0
        %v6797 = vsel %vm5860, %v6719, 0
        %v6800 = vsel %vm5860, %v6720, 0
        %v6803 = vsel %vm5860, %v6721, 0
        %v6806 = vsel %vm5860, %v6722, 0
        %v6809 = vsel %vm5860, %v6723, 0
        %v6812 = vsel %vm5860, %v6724, 0
        %v6815 = vsel %vm5860, %v6725, 0
        %v6818 = vsel %vm5860, %v6726, 0
        %v6821 = vsel %vm5860, %v6727, 0
        %v6824 = vsel %vm5860, %v6728, 0
        %v6827 = vsel %vm5860, %v6729, 0
        %v6830 = vsel %vm5860, %v6730, 0
        %v6833 = vsel %vm5860, %v6731, 0
        %v6836 = vsel %vm5860, %v6732, 0
        %v6839 = vsel %vm5860, %v6733, 0
        %v6842 = vsel %vm5860, %v6734, 0
        %v6845 = vsel %vm5860, %v6735, 0
        %v6848 = vsel %vm5860, %v6736, 0
        %v6851 = vsel %vm5860, %v6737, 0
        %v6854 = vsel %vm5860, %v6738, 0
        %v6857 = vsel %vm5860, %v6739, 0
        %v6860 = vsel %vm5860, %v6740, 0
        %v6863 = vsel %vm5860, %v6741, 0
        %v6866 = vsel %vm5860, %v6742, 0
        %6868 = vmatpush.bf16.msra.mxu0 0
        %6869 = vmatpush.bf16.msra.mxu0 0
        %6870 = vmatpush.bf16.msra.mxu0 0
        %6871 = vmatpush.bf16.msra.mxu0 0
        %6872 = vmatpush.bf16.msra.mxu0 0
        %6873 = vmatpush.bf16.msra.mxu0 0
        %6874 = vmatpush.bf16.msra.mxu0 %v6757
        %6875 = vmatpush.bf16.msra.mxu0 %v6756
        %6876 = vmatmul.bf16.gmra.mxu0 %v6761
        %v6877 = vpop.f32.mrf.mxu0
        %v6878 = vadd.f32 0.0, %v6877
        %v6879 = vpop.f32.mrf.mxu0
        %v6880 = vadd.f32 0.0, %v6879
        %6881 = vmatmul.bf16.gmra.mxu0 %v6764
        %v6882 = vpop.f32.mrf.mxu0
        %v6883 = vadd.f32 0.0, %v6882
        %v6884 = vpop.f32.mrf.mxu0
        %v6885 = vadd.f32 0.0, %v6884
        %6886 = vmatmul.bf16.gmra.mxu0 %v6767
        %v6887 = vpop.f32.mrf.mxu0
        %v6888 = vadd.f32 0.0, %v6887
        %v6889 = vpop.f32.mrf.mxu0
        %v6890 = vadd.f32 0.0, %v6889
        %6891 = vmatmul.bf16.gmra.mxu0 %v6770
        %v6892 = vpop.f32.mrf.mxu0
        %v6893 = vadd.f32 0.0, %v6892
        %v6894 = vpop.f32.mrf.mxu0
        %v6895 = vadd.f32 0.0, %v6894
        %6896 = vmatmul.bf16.gmra.mxu0 %v6773
        %v6897 = vpop.f32.mrf.mxu0
        %v6898 = vadd.f32 0.0, %v6897
        %v6899 = vpop.f32.mrf.mxu0
        %v6900 = vadd.f32 0.0, %v6899
        %6901 = vmatmul.bf16.gmra.mxu0 %v6776
        %v6902 = vpop.f32.mrf.mxu0
        %v6903 = vadd.f32 0.0, %v6902
        %v6904 = vpop.f32.mrf.mxu0
        %v6905 = vadd.f32 0.0, %v6904
        %6906 = vmatmul.bf16.gmra.mxu0 %v6779
        %v6907 = vpop.f32.mrf.mxu0
        %v6908 = vadd.f32 0.0, %v6907
        %v6909 = vpop.f32.mrf.mxu0
        %v6910 = vadd.f32 0.0, %v6909
        %6911 = vmatmul.bf16.gmra.mxu0 %v6782
        %v6912 = vpop.f32.mrf.mxu0
        %v6913 = vadd.f32 0.0, %v6912
        %v6914 = vpop.f32.mrf.mxu0
        %v6915 = vadd.f32 0.0, %v6914
        %6916 = vmatmul.bf16.gmra.mxu0 %v6785
        %v6917 = vpop.f32.mrf.mxu0
        %v6918 = vadd.f32 0.0, %v6917
        %v6919 = vpop.f32.mrf.mxu0
        %v6920 = vadd.f32 0.0, %v6919
        %6921 = vmatmul.bf16.gmra.mxu0 %v6788
        %v6922 = vpop.f32.mrf.mxu0
        %v6923 = vadd.f32 0.0, %v6922
        %v6924 = vpop.f32.mrf.mxu0
        %v6925 = vadd.f32 0.0, %v6924
        %6926 = vmatmul.bf16.gmra.mxu0 %v6791
        %v6927 = vpop.f32.mrf.mxu0
        %v6928 = vadd.f32 0.0, %v6927
        %v6929 = vpop.f32.mrf.mxu0
        %v6930 = vadd.f32 0.0, %v6929
        %6931 = vmatmul.bf16.gmra.mxu0 %v6794
        %v6932 = vpop.f32.mrf.mxu0
        %v6933 = vadd.f32 0.0, %v6932
        %v6934 = vpop.f32.mrf.mxu0
        %v6935 = vadd.f32 0.0, %v6934
        %6936 = vmatmul.bf16.gmra.mxu0 %v6797
        %v6937 = vpop.f32.mrf.mxu0
        %v6938 = vadd.f32 0.0, %v6937
        %v6939 = vpop.f32.mrf.mxu0
        %v6940 = vadd.f32 0.0, %v6939
        %6941 = vmatmul.bf16.gmra.mxu0 %v6800
        %v6942 = vpop.f32.mrf.mxu0
        %v6943 = vadd.f32 0.0, %v6942
        %v6944 = vpop.f32.mrf.mxu0
        %v6945 = vadd.f32 0.0, %v6944
        %6946 = vmatmul.bf16.gmra.mxu0 %v6803
        %v6947 = vpop.f32.mrf.mxu0
        %v6948 = vadd.f32 0.0, %v6947
        %v6949 = vpop.f32.mrf.mxu0
        %v6950 = vadd.f32 0.0, %v6949
        %6951 = vmatmul.bf16.gmra.mxu0 %v6806
        %v6952 = vpop.f32.mrf.mxu0
        %v6953 = vadd.f32 0.0, %v6952
        %v6954 = vpop.f32.mrf.mxu0
        %v6955 = vadd.f32 0.0, %v6954
        %6956 = vmatmul.bf16.gmra.mxu0 %v6809
        %v6957 = vpop.f32.mrf.mxu0
        %v6958 = vadd.f32 0.0, %v6957
        %v6959 = vpop.f32.mrf.mxu0
        %v6960 = vadd.f32 0.0, %v6959
        %6961 = vmatmul.bf16.gmra.mxu0 %v6812
        %v6962 = vpop.f32.mrf.mxu0
        %v6963 = vadd.f32 0.0, %v6962
        %v6964 = vpop.f32.mrf.mxu0
        %v6965 = vadd.f32 0.0, %v6964
        %6966 = vmatmul.bf16.gmra.mxu0 %v6815
        %v6967 = vpop.f32.mrf.mxu0
        %v6968 = vadd.f32 0.0, %v6967
        %v6969 = vpop.f32.mrf.mxu0
        %v6970 = vadd.f32 0.0, %v6969
        %6971 = vmatmul.bf16.gmra.mxu0 %v6818
        %v6972 = vpop.f32.mrf.mxu0
        %v6973 = vadd.f32 0.0, %v6972
        %v6974 = vpop.f32.mrf.mxu0
        %v6975 = vadd.f32 0.0, %v6974
        %6976 = vmatmul.bf16.gmra.mxu0 %v6821
        %v6977 = vpop.f32.mrf.mxu0
        %v6978 = vadd.f32 0.0, %v6977
        %v6979 = vpop.f32.mrf.mxu0
        %v6980 = vadd.f32 0.0, %v6979
        %6981 = vmatmul.bf16.gmra.mxu0 %v6824
        %v6982 = vpop.f32.mrf.mxu0
        %v6983 = vadd.f32 0.0, %v6982
        %v6984 = vpop.f32.mrf.mxu0
        %v6985 = vadd.f32 0.0, %v6984
        %6986 = vmatmul.bf16.gmra.mxu0 %v6827
        %v6987 = vpop.f32.mrf.mxu0
        %v6988 = vadd.f32 0.0, %v6987
        %v6989 = vpop.f32.mrf.mxu0
        %v6990 = vadd.f32 0.0, %v6989
        %6991 = vmatmul.bf16.gmra.mxu0 %v6830
        %v6992 = vpop.f32.mrf.mxu0
        %v6993 = vadd.f32 0.0, %v6992
        %v6994 = vpop.f32.mrf.mxu0
        %v6995 = vadd.f32 0.0, %v6994
        %6996 = vmatmul.bf16.gmra.mxu0 %v6833
        %v6997 = vpop.f32.mrf.mxu0
        %v6998 = vadd.f32 0.0, %v6997
        %v6999 = vpop.f32.mrf.mxu0
        %v7000 = vadd.f32 0.0, %v6999
        %7001 = vmatmul.bf16.gmra.mxu0 %v6836
        %v7002 = vpop.f32.mrf.mxu0
        %v7003 = vadd.f32 0.0, %v7002
        %v7004 = vpop.f32.mrf.mxu0
        %v7005 = vadd.f32 0.0, %v7004
        %7006 = vmatmul.bf16.gmra.mxu0 %v6839
        %v7007 = vpop.f32.mrf.mxu0
        %v7008 = vadd.f32 0.0, %v7007
        %v7009 = vpop.f32.mrf.mxu0
        %v7010 = vadd.f32 0.0, %v7009
        %7011 = vmatmul.bf16.gmra.mxu0 %v6842
        %v7012 = vpop.f32.mrf.mxu0
        %v7013 = vadd.f32 0.0, %v7012
        %v7014 = vpop.f32.mrf.mxu0
        %v7015 = vadd.f32 0.0, %v7014
        %7016 = vmatmul.bf16.gmra.mxu0 %v6845
        %v7017 = vpop.f32.mrf.mxu0
        %v7018 = vadd.f32 0.0, %v7017
        %v7019 = vpop.f32.mrf.mxu0
        %v7020 = vadd.f32 0.0, %v7019
        %7021 = vmatmul.bf16.gmra.mxu0 %v6848
        %v7022 = vpop.f32.mrf.mxu0
        %v7023 = vadd.f32 0.0, %v7022
        %v7024 = vpop.f32.mrf.mxu0
        %v7025 = vadd.f32 0.0, %v7024
        %7026 = vmatmul.bf16.gmra.mxu0 %v6851
        %v7027 = vpop.f32.mrf.mxu0
        %v7028 = vadd.f32 0.0, %v7027
        %v7029 = vpop.f32.mrf.mxu0
        %v7030 = vadd.f32 0.0, %v7029
        %7031 = vmatmul.bf16.gmra.mxu0 %v6854
        %v7032 = vpop.f32.mrf.mxu0
        %v7033 = vadd.f32 0.0, %v7032
        %v7034 = vpop.f32.mrf.mxu0
        %v7035 = vadd.f32 0.0, %v7034
        %7036 = vmatmul.bf16.gmra.mxu0 %v6857
        %v7037 = vpop.f32.mrf.mxu0
        %v7038 = vadd.f32 0.0, %v7037
        %v7039 = vpop.f32.mrf.mxu0
        %v7040 = vadd.f32 0.0, %v7039
        %7041 = vmatmul.bf16.gmra.mxu0 %v6860
        %v7042 = vpop.f32.mrf.mxu0
        %v7043 = vadd.f32 0.0, %v7042
        %v7044 = vpop.f32.mrf.mxu0
        %v7045 = vadd.f32 0.0, %v7044
        %7046 = vmatmul.bf16.gmra.mxu0 %v6863
        %v7047 = vpop.f32.mrf.mxu0
        %v7048 = vadd.f32 0.0, %v7047
        %v7049 = vpop.f32.mrf.mxu0
        %v7050 = vadd.f32 0.0, %v7049
        %7051 = vmatmul.bf16.gmra.mxu0 %v6866
        %v7052 = vpop.f32.mrf.mxu0
        %v7053 = vadd.f32 0.0, %v7052
        %v7054 = vpop.f32.mrf.mxu0
        %v7055 = vadd.f32 0.0, %v7054
        %7056 = vdwg.mxu0
        %v7057 = vadd.f32 %v6288, %v6878
        %v7058 = vadd.f32 %v6290, %v6880
        %v7059 = vadd.f32 %v6293, %v6883
        %v7060 = vadd.f32 %v6295, %v6885
        %v7061 = vadd.f32 %v6298, %v6888
        %v7062 = vadd.f32 %v6300, %v6890
        %v7063 = vadd.f32 %v6303, %v6893
        %v7064 = vadd.f32 %v6305, %v6895
        %v7065 = vadd.f32 %v6308, %v6898
        %v7066 = vadd.f32 %v6310, %v6900
        %v7067 = vadd.f32 %v6313, %v6903
        %v7068 = vadd.f32 %v6315, %v6905
        %v7069 = vadd.f32 %v6318, %v6908
        %v7070 = vadd.f32 %v6320, %v6910
        %v7071 = vadd.f32 %v6323, %v6913
        %v7072 = vadd.f32 %v6325, %v6915
        %v7073 = vadd.f32 %v6328, %v6918
        %v7074 = vadd.f32 %v6330, %v6920
        %v7075 = vadd.f32 %v6333, %v6923
        %v7076 = vadd.f32 %v6335, %v6925
        %v7077 = vadd.f32 %v6338, %v6928
        %v7078 = vadd.f32 %v6340, %v6930
        %v7079 = vadd.f32 %v6343, %v6933
        %v7080 = vadd.f32 %v6345, %v6935
        %v7081 = vadd.f32 %v6348, %v6938
        %v7082 = vadd.f32 %v6350, %v6940
        %v7083 = vadd.f32 %v6353, %v6943
        %v7084 = vadd.f32 %v6355, %v6945
        %v7085 = vadd.f32 %v6358, %v6948
        %v7086 = vadd.f32 %v6360, %v6950
        %v7087 = vadd.f32 %v6363, %v6953
        %v7088 = vadd.f32 %v6365, %v6955
        %v7089 = vadd.f32 %v6368, %v6958
        %v7090 = vadd.f32 %v6370, %v6960
        %v7091 = vadd.f32 %v6373, %v6963
        %v7092 = vadd.f32 %v6375, %v6965
        %v7093 = vadd.f32 %v6378, %v6968
        %v7094 = vadd.f32 %v6380, %v6970
        %v7095 = vadd.f32 %v6383, %v6973
        %v7096 = vadd.f32 %v6385, %v6975
        %v7097 = vadd.f32 %v6388, %v6978
        %v7098 = vadd.f32 %v6390, %v6980
        %v7099 = vadd.f32 %v6393, %v6983
        %v7100 = vadd.f32 %v6395, %v6985
        %v7101 = vadd.f32 %v6398, %v6988
        %v7102 = vadd.f32 %v6400, %v6990
        %v7103 = vadd.f32 %v6403, %v6993
        %v7104 = vadd.f32 %v6405, %v6995
        %v7105 = vadd.f32 %v6408, %v6998
        %v7106 = vadd.f32 %v6410, %v7000
        %v7107 = vadd.f32 %v6413, %v7003
        %v7108 = vadd.f32 %v6415, %v7005
        %v7109 = vadd.f32 %v6418, %v7008
        %v7110 = vadd.f32 %v6420, %v7010
        %v7111 = vadd.f32 %v6423, %v7013
        %v7112 = vadd.f32 %v6425, %v7015
        %v7113 = vadd.f32 %v6428, %v7018
        %v7114 = vadd.f32 %v6430, %v7020
        %v7115 = vadd.f32 %v6433, %v7023
        %v7116 = vadd.f32 %v6435, %v7025
        %v7117 = vadd.f32 %v6438, %v7028
        %v7118 = vadd.f32 %v6440, %v7030
        %v7119 = vadd.f32 %v6443, %v7033
        %v7120 = vadd.f32 %v6445, %v7035
        %v7121 = vadd.f32 %v6448, %v7038
        %v7122 = vadd.f32 %v6450, %v7040
        %v7123 = vadd.f32 %v6453, %v7043
        %v7124 = vadd.f32 %v6455, %v7045
        %v7125 = vadd.f32 %v6458, %v7048
        %v7126 = vadd.f32 %v6460, %v7050
        %v7127 = vadd.f32 %v6463, %v7053
        %v7128 = vadd.f32 %v6465, %v7055
        %v7129 = vpack.c.bf16 %v5332, %v5331
        %v7130 = vpack.c.bf16 %v5335, %v5333
        %v7131 = vpack.c.bf16 %v5337, %v5336
        %v7132 = vpack.c.bf16 %v5340, %v5339
        %v7133 = vpack.c.bf16 %v5343, %v5341
        %v7134 = vpack.c.bf16 %v5345, %v5344
        %v7135 = vpack.c.bf16 %v5348, %v5347
        %v7136 = vpack.c.bf16 %v5351, %v5349
        %v7137 = vpack.c.bf16 %v5353, %v5352
        %v7138 = vpack.c.bf16 %v5356, %v5355
        %v7139 = vpack.c.bf16 %v5359, %v5357
        %v7140 = vpack.c.bf16 %v5361, %v5360
        %v7141 = vpack.c.bf16 %v5364, %v5363
        %v7142 = vpack.c.bf16 %v5367, %v5365
        %v7143 = vpack.c.bf16 %v5369, %v5368
        %v7144 = vpack.c.bf16 %v5372, %v5371
        %v7145 = vpack.c.bf16 %v5375, %v5373
        %v7146 = vpack.c.bf16 %v5377, %v5376
        %v7147 = vpack.c.bf16 %v5380, %v5379
        %v7148 = vpack.c.bf16 %v5383, %v5381
        %v7149 = vpack.c.bf16 %v5385, %v5384
        %v7150 = vpack.c.bf16 %v5388, %v5387
        %v7151 = vpack.c.bf16 %v5391, %v5389
        %v7152 = vpack.c.bf16 %v5393, %v5392
        %v7153 = vpack.c.bf16 %v5396, %v5395
        %v7154 = vpack.c.bf16 %v5399, %v5397
        %v7155 = vpack.c.bf16 %v5401, %v5400
        %v7156 = vpack.c.bf16 %v5404, %v5403
        %v7157 = vpack.c.bf16 %v5407, %v5405
        %v7158 = vpack.c.bf16 %v5409, %v5408
        %v7159 = vpack.c.bf16 %v5412, %v5411
        %v7160 = vpack.c.bf16 %v5415, %v5413
        %v7161 = vpack.c.bf16 %v5417, %v5416
        %v7162 = vpack.c.bf16 %v5420, %v5419
        %v7163 = vpack.c.bf16 %v5423, %v5421
        %v7164 = vpack.c.bf16 %v5425, %v5424
        %s7165 = scalar_lea.vmem [#allocation6], 48
        %v7166 = vld [vmem:[%s7165] sm:$0xf]
        %v7167 = vld [vmem:[%s7165 + $0x4] sm:$0xf]
        %v7168 = vld [vmem:[%s7165 + $0x8] sm:$0xf]
        %v7169 = vld [vmem:[%s7165 + $0xc] sm:$0xf]
        %v7174 = vunpack.c.l.b16 %v7166
        %v7175 = vunpack.c.l.b16 %v7167
        %v7176 = vunpack.c.l.b16 %v7168
        %v7177 = vunpack.c.l.b16 %v7169
        %v7178 = vpack.c.b16 %v7175, %v7174
        %v7179 = vpack.c.b16 %v7177, %v7176
        %v7183 = vsel %vm5860, %v7129, 0
        %v7186 = vsel %vm5860, %v7130, 0
        %v7189 = vsel %vm5860, %v7131, 0
        %v7192 = vsel %vm5860, %v7132, 0
        %v7195 = vsel %vm5860, %v7133, 0
        %v7198 = vsel %vm5860, %v7134, 0
        %v7201 = vsel %vm5860, %v7135, 0
        %v7204 = vsel %vm5860, %v7136, 0
        %v7207 = vsel %vm5860, %v7137, 0
        %v7210 = vsel %vm5860, %v7138, 0
        %v7213 = vsel %vm5860, %v7139, 0
        %v7216 = vsel %vm5860, %v7140, 0
        %v7219 = vsel %vm5860, %v7141, 0
        %v7222 = vsel %vm5860, %v7142, 0
        %v7225 = vsel %vm5860, %v7143, 0
        %v7228 = vsel %vm5860, %v7144, 0
        %v7231 = vsel %vm5860, %v7145, 0
        %v7234 = vsel %vm5860, %v7146, 0
        %v7237 = vsel %vm5860, %v7147, 0
        %v7240 = vsel %vm5860, %v7148, 0
        %v7243 = vsel %vm5860, %v7149, 0
        %v7246 = vsel %vm5860, %v7150, 0
        %v7249 = vsel %vm5860, %v7151, 0
        %v7252 = vsel %vm5860, %v7152, 0
        %v7255 = vsel %vm5860, %v7153, 0
        %v7258 = vsel %vm5860, %v7154, 0
        %v7261 = vsel %vm5860, %v7155, 0
        %v7264 = vsel %vm5860, %v7156, 0
        %v7267 = vsel %vm5860, %v7157, 0
        %v7270 = vsel %vm5860, %v7158, 0
        %v7273 = vsel %vm5860, %v7159, 0
        %v7276 = vsel %vm5860, %v7160, 0
        %v7279 = vsel %vm5860, %v7161, 0
        %v7282 = vsel %vm5860, %v7162, 0
        %v7285 = vsel %vm5860, %v7163, 0
        %v7288 = vsel %vm5860, %v7164, 0
        %7290 = vmatpush.bf16.msra.mxu0 0
        %7291 = vmatpush.bf16.msra.mxu0 0
        %7292 = vmatpush.bf16.msra.mxu0 0
        %7293 = vmatpush.bf16.msra.mxu0 0
        %7294 = vmatpush.bf16.msra.mxu0 0
        %7295 = vmatpush.bf16.msra.mxu0 0
        %7296 = vmatpush.bf16.msra.mxu0 %v7179
        %7297 = vmatpush.bf16.msra.mxu0 %v7178
        %7298 = vmatmul.bf16.gmra.mxu0 %v7183
        %v7299 = vpop.f32.mrf.mxu0
        %v7300 = vadd.f32 0.0, %v7299
        %v7301 = vpop.f32.mrf.mxu0
        %v7302 = vadd.f32 0.0, %v7301
        %7303 = vmatmul.bf16.gmra.mxu0 %v7186
        %v7304 = vpop.f32.mrf.mxu0
        %v7305 = vadd.f32 0.0, %v7304
        %v7306 = vpop.f32.mrf.mxu0
        %v7307 = vadd.f32 0.0, %v7306
        %7308 = vmatmul.bf16.gmra.mxu0 %v7189
        %v7309 = vpop.f32.mrf.mxu0
        %v7310 = vadd.f32 0.0, %v7309
        %v7311 = vpop.f32.mrf.mxu0
        %v7312 = vadd.f32 0.0, %v7311
        %7313 = vmatmul.bf16.gmra.mxu0 %v7192
        %v7314 = vpop.f32.mrf.mxu0
        %v7315 = vadd.f32 0.0, %v7314
        %v7316 = vpop.f32.mrf.mxu0
        %v7317 = vadd.f32 0.0, %v7316
        %7318 = vmatmul.bf16.gmra.mxu0 %v7195
        %v7319 = vpop.f32.mrf.mxu0
        %v7320 = vadd.f32 0.0, %v7319
        %v7321 = vpop.f32.mrf.mxu0
        %v7322 = vadd.f32 0.0, %v7321
        %7323 = vmatmul.bf16.gmra.mxu0 %v7198
        %v7324 = vpop.f32.mrf.mxu0
        %v7325 = vadd.f32 0.0, %v7324
        %v7326 = vpop.f32.mrf.mxu0
        %v7327 = vadd.f32 0.0, %v7326
        %7328 = vmatmul.bf16.gmra.mxu0 %v7201
        %v7329 = vpop.f32.mrf.mxu0
        %v7330 = vadd.f32 0.0, %v7329
        %v7331 = vpop.f32.mrf.mxu0
        %v7332 = vadd.f32 0.0, %v7331
        %7333 = vmatmul.bf16.gmra.mxu0 %v7204
        %v7334 = vpop.f32.mrf.mxu0
        %v7335 = vadd.f32 0.0, %v7334
        %v7336 = vpop.f32.mrf.mxu0
        %v7337 = vadd.f32 0.0, %v7336
        %7338 = vmatmul.bf16.gmra.mxu0 %v7207
        %v7339 = vpop.f32.mrf.mxu0
        %v7340 = vadd.f32 0.0, %v7339
        %v7341 = vpop.f32.mrf.mxu0
        %v7342 = vadd.f32 0.0, %v7341
        %7343 = vmatmul.bf16.gmra.mxu0 %v7210
        %v7344 = vpop.f32.mrf.mxu0
        %v7345 = vadd.f32 0.0, %v7344
        %v7346 = vpop.f32.mrf.mxu0
        %v7347 = vadd.f32 0.0, %v7346
        %7348 = vmatmul.bf16.gmra.mxu0 %v7213
        %v7349 = vpop.f32.mrf.mxu0
        %v7350 = vadd.f32 0.0, %v7349
        %v7351 = vpop.f32.mrf.mxu0
        %v7352 = vadd.f32 0.0, %v7351
        %7353 = vmatmul.bf16.gmra.mxu0 %v7216
        %v7354 = vpop.f32.mrf.mxu0
        %v7355 = vadd.f32 0.0, %v7354
        %v7356 = vpop.f32.mrf.mxu0
        %v7357 = vadd.f32 0.0, %v7356
        %7358 = vmatmul.bf16.gmra.mxu0 %v7219
        %v7359 = vpop.f32.mrf.mxu0
        %v7360 = vadd.f32 0.0, %v7359
        %v7361 = vpop.f32.mrf.mxu0
        %v7362 = vadd.f32 0.0, %v7361
        %7363 = vmatmul.bf16.gmra.mxu0 %v7222
        %v7364 = vpop.f32.mrf.mxu0
        %v7365 = vadd.f32 0.0, %v7364
        %v7366 = vpop.f32.mrf.mxu0
        %v7367 = vadd.f32 0.0, %v7366
        %7368 = vmatmul.bf16.gmra.mxu0 %v7225
        %v7369 = vpop.f32.mrf.mxu0
        %v7370 = vadd.f32 0.0, %v7369
        %v7371 = vpop.f32.mrf.mxu0
        %v7372 = vadd.f32 0.0, %v7371
        %7373 = vmatmul.bf16.gmra.mxu0 %v7228
        %v7374 = vpop.f32.mrf.mxu0
        %v7375 = vadd.f32 0.0, %v7374
        %v7376 = vpop.f32.mrf.mxu0
        %v7377 = vadd.f32 0.0, %v7376
        %7378 = vmatmul.bf16.gmra.mxu0 %v7231
        %v7379 = vpop.f32.mrf.mxu0
        %v7380 = vadd.f32 0.0, %v7379
        %v7381 = vpop.f32.mrf.mxu0
        %v7382 = vadd.f32 0.0, %v7381
        %7383 = vmatmul.bf16.gmra.mxu0 %v7234
        %v7384 = vpop.f32.mrf.mxu0
        %v7385 = vadd.f32 0.0, %v7384
        %v7386 = vpop.f32.mrf.mxu0
        %v7387 = vadd.f32 0.0, %v7386
        %7388 = vmatmul.bf16.gmra.mxu0 %v7237
        %v7389 = vpop.f32.mrf.mxu0
        %v7390 = vadd.f32 0.0, %v7389
        %v7391 = vpop.f32.mrf.mxu0
        %v7392 = vadd.f32 0.0, %v7391
        %7393 = vmatmul.bf16.gmra.mxu0 %v7240
        %v7394 = vpop.f32.mrf.mxu0
        %v7395 = vadd.f32 0.0, %v7394
        %v7396 = vpop.f32.mrf.mxu0
        %v7397 = vadd.f32 0.0, %v7396
        %7398 = vmatmul.bf16.gmra.mxu0 %v7243
        %v7399 = vpop.f32.mrf.mxu0
        %v7400 = vadd.f32 0.0, %v7399
        %v7401 = vpop.f32.mrf.mxu0
        %v7402 = vadd.f32 0.0, %v7401
        %7403 = vmatmul.bf16.gmra.mxu0 %v7246
        %v7404 = vpop.f32.mrf.mxu0
        %v7405 = vadd.f32 0.0, %v7404
        %v7406 = vpop.f32.mrf.mxu0
        %v7407 = vadd.f32 0.0, %v7406
        %7408 = vmatmul.bf16.gmra.mxu0 %v7249
        %v7409 = vpop.f32.mrf.mxu0
        %v7410 = vadd.f32 0.0, %v7409
        %v7411 = vpop.f32.mrf.mxu0
        %v7412 = vadd.f32 0.0, %v7411
        %7413 = vmatmul.bf16.gmra.mxu0 %v7252
        %v7414 = vpop.f32.mrf.mxu0
        %v7415 = vadd.f32 0.0, %v7414
        %v7416 = vpop.f32.mrf.mxu0
        %v7417 = vadd.f32 0.0, %v7416
        %7418 = vmatmul.bf16.gmra.mxu0 %v7255
        %v7419 = vpop.f32.mrf.mxu0
        %v7420 = vadd.f32 0.0, %v7419
        %v7421 = vpop.f32.mrf.mxu0
        %v7422 = vadd.f32 0.0, %v7421
        %7423 = vmatmul.bf16.gmra.mxu0 %v7258
        %v7424 = vpop.f32.mrf.mxu0
        %v7425 = vadd.f32 0.0, %v7424
        %v7426 = vpop.f32.mrf.mxu0
        %v7427 = vadd.f32 0.0, %v7426
        %7428 = vmatmul.bf16.gmra.mxu0 %v7261
        %v7429 = vpop.f32.mrf.mxu0
        %v7430 = vadd.f32 0.0, %v7429
        %v7431 = vpop.f32.mrf.mxu0
        %v7432 = vadd.f32 0.0, %v7431
        %7433 = vmatmul.bf16.gmra.mxu0 %v7264
        %v7434 = vpop.f32.mrf.mxu0
        %v7435 = vadd.f32 0.0, %v7434
        %v7436 = vpop.f32.mrf.mxu0
        %v7437 = vadd.f32 0.0, %v7436
        %7438 = vmatmul.bf16.gmra.mxu0 %v7267
        %v7439 = vpop.f32.mrf.mxu0
        %v7440 = vadd.f32 0.0, %v7439
        %v7441 = vpop.f32.mrf.mxu0
        %v7442 = vadd.f32 0.0, %v7441
        %7443 = vmatmul.bf16.gmra.mxu0 %v7270
        %v7444 = vpop.f32.mrf.mxu0
        %v7445 = vadd.f32 0.0, %v7444
        %v7446 = vpop.f32.mrf.mxu0
        %v7447 = vadd.f32 0.0, %v7446
        %7448 = vmatmul.bf16.gmra.mxu0 %v7273
        %v7449 = vpop.f32.mrf.mxu0
        %v7450 = vadd.f32 0.0, %v7449
        %v7451 = vpop.f32.mrf.mxu0
        %v7452 = vadd.f32 0.0, %v7451
        %7453 = vmatmul.bf16.gmra.mxu0 %v7276
        %v7454 = vpop.f32.mrf.mxu0
        %v7455 = vadd.f32 0.0, %v7454
        %v7456 = vpop.f32.mrf.mxu0
        %v7457 = vadd.f32 0.0, %v7456
        %7458 = vmatmul.bf16.gmra.mxu0 %v7279
        %v7459 = vpop.f32.mrf.mxu0
        %v7460 = vadd.f32 0.0, %v7459
        %v7461 = vpop.f32.mrf.mxu0
        %v7462 = vadd.f32 0.0, %v7461
        %7463 = vmatmul.bf16.gmra.mxu0 %v7282
        %v7464 = vpop.f32.mrf.mxu0
        %v7465 = vadd.f32 0.0, %v7464
        %v7466 = vpop.f32.mrf.mxu0
        %v7467 = vadd.f32 0.0, %v7466
        %7468 = vmatmul.bf16.gmra.mxu0 %v7285
        %v7469 = vpop.f32.mrf.mxu0
        %v7470 = vadd.f32 0.0, %v7469
        %v7471 = vpop.f32.mrf.mxu0
        %v7472 = vadd.f32 0.0, %v7471
        %7473 = vmatmul.bf16.gmra.mxu0 %v7288
        %v7474 = vpop.f32.mrf.mxu0
        %v7475 = vadd.f32 0.0, %v7474
        %v7476 = vpop.f32.mrf.mxu0
        %v7477 = vadd.f32 0.0, %v7476
        %7478 = vdwg.mxu0
        %v7479 = vadd.f32 %v7057, %v7300
        %v7480 = vadd.f32 %v7058, %v7302
        %v7481 = vadd.f32 %v7059, %v7305
        %v7482 = vadd.f32 %v7060, %v7307
        %v7483 = vadd.f32 %v7061, %v7310
        %v7484 = vadd.f32 %v7062, %v7312
        %v7485 = vadd.f32 %v7063, %v7315
        %v7486 = vadd.f32 %v7064, %v7317
        %v7487 = vadd.f32 %v7065, %v7320
        %v7488 = vadd.f32 %v7066, %v7322
        %v7489 = vadd.f32 %v7067, %v7325
        %v7490 = vadd.f32 %v7068, %v7327
        %v7491 = vadd.f32 %v7069, %v7330
        %v7492 = vadd.f32 %v7070, %v7332
        %v7493 = vadd.f32 %v7071, %v7335
        %v7494 = vadd.f32 %v7072, %v7337
        %v7495 = vadd.f32 %v7073, %v7340
        %v7496 = vadd.f32 %v7074, %v7342
        %v7497 = vadd.f32 %v7075, %v7345
        %v7498 = vadd.f32 %v7076, %v7347
        %v7499 = vadd.f32 %v7077, %v7350
        %v7500 = vadd.f32 %v7078, %v7352
        %v7501 = vadd.f32 %v7079, %v7355
        %v7502 = vadd.f32 %v7080, %v7357
        %v7503 = vadd.f32 %v7081, %v7360
        %v7504 = vadd.f32 %v7082, %v7362
        %v7505 = vadd.f32 %v7083, %v7365
        %v7506 = vadd.f32 %v7084, %v7367
        %v7507 = vadd.f32 %v7085, %v7370
        %v7508 = vadd.f32 %v7086, %v7372
        %v7509 = vadd.f32 %v7087, %v7375
        %v7510 = vadd.f32 %v7088, %v7377
        %v7511 = vadd.f32 %v7089, %v7380
        %v7512 = vadd.f32 %v7090, %v7382
        %v7513 = vadd.f32 %v7091, %v7385
        %v7514 = vadd.f32 %v7092, %v7387
        %v7515 = vadd.f32 %v7093, %v7390
        %v7516 = vadd.f32 %v7094, %v7392
        %v7517 = vadd.f32 %v7095, %v7395
        %v7518 = vadd.f32 %v7096, %v7397
        %v7519 = vadd.f32 %v7097, %v7400
        %v7520 = vadd.f32 %v7098, %v7402
        %v7521 = vadd.f32 %v7099, %v7405
        %v7522 = vadd.f32 %v7100, %v7407
        %v7523 = vadd.f32 %v7101, %v7410
        %v7524 = vadd.f32 %v7102, %v7412
        %v7525 = vadd.f32 %v7103, %v7415
        %v7526 = vadd.f32 %v7104, %v7417
        %v7527 = vadd.f32 %v7105, %v7420
        %v7528 = vadd.f32 %v7106, %v7422
        %v7529 = vadd.f32 %v7107, %v7425
        %v7530 = vadd.f32 %v7108, %v7427
        %v7531 = vadd.f32 %v7109, %v7430
        %v7532 = vadd.f32 %v7110, %v7432
        %v7533 = vadd.f32 %v7111, %v7435
        %v7534 = vadd.f32 %v7112, %v7437
        %v7535 = vadd.f32 %v7113, %v7440
        %v7536 = vadd.f32 %v7114, %v7442
        %v7537 = vadd.f32 %v7115, %v7445
        %v7538 = vadd.f32 %v7116, %v7447
        %v7539 = vadd.f32 %v7117, %v7450
        %v7540 = vadd.f32 %v7118, %v7452
        %v7541 = vadd.f32 %v7119, %v7455
        %v7542 = vadd.f32 %v7120, %v7457
        %v7543 = vadd.f32 %v7121, %v7460
        %v7544 = vadd.f32 %v7122, %v7462
        %v7545 = vadd.f32 %v7123, %v7465
        %v7546 = vadd.f32 %v7124, %v7467
        %v7547 = vadd.f32 %v7125, %v7470
        %v7548 = vadd.f32 %v7126, %v7472
        %v7549 = vadd.f32 %v7127, %v7475
        %v7550 = vadd.f32 %v7128, %v7477
        %v7555 = vrot.slane %v5423, 1
        %v7556 = vrot.slane %v5424, 1
        %v7557 = vsel %vm1346, %v7555, %v7556
        %v7558 = vrot.slane %v5425, 1
        %v7559 = vsel %vm1346, %v7556, %v7558
        %v7560 = vrot.slane %v5426, 1
        %v7561 = vsel %vm1346, %v7558, %v7560
        %v7565 = vpack.c.bf16 %v5578, %v5576
        %v7566 = vpack.c.bf16 %v5583, %v5580
        %v7567 = vpack.c.bf16 %v5587, %v5585
        %v7568 = vpack.c.bf16 %v5592, %v5590
        %v7569 = vpack.c.bf16 %v5597, %v5594
        %v7570 = vpack.c.bf16 %v5601, %v5599
        %v7571 = vpack.c.bf16 %v5606, %v5604
        %v7572 = vpack.c.bf16 %v5611, %v5608
        %v7573 = vpack.c.bf16 %v5615, %v5613
        %v7574 = vpack.c.bf16 %v5620, %v5618
        %v7575 = vpack.c.bf16 %v5625, %v5622
        %v7576 = vpack.c.bf16 %v5629, %v5627
        %v7577 = vpack.c.bf16 %v5634, %v5632
        %v7578 = vpack.c.bf16 %v5639, %v5636
        %v7579 = vpack.c.bf16 %v5643, %v5641
        %v7580 = vpack.c.bf16 %v5648, %v5646
        %v7581 = vpack.c.bf16 %v5653, %v5650
        %v7582 = vpack.c.bf16 %v5657, %v5655
        %v7583 = vpack.c.bf16 %v5662, %v5660
        %v7584 = vpack.c.bf16 %v5667, %v5664
        %v7585 = vpack.c.bf16 %v5671, %v5669
        %v7586 = vpack.c.bf16 %v5676, %v5674
        %v7587 = vpack.c.bf16 %v5681, %v5678
        %v7588 = vpack.c.bf16 %v5685, %v5683
        %v7589 = vpack.c.bf16 %v5690, %v5688
        %v7590 = vpack.c.bf16 %v5695, %v5692
        %v7591 = vpack.c.bf16 %v5699, %v5697
        %v7592 = vpack.c.bf16 %v5704, %v5702
        %v7593 = vpack.c.bf16 %v5709, %v5706
        %v7594 = vpack.c.bf16 %v5713, %v5711
        %v7595 = vpack.c.bf16 %v5718, %v5716
        %v7596 = vpack.c.bf16 %v5723, %v5720
        %v7597 = vpack.c.bf16 %v5727, %v5725
        %v7598 = vpack.c.bf16 %v5732, %v5730
        %v7599 = vpack.c.bf16 %v7557, %v5734
        %v7600 = vpack.c.bf16 %v7561, %v7559
        %s7601 = scalar_lea.vmem [#allocation6], 64
        %v7602 = vld [vmem:[%s7601] sm:$0xf]
        %v7603 = vld [vmem:[%s7601 + $0x4] sm:$0xf]
        %v7604 = vld [vmem:[%s7601 + $0x8] sm:$0xf]
        %v7605 = vld [vmem:[%s7601 + $0xc] sm:$0xf]
        %v7610 = vunpack.c.l.b16 %v7602
        %v7611 = vunpack.c.l.b16 %v7603
        %v7612 = vunpack.c.l.b16 %v7604
        %v7613 = vunpack.c.l.b16 %v7605
        %v7614 = vpack.c.b16 %v7611, %v7610
        %v7615 = vpack.c.b16 %v7613, %v7612
        %v7619 = vsel %vm5860, %v7565, 0
        %v7622 = vsel %vm5860, %v7566, 0
        %v7625 = vsel %vm5860, %v7567, 0
        %v7628 = vsel %vm5860, %v7568, 0
        %v7631 = vsel %vm5860, %v7569, 0
        %v7634 = vsel %vm5860, %v7570, 0
        %v7637 = vsel %vm5860, %v7571, 0
        %v7640 = vsel %vm5860, %v7572, 0
        %v7643 = vsel %vm5860, %v7573, 0
        %v7646 = vsel %vm5860, %v7574, 0
        %v7649 = vsel %vm5860, %v7575, 0
        %v7652 = vsel %vm5860, %v7576, 0
        %v7655 = vsel %vm5860, %v7577, 0
        %v7658 = vsel %vm5860, %v7578, 0
        %v7661 = vsel %vm5860, %v7579, 0
        %v7664 = vsel %vm5860, %v7580, 0
        %v7667 = vsel %vm5860, %v7581, 0
        %v7670 = vsel %vm5860, %v7582, 0
        %v7673 = vsel %vm5860, %v7583, 0
        %v7676 = vsel %vm5860, %v7584, 0
        %v7679 = vsel %vm5860, %v7585, 0
        %v7682 = vsel %vm5860, %v7586, 0
        %v7685 = vsel %vm5860, %v7587, 0
        %v7688 = vsel %vm5860, %v7588, 0
        %v7691 = vsel %vm5860, %v7589, 0
        %v7694 = vsel %vm5860, %v7590, 0
        %v7697 = vsel %vm5860, %v7591, 0
        %v7700 = vsel %vm5860, %v7592, 0
        %v7703 = vsel %vm5860, %v7593, 0
        %v7706 = vsel %vm5860, %v7594, 0
        %v7709 = vsel %vm5860, %v7595, 0
        %v7712 = vsel %vm5860, %v7596, 0
        %v7715 = vsel %vm5860, %v7597, 0
        %v7718 = vsel %vm5860, %v7598, 0
        %v7721 = vsel %vm5860, %v7599, 0
        %v7724 = vsel %vm5860, %v7600, 0
        %7726 = vmatpush.bf16.msra.mxu0 0
        %7727 = vmatpush.bf16.msra.mxu0 0
        %7728 = vmatpush.bf16.msra.mxu0 0
        %7729 = vmatpush.bf16.msra.mxu0 0
        %7730 = vmatpush.bf16.msra.mxu0 0
        %7731 = vmatpush.bf16.msra.mxu0 0
        %7732 = vmatpush.bf16.msra.mxu0 %v7615
        %7733 = vmatpush.bf16.msra.mxu0 %v7614
        %7734 = vmatmul.bf16.gmra.mxu0 %v7619
        %v7735 = vpop.f32.mrf.mxu0
        %v7736 = vadd.f32 0.0, %v7735
        %v7737 = vpop.f32.mrf.mxu0
        %v7738 = vadd.f32 0.0, %v7737
        %7739 = vmatmul.bf16.gmra.mxu0 %v7622
        %v7740 = vpop.f32.mrf.mxu0
        %v7741 = vadd.f32 0.0, %v7740
        %v7742 = vpop.f32.mrf.mxu0
        %v7743 = vadd.f32 0.0, %v7742
        %7744 = vmatmul.bf16.gmra.mxu0 %v7625
        %v7745 = vpop.f32.mrf.mxu0
        %v7746 = vadd.f32 0.0, %v7745
        %v7747 = vpop.f32.mrf.mxu0
        %v7748 = vadd.f32 0.0, %v7747
        %7749 = vmatmul.bf16.gmra.mxu0 %v7628
        %v7750 = vpop.f32.mrf.mxu0
        %v7751 = vadd.f32 0.0, %v7750
        %v7752 = vpop.f32.mrf.mxu0
        %v7753 = vadd.f32 0.0, %v7752
        %7754 = vmatmul.bf16.gmra.mxu0 %v7631
        %v7755 = vpop.f32.mrf.mxu0
        %v7756 = vadd.f32 0.0, %v7755
        %v7757 = vpop.f32.mrf.mxu0
        %v7758 = vadd.f32 0.0, %v7757
        %7759 = vmatmul.bf16.gmra.mxu0 %v7634
        %v7760 = vpop.f32.mrf.mxu0
        %v7761 = vadd.f32 0.0, %v7760
        %v7762 = vpop.f32.mrf.mxu0
        %v7763 = vadd.f32 0.0, %v7762
        %7764 = vmatmul.bf16.gmra.mxu0 %v7637
        %v7765 = vpop.f32.mrf.mxu0
        %v7766 = vadd.f32 0.0, %v7765
        %v7767 = vpop.f32.mrf.mxu0
        %v7768 = vadd.f32 0.0, %v7767
        %7769 = vmatmul.bf16.gmra.mxu0 %v7640
        %v7770 = vpop.f32.mrf.mxu0
        %v7771 = vadd.f32 0.0, %v7770
        %v7772 = vpop.f32.mrf.mxu0
        %v7773 = vadd.f32 0.0, %v7772
        %7774 = vmatmul.bf16.gmra.mxu0 %v7643
        %v7775 = vpop.f32.mrf.mxu0
        %v7776 = vadd.f32 0.0, %v7775
        %v7777 = vpop.f32.mrf.mxu0
        %v7778 = vadd.f32 0.0, %v7777
        %7779 = vmatmul.bf16.gmra.mxu0 %v7646
        %v7780 = vpop.f32.mrf.mxu0
        %v7781 = vadd.f32 0.0, %v7780
        %v7782 = vpop.f32.mrf.mxu0
        %v7783 = vadd.f32 0.0, %v7782
        %7784 = vmatmul.bf16.gmra.mxu0 %v7649
        %v7785 = vpop.f32.mrf.mxu0
        %v7786 = vadd.f32 0.0, %v7785
        %v7787 = vpop.f32.mrf.mxu0
        %v7788 = vadd.f32 0.0, %v7787
        %7789 = vmatmul.bf16.gmra.mxu0 %v7652
        %v7790 = vpop.f32.mrf.mxu0
        %v7791 = vadd.f32 0.0, %v7790
        %v7792 = vpop.f32.mrf.mxu0
        %v7793 = vadd.f32 0.0, %v7792
        %7794 = vmatmul.bf16.gmra.mxu0 %v7655
        %v7795 = vpop.f32.mrf.mxu0
        %v7796 = vadd.f32 0.0, %v7795
        %v7797 = vpop.f32.mrf.mxu0
        %v7798 = vadd.f32 0.0, %v7797
        %7799 = vmatmul.bf16.gmra.mxu0 %v7658
        %v7800 = vpop.f32.mrf.mxu0
        %v7801 = vadd.f32 0.0, %v7800
        %v7802 = vpop.f32.mrf.mxu0
        %v7803 = vadd.f32 0.0, %v7802
        %7804 = vmatmul.bf16.gmra.mxu0 %v7661
        %v7805 = vpop.f32.mrf.mxu0
        %v7806 = vadd.f32 0.0, %v7805
        %v7807 = vpop.f32.mrf.mxu0
        %v7808 = vadd.f32 0.0, %v7807
        %7809 = vmatmul.bf16.gmra.mxu0 %v7664
        %v7810 = vpop.f32.mrf.mxu0
        %v7811 = vadd.f32 0.0, %v7810
        %v7812 = vpop.f32.mrf.mxu0
        %v7813 = vadd.f32 0.0, %v7812
        %7814 = vmatmul.bf16.gmra.mxu0 %v7667
        %v7815 = vpop.f32.mrf.mxu0
        %v7816 = vadd.f32 0.0, %v7815
        %v7817 = vpop.f32.mrf.mxu0
        %v7818 = vadd.f32 0.0, %v7817
        %7819 = vmatmul.bf16.gmra.mxu0 %v7670
        %v7820 = vpop.f32.mrf.mxu0
        %v7821 = vadd.f32 0.0, %v7820
        %v7822 = vpop.f32.mrf.mxu0
        %v7823 = vadd.f32 0.0, %v7822
        %7824 = vmatmul.bf16.gmra.mxu0 %v7673
        %v7825 = vpop.f32.mrf.mxu0
        %v7826 = vadd.f32 0.0, %v7825
        %v7827 = vpop.f32.mrf.mxu0
        %v7828 = vadd.f32 0.0, %v7827
        %7829 = vmatmul.bf16.gmra.mxu0 %v7676
        %v7830 = vpop.f32.mrf.mxu0
        %v7831 = vadd.f32 0.0, %v7830
        %v7832 = vpop.f32.mrf.mxu0
        %v7833 = vadd.f32 0.0, %v7832
        %7834 = vmatmul.bf16.gmra.mxu0 %v7679
        %v7835 = vpop.f32.mrf.mxu0
        %v7836 = vadd.f32 0.0, %v7835
        %v7837 = vpop.f32.mrf.mxu0
        %v7838 = vadd.f32 0.0, %v7837
        %7839 = vmatmul.bf16.gmra.mxu0 %v7682
        %v7840 = vpop.f32.mrf.mxu0
        %v7841 = vadd.f32 0.0, %v7840
        %v7842 = vpop.f32.mrf.mxu0
        %v7843 = vadd.f32 0.0, %v7842
        %7844 = vmatmul.bf16.gmra.mxu0 %v7685
        %v7845 = vpop.f32.mrf.mxu0
        %v7846 = vadd.f32 0.0, %v7845
        %v7847 = vpop.f32.mrf.mxu0
        %v7848 = vadd.f32 0.0, %v7847
        %7849 = vmatmul.bf16.gmra.mxu0 %v7688
        %v7850 = vpop.f32.mrf.mxu0
        %v7851 = vadd.f32 0.0, %v7850
        %v7852 = vpop.f32.mrf.mxu0
        %v7853 = vadd.f32 0.0, %v7852
        %7854 = vmatmul.bf16.gmra.mxu0 %v7691
        %v7855 = vpop.f32.mrf.mxu0
        %v7856 = vadd.f32 0.0, %v7855
        %v7857 = vpop.f32.mrf.mxu0
        %v7858 = vadd.f32 0.0, %v7857
        %7859 = vmatmul.bf16.gmra.mxu0 %v7694
        %v7860 = vpop.f32.mrf.mxu0
        %v7861 = vadd.f32 0.0, %v7860
        %v7862 = vpop.f32.mrf.mxu0
        %v7863 = vadd.f32 0.0, %v7862
        %7864 = vmatmul.bf16.gmra.mxu0 %v7697
        %v7865 = vpop.f32.mrf.mxu0
        %v7866 = vadd.f32 0.0, %v7865
        %v7867 = vpop.f32.mrf.mxu0
        %v7868 = vadd.f32 0.0, %v7867
        %7869 = vmatmul.bf16.gmra.mxu0 %v7700
        %v7870 = vpop.f32.mrf.mxu0
        %v7871 = vadd.f32 0.0, %v7870
        %v7872 = vpop.f32.mrf.mxu0
        %v7873 = vadd.f32 0.0, %v7872
        %7874 = vmatmul.bf16.gmra.mxu0 %v7703
        %v7875 = vpop.f32.mrf.mxu0
        %v7876 = vadd.f32 0.0, %v7875
        %v7877 = vpop.f32.mrf.mxu0
        %v7878 = vadd.f32 0.0, %v7877
        %7879 = vmatmul.bf16.gmra.mxu0 %v7706
        %v7880 = vpop.f32.mrf.mxu0
        %v7881 = vadd.f32 0.0, %v7880
        %v7882 = vpop.f32.mrf.mxu0
        %v7883 = vadd.f32 0.0, %v7882
        %7884 = vmatmul.bf16.gmra.mxu0 %v7709
        %v7885 = vpop.f32.mrf.mxu0
        %v7886 = vadd.f32 0.0, %v7885
        %v7887 = vpop.f32.mrf.mxu0
        %v7888 = vadd.f32 0.0, %v7887
        %7889 = vmatmul.bf16.gmra.mxu0 %v7712
        %v7890 = vpop.f32.mrf.mxu0
        %v7891 = vadd.f32 0.0, %v7890
        %v7892 = vpop.f32.mrf.mxu0
        %v7893 = vadd.f32 0.0, %v7892
        %7894 = vmatmul.bf16.gmra.mxu0 %v7715
        %v7895 = vpop.f32.mrf.mxu0
        %v7896 = vadd.f32 0.0, %v7895
        %v7897 = vpop.f32.mrf.mxu0
        %v7898 = vadd.f32 0.0, %v7897
        %7899 = vmatmul.bf16.gmra.mxu0 %v7718
        %v7900 = vpop.f32.mrf.mxu0
        %v7901 = vadd.f32 0.0, %v7900
        %v7902 = vpop.f32.mrf.mxu0
        %v7903 = vadd.f32 0.0, %v7902
        %7904 = vmatmul.bf16.gmra.mxu0 %v7721
        %v7905 = vpop.f32.mrf.mxu0
        %v7906 = vadd.f32 0.0, %v7905
        %v7907 = vpop.f32.mrf.mxu0
        %v7908 = vadd.f32 0.0, %v7907
        %7909 = vmatmul.bf16.gmra.mxu0 %v7724
        %v7910 = vpop.f32.mrf.mxu0
        %v7911 = vadd.f32 0.0, %v7910
        %v7912 = vpop.f32.mrf.mxu0
        %v7913 = vadd.f32 0.0, %v7912
        %7914 = vdwg.mxu0
        %v7915 = vadd.f32 %v7479, %v7736
        %v7916 = vadd.f32 %v7480, %v7738
        %v7917 = vadd.f32 %v7481, %v7741
        %v7918 = vadd.f32 %v7482, %v7743
        %v7919 = vadd.f32 %v7483, %v7746
        %v7920 = vadd.f32 %v7484, %v7748
        %v7921 = vadd.f32 %v7485, %v7751
        %v7922 = vadd.f32 %v7486, %v7753
        %v7923 = vadd.f32 %v7487, %v7756
        %v7924 = vadd.f32 %v7488, %v7758
        %v7925 = vadd.f32 %v7489, %v7761
        %v7926 = vadd.f32 %v7490, %v7763
        %v7927 = vadd.f32 %v7491, %v7766
        %v7928 = vadd.f32 %v7492, %v7768
        %v7929 = vadd.f32 %v7493, %v7771
        %v7930 = vadd.f32 %v7494, %v7773
        %v7931 = vadd.f32 %v7495, %v7776
        %v7932 = vadd.f32 %v7496, %v7778
        %v7933 = vadd.f32 %v7497, %v7781
        %v7934 = vadd.f32 %v7498, %v7783
        %v7935 = vadd.f32 %v7499, %v7786
        %v7936 = vadd.f32 %v7500, %v7788
        %v7937 = vadd.f32 %v7501, %v7791
        %v7938 = vadd.f32 %v7502, %v7793
        %v7939 = vadd.f32 %v7503, %v7796
        %v7940 = vadd.f32 %v7504, %v7798
        %v7941 = vadd.f32 %v7505, %v7801
        %v7942 = vadd.f32 %v7506, %v7803
        %v7943 = vadd.f32 %v7507, %v7806
        %v7944 = vadd.f32 %v7508, %v7808
        %v7945 = vadd.f32 %v7509, %v7811
        %v7946 = vadd.f32 %v7510, %v7813
        %v7947 = vadd.f32 %v7511, %v7816
        %v7948 = vadd.f32 %v7512, %v7818
        %v7949 = vadd.f32 %v7513, %v7821
        %v7950 = vadd.f32 %v7514, %v7823
        %v7951 = vadd.f32 %v7515, %v7826
        %v7952 = vadd.f32 %v7516, %v7828
        %v7953 = vadd.f32 %v7517, %v7831
        %v7954 = vadd.f32 %v7518, %v7833
        %v7955 = vadd.f32 %v7519, %v7836
        %v7956 = vadd.f32 %v7520, %v7838
        %v7957 = vadd.f32 %v7521, %v7841
        %v7958 = vadd.f32 %v7522, %v7843
        %v7959 = vadd.f32 %v7523, %v7846
        %v7960 = vadd.f32 %v7524, %v7848
        %v7961 = vadd.f32 %v7525, %v7851
        %v7962 = vadd.f32 %v7526, %v7853
        %v7963 = vadd.f32 %v7527, %v7856
        %v7964 = vadd.f32 %v7528, %v7858
        %v7965 = vadd.f32 %v7529, %v7861
        %v7966 = vadd.f32 %v7530, %v7863
        %v7967 = vadd.f32 %v7531, %v7866
        %v7968 = vadd.f32 %v7532, %v7868
        %v7969 = vadd.f32 %v7533, %v7871
        %v7970 = vadd.f32 %v7534, %v7873
        %v7971 = vadd.f32 %v7535, %v7876
        %v7972 = vadd.f32 %v7536, %v7878
        %v7973 = vadd.f32 %v7537, %v7881
        %v7974 = vadd.f32 %v7538, %v7883
        %v7975 = vadd.f32 %v7539, %v7886
        %v7976 = vadd.f32 %v7540, %v7888
        %v7977 = vadd.f32 %v7541, %v7891
        %v7978 = vadd.f32 %v7542, %v7893
        %v7979 = vadd.f32 %v7543, %v7896
        %v7980 = vadd.f32 %v7544, %v7898
        %v7981 = vadd.f32 %v7545, %v7901
        %v7982 = vadd.f32 %v7546, %v7903
        %v7983 = vadd.f32 %v7547, %v7906
        %v7984 = vadd.f32 %v7548, %v7908
        %v7985 = vadd.f32 %v7549, %v7911
        %v7986 = vadd.f32 %v7550, %v7913
        %v7987 = vrot.slane %v5423, 2
        %v7988 = vrot.slane %v5424, 2
        %v7989 = vsel %vm1950, %v7987, %v7988
        %v7990 = vrot.slane %v5425, 2
        %v7991 = vsel %vm1950, %v7988, %v7990
        %v7992 = vrot.slane %v5426, 2
        %v7993 = vsel %vm1950, %v7990, %v7992
        %v7997 = vpack.c.bf16 %v6478, %v6476
        %v7998 = vpack.c.bf16 %v6483, %v6480
        %v7999 = vpack.c.bf16 %v6487, %v6485
        %v8000 = vpack.c.bf16 %v6492, %v6490
        %v8001 = vpack.c.bf16 %v6497, %v6494
        %v8002 = vpack.c.bf16 %v6501, %v6499
        %v8003 = vpack.c.bf16 %v6506, %v6504
        %v8004 = vpack.c.bf16 %v6511, %v6508
        %v8005 = vpack.c.bf16 %v6515, %v6513
        %v8006 = vpack.c.bf16 %v6520, %v6518
        %v8007 = vpack.c.bf16 %v6525, %v6522
        %v8008 = vpack.c.bf16 %v6529, %v6527
        %v8009 = vpack.c.bf16 %v6534, %v6532
        %v8010 = vpack.c.bf16 %v6539, %v6536
        %v8011 = vpack.c.bf16 %v6543, %v6541
        %v8012 = vpack.c.bf16 %v6548, %v6546
        %v8013 = vpack.c.bf16 %v6553, %v6550
        %v8014 = vpack.c.bf16 %v6557, %v6555
        %v8015 = vpack.c.bf16 %v6562, %v6560
        %v8016 = vpack.c.bf16 %v6567, %v6564
        %v8017 = vpack.c.bf16 %v6571, %v6569
        %v8018 = vpack.c.bf16 %v6576, %v6574
        %v8019 = vpack.c.bf16 %v6581, %v6578
        %v8020 = vpack.c.bf16 %v6585, %v6583
        %v8021 = vpack.c.bf16 %v6590, %v6588
        %v8022 = vpack.c.bf16 %v6595, %v6592
        %v8023 = vpack.c.bf16 %v6599, %v6597
        %v8024 = vpack.c.bf16 %v6604, %v6602
        %v8025 = vpack.c.bf16 %v6609, %v6606
        %v8026 = vpack.c.bf16 %v6613, %v6611
        %v8027 = vpack.c.bf16 %v6618, %v6616
        %v8028 = vpack.c.bf16 %v6623, %v6620
        %v8029 = vpack.c.bf16 %v6627, %v6625
        %v8030 = vpack.c.bf16 %v6632, %v6630
        %v8031 = vpack.c.bf16 %v7989, %v6634
        %v8032 = vpack.c.bf16 %v7993, %v7991
        %s8033 = scalar_lea.vmem [#allocation6], 80
        %v8034 = vld [vmem:[%s8033] sm:$0xf]
        %v8035 = vld [vmem:[%s8033 + $0x4] sm:$0xf]
        %v8036 = vld [vmem:[%s8033 + $0x8] sm:$0xf]
        %v8037 = vld [vmem:[%s8033 + $0xc] sm:$0xf]
        %v8042 = vunpack.c.l.b16 %v8034
        %v8043 = vunpack.c.l.b16 %v8035
        %v8044 = vunpack.c.l.b16 %v8036
        %v8045 = vunpack.c.l.b16 %v8037
        %v8046 = vpack.c.b16 %v8043, %v8042
        %v8047 = vpack.c.b16 %v8045, %v8044
        %v8051 = vsel %vm5860, %v7997, 0
        %v8054 = vsel %vm5860, %v7998, 0
        %v8057 = vsel %vm5860, %v7999, 0
        %v8060 = vsel %vm5860, %v8000, 0
        %v8063 = vsel %vm5860, %v8001, 0
        %v8066 = vsel %vm5860, %v8002, 0
        %v8069 = vsel %vm5860, %v8003, 0
        %v8072 = vsel %vm5860, %v8004, 0
        %v8075 = vsel %vm5860, %v8005, 0
        %v8078 = vsel %vm5860, %v8006, 0
        %v8081 = vsel %vm5860, %v8007, 0
        %v8084 = vsel %vm5860, %v8008, 0
        %v8087 = vsel %vm5860, %v8009, 0
        %v8090 = vsel %vm5860, %v8010, 0
        %v8093 = vsel %vm5860, %v8011, 0
        %v8096 = vsel %vm5860, %v8012, 0
        %v8099 = vsel %vm5860, %v8013, 0
        %v8102 = vsel %vm5860, %v8014, 0
        %v8105 = vsel %vm5860, %v8015, 0
        %v8108 = vsel %vm5860, %v8016, 0
        %v8111 = vsel %vm5860, %v8017, 0
        %v8114 = vsel %vm5860, %v8018, 0
        %v8117 = vsel %vm5860, %v8019, 0
        %v8120 = vsel %vm5860, %v8020, 0
        %v8123 = vsel %vm5860, %v8021, 0
        %v8126 = vsel %vm5860, %v8022, 0
        %v8129 = vsel %vm5860, %v8023, 0
        %v8132 = vsel %vm5860, %v8024, 0
        %v8135 = vsel %vm5860, %v8025, 0
        %v8138 = vsel %vm5860, %v8026, 0
        %v8141 = vsel %vm5860, %v8027, 0
        %v8144 = vsel %vm5860, %v8028, 0
        %v8147 = vsel %vm5860, %v8029, 0
        %v8150 = vsel %vm5860, %v8030, 0
        %v8153 = vsel %vm5860, %v8031, 0
        %v8156 = vsel %vm5860, %v8032, 0
        %8158 = vmatpush.bf16.msra.mxu0 0
        %8159 = vmatpush.bf16.msra.mxu0 0
        %8160 = vmatpush.bf16.msra.mxu0 0
        %8161 = vmatpush.bf16.msra.mxu0 0
        %8162 = vmatpush.bf16.msra.mxu0 0
        %8163 = vmatpush.bf16.msra.mxu0 0
        %8164 = vmatpush.bf16.msra.mxu0 %v8047
        %8165 = vmatpush.bf16.msra.mxu0 %v8046
        %8166 = vmatmul.bf16.gmra.mxu0 %v8051
        %v8167 = vpop.f32.mrf.mxu0
        %v8168 = vadd.f32 0.0, %v8167
        %v8169 = vpop.f32.mrf.mxu0
        %v8170 = vadd.f32 0.0, %v8169
        %8171 = vmatmul.bf16.gmra.mxu0 %v8054
        %v8172 = vpop.f32.mrf.mxu0
        %v8173 = vadd.f32 0.0, %v8172
        %v8174 = vpop.f32.mrf.mxu0
        %v8175 = vadd.f32 0.0, %v8174
        %8176 = vmatmul.bf16.gmra.mxu0 %v8057
        %v8177 = vpop.f32.mrf.mxu0
        %v8178 = vadd.f32 0.0, %v8177
        %v8179 = vpop.f32.mrf.mxu0
        %v8180 = vadd.f32 0.0, %v8179
        %8181 = vmatmul.bf16.gmra.mxu0 %v8060
        %v8182 = vpop.f32.mrf.mxu0
        %v8183 = vadd.f32 0.0, %v8182
        %v8184 = vpop.f32.mrf.mxu0
        %v8185 = vadd.f32 0.0, %v8184
        %8186 = vmatmul.bf16.gmra.mxu0 %v8063
        %v8187 = vpop.f32.mrf.mxu0
        %v8188 = vadd.f32 0.0, %v8187
        %v8189 = vpop.f32.mrf.mxu0
        %v8190 = vadd.f32 0.0, %v8189
        %8191 = vmatmul.bf16.gmra.mxu0 %v8066
        %v8192 = vpop.f32.mrf.mxu0
        %v8193 = vadd.f32 0.0, %v8192
        %v8194 = vpop.f32.mrf.mxu0
        %v8195 = vadd.f32 0.0, %v8194
        %8196 = vmatmul.bf16.gmra.mxu0 %v8069
        %v8197 = vpop.f32.mrf.mxu0
        %v8198 = vadd.f32 0.0, %v8197
        %v8199 = vpop.f32.mrf.mxu0
        %v8200 = vadd.f32 0.0, %v8199
        %8201 = vmatmul.bf16.gmra.mxu0 %v8072
        %v8202 = vpop.f32.mrf.mxu0
        %v8203 = vadd.f32 0.0, %v8202
        %v8204 = vpop.f32.mrf.mxu0
        %v8205 = vadd.f32 0.0, %v8204
        %8206 = vmatmul.bf16.gmra.mxu0 %v8075
        %v8207 = vpop.f32.mrf.mxu0
        %v8208 = vadd.f32 0.0, %v8207
        %v8209 = vpop.f32.mrf.mxu0
        %v8210 = vadd.f32 0.0, %v8209
        %8211 = vmatmul.bf16.gmra.mxu0 %v8078
        %v8212 = vpop.f32.mrf.mxu0
        %v8213 = vadd.f32 0.0, %v8212
        %v8214 = vpop.f32.mrf.mxu0
        %v8215 = vadd.f32 0.0, %v8214
        %8216 = vmatmul.bf16.gmra.mxu0 %v8081
        %v8217 = vpop.f32.mrf.mxu0
        %v8218 = vadd.f32 0.0, %v8217
        %v8219 = vpop.f32.mrf.mxu0
        %v8220 = vadd.f32 0.0, %v8219
        %8221 = vmatmul.bf16.gmra.mxu0 %v8084
        %v8222 = vpop.f32.mrf.mxu0
        %v8223 = vadd.f32 0.0, %v8222
        %v8224 = vpop.f32.mrf.mxu0
        %v8225 = vadd.f32 0.0, %v8224
        %8226 = vmatmul.bf16.gmra.mxu0 %v8087
        %v8227 = vpop.f32.mrf.mxu0
        %v8228 = vadd.f32 0.0, %v8227
        %v8229 = vpop.f32.mrf.mxu0
        %v8230 = vadd.f32 0.0, %v8229
        %8231 = vmatmul.bf16.gmra.mxu0 %v8090
        %v8232 = vpop.f32.mrf.mxu0
        %v8233 = vadd.f32 0.0, %v8232
        %v8234 = vpop.f32.mrf.mxu0
        %v8235 = vadd.f32 0.0, %v8234
        %8236 = vmatmul.bf16.gmra.mxu0 %v8093
        %v8237 = vpop.f32.mrf.mxu0
        %v8238 = vadd.f32 0.0, %v8237
        %v8239 = vpop.f32.mrf.mxu0
        %v8240 = vadd.f32 0.0, %v8239
        %8241 = vmatmul.bf16.gmra.mxu0 %v8096
        %v8242 = vpop.f32.mrf.mxu0
        %v8243 = vadd.f32 0.0, %v8242
        %v8244 = vpop.f32.mrf.mxu0
        %v8245 = vadd.f32 0.0, %v8244
        %8246 = vmatmul.bf16.gmra.mxu0 %v8099
        %v8247 = vpop.f32.mrf.mxu0
        %v8248 = vadd.f32 0.0, %v8247
        %v8249 = vpop.f32.mrf.mxu0
        %v8250 = vadd.f32 0.0, %v8249
        %8251 = vmatmul.bf16.gmra.mxu0 %v8102
        %v8252 = vpop.f32.mrf.mxu0
        %v8253 = vadd.f32 0.0, %v8252
        %v8254 = vpop.f32.mrf.mxu0
        %v8255 = vadd.f32 0.0, %v8254
        %8256 = vmatmul.bf16.gmra.mxu0 %v8105
        %v8257 = vpop.f32.mrf.mxu0
        %v8258 = vadd.f32 0.0, %v8257
        %v8259 = vpop.f32.mrf.mxu0
        %v8260 = vadd.f32 0.0, %v8259
        %8261 = vmatmul.bf16.gmra.mxu0 %v8108
        %v8262 = vpop.f32.mrf.mxu0
        %v8263 = vadd.f32 0.0, %v8262
        %v8264 = vpop.f32.mrf.mxu0
        %v8265 = vadd.f32 0.0, %v8264
        %8266 = vmatmul.bf16.gmra.mxu0 %v8111
        %v8267 = vpop.f32.mrf.mxu0
        %v8268 = vadd.f32 0.0, %v8267
        %v8269 = vpop.f32.mrf.mxu0
        %v8270 = vadd.f32 0.0, %v8269
        %8271 = vmatmul.bf16.gmra.mxu0 %v8114
        %v8272 = vpop.f32.mrf.mxu0
        %v8273 = vadd.f32 0.0, %v8272
        %v8274 = vpop.f32.mrf.mxu0
        %v8275 = vadd.f32 0.0, %v8274
        %8276 = vmatmul.bf16.gmra.mxu0 %v8117
        %v8277 = vpop.f32.mrf.mxu0
        %v8278 = vadd.f32 0.0, %v8277
        %v8279 = vpop.f32.mrf.mxu0
        %v8280 = vadd.f32 0.0, %v8279
        %8281 = vmatmul.bf16.gmra.mxu0 %v8120
        %v8282 = vpop.f32.mrf.mxu0
        %v8283 = vadd.f32 0.0, %v8282
        %v8284 = vpop.f32.mrf.mxu0
        %v8285 = vadd.f32 0.0, %v8284
        %8286 = vmatmul.bf16.gmra.mxu0 %v8123
        %v8287 = vpop.f32.mrf.mxu0
        %v8288 = vadd.f32 0.0, %v8287
        %v8289 = vpop.f32.mrf.mxu0
        %v8290 = vadd.f32 0.0, %v8289
        %8291 = vmatmul.bf16.gmra.mxu0 %v8126
        %v8292 = vpop.f32.mrf.mxu0
        %v8293 = vadd.f32 0.0, %v8292
        %v8294 = vpop.f32.mrf.mxu0
        %v8295 = vadd.f32 0.0, %v8294
        %8296 = vmatmul.bf16.gmra.mxu0 %v8129
        %v8297 = vpop.f32.mrf.mxu0
        %v8298 = vadd.f32 0.0, %v8297
        %v8299 = vpop.f32.mrf.mxu0
        %v8300 = vadd.f32 0.0, %v8299
        %8301 = vmatmul.bf16.gmra.mxu0 %v8132
        %v8302 = vpop.f32.mrf.mxu0
        %v8303 = vadd.f32 0.0, %v8302
        %v8304 = vpop.f32.mrf.mxu0
        %v8305 = vadd.f32 0.0, %v8304
        %8306 = vmatmul.bf16.gmra.mxu0 %v8135
        %v8307 = vpop.f32.mrf.mxu0
        %v8308 = vadd.f32 0.0, %v8307
        %v8309 = vpop.f32.mrf.mxu0
        %v8310 = vadd.f32 0.0, %v8309
        %8311 = vmatmul.bf16.gmra.mxu0 %v8138
        %v8312 = vpop.f32.mrf.mxu0
        %v8313 = vadd.f32 0.0, %v8312
        %v8314 = vpop.f32.mrf.mxu0
        %v8315 = vadd.f32 0.0, %v8314
        %8316 = vmatmul.bf16.gmra.mxu0 %v8141
        %v8317 = vpop.f32.mrf.mxu0
        %v8318 = vadd.f32 0.0, %v8317
        %v8319 = vpop.f32.mrf.mxu0
        %v8320 = vadd.f32 0.0, %v8319
        %8321 = vmatmul.bf16.gmra.mxu0 %v8144
        %v8322 = vpop.f32.mrf.mxu0
        %v8323 = vadd.f32 0.0, %v8322
        %v8324 = vpop.f32.mrf.mxu0
        %v8325 = vadd.f32 0.0, %v8324
        %8326 = vmatmul.bf16.gmra.mxu0 %v8147
        %v8327 = vpop.f32.mrf.mxu0
        %v8328 = vadd.f32 0.0, %v8327
        %v8329 = vpop.f32.mrf.mxu0
        %v8330 = vadd.f32 0.0, %v8329
        %8331 = vmatmul.bf16.gmra.mxu0 %v8150
        %v8332 = vpop.f32.mrf.mxu0
        %v8333 = vadd.f32 0.0, %v8332
        %v8334 = vpop.f32.mrf.mxu0
        %v8335 = vadd.f32 0.0, %v8334
        %8336 = vmatmul.bf16.gmra.mxu0 %v8153
        %v8337 = vpop.f32.mrf.mxu0
        %v8338 = vadd.f32 0.0, %v8337
        %v8339 = vpop.f32.mrf.mxu0
        %v8340 = vadd.f32 0.0, %v8339
        %8341 = vmatmul.bf16.gmra.mxu0 %v8156
        %v8342 = vpop.f32.mrf.mxu0
        %v8343 = vadd.f32 0.0, %v8342
        %v8344 = vpop.f32.mrf.mxu0
        %v8345 = vadd.f32 0.0, %v8344
        %8346 = vdwg.mxu0
        %v8347 = vadd.f32 %v7915, %v8168
        %v8348 = vadd.f32 %v7916, %v8170
        %v8349 = vadd.f32 %v7917, %v8173
        %v8350 = vadd.f32 %v7918, %v8175
        %v8351 = vadd.f32 %v7919, %v8178
        %v8352 = vadd.f32 %v7920, %v8180
        %v8353 = vadd.f32 %v7921, %v8183
        %v8354 = vadd.f32 %v7922, %v8185
        %v8355 = vadd.f32 %v7923, %v8188
        %v8356 = vadd.f32 %v7924, %v8190
        %v8357 = vadd.f32 %v7925, %v8193
        %v8358 = vadd.f32 %v7926, %v8195
        %v8359 = vadd.f32 %v7927, %v8198
        %v8360 = vadd.f32 %v7928, %v8200
        %v8361 = vadd.f32 %v7929, %v8203
        %v8362 = vadd.f32 %v7930, %v8205
        %v8363 = vadd.f32 %v7931, %v8208
        %v8364 = vadd.f32 %v7932, %v8210
        %v8365 = vadd.f32 %v7933, %v8213
        %v8366 = vadd.f32 %v7934, %v8215
        %v8367 = vadd.f32 %v7935, %v8218
        %v8368 = vadd.f32 %v7936, %v8220
        %v8369 = vadd.f32 %v7937, %v8223
        %v8370 = vadd.f32 %v7938, %v8225
        %v8371 = vadd.f32 %v7939, %v8228
        %v8372 = vadd.f32 %v7940, %v8230
        %v8373 = vadd.f32 %v7941, %v8233
        %v8374 = vadd.f32 %v7942, %v8235
        %v8375 = vadd.f32 %v7943, %v8238
        %v8376 = vadd.f32 %v7944, %v8240
        %v8377 = vadd.f32 %v7945, %v8243
        %v8378 = vadd.f32 %v7946, %v8245
        %v8379 = vadd.f32 %v7947, %v8248
        %v8380 = vadd.f32 %v7948, %v8250
        %v8381 = vadd.f32 %v7949, %v8253
        %v8382 = vadd.f32 %v7950, %v8255
        %v8383 = vadd.f32 %v7951, %v8258
        %v8384 = vadd.f32 %v7952, %v8260
        %v8385 = vadd.f32 %v7953, %v8263
        %v8386 = vadd.f32 %v7954, %v8265
        %v8387 = vadd.f32 %v7955, %v8268
        %v8388 = vadd.f32 %v7956, %v8270
        %v8389 = vadd.f32 %v7957, %v8273
        %v8390 = vadd.f32 %v7958, %v8275
        %v8391 = vadd.f32 %v7959, %v8278
        %v8392 = vadd.f32 %v7960, %v8280
        %v8393 = vadd.f32 %v7961, %v8283
        %v8394 = vadd.f32 %v7962, %v8285
        %v8395 = vadd.f32 %v7963, %v8288
        %v8396 = vadd.f32 %v7964, %v8290
        %v8397 = vadd.f32 %v7965, %v8293
        %v8398 = vadd.f32 %v7966, %v8295
        %v8399 = vadd.f32 %v7967, %v8298
        %v8400 = vadd.f32 %v7968, %v8300
        %v8401 = vadd.f32 %v7969, %v8303
        %v8402 = vadd.f32 %v7970, %v8305
        %v8403 = vadd.f32 %v7971, %v8308
        %v8404 = vadd.f32 %v7972, %v8310
        %v8405 = vadd.f32 %v7973, %v8313
        %v8406 = vadd.f32 %v7974, %v8315
        %v8407 = vadd.f32 %v7975, %v8318
        %v8408 = vadd.f32 %v7976, %v8320
        %v8409 = vadd.f32 %v7977, %v8323
        %v8410 = vadd.f32 %v7978, %v8325
        %v8411 = vadd.f32 %v7979, %v8328
        %v8412 = vadd.f32 %v7980, %v8330
        %v8413 = vadd.f32 %v7981, %v8333
        %v8414 = vadd.f32 %v7982, %v8335
        %v8415 = vadd.f32 %v7983, %v8338
        %v8416 = vadd.f32 %v7984, %v8340
        %v8417 = vadd.f32 %v7985, %v8343
        %v8418 = vadd.f32 %v7986, %v8345
        %v8419 = vpack.c.bf16 %v5424, %v5423
        %v8420 = vpack.c.bf16 %v5427, %v5425
        %v8421 = vpack.c.bf16 %v5429, %v5428
        %s8422 = scalar_lea.vmem [#allocation6], 96
        %v8423 = vld [vmem:[%s8422] sm:$0xf]
        %v8424 = vld [vmem:[%s8422 + $0x4] sm:$0xf]
        %v8425 = vld [vmem:[%s8422 + $0x8] sm:$0xf]
        %v8426 = vld [vmem:[%s8422 + $0xc] sm:$0xf]
        %v8431 = vunpack.c.l.b16 %v8423
        %v8432 = vunpack.c.l.b16 %v8424
        %v8433 = vunpack.c.l.b16 %v8425
        %v8434 = vunpack.c.l.b16 %v8426
        %v8435 = vpack.c.b16 %v8432, %v8431
        %v8436 = vpack.c.b16 %v8434, %v8433
        %v8440 = vsel %vm5860, %v8419, 0
        %v8443 = vsel %vm5860, %v8420, 0
        %v8446 = vsel %vm5860, %v8421, 0
        %8448 = vmatpush.bf16.msra.mxu0 0
        %8449 = vmatpush.bf16.msra.mxu0 0
        %8450 = vmatpush.bf16.msra.mxu0 0
        %8451 = vmatpush.bf16.msra.mxu0 0
        %8452 = vmatpush.bf16.msra.mxu0 0
        %8453 = vmatpush.bf16.msra.mxu0 0
        %8454 = vmatpush.bf16.msra.mxu0 %v8436
        %8455 = vmatpush.bf16.msra.mxu0 %v8435
        %8456 = vmatmul.bf16.gmra.mxu0 %v6180
        %v8457 = vpop.f32.mrf.mxu0
        %v8458 = vadd.f32 0.0, %v8457
        %v8459 = vpop.f32.mrf.mxu0
        %v8460 = vadd.f32 0.0, %v8459
        %8461 = vmatmul.bf16.gmra.mxu0 %v6183
        %v8462 = vpop.f32.mrf.mxu0
        %v8463 = vadd.f32 0.0, %v8462
        %v8464 = vpop.f32.mrf.mxu0
        %v8465 = vadd.f32 0.0, %v8464
        %8466 = vmatmul.bf16.gmra.mxu0 %v6186
        %v8467 = vpop.f32.mrf.mxu0
        %v8468 = vadd.f32 0.0, %v8467
        %v8469 = vpop.f32.mrf.mxu0
        %v8470 = vadd.f32 0.0, %v8469
        %8471 = vmatmul.bf16.gmra.mxu0 %v6189
        %v8472 = vpop.f32.mrf.mxu0
        %v8473 = vadd.f32 0.0, %v8472
        %v8474 = vpop.f32.mrf.mxu0
        %v8475 = vadd.f32 0.0, %v8474
        %8476 = vmatmul.bf16.gmra.mxu0 %v6192
        %v8477 = vpop.f32.mrf.mxu0
        %v8478 = vadd.f32 0.0, %v8477
        %v8479 = vpop.f32.mrf.mxu0
        %v8480 = vadd.f32 0.0, %v8479
        %8481 = vmatmul.bf16.gmra.mxu0 %v6195
        %v8482 = vpop.f32.mrf.mxu0
        %v8483 = vadd.f32 0.0, %v8482
        %v8484 = vpop.f32.mrf.mxu0
        %v8485 = vadd.f32 0.0, %v8484
        %8486 = vmatmul.bf16.gmra.mxu0 %v6198
        %v8487 = vpop.f32.mrf.mxu0
        %v8488 = vadd.f32 0.0, %v8487
        %v8489 = vpop.f32.mrf.mxu0
        %v8490 = vadd.f32 0.0, %v8489
        %8491 = vmatmul.bf16.gmra.mxu0 %v6201
        %v8492 = vpop.f32.mrf.mxu0
        %v8493 = vadd.f32 0.0, %v8492
        %v8494 = vpop.f32.mrf.mxu0
        %v8495 = vadd.f32 0.0, %v8494
        %8496 = vmatmul.bf16.gmra.mxu0 %v6204
        %v8497 = vpop.f32.mrf.mxu0
        %v8498 = vadd.f32 0.0, %v8497
        %v8499 = vpop.f32.mrf.mxu0
        %v8500 = vadd.f32 0.0, %v8499
        %8501 = vmatmul.bf16.gmra.mxu0 %v6207
        %v8502 = vpop.f32.mrf.mxu0
        %v8503 = vadd.f32 0.0, %v8502
        %v8504 = vpop.f32.mrf.mxu0
        %v8505 = vadd.f32 0.0, %v8504
        %8506 = vmatmul.bf16.gmra.mxu0 %v6210
        %v8507 = vpop.f32.mrf.mxu0
        %v8508 = vadd.f32 0.0, %v8507
        %v8509 = vpop.f32.mrf.mxu0
        %v8510 = vadd.f32 0.0, %v8509
        %8511 = vmatmul.bf16.gmra.mxu0 %v6213
        %v8512 = vpop.f32.mrf.mxu0
        %v8513 = vadd.f32 0.0, %v8512
        %v8514 = vpop.f32.mrf.mxu0
        %v8515 = vadd.f32 0.0, %v8514
        %8516 = vmatmul.bf16.gmra.mxu0 %v6216
        %v8517 = vpop.f32.mrf.mxu0
        %v8518 = vadd.f32 0.0, %v8517
        %v8519 = vpop.f32.mrf.mxu0
        %v8520 = vadd.f32 0.0, %v8519
        %8521 = vmatmul.bf16.gmra.mxu0 %v6219
        %v8522 = vpop.f32.mrf.mxu0
        %v8523 = vadd.f32 0.0, %v8522
        %v8524 = vpop.f32.mrf.mxu0
        %v8525 = vadd.f32 0.0, %v8524
        %8526 = vmatmul.bf16.gmra.mxu0 %v6222
        %v8527 = vpop.f32.mrf.mxu0
        %v8528 = vadd.f32 0.0, %v8527
        %v8529 = vpop.f32.mrf.mxu0
        %v8530 = vadd.f32 0.0, %v8529
        %8531 = vmatmul.bf16.gmra.mxu0 %v6225
        %v8532 = vpop.f32.mrf.mxu0
        %v8533 = vadd.f32 0.0, %v8532
        %v8534 = vpop.f32.mrf.mxu0
        %v8535 = vadd.f32 0.0, %v8534
        %8536 = vmatmul.bf16.gmra.mxu0 %v6228
        %v8537 = vpop.f32.mrf.mxu0
        %v8538 = vadd.f32 0.0, %v8537
        %v8539 = vpop.f32.mrf.mxu0
        %v8540 = vadd.f32 0.0, %v8539
        %8541 = vmatmul.bf16.gmra.mxu0 %v6231
        %v8542 = vpop.f32.mrf.mxu0
        %v8543 = vadd.f32 0.0, %v8542
        %v8544 = vpop.f32.mrf.mxu0
        %v8545 = vadd.f32 0.0, %v8544
        %8546 = vmatmul.bf16.gmra.mxu0 %v6234
        %v8547 = vpop.f32.mrf.mxu0
        %v8548 = vadd.f32 0.0, %v8547
        %v8549 = vpop.f32.mrf.mxu0
        %v8550 = vadd.f32 0.0, %v8549
        %8551 = vmatmul.bf16.gmra.mxu0 %v6237
        %v8552 = vpop.f32.mrf.mxu0
        %v8553 = vadd.f32 0.0, %v8552
        %v8554 = vpop.f32.mrf.mxu0
        %v8555 = vadd.f32 0.0, %v8554
        %8556 = vmatmul.bf16.gmra.mxu0 %v6240
        %v8557 = vpop.f32.mrf.mxu0
        %v8558 = vadd.f32 0.0, %v8557
        %v8559 = vpop.f32.mrf.mxu0
        %v8560 = vadd.f32 0.0, %v8559
        %8561 = vmatmul.bf16.gmra.mxu0 %v6243
        %v8562 = vpop.f32.mrf.mxu0
        %v8563 = vadd.f32 0.0, %v8562
        %v8564 = vpop.f32.mrf.mxu0
        %v8565 = vadd.f32 0.0, %v8564
        %8566 = vmatmul.bf16.gmra.mxu0 %v6246
        %v8567 = vpop.f32.mrf.mxu0
        %v8568 = vadd.f32 0.0, %v8567
        %v8569 = vpop.f32.mrf.mxu0
        %v8570 = vadd.f32 0.0, %v8569
        %8571 = vmatmul.bf16.gmra.mxu0 %v6249
        %v8572 = vpop.f32.mrf.mxu0
        %v8573 = vadd.f32 0.0, %v8572
        %v8574 = vpop.f32.mrf.mxu0
        %v8575 = vadd.f32 0.0, %v8574
        %8576 = vmatmul.bf16.gmra.mxu0 %v6252
        %v8577 = vpop.f32.mrf.mxu0
        %v8578 = vadd.f32 0.0, %v8577
        %v8579 = vpop.f32.mrf.mxu0
        %v8580 = vadd.f32 0.0, %v8579
        %8581 = vmatmul.bf16.gmra.mxu0 %v6255
        %v8582 = vpop.f32.mrf.mxu0
        %v8583 = vadd.f32 0.0, %v8582
        %v8584 = vpop.f32.mrf.mxu0
        %v8585 = vadd.f32 0.0, %v8584
        %8586 = vmatmul.bf16.gmra.mxu0 %v6258
        %v8587 = vpop.f32.mrf.mxu0
        %v8588 = vadd.f32 0.0, %v8587
        %v8589 = vpop.f32.mrf.mxu0
        %v8590 = vadd.f32 0.0, %v8589
        %8591 = vmatmul.bf16.gmra.mxu0 %v6261
        %v8592 = vpop.f32.mrf.mxu0
        %v8593 = vadd.f32 0.0, %v8592
        %v8594 = vpop.f32.mrf.mxu0
        %v8595 = vadd.f32 0.0, %v8594
        %8596 = vmatmul.bf16.gmra.mxu0 %v6264
        %v8597 = vpop.f32.mrf.mxu0
        %v8598 = vadd.f32 0.0, %v8597
        %v8599 = vpop.f32.mrf.mxu0
        %v8600 = vadd.f32 0.0, %v8599
        %8601 = vmatmul.bf16.gmra.mxu0 %v6267
        %v8602 = vpop.f32.mrf.mxu0
        %v8603 = vadd.f32 0.0, %v8602
        %v8604 = vpop.f32.mrf.mxu0
        %v8605 = vadd.f32 0.0, %v8604
        %8606 = vmatmul.bf16.gmra.mxu0 %v6270
        %v8607 = vpop.f32.mrf.mxu0
        %v8608 = vadd.f32 0.0, %v8607
        %v8609 = vpop.f32.mrf.mxu0
        %v8610 = vadd.f32 0.0, %v8609
        %8611 = vmatmul.bf16.gmra.mxu0 %v6273
        %v8612 = vpop.f32.mrf.mxu0
        %v8613 = vadd.f32 0.0, %v8612
        %v8614 = vpop.f32.mrf.mxu0
        %v8615 = vadd.f32 0.0, %v8614
        %8616 = vmatmul.bf16.gmra.mxu0 %v6276
        %v8617 = vpop.f32.mrf.mxu0
        %v8618 = vadd.f32 0.0, %v8617
        %v8619 = vpop.f32.mrf.mxu0
        %v8620 = vadd.f32 0.0, %v8619
        %8621 = vmatmul.bf16.gmra.mxu0 %v8440
        %v8622 = vpop.f32.mrf.mxu0
        %v8623 = vadd.f32 0.0, %v8622
        %v8624 = vpop.f32.mrf.mxu0
        %v8625 = vadd.f32 0.0, %v8624
        %8626 = vmatmul.bf16.gmra.mxu0 %v8443
        %v8627 = vpop.f32.mrf.mxu0
        %v8628 = vadd.f32 0.0, %v8627
        %v8629 = vpop.f32.mrf.mxu0
        %v8630 = vadd.f32 0.0, %v8629
        %8631 = vmatmul.bf16.gmra.mxu0 %v8446
        %v8632 = vpop.f32.mrf.mxu0
        %v8633 = vadd.f32 0.0, %v8632
        %v8634 = vpop.f32.mrf.mxu0
        %v8635 = vadd.f32 0.0, %v8634
        %8636 = vdwg.mxu0
        %v8637 = vadd.f32 %v8347, %v8458
        %v8638 = vadd.f32 %v8348, %v8460
        %v8639 = vadd.f32 %v8349, %v8463
        %v8640 = vadd.f32 %v8350, %v8465
        %v8641 = vadd.f32 %v8351, %v8468
        %v8642 = vadd.f32 %v8352, %v8470
        %v8643 = vadd.f32 %v8353, %v8473
        %v8644 = vadd.f32 %v8354, %v8475
        %v8645 = vadd.f32 %v8355, %v8478
        %v8646 = vadd.f32 %v8356, %v8480
        %v8647 = vadd.f32 %v8357, %v8483
        %v8648 = vadd.f32 %v8358, %v8485
        %v8649 = vadd.f32 %v8359, %v8488
        %v8650 = vadd.f32 %v8360, %v8490
        %v8651 = vadd.f32 %v8361, %v8493
        %v8652 = vadd.f32 %v8362, %v8495
        %v8653 = vadd.f32 %v8363, %v8498
        %v8654 = vadd.f32 %v8364, %v8500
        %v8655 = vadd.f32 %v8365, %v8503
        %v8656 = vadd.f32 %v8366, %v8505
        %v8657 = vadd.f32 %v8367, %v8508
        %v8658 = vadd.f32 %v8368, %v8510
        %v8659 = vadd.f32 %v8369, %v8513
        %v8660 = vadd.f32 %v8370, %v8515
        %v8661 = vadd.f32 %v8371, %v8518
        %v8662 = vadd.f32 %v8372, %v8520
        %v8663 = vadd.f32 %v8373, %v8523
        %v8664 = vadd.f32 %v8374, %v8525
        %v8665 = vadd.f32 %v8375, %v8528
        %v8666 = vadd.f32 %v8376, %v8530
        %v8667 = vadd.f32 %v8377, %v8533
        %v8668 = vadd.f32 %v8378, %v8535
        %v8669 = vadd.f32 %v8379, %v8538
        %v8670 = vadd.f32 %v8380, %v8540
        %v8671 = vadd.f32 %v8381, %v8543
        %v8672 = vadd.f32 %v8382, %v8545
        %v8673 = vadd.f32 %v8383, %v8548
        %v8674 = vadd.f32 %v8384, %v8550
        %v8675 = vadd.f32 %v8385, %v8553
        %v8676 = vadd.f32 %v8386, %v8555
        %v8677 = vadd.f32 %v8387, %v8558
        %v8678 = vadd.f32 %v8388, %v8560
        %v8679 = vadd.f32 %v8389, %v8563
        %v8680 = vadd.f32 %v8390, %v8565
        %v8681 = vadd.f32 %v8391, %v8568
        %v8682 = vadd.f32 %v8392, %v8570
        %v8683 = vadd.f32 %v8393, %v8573
        %v8684 = vadd.f32 %v8394, %v8575
        %v8685 = vadd.f32 %v8395, %v8578
        %v8686 = vadd.f32 %v8396, %v8580
        %v8687 = vadd.f32 %v8397, %v8583
        %v8688 = vadd.f32 %v8398, %v8585
        %v8689 = vadd.f32 %v8399, %v8588
        %v8690 = vadd.f32 %v8400, %v8590
        %v8691 = vadd.f32 %v8401, %v8593
        %v8692 = vadd.f32 %v8402, %v8595
        %v8693 = vadd.f32 %v8403, %v8598
        %v8694 = vadd.f32 %v8404, %v8600
        %v8695 = vadd.f32 %v8405, %v8603
        %v8696 = vadd.f32 %v8406, %v8605
        %v8697 = vadd.f32 %v8407, %v8608
        %v8698 = vadd.f32 %v8408, %v8610
        %v8699 = vadd.f32 %v8409, %v8613
        %v8700 = vadd.f32 %v8410, %v8615
        %v8701 = vadd.f32 %v8411, %v8618
        %v8702 = vadd.f32 %v8412, %v8620
        %v8703 = vadd.f32 %v8413, %v8623
        %v8704 = vadd.f32 %v8414, %v8625
        %v8705 = vadd.f32 %v8415, %v8628
        %v8706 = vadd.f32 %v8416, %v8630
        %v8707 = vadd.f32 %v8417, %v8633
        %v8708 = vadd.f32 %v8418, %v8635
        %v8713 = vrot.slane %v5427, 1
        %v8714 = vrot.slane %v5428, 1
        %v8715 = vsel %vm1346, %v8713, %v8714
        %v8716 = vrot.slane %v5429, 1
        %v8717 = vsel %vm1346, %v8714, %v8716
        %v8718 = vrot.slane %v5430, 1
        %v8719 = vsel %vm1346, %v8716, %v8718
        %v8723 = vpack.c.bf16 %v7559, %v7557
        %v8724 = vpack.c.bf16 %v8715, %v7561
        %v8725 = vpack.c.bf16 %v8719, %v8717
        %s8726 = scalar_lea.vmem [#allocation6], 112
        %v8727 = vld [vmem:[%s8726] sm:$0xf]
        %v8728 = vld [vmem:[%s8726 + $0x4] sm:$0xf]
        %v8729 = vld [vmem:[%s8726 + $0x8] sm:$0xf]
        %v8730 = vld [vmem:[%s8726 + $0xc] sm:$0xf]
        %v8735 = vunpack.c.l.b16 %v8727
        %v8736 = vunpack.c.l.b16 %v8728
        %v8737 = vunpack.c.l.b16 %v8729
        %v8738 = vunpack.c.l.b16 %v8730
        %v8739 = vpack.c.b16 %v8736, %v8735
        %v8740 = vpack.c.b16 %v8738, %v8737
        %v8744 = vsel %vm5860, %v8723, 0
        %v8747 = vsel %vm5860, %v8724, 0
        %v8750 = vsel %vm5860, %v8725, 0
        %8752 = vmatpush.bf16.msra.mxu0 0
        %8753 = vmatpush.bf16.msra.mxu0 0
        %8754 = vmatpush.bf16.msra.mxu0 0
        %8755 = vmatpush.bf16.msra.mxu0 0
        %8756 = vmatpush.bf16.msra.mxu0 0
        %8757 = vmatpush.bf16.msra.mxu0 0
        %8758 = vmatpush.bf16.msra.mxu0 %v8740
        %8759 = vmatpush.bf16.msra.mxu0 %v8739
        %8760 = vmatmul.bf16.gmra.mxu0 %v5871
        %v8761 = vpop.f32.mrf.mxu0
        %v8762 = vadd.f32 0.0, %v8761
        %v8763 = vpop.f32.mrf.mxu0
        %v8764 = vadd.f32 0.0, %v8763
        %8765 = vmatmul.bf16.gmra.mxu0 %v5874
        %v8766 = vpop.f32.mrf.mxu0
        %v8767 = vadd.f32 0.0, %v8766
        %v8768 = vpop.f32.mrf.mxu0
        %v8769 = vadd.f32 0.0, %v8768
        %8770 = vmatmul.bf16.gmra.mxu0 %v5877
        %v8771 = vpop.f32.mrf.mxu0
        %v8772 = vadd.f32 0.0, %v8771
        %v8773 = vpop.f32.mrf.mxu0
        %v8774 = vadd.f32 0.0, %v8773
        %8775 = vmatmul.bf16.gmra.mxu0 %v5880
        %v8776 = vpop.f32.mrf.mxu0
        %v8777 = vadd.f32 0.0, %v8776
        %v8778 = vpop.f32.mrf.mxu0
        %v8779 = vadd.f32 0.0, %v8778
        %8780 = vmatmul.bf16.gmra.mxu0 %v5883
        %v8781 = vpop.f32.mrf.mxu0
        %v8782 = vadd.f32 0.0, %v8781
        %v8783 = vpop.f32.mrf.mxu0
        %v8784 = vadd.f32 0.0, %v8783
        %8785 = vmatmul.bf16.gmra.mxu0 %v5886
        %v8786 = vpop.f32.mrf.mxu0
        %v8787 = vadd.f32 0.0, %v8786
        %v8788 = vpop.f32.mrf.mxu0
        %v8789 = vadd.f32 0.0, %v8788
        %8790 = vmatmul.bf16.gmra.mxu0 %v5889
        %v8791 = vpop.f32.mrf.mxu0
        %v8792 = vadd.f32 0.0, %v8791
        %v8793 = vpop.f32.mrf.mxu0
        %v8794 = vadd.f32 0.0, %v8793
        %8795 = vmatmul.bf16.gmra.mxu0 %v5892
        %v8796 = vpop.f32.mrf.mxu0
        %v8797 = vadd.f32 0.0, %v8796
        %v8798 = vpop.f32.mrf.mxu0
        %v8799 = vadd.f32 0.0, %v8798
        %8800 = vmatmul.bf16.gmra.mxu0 %v5895
        %v8801 = vpop.f32.mrf.mxu0
        %v8802 = vadd.f32 0.0, %v8801
        %v8803 = vpop.f32.mrf.mxu0
        %v8804 = vadd.f32 0.0, %v8803
        %8805 = vmatmul.bf16.gmra.mxu0 %v5898
        %v8806 = vpop.f32.mrf.mxu0
        %v8807 = vadd.f32 0.0, %v8806
        %v8808 = vpop.f32.mrf.mxu0
        %v8809 = vadd.f32 0.0, %v8808
        %8810 = vmatmul.bf16.gmra.mxu0 %v5901
        %v8811 = vpop.f32.mrf.mxu0
        %v8812 = vadd.f32 0.0, %v8811
        %v8813 = vpop.f32.mrf.mxu0
        %v8814 = vadd.f32 0.0, %v8813
        %8815 = vmatmul.bf16.gmra.mxu0 %v5904
        %v8816 = vpop.f32.mrf.mxu0
        %v8817 = vadd.f32 0.0, %v8816
        %v8818 = vpop.f32.mrf.mxu0
        %v8819 = vadd.f32 0.0, %v8818
        %8820 = vmatmul.bf16.gmra.mxu0 %v5907
        %v8821 = vpop.f32.mrf.mxu0
        %v8822 = vadd.f32 0.0, %v8821
        %v8823 = vpop.f32.mrf.mxu0
        %v8824 = vadd.f32 0.0, %v8823
        %8825 = vmatmul.bf16.gmra.mxu0 %v5910
        %v8826 = vpop.f32.mrf.mxu0
        %v8827 = vadd.f32 0.0, %v8826
        %v8828 = vpop.f32.mrf.mxu0
        %v8829 = vadd.f32 0.0, %v8828
        %8830 = vmatmul.bf16.gmra.mxu0 %v5913
        %v8831 = vpop.f32.mrf.mxu0
        %v8832 = vadd.f32 0.0, %v8831
        %v8833 = vpop.f32.mrf.mxu0
        %v8834 = vadd.f32 0.0, %v8833
        %8835 = vmatmul.bf16.gmra.mxu0 %v5916
        %v8836 = vpop.f32.mrf.mxu0
        %v8837 = vadd.f32 0.0, %v8836
        %v8838 = vpop.f32.mrf.mxu0
        %v8839 = vadd.f32 0.0, %v8838
        %8840 = vmatmul.bf16.gmra.mxu0 %v5919
        %v8841 = vpop.f32.mrf.mxu0
        %v8842 = vadd.f32 0.0, %v8841
        %v8843 = vpop.f32.mrf.mxu0
        %v8844 = vadd.f32 0.0, %v8843
        %8845 = vmatmul.bf16.gmra.mxu0 %v5922
        %v8846 = vpop.f32.mrf.mxu0
        %v8847 = vadd.f32 0.0, %v8846
        %v8848 = vpop.f32.mrf.mxu0
        %v8849 = vadd.f32 0.0, %v8848
        %8850 = vmatmul.bf16.gmra.mxu0 %v5925
        %v8851 = vpop.f32.mrf.mxu0
        %v8852 = vadd.f32 0.0, %v8851
        %v8853 = vpop.f32.mrf.mxu0
        %v8854 = vadd.f32 0.0, %v8853
        %8855 = vmatmul.bf16.gmra.mxu0 %v5928
        %v8856 = vpop.f32.mrf.mxu0
        %v8857 = vadd.f32 0.0, %v8856
        %v8858 = vpop.f32.mrf.mxu0
        %v8859 = vadd.f32 0.0, %v8858
        %8860 = vmatmul.bf16.gmra.mxu0 %v5931
        %v8861 = vpop.f32.mrf.mxu0
        %v8862 = vadd.f32 0.0, %v8861
        %v8863 = vpop.f32.mrf.mxu0
        %v8864 = vadd.f32 0.0, %v8863
        %8865 = vmatmul.bf16.gmra.mxu0 %v5934
        %v8866 = vpop.f32.mrf.mxu0
        %v8867 = vadd.f32 0.0, %v8866
        %v8868 = vpop.f32.mrf.mxu0
        %v8869 = vadd.f32 0.0, %v8868
        %8870 = vmatmul.bf16.gmra.mxu0 %v5937
        %v8871 = vpop.f32.mrf.mxu0
        %v8872 = vadd.f32 0.0, %v8871
        %v8873 = vpop.f32.mrf.mxu0
        %v8874 = vadd.f32 0.0, %v8873
        %8875 = vmatmul.bf16.gmra.mxu0 %v5940
        %v8876 = vpop.f32.mrf.mxu0
        %v8877 = vadd.f32 0.0, %v8876
        %v8878 = vpop.f32.mrf.mxu0
        %v8879 = vadd.f32 0.0, %v8878
        %8880 = vmatmul.bf16.gmra.mxu0 %v5943
        %v8881 = vpop.f32.mrf.mxu0
        %v8882 = vadd.f32 0.0, %v8881
        %v8883 = vpop.f32.mrf.mxu0
        %v8884 = vadd.f32 0.0, %v8883
        %8885 = vmatmul.bf16.gmra.mxu0 %v5946
        %v8886 = vpop.f32.mrf.mxu0
        %v8887 = vadd.f32 0.0, %v8886
        %v8888 = vpop.f32.mrf.mxu0
        %v8889 = vadd.f32 0.0, %v8888
        %8890 = vmatmul.bf16.gmra.mxu0 %v5949
        %v8891 = vpop.f32.mrf.mxu0
        %v8892 = vadd.f32 0.0, %v8891
        %v8893 = vpop.f32.mrf.mxu0
        %v8894 = vadd.f32 0.0, %v8893
        %8895 = vmatmul.bf16.gmra.mxu0 %v5952
        %v8896 = vpop.f32.mrf.mxu0
        %v8897 = vadd.f32 0.0, %v8896
        %v8898 = vpop.f32.mrf.mxu0
        %v8899 = vadd.f32 0.0, %v8898
        %8900 = vmatmul.bf16.gmra.mxu0 %v5955
        %v8901 = vpop.f32.mrf.mxu0
        %v8902 = vadd.f32 0.0, %v8901
        %v8903 = vpop.f32.mrf.mxu0
        %v8904 = vadd.f32 0.0, %v8903
        %8905 = vmatmul.bf16.gmra.mxu0 %v5958
        %v8906 = vpop.f32.mrf.mxu0
        %v8907 = vadd.f32 0.0, %v8906
        %v8908 = vpop.f32.mrf.mxu0
        %v8909 = vadd.f32 0.0, %v8908
        %8910 = vmatmul.bf16.gmra.mxu0 %v5961
        %v8911 = vpop.f32.mrf.mxu0
        %v8912 = vadd.f32 0.0, %v8911
        %v8913 = vpop.f32.mrf.mxu0
        %v8914 = vadd.f32 0.0, %v8913
        %8915 = vmatmul.bf16.gmra.mxu0 %v5964
        %v8916 = vpop.f32.mrf.mxu0
        %v8917 = vadd.f32 0.0, %v8916
        %v8918 = vpop.f32.mrf.mxu0
        %v8919 = vadd.f32 0.0, %v8918
        %8920 = vmatmul.bf16.gmra.mxu0 %v5967
        %v8921 = vpop.f32.mrf.mxu0
        %v8922 = vadd.f32 0.0, %v8921
        %v8923 = vpop.f32.mrf.mxu0
        %v8924 = vadd.f32 0.0, %v8923
        %8925 = vmatmul.bf16.gmra.mxu0 %v8744
        %v8926 = vpop.f32.mrf.mxu0
        %v8927 = vadd.f32 0.0, %v8926
        %v8928 = vpop.f32.mrf.mxu0
        %v8929 = vadd.f32 0.0, %v8928
        %8930 = vmatmul.bf16.gmra.mxu0 %v8747
        %v8931 = vpop.f32.mrf.mxu0
        %v8932 = vadd.f32 0.0, %v8931
        %v8933 = vpop.f32.mrf.mxu0
        %v8934 = vadd.f32 0.0, %v8933
        %8935 = vmatmul.bf16.gmra.mxu0 %v8750
        %v8936 = vpop.f32.mrf.mxu0
        %v8937 = vadd.f32 0.0, %v8936
        %v8938 = vpop.f32.mrf.mxu0
        %v8939 = vadd.f32 0.0, %v8938
        %8940 = vdwg.mxu0
        %v8941 = vadd.f32 %v8637, %v8762
        %v8942 = vadd.f32 %v8638, %v8764
        %v8943 = vadd.f32 %v8639, %v8767
        %v8944 = vadd.f32 %v8640, %v8769
        %v8945 = vadd.f32 %v8641, %v8772
        %v8946 = vadd.f32 %v8642, %v8774
        %v8947 = vadd.f32 %v8643, %v8777
        %v8948 = vadd.f32 %v8644, %v8779
        %v8949 = vadd.f32 %v8645, %v8782
        %v8950 = vadd.f32 %v8646, %v8784
        %v8951 = vadd.f32 %v8647, %v8787
        %v8952 = vadd.f32 %v8648, %v8789
        %v8953 = vadd.f32 %v8649, %v8792
        %v8954 = vadd.f32 %v8650, %v8794
        %v8955 = vadd.f32 %v8651, %v8797
        %v8956 = vadd.f32 %v8652, %v8799
        %v8957 = vadd.f32 %v8653, %v8802
        %v8958 = vadd.f32 %v8654, %v8804
        %v8959 = vadd.f32 %v8655, %v8807
        %v8960 = vadd.f32 %v8656, %v8809
        %v8961 = vadd.f32 %v8657, %v8812
        %v8962 = vadd.f32 %v8658, %v8814
        %v8963 = vadd.f32 %v8659, %v8817
        %v8964 = vadd.f32 %v8660, %v8819
        %v8965 = vadd.f32 %v8661, %v8822
        %v8966 = vadd.f32 %v8662, %v8824
        %v8967 = vadd.f32 %v8663, %v8827
        %v8968 = vadd.f32 %v8664, %v8829
        %v8969 = vadd.f32 %v8665, %v8832
        %v8970 = vadd.f32 %v8666, %v8834
        %v8971 = vadd.f32 %v8667, %v8837
        %v8972 = vadd.f32 %v8668, %v8839
        %v8973 = vadd.f32 %v8669, %v8842
        %v8974 = vadd.f32 %v8670, %v8844
        %v8975 = vadd.f32 %v8671, %v8847
        %v8976 = vadd.f32 %v8672, %v8849
        %v8977 = vadd.f32 %v8673, %v8852
        %v8978 = vadd.f32 %v8674, %v8854
        %v8979 = vadd.f32 %v8675, %v8857
        %v8980 = vadd.f32 %v8676, %v8859
        %v8981 = vadd.f32 %v8677, %v8862
        %v8982 = vadd.f32 %v8678, %v8864
        %v8983 = vadd.f32 %v8679, %v8867
        %v8984 = vadd.f32 %v8680, %v8869
        %v8985 = vadd.f32 %v8681, %v8872
        %v8986 = vadd.f32 %v8682, %v8874
        %v8987 = vadd.f32 %v8683, %v8877
        %v8988 = vadd.f32 %v8684, %v8879
        %v8989 = vadd.f32 %v8685, %v8882
        %v8990 = vadd.f32 %v8686, %v8884
        %v8991 = vadd.f32 %v8687, %v8887
        %v8992 = vadd.f32 %v8688, %v8889
        %v8993 = vadd.f32 %v8689, %v8892
        %v8994 = vadd.f32 %v8690, %v8894
        %v8995 = vadd.f32 %v8691, %v8897
        %v8996 = vadd.f32 %v8692, %v8899
        %v8997 = vadd.f32 %v8693, %v8902
        %v8998 = vadd.f32 %v8694, %v8904
        %v8999 = vadd.f32 %v8695, %v8907
        %v9000 = vadd.f32 %v8696, %v8909
        %v9001 = vadd.f32 %v8697, %v8912
        %v9002 = vadd.f32 %v8698, %v8914
        %v9003 = vadd.f32 %v8699, %v8917
        %v9004 = vadd.f32 %v8700, %v8919
        %v9005 = vadd.f32 %v8701, %v8922
        %v9006 = vadd.f32 %v8702, %v8924
        %v9007 = vadd.f32 %v8703, %v8927
        %v9008 = vadd.f32 %v8704, %v8929
        %v9009 = vadd.f32 %v8705, %v8932
        %v9010 = vadd.f32 %v8706, %v8934
        %v9011 = vadd.f32 %v8707, %v8937
        %v9012 = vadd.f32 %v8708, %v8939
        %v9013 = vrot.slane %v5427, 2
        %v9014 = vrot.slane %v5428, 2
        %v9015 = vsel %vm1950, %v9013, %v9014
        %v9016 = vrot.slane %v5429, 2
        %v9017 = vsel %vm1950, %v9014, %v9016
        %v9018 = vrot.slane %v5430, 2
        %v9019 = vsel %vm1950, %v9016, %v9018
        %v9023 = vpack.c.bf16 %v7991, %v7989
        %v9024 = vpack.c.bf16 %v9015, %v7993
        %v9025 = vpack.c.bf16 %v9019, %v9017
        %s9026 = scalar_lea.vmem [#allocation6], 128
        %v9027 = vld [vmem:[%s9026] sm:$0xf]
        %v9028 = vld [vmem:[%s9026 + $0x4] sm:$0xf]
        %v9029 = vld [vmem:[%s9026 + $0x8] sm:$0xf]
        %v9030 = vld [vmem:[%s9026 + $0xc] sm:$0xf]
        %v9035 = vunpack.c.l.b16 %v9027
        %v9036 = vunpack.c.l.b16 %v9028
        %v9037 = vunpack.c.l.b16 %v9029
        %v9038 = vunpack.c.l.b16 %v9030
        %v9039 = vpack.c.b16 %v9036, %v9035
        %v9040 = vpack.c.b16 %v9038, %v9037
        %v9044 = vsel %vm5860, %v9023, 0
        %v9047 = vsel %vm5860, %v9024, 0
        %v9050 = vsel %vm5860, %v9025, 0
        %9052 = vmatpush.bf16.msra.mxu0 0
        %9053 = vmatpush.bf16.msra.mxu0 0
        %9054 = vmatpush.bf16.msra.mxu0 0
        %9055 = vmatpush.bf16.msra.mxu0 0
        %9056 = vmatpush.bf16.msra.mxu0 0
        %9057 = vmatpush.bf16.msra.mxu0 0
        %9058 = vmatpush.bf16.msra.mxu0 %v9040
        %9059 = vmatpush.bf16.msra.mxu0 %v9039
        %9060 = vmatmul.bf16.gmra.mxu0 %v6770
        %v9061 = vpop.f32.mrf.mxu0
        %v9062 = vadd.f32 0.0, %v9061
        %v9063 = vpop.f32.mrf.mxu0
        %v9064 = vadd.f32 0.0, %v9063
        %9065 = vmatmul.bf16.gmra.mxu0 %v6773
        %v9066 = vpop.f32.mrf.mxu0
        %v9067 = vadd.f32 0.0, %v9066
        %v9068 = vpop.f32.mrf.mxu0
        %v9069 = vadd.f32 0.0, %v9068
        %9070 = vmatmul.bf16.gmra.mxu0 %v6776
        %v9071 = vpop.f32.mrf.mxu0
        %v9072 = vadd.f32 0.0, %v9071
        %v9073 = vpop.f32.mrf.mxu0
        %v9074 = vadd.f32 0.0, %v9073
        %9075 = vmatmul.bf16.gmra.mxu0 %v6779
        %v9076 = vpop.f32.mrf.mxu0
        %v9077 = vadd.f32 0.0, %v9076
        %v9078 = vpop.f32.mrf.mxu0
        %v9079 = vadd.f32 0.0, %v9078
        %9080 = vmatmul.bf16.gmra.mxu0 %v6782
        %v9081 = vpop.f32.mrf.mxu0
        %v9082 = vadd.f32 0.0, %v9081
        %v9083 = vpop.f32.mrf.mxu0
        %v9084 = vadd.f32 0.0, %v9083
        %9085 = vmatmul.bf16.gmra.mxu0 %v6785
        %v9086 = vpop.f32.mrf.mxu0
        %v9087 = vadd.f32 0.0, %v9086
        %v9088 = vpop.f32.mrf.mxu0
        %v9089 = vadd.f32 0.0, %v9088
        %9090 = vmatmul.bf16.gmra.mxu0 %v6788
        %v9091 = vpop.f32.mrf.mxu0
        %v9092 = vadd.f32 0.0, %v9091
        %v9093 = vpop.f32.mrf.mxu0
        %v9094 = vadd.f32 0.0, %v9093
        %9095 = vmatmul.bf16.gmra.mxu0 %v6791
        %v9096 = vpop.f32.mrf.mxu0
        %v9097 = vadd.f32 0.0, %v9096
        %v9098 = vpop.f32.mrf.mxu0
        %v9099 = vadd.f32 0.0, %v9098
        %9100 = vmatmul.bf16.gmra.mxu0 %v6794
        %v9101 = vpop.f32.mrf.mxu0
        %v9102 = vadd.f32 0.0, %v9101
        %v9103 = vpop.f32.mrf.mxu0
        %v9104 = vadd.f32 0.0, %v9103
        %9105 = vmatmul.bf16.gmra.mxu0 %v6797
        %v9106 = vpop.f32.mrf.mxu0
        %v9107 = vadd.f32 0.0, %v9106
        %v9108 = vpop.f32.mrf.mxu0
        %v9109 = vadd.f32 0.0, %v9108
        %9110 = vmatmul.bf16.gmra.mxu0 %v6800
        %v9111 = vpop.f32.mrf.mxu0
        %v9112 = vadd.f32 0.0, %v9111
        %v9113 = vpop.f32.mrf.mxu0
        %v9114 = vadd.f32 0.0, %v9113
        %9115 = vmatmul.bf16.gmra.mxu0 %v6803
        %v9116 = vpop.f32.mrf.mxu0
        %v9117 = vadd.f32 0.0, %v9116
        %v9118 = vpop.f32.mrf.mxu0
        %v9119 = vadd.f32 0.0, %v9118
        %9120 = vmatmul.bf16.gmra.mxu0 %v6806
        %v9121 = vpop.f32.mrf.mxu0
        %v9122 = vadd.f32 0.0, %v9121
        %v9123 = vpop.f32.mrf.mxu0
        %v9124 = vadd.f32 0.0, %v9123
        %9125 = vmatmul.bf16.gmra.mxu0 %v6809
        %v9126 = vpop.f32.mrf.mxu0
        %v9127 = vadd.f32 0.0, %v9126
        %v9128 = vpop.f32.mrf.mxu0
        %v9129 = vadd.f32 0.0, %v9128
        %9130 = vmatmul.bf16.gmra.mxu0 %v6812
        %v9131 = vpop.f32.mrf.mxu0
        %v9132 = vadd.f32 0.0, %v9131
        %v9133 = vpop.f32.mrf.mxu0
        %v9134 = vadd.f32 0.0, %v9133
        %9135 = vmatmul.bf16.gmra.mxu0 %v6815
        %v9136 = vpop.f32.mrf.mxu0
        %v9137 = vadd.f32 0.0, %v9136
        %v9138 = vpop.f32.mrf.mxu0
        %v9139 = vadd.f32 0.0, %v9138
        %9140 = vmatmul.bf16.gmra.mxu0 %v6818
        %v9141 = vpop.f32.mrf.mxu0
        %v9142 = vadd.f32 0.0, %v9141
        %v9143 = vpop.f32.mrf.mxu0
        %v9144 = vadd.f32 0.0, %v9143
        %9145 = vmatmul.bf16.gmra.mxu0 %v6821
        %v9146 = vpop.f32.mrf.mxu0
        %v9147 = vadd.f32 0.0, %v9146
        %v9148 = vpop.f32.mrf.mxu0
        %v9149 = vadd.f32 0.0, %v9148
        %9150 = vmatmul.bf16.gmra.mxu0 %v6824
        %v9151 = vpop.f32.mrf.mxu0
        %v9152 = vadd.f32 0.0, %v9151
        %v9153 = vpop.f32.mrf.mxu0
        %v9154 = vadd.f32 0.0, %v9153
        %9155 = vmatmul.bf16.gmra.mxu0 %v6827
        %v9156 = vpop.f32.mrf.mxu0
        %v9157 = vadd.f32 0.0, %v9156
        %v9158 = vpop.f32.mrf.mxu0
        %v9159 = vadd.f32 0.0, %v9158
        %9160 = vmatmul.bf16.gmra.mxu0 %v6830
        %v9161 = vpop.f32.mrf.mxu0
        %v9162 = vadd.f32 0.0, %v9161
        %v9163 = vpop.f32.mrf.mxu0
        %v9164 = vadd.f32 0.0, %v9163
        %9165 = vmatmul.bf16.gmra.mxu0 %v6833
        %v9166 = vpop.f32.mrf.mxu0
        %v9167 = vadd.f32 0.0, %v9166
        %v9168 = vpop.f32.mrf.mxu0
        %v9169 = vadd.f32 0.0, %v9168
        %9170 = vmatmul.bf16.gmra.mxu0 %v6836
        %v9171 = vpop.f32.mrf.mxu0
        %v9172 = vadd.f32 0.0, %v9171
        %v9173 = vpop.f32.mrf.mxu0
        %v9174 = vadd.f32 0.0, %v9173
        %9175 = vmatmul.bf16.gmra.mxu0 %v6839
        %v9176 = vpop.f32.mrf.mxu0
        %v9177 = vadd.f32 0.0, %v9176
        %v9178 = vpop.f32.mrf.mxu0
        %v9179 = vadd.f32 0.0, %v9178
        %9180 = vmatmul.bf16.gmra.mxu0 %v6842
        %v9181 = vpop.f32.mrf.mxu0
        %v9182 = vadd.f32 0.0, %v9181
        %v9183 = vpop.f32.mrf.mxu0
        %v9184 = vadd.f32 0.0, %v9183
        %9185 = vmatmul.bf16.gmra.mxu0 %v6845
        %v9186 = vpop.f32.mrf.mxu0
        %v9187 = vadd.f32 0.0, %v9186
        %v9188 = vpop.f32.mrf.mxu0
        %v9189 = vadd.f32 0.0, %v9188
        %9190 = vmatmul.bf16.gmra.mxu0 %v6848
        %v9191 = vpop.f32.mrf.mxu0
        %v9192 = vadd.f32 0.0, %v9191
        %v9193 = vpop.f32.mrf.mxu0
        %v9194 = vadd.f32 0.0, %v9193
        %9195 = vmatmul.bf16.gmra.mxu0 %v6851
        %v9196 = vpop.f32.mrf.mxu0
        %v9197 = vadd.f32 0.0, %v9196
        %v9198 = vpop.f32.mrf.mxu0
        %v9199 = vadd.f32 0.0, %v9198
        %9200 = vmatmul.bf16.gmra.mxu0 %v6854
        %v9201 = vpop.f32.mrf.mxu0
        %v9202 = vadd.f32 0.0, %v9201
        %v9203 = vpop.f32.mrf.mxu0
        %v9204 = vadd.f32 0.0, %v9203
        %9205 = vmatmul.bf16.gmra.mxu0 %v6857
        %v9206 = vpop.f32.mrf.mxu0
        %v9207 = vadd.f32 0.0, %v9206
        %v9208 = vpop.f32.mrf.mxu0
        %v9209 = vadd.f32 0.0, %v9208
        %9210 = vmatmul.bf16.gmra.mxu0 %v6860
        %v9211 = vpop.f32.mrf.mxu0
        %v9212 = vadd.f32 0.0, %v9211
        %v9213 = vpop.f32.mrf.mxu0
        %v9214 = vadd.f32 0.0, %v9213
        %9215 = vmatmul.bf16.gmra.mxu0 %v6863
        %v9216 = vpop.f32.mrf.mxu0
        %v9217 = vadd.f32 0.0, %v9216
        %v9218 = vpop.f32.mrf.mxu0
        %v9219 = vadd.f32 0.0, %v9218
        %9220 = vmatmul.bf16.gmra.mxu0 %v6866
        %v9221 = vpop.f32.mrf.mxu0
        %v9222 = vadd.f32 0.0, %v9221
        %v9223 = vpop.f32.mrf.mxu0
        %v9224 = vadd.f32 0.0, %v9223
        %9225 = vmatmul.bf16.gmra.mxu0 %v9044
        %v9226 = vpop.f32.mrf.mxu0
        %v9227 = vadd.f32 0.0, %v9226
        %v9228 = vpop.f32.mrf.mxu0
        %v9229 = vadd.f32 0.0, %v9228
        %9230 = vmatmul.bf16.gmra.mxu0 %v9047
        %v9231 = vpop.f32.mrf.mxu0
        %v9232 = vadd.f32 0.0, %v9231
        %v9233 = vpop.f32.mrf.mxu0
        %v9234 = vadd.f32 0.0, %v9233
        %9235 = vmatmul.bf16.gmra.mxu0 %v9050
        %v9236 = vpop.f32.mrf.mxu0
        %v9237 = vadd.f32 0.0, %v9236
        %v9238 = vpop.f32.mrf.mxu0
        %v9239 = vadd.f32 0.0, %v9238
        %9240 = vdwg.mxu0
        %v9241 = vadd.f32 %v8941, %v9062
        %v9242 = vadd.f32 %v8942, %v9064
        %v9243 = vadd.f32 %v8943, %v9067
        %v9244 = vadd.f32 %v8944, %v9069
        %v9245 = vadd.f32 %v8945, %v9072
        %v9246 = vadd.f32 %v8946, %v9074
        %v9247 = vadd.f32 %v8947, %v9077
        %v9248 = vadd.f32 %v8948, %v9079
        %v9249 = vadd.f32 %v8949, %v9082
        %v9250 = vadd.f32 %v8950, %v9084
        %v9251 = vadd.f32 %v8951, %v9087
        %v9252 = vadd.f32 %v8952, %v9089
        %v9253 = vadd.f32 %v8953, %v9092
        %v9254 = vadd.f32 %v8954, %v9094
        %v9255 = vadd.f32 %v8955, %v9097
        %v9256 = vadd.f32 %v8956, %v9099
        %v9257 = vadd.f32 %v8957, %v9102
        %v9258 = vadd.f32 %v8958, %v9104
        %v9259 = vadd.f32 %v8959, %v9107
        %v9260 = vadd.f32 %v8960, %v9109
        %v9261 = vadd.f32 %v8961, %v9112
        %v9262 = vadd.f32 %v8962, %v9114
        %v9263 = vadd.f32 %v8963, %v9117
        %v9264 = vadd.f32 %v8964, %v9119
        %v9265 = vadd.f32 %v8965, %v9122
        %v9266 = vadd.f32 %v8966, %v9124
        %v9267 = vadd.f32 %v8967, %v9127
        %v9268 = vadd.f32 %v8968, %v9129
        %v9269 = vadd.f32 %v8969, %v9132
        %v9270 = vadd.f32 %v8970, %v9134
        %v9271 = vadd.f32 %v8971, %v9137
        %v9272 = vadd.f32 %v8972, %v9139
        %v9273 = vadd.f32 %v8973, %v9142
        %v9274 = vadd.f32 %v8974, %v9144
        %v9275 = vadd.f32 %v8975, %v9147
        %v9276 = vadd.f32 %v8976, %v9149
        %v9277 = vadd.f32 %v8977, %v9152
        %v9278 = vadd.f32 %v8978, %v9154
        %v9279 = vadd.f32 %v8979, %v9157
        %v9280 = vadd.f32 %v8980, %v9159
        %v9281 = vadd.f32 %v8981, %v9162
        %v9282 = vadd.f32 %v8982, %v9164
        %v9283 = vadd.f32 %v8983, %v9167
        %v9284 = vadd.f32 %v8984, %v9169
        %v9285 = vadd.f32 %v8985, %v9172
        %v9286 = vadd.f32 %v8986, %v9174
        %v9287 = vadd.f32 %v8987, %v9177
        %v9288 = vadd.f32 %v8988, %v9179
        %v9289 = vadd.f32 %v8989, %v9182
        %v9290 = vadd.f32 %v8990, %v9184
        %v9291 = vadd.f32 %v8991, %v9187
        %v9292 = vadd.f32 %v8992, %v9189
        %v9293 = vadd.f32 %v8993, %v9192
        %v9294 = vadd.f32 %v8994, %v9194
        %v9295 = vadd.f32 %v8995, %v9197
        %v9296 = vadd.f32 %v8996, %v9199
        %v9297 = vadd.f32 %v8997, %v9202
        %v9298 = vadd.f32 %v8998, %v9204
        %v9299 = vadd.f32 %v8999, %v9207
        %v9300 = vadd.f32 %v9000, %v9209
        %v9301 = vadd.f32 %v9001, %v9212
        %v9302 = vadd.f32 %v9002, %v9214
        %v9303 = vadd.f32 %v9003, %v9217
        %v9304 = vadd.f32 %v9004, %v9219
        %v9305 = vadd.f32 %v9005, %v9222
        %v9306 = vadd.f32 %v9006, %v9224
        %v9307 = vadd.f32 %v9007, %v9227
        %v9308 = vadd.f32 %v9008, %v9229
        %v9309 = vadd.f32 %v9009, %v9232
        %v9310 = vadd.f32 %v9010, %v9234
        %v9311 = vadd.f32 %v9011, %v9237
        %v9312 = vadd.f32 %v9012, %v9239
        %v9313 = vld [vmem:[#allocation7] sm:$0x1]
        %v9315 = vperm.slane %v9313, 0
        %v9317 = vadd.f32 %v9241, %v9315
        %v9318 = vadd.f32 %v9242, %v9315
        %v9319 = vadd.f32 %v9243, %v9315
        %v9320 = vadd.f32 %v9244, %v9315
        %v9321 = vadd.f32 %v9245, %v9315
        %v9322 = vadd.f32 %v9246, %v9315
        %v9323 = vadd.f32 %v9247, %v9315
        %v9324 = vadd.f32 %v9248, %v9315
        %v9325 = vadd.f32 %v9249, %v9315
        %v9326 = vadd.f32 %v9250, %v9315
        %v9327 = vadd.f32 %v9251, %v9315
        %v9328 = vadd.f32 %v9252, %v9315
        %v9329 = vadd.f32 %v9253, %v9315
        %v9330 = vadd.f32 %v9254, %v9315
        %v9331 = vadd.f32 %v9255, %v9315
        %v9332 = vadd.f32 %v9256, %v9315
        %v9333 = vadd.f32 %v9257, %v9315
        %v9334 = vadd.f32 %v9258, %v9315
        %v9335 = vadd.f32 %v9259, %v9315
        %v9336 = vadd.f32 %v9260, %v9315
        %v9337 = vadd.f32 %v9261, %v9315
        %v9338 = vadd.f32 %v9262, %v9315
        %v9339 = vadd.f32 %v9263, %v9315
        %v9340 = vadd.f32 %v9264, %v9315
        %v9341 = vadd.f32 %v9265, %v9315
        %v9342 = vadd.f32 %v9266, %v9315
        %v9343 = vadd.f32 %v9267, %v9315
        %v9344 = vadd.f32 %v9268, %v9315
        %v9345 = vadd.f32 %v9269, %v9315
        %v9346 = vadd.f32 %v9270, %v9315
        %v9347 = vadd.f32 %v9271, %v9315
        %v9348 = vadd.f32 %v9272, %v9315
        %v9349 = vadd.f32 %v9273, %v9315
        %v9350 = vadd.f32 %v9274, %v9315
        %v9351 = vadd.f32 %v9275, %v9315
        %v9352 = vadd.f32 %v9276, %v9315
        %v9353 = vadd.f32 %v9277, %v9315
        %v9354 = vadd.f32 %v9278, %v9315
        %v9355 = vadd.f32 %v9279, %v9315
        %v9356 = vadd.f32 %v9280, %v9315
        %v9357 = vadd.f32 %v9281, %v9315
        %v9358 = vadd.f32 %v9282, %v9315
        %v9359 = vadd.f32 %v9283, %v9315
        %v9360 = vadd.f32 %v9284, %v9315
        %v9361 = vadd.f32 %v9285, %v9315
        %v9362 = vadd.f32 %v9286, %v9315
        %v9363 = vadd.f32 %v9287, %v9315
        %v9364 = vadd.f32 %v9288, %v9315
        %v9365 = vadd.f32 %v9289, %v9315
        %v9366 = vadd.f32 %v9290, %v9315
        %v9367 = vadd.f32 %v9291, %v9315
        %v9368 = vadd.f32 %v9292, %v9315
        %v9369 = vadd.f32 %v9293, %v9315
        %v9370 = vadd.f32 %v9294, %v9315
        %v9371 = vadd.f32 %v9295, %v9315
        %v9372 = vadd.f32 %v9296, %v9315
        %v9373 = vadd.f32 %v9297, %v9315
        %v9374 = vadd.f32 %v9298, %v9315
        %v9375 = vadd.f32 %v9299, %v9315
        %v9376 = vadd.f32 %v9300, %v9315
        %v9377 = vadd.f32 %v9301, %v9315
        %v9378 = vadd.f32 %v9302, %v9315
        %v9379 = vadd.f32 %v9303, %v9315
        %v9380 = vadd.f32 %v9304, %v9315
        %v9381 = vadd.f32 %v9305, %v9315
        %v9382 = vadd.f32 %v9306, %v9315
        %v9383 = vadd.f32 %v9307, %v9315
        %v9384 = vadd.f32 %v9308, %v9315
        %v9385 = vadd.f32 %v9309, %v9315
        %v9386 = vadd.f32 %v9310, %v9315
        %v9387 = vadd.f32 %v9311, %v9315
        %v9388 = vadd.f32 %v9312, %v9315
        %v9389 = vmax.f32 %v9317, 0.0
        %v9390 = vmax.f32 %v9318, 0.0
        %v9391 = vmax.f32 %v9319, 0.0
        %v9392 = vmax.f32 %v9320, 0.0
        %v9393 = vmax.f32 %v9321, 0.0
        %v9394 = vmax.f32 %v9322, 0.0
        %v9395 = vmax.f32 %v9323, 0.0
        %v9396 = vmax.f32 %v9324, 0.0
        %v9397 = vmax.f32 %v9325, 0.0
        %v9398 = vmax.f32 %v9326, 0.0
        %v9399 = vmax.f32 %v9327, 0.0
        %v9400 = vmax.f32 %v9328, 0.0
        %v9401 = vmax.f32 %v9329, 0.0
        %v9402 = vmax.f32 %v9330, 0.0
        %v9403 = vmax.f32 %v9331, 0.0
        %v9404 = vmax.f32 %v9332, 0.0
        %v9405 = vmax.f32 %v9333, 0.0
        %v9406 = vmax.f32 %v9334, 0.0
        %v9407 = vmax.f32 %v9335, 0.0
        %v9408 = vmax.f32 %v9336, 0.0
        %v9409 = vmax.f32 %v9337, 0.0
        %v9410 = vmax.f32 %v9338, 0.0
        %v9411 = vmax.f32 %v9339, 0.0
        %v9412 = vmax.f32 %v9340, 0.0
        %v9413 = vmax.f32 %v9341, 0.0
        %v9414 = vmax.f32 %v9342, 0.0
        %v9415 = vmax.f32 %v9343, 0.0
        %v9416 = vmax.f32 %v9344, 0.0
        %v9417 = vmax.f32 %v9345, 0.0
        %v9418 = vmax.f32 %v9346, 0.0
        %v9419 = vmax.f32 %v9347, 0.0
        %v9420 = vmax.f32 %v9348, 0.0
        %v9421 = vmax.f32 %v9349, 0.0
        %v9422 = vmax.f32 %v9350, 0.0
        %v9423 = vmax.f32 %v9351, 0.0
        %v9424 = vmax.f32 %v9352, 0.0
        %v9425 = vmax.f32 %v9353, 0.0
        %v9426 = vmax.f32 %v9354, 0.0
        %v9427 = vmax.f32 %v9355, 0.0
        %v9428 = vmax.f32 %v9356, 0.0
        %v9429 = vmax.f32 %v9357, 0.0
        %v9430 = vmax.f32 %v9358, 0.0
        %v9431 = vmax.f32 %v9359, 0.0
        %v9432 = vmax.f32 %v9360, 0.0
        %v9433 = vmax.f32 %v9361, 0.0
        %v9434 = vmax.f32 %v9362, 0.0
        %v9435 = vmax.f32 %v9363, 0.0
        %v9436 = vmax.f32 %v9364, 0.0
        %v9437 = vmax.f32 %v9365, 0.0
        %v9438 = vmax.f32 %v9366, 0.0
        %v9439 = vmax.f32 %v9367, 0.0
        %v9440 = vmax.f32 %v9368, 0.0
        %v9441 = vmax.f32 %v9369, 0.0
        %v9442 = vmax.f32 %v9370, 0.0
        %v9443 = vmax.f32 %v9371, 0.0
        %v9444 = vmax.f32 %v9372, 0.0
        %v9445 = vmax.f32 %v9373, 0.0
        %v9446 = vmax.f32 %v9374, 0.0
        %v9447 = vmax.f32 %v9375, 0.0
        %v9448 = vmax.f32 %v9376, 0.0
        %v9449 = vmax.f32 %v9377, 0.0
        %v9450 = vmax.f32 %v9378, 0.0
        %v9451 = vmax.f32 %v9379, 0.0
        %v9452 = vmax.f32 %v9380, 0.0
        %v9453 = vmax.f32 %v9381, 0.0
        %v9454 = vmax.f32 %v9382, 0.0
        %v9455 = vmax.f32 %v9383, 0.0
        %v9456 = vmax.f32 %v9384, 0.0
        %v9457 = vmax.f32 %v9385, 0.0
        %v9458 = vmax.f32 %v9386, 0.0
        %v9459 = vmax.f32 %v9387, 0.0
        %v9460 = vmax.f32 %v9388, 0.0
        %vm9461 = vcmask 523264
        %v9462 = vsel %vm9461, %v9389, -inf
        %v9463 = vsel %vm9461, %v9392, -inf
        %v9464 = vmax.f32 %v9462, %v9463
        %v9465 = vsel %vm9461, %v9390, -inf
        %v9466 = vsel %vm9461, %v9393, -inf
        %v9467 = vmax.f32 %v9465, %v9466
        %v9468 = vsel %vm9461, %v9391, -inf
        %v9469 = vsel %vm9461, %v9394, -inf
        %v9470 = vmax.f32 %v9468, %v9469
        %v9471 = vsel %vm9461, %v9395, -inf
        %v9472 = vsel %vm9461, %v9398, -inf
        %v9473 = vmax.f32 %v9471, %v9472
        %v9474 = vsel %vm9461, %v9396, -inf
        %v9475 = vsel %vm9461, %v9399, -inf
        %v9476 = vmax.f32 %v9474, %v9475
        %v9477 = vsel %vm9461, %v9397, -inf
        %v9478 = vsel %vm9461, %v9400, -inf
        %v9479 = vmax.f32 %v9477, %v9478
        %v9480 = vsel %vm9461, %v9401, -inf
        %v9481 = vsel %vm9461, %v9404, -inf
        %v9482 = vmax.f32 %v9480, %v9481
        %v9483 = vsel %vm9461, %v9402, -inf
        %v9484 = vsel %vm9461, %v9405, -inf
        %v9485 = vmax.f32 %v9483, %v9484
        %v9486 = vsel %vm9461, %v9403, -inf
        %v9487 = vsel %vm9461, %v9406, -inf
        %v9488 = vmax.f32 %v9486, %v9487
        %v9489 = vsel %vm9461, %v9407, -inf
        %v9490 = vsel %vm9461, %v9410, -inf
        %v9491 = vmax.f32 %v9489, %v9490
        %v9492 = vsel %vm9461, %v9408, -inf
        %v9493 = vsel %vm9461, %v9411, -inf
        %v9494 = vmax.f32 %v9492, %v9493
        %v9495 = vsel %vm9461, %v9409, -inf
        %v9496 = vsel %vm9461, %v9412, -inf
        %v9497 = vmax.f32 %v9495, %v9496
        %v9498 = vsel %vm9461, %v9413, -inf
        %v9499 = vsel %vm9461, %v9416, -inf
        %v9500 = vmax.f32 %v9498, %v9499
        %v9501 = vsel %vm9461, %v9414, -inf
        %v9502 = vsel %vm9461, %v9417, -inf
        %v9503 = vmax.f32 %v9501, %v9502
        %v9504 = vsel %vm9461, %v9415, -inf
        %v9505 = vsel %vm9461, %v9418, -inf
        %v9506 = vmax.f32 %v9504, %v9505
        %v9507 = vsel %vm9461, %v9419, -inf
        %v9508 = vsel %vm9461, %v9422, -inf
        %v9509 = vmax.f32 %v9507, %v9508
        %v9510 = vsel %vm9461, %v9420, -inf
        %v9511 = vsel %vm9461, %v9423, -inf
        %v9512 = vmax.f32 %v9510, %v9511
        %v9513 = vsel %vm9461, %v9421, -inf
        %v9514 = vsel %vm9461, %v9424, -inf
        %v9515 = vmax.f32 %v9513, %v9514
        %v9516 = vsel %vm9461, %v9425, -inf
        %v9517 = vsel %vm9461, %v9428, -inf
        %v9518 = vmax.f32 %v9516, %v9517
        %v9519 = vsel %vm9461, %v9426, -inf
        %v9520 = vsel %vm9461, %v9429, -inf
        %v9521 = vmax.f32 %v9519, %v9520
        %v9522 = vsel %vm9461, %v9427, -inf
        %v9523 = vsel %vm9461, %v9430, -inf
        %v9524 = vmax.f32 %v9522, %v9523
        %v9525 = vsel %vm9461, %v9431, -inf
        %v9526 = vsel %vm9461, %v9434, -inf
        %v9527 = vmax.f32 %v9525, %v9526
        %v9528 = vsel %vm9461, %v9432, -inf
        %v9529 = vsel %vm9461, %v9435, -inf
        %v9530 = vmax.f32 %v9528, %v9529
        %v9531 = vsel %vm9461, %v9433, -inf
        %v9532 = vsel %vm9461, %v9436, -inf
        %v9533 = vmax.f32 %v9531, %v9532
        %v9534 = vsel %vm9461, %v9437, -inf
        %v9535 = vsel %vm9461, %v9440, -inf
        %v9536 = vmax.f32 %v9534, %v9535
        %v9537 = vsel %vm9461, %v9438, -inf
        %v9538 = vsel %vm9461, %v9441, -inf
        %v9539 = vmax.f32 %v9537, %v9538
        %v9540 = vsel %vm9461, %v9439, -inf
        %v9541 = vsel %vm9461, %v9442, -inf
        %v9542 = vmax.f32 %v9540, %v9541
        %v9543 = vsel %vm9461, %v9443, -inf
        %v9544 = vsel %vm9461, %v9446, -inf
        %v9545 = vmax.f32 %v9543, %v9544
        %v9546 = vsel %vm9461, %v9444, -inf
        %v9547 = vsel %vm9461, %v9447, -inf
        %v9548 = vmax.f32 %v9546, %v9547
        %v9549 = vsel %vm9461, %v9445, -inf
        %v9550 = vsel %vm9461, %v9448, -inf
        %v9551 = vmax.f32 %v9549, %v9550
        %v9552 = vsel %vm9461, %v9449, -inf
        %v9553 = vsel %vm9461, %v9452, -inf
        %v9554 = vmax.f32 %v9552, %v9553
        %v9555 = vsel %vm9461, %v9450, -inf
        %v9556 = vsel %vm9461, %v9453, -inf
        %v9557 = vmax.f32 %v9555, %v9556
        %v9558 = vsel %vm9461, %v9451, -inf
        %v9559 = vsel %vm9461, %v9454, -inf
        %v9560 = vmax.f32 %v9558, %v9559
        %v9561 = vsel %vm9461, %v9455, -inf
        %v9562 = vsel %vm9461, %v9458, -inf
        %v9563 = vmax.f32 %v9561, %v9562
        %v9564 = vsel %vm9461, %v9456, -inf
        %v9565 = vsel %vm9461, %v9459, -inf
        %v9566 = vmax.f32 %v9564, %v9565
        %v9567 = vsel %vm9461, %v9457, -inf
        %v9568 = vsel %vm9461, %v9460, -inf
        %v9569 = vmax.f32 %v9567, %v9568
        %v9582 = vrot.slane %v9464, 1
        %v9583 = vrot.slane %v9473, 1
        %v9584 = vrot.slane %v9482, 1
        %v9585 = vrot.slane %v9491, 1
        %v9586 = vrot.slane %v9500, 1
        %v9587 = vrot.slane %v9509, 1
        %v9588 = vrot.slane %v9518, 1
        %v9589 = vrot.slane %v9527, 1
        %v9590 = vrot.slane %v9536, 1
        %v9591 = vrot.slane %v9545, 1
        %v9592 = vrot.slane %v9554, 1
        %v9593 = vrot.slane %v9563, 1
        %v9606 = vmax.f32 %v9464, %v9582
        %v9607 = vmax.f32 %v9473, %v9583
        %v9608 = vmax.f32 %v9482, %v9584
        %v9609 = vmax.f32 %v9491, %v9585
        %v9610 = vmax.f32 %v9500, %v9586
        %v9611 = vmax.f32 %v9509, %v9587
        %v9612 = vmax.f32 %v9518, %v9588
        %v9613 = vmax.f32 %v9527, %v9589
        %v9614 = vmax.f32 %v9536, %v9590
        %v9615 = vmax.f32 %v9545, %v9591
        %v9616 = vmax.f32 %v9554, %v9592
        %v9617 = vmax.f32 %v9563, %v9593
        %v9630 = vrot.slane %v9467, 1
        %v9631 = vrot.slane %v9476, 1
        %v9632 = vrot.slane %v9485, 1
        %v9633 = vrot.slane %v9494, 1
        %v9634 = vrot.slane %v9503, 1
        %v9635 = vrot.slane %v9512, 1
        %v9636 = vrot.slane %v9521, 1
        %v9637 = vrot.slane %v9530, 1
        %v9638 = vrot.slane %v9539, 1
        %v9639 = vrot.slane %v9548, 1
        %v9640 = vrot.slane %v9557, 1
        %v9641 = vrot.slane %v9566, 1
        %v9654 = vmax.f32 %v9467, %v9630
        %v9655 = vmax.f32 %v9476, %v9631
        %v9656 = vmax.f32 %v9485, %v9632
        %v9657 = vmax.f32 %v9494, %v9633
        %v9658 = vmax.f32 %v9503, %v9634
        %v9659 = vmax.f32 %v9512, %v9635
        %v9660 = vmax.f32 %v9521, %v9636
        %v9661 = vmax.f32 %v9530, %v9637
        %v9662 = vmax.f32 %v9539, %v9638
        %v9663 = vmax.f32 %v9548, %v9639
        %v9664 = vmax.f32 %v9557, %v9640
        %v9665 = vmax.f32 %v9566, %v9641
        %v9678 = vrot.slane %v9470, 1
        %v9679 = vrot.slane %v9479, 1
        %v9680 = vrot.slane %v9488, 1
        %v9681 = vrot.slane %v9497, 1
        %v9682 = vrot.slane %v9506, 1
        %v9683 = vrot.slane %v9515, 1
        %v9684 = vrot.slane %v9524, 1
        %v9685 = vrot.slane %v9533, 1
        %v9686 = vrot.slane %v9542, 1
        %v9687 = vrot.slane %v9551, 1
        %v9688 = vrot.slane %v9560, 1
        %v9689 = vrot.slane %v9569, 1
        %v9702 = vmax.f32 %v9470, %v9678
        %v9703 = vmax.f32 %v9479, %v9679
        %v9704 = vmax.f32 %v9488, %v9680
        %v9705 = vmax.f32 %v9497, %v9681
        %v9706 = vmax.f32 %v9506, %v9682
        %v9707 = vmax.f32 %v9515, %v9683
        %v9708 = vmax.f32 %v9524, %v9684
        %v9709 = vmax.f32 %v9533, %v9685
        %v9710 = vmax.f32 %v9542, %v9686
        %v9711 = vmax.f32 %v9551, %v9687
        %v9712 = vmax.f32 %v9560, %v9688
        %v9713 = vmax.f32 %v9569, %v9689
        %v9726 = vrot.slane %v9606, 1
        %v9727 = vrot.slane %v9607, 1
        %v9728 = vrot.slane %v9608, 1
        %v9729 = vrot.slane %v9609, 1
        %v9730 = vrot.slane %v9610, 1
        %v9731 = vrot.slane %v9611, 1
        %v9732 = vrot.slane %v9612, 1
        %v9733 = vrot.slane %v9613, 1
        %v9734 = vrot.slane %v9614, 1
        %v9735 = vrot.slane %v9615, 1
        %v9736 = vrot.slane %v9616, 1
        %v9737 = vrot.slane %v9617, 1
        %v9750 = vrot.slane %v9606, 2
        %v9751 = vrot.slane %v9607, 2
        %v9752 = vrot.slane %v9608, 2
        %v9753 = vrot.slane %v9609, 2
        %v9754 = vrot.slane %v9610, 2
        %v9755 = vrot.slane %v9611, 2
        %v9756 = vrot.slane %v9612, 2
        %v9757 = vrot.slane %v9613, 2
        %v9758 = vrot.slane %v9614, 2
        %v9759 = vrot.slane %v9615, 2
        %v9760 = vrot.slane %v9616, 2
        %v9761 = vrot.slane %v9617, 2
        %v9774 = vrot.slane %v9606, 3
        %v9775 = vrot.slane %v9607, 3
        %v9776 = vrot.slane %v9608, 3
        %v9777 = vrot.slane %v9609, 3
        %v9778 = vrot.slane %v9610, 3
        %v9779 = vrot.slane %v9611, 3
        %v9780 = vrot.slane %v9612, 3
        %v9781 = vrot.slane %v9613, 3
        %v9782 = vrot.slane %v9614, 3
        %v9783 = vrot.slane %v9615, 3
        %v9784 = vrot.slane %v9616, 3
        %v9785 = vrot.slane %v9617, 3
        %v9810 = vrot.slane %v9654, 4
        %v9811 = vrot.slane %v9655, 4
        %v9812 = vrot.slane %v9656, 4
        %v9813 = vrot.slane %v9657, 4
        %v9814 = vrot.slane %v9658, 4
        %v9815 = vrot.slane %v9659, 4
        %v9816 = vrot.slane %v9660, 4
        %v9817 = vrot.slane %v9661, 4
        %v9818 = vrot.slane %v9662, 4
        %v9819 = vrot.slane %v9663, 4
        %v9820 = vrot.slane %v9664, 4
        %v9821 = vrot.slane %v9665, 4
        %v9834 = vrot.slane %v9654, 5
        %v9835 = vrot.slane %v9655, 5
        %v9836 = vrot.slane %v9656, 5
        %v9837 = vrot.slane %v9657, 5
        %v9838 = vrot.slane %v9658, 5
        %v9839 = vrot.slane %v9659, 5
        %v9840 = vrot.slane %v9660, 5
        %v9841 = vrot.slane %v9661, 5
        %v9842 = vrot.slane %v9662, 5
        %v9843 = vrot.slane %v9663, 5
        %v9844 = vrot.slane %v9664, 5
        %v9845 = vrot.slane %v9665, 5
        %v9858 = vrot.slane %v9654, 6
        %v9859 = vrot.slane %v9655, 6
        %v9860 = vrot.slane %v9656, 6
        %v9861 = vrot.slane %v9657, 6
        %v9862 = vrot.slane %v9658, 6
        %v9863 = vrot.slane %v9659, 6
        %v9864 = vrot.slane %v9660, 6
        %v9865 = vrot.slane %v9661, 6
        %v9866 = vrot.slane %v9662, 6
        %v9867 = vrot.slane %v9663, 6
        %v9868 = vrot.slane %v9664, 6
        %v9869 = vrot.slane %v9665, 6
        %v9882 = vrot.slane %v9654, 7
        %v9883 = vrot.slane %v9655, 7
        %v9884 = vrot.slane %v9656, 7
        %v9885 = vrot.slane %v9657, 7
        %v9886 = vrot.slane %v9658, 7
        %v9887 = vrot.slane %v9659, 7
        %v9888 = vrot.slane %v9660, 7
        %v9889 = vrot.slane %v9661, 7
        %v9890 = vrot.slane %v9662, 7
        %v9891 = vrot.slane %v9663, 7
        %v9892 = vrot.slane %v9664, 7
        %v9893 = vrot.slane %v9665, 7
        %v9918 = vrot.slane %v9702, 1
        %v9919 = vrot.slane %v9703, 1
        %v9920 = vrot.slane %v9704, 1
        %v9921 = vrot.slane %v9705, 1
        %v9922 = vrot.slane %v9706, 1
        %v9923 = vrot.slane %v9707, 1
        %v9924 = vrot.slane %v9708, 1
        %v9925 = vrot.slane %v9709, 1
        %v9926 = vrot.slane %v9710, 1
        %v9927 = vrot.slane %v9711, 1
        %v9928 = vrot.slane %v9712, 1
        %v9929 = vrot.slane %v9713, 1
        %v9942 = vrot.slane %v9702, 2
        %v9943 = vrot.slane %v9703, 2
        %v9944 = vrot.slane %v9704, 2
        %v9945 = vrot.slane %v9705, 2
        %v9946 = vrot.slane %v9706, 2
        %v9947 = vrot.slane %v9707, 2
        %v9948 = vrot.slane %v9708, 2
        %v9949 = vrot.slane %v9709, 2
        %v9950 = vrot.slane %v9710, 2
        %v9951 = vrot.slane %v9711, 2
        %v9952 = vrot.slane %v9712, 2
        %v9953 = vrot.slane %v9713, 2
        %v9966 = vrot.slane %v9702, 3
        %v9967 = vrot.slane %v9703, 3
        %v9968 = vrot.slane %v9704, 3
        %v9969 = vrot.slane %v9705, 3
        %v9970 = vrot.slane %v9706, 3
        %v9971 = vrot.slane %v9707, 3
        %v9972 = vrot.slane %v9708, 3
        %v9973 = vrot.slane %v9709, 3
        %v9974 = vrot.slane %v9710, 3
        %v9975 = vrot.slane %v9711, 3
        %v9976 = vrot.slane %v9712, 3
        %v9977 = vrot.slane %v9713, 3
        %vm9990 = vcmask 1040384
        %v9991 = vsel %vm9990, %v9606, %v9726
        %v9992 = vsel %vm9990, %v9607, %v9727
        %v9993 = vsel %vm9990, %v9608, %v9728
        %v9994 = vsel %vm9990, %v9609, %v9729
        %v9995 = vsel %vm9990, %v9610, %v9730
        %v9996 = vsel %vm9990, %v9611, %v9731
        %v9997 = vsel %vm9990, %v9612, %v9732
        %v9998 = vsel %vm9990, %v9613, %v9733
        %v9999 = vsel %vm9990, %v9614, %v9734
        %v10000 = vsel %vm9990, %v9615, %v9735
        %v10001 = vsel %vm9990, %v9616, %v9736
        %v10002 = vsel %vm9990, %v9617, %v9737
        %vm10003 = vcmask 1041408
        %v10004 = vsel %vm10003, %v9991, %v9750
        %v10005 = vsel %vm10003, %v9992, %v9751
        %v10006 = vsel %vm10003, %v9993, %v9752
        %v10007 = vsel %vm10003, %v9994, %v9753
        %v10008 = vsel %vm10003, %v9995, %v9754
        %v10009 = vsel %vm10003, %v9996, %v9755
        %v10010 = vsel %vm10003, %v9997, %v9756
        %v10011 = vsel %vm10003, %v9998, %v9757
        %v10012 = vsel %vm10003, %v9999, %v9758
        %v10013 = vsel %vm10003, %v10000, %v9759
        %v10014 = vsel %vm10003, %v10001, %v9760
        %v10015 = vsel %vm10003, %v10002, %v9761
        %vm10016 = vcmask 1042432
        %v10017 = vsel %vm10016, %v10004, %v9774
        %v10018 = vsel %vm10016, %v10005, %v9775
        %v10019 = vsel %vm10016, %v10006, %v9776
        %v10020 = vsel %vm10016, %v10007, %v9777
        %v10021 = vsel %vm10016, %v10008, %v9778
        %v10022 = vsel %vm10016, %v10009, %v9779
        %v10023 = vsel %vm10016, %v10010, %v9780
        %v10024 = vsel %vm10016, %v10011, %v9781
        %v10025 = vsel %vm10016, %v10012, %v9782
        %v10026 = vsel %vm10016, %v10013, %v9783
        %v10027 = vsel %vm10016, %v10014, %v9784
        %v10028 = vsel %vm10016, %v10015, %v9785
        %vm10029 = vcmask 1043456
        %v10030 = vsel %vm10029, %v10017, %v9810
        %v10031 = vsel %vm10029, %v10018, %v9811
        %v10032 = vsel %vm10029, %v10019, %v9812
        %v10033 = vsel %vm10029, %v10020, %v9813
        %v10034 = vsel %vm10029, %v10021, %v9814
        %v10035 = vsel %vm10029, %v10022, %v9815
        %v10036 = vsel %vm10029, %v10023, %v9816
        %v10037 = vsel %vm10029, %v10024, %v9817
        %v10038 = vsel %vm10029, %v10025, %v9818
        %v10039 = vsel %vm10029, %v10026, %v9819
        %v10040 = vsel %vm10029, %v10027, %v9820
        %v10041 = vsel %vm10029, %v10028, %v9821
        %vm10042 = vcmask 1044480
        %v10043 = vsel %vm10042, %v10030, %v9834
        %v10044 = vsel %vm10042, %v10031, %v9835
        %v10045 = vsel %vm10042, %v10032, %v9836
        %v10046 = vsel %vm10042, %v10033, %v9837
        %v10047 = vsel %vm10042, %v10034, %v9838
        %v10048 = vsel %vm10042, %v10035, %v9839
        %v10049 = vsel %vm10042, %v10036, %v9840
        %v10050 = vsel %vm10042, %v10037, %v9841
        %v10051 = vsel %vm10042, %v10038, %v9842
        %v10052 = vsel %vm10042, %v10039, %v9843
        %v10053 = vsel %vm10042, %v10040, %v9844
        %v10054 = vsel %vm10042, %v10041, %v9845
        %v10055 = vsel %vm1950, %v10043, %v9858
        %v10056 = vsel %vm1950, %v10044, %v9859
        %v10057 = vsel %vm1950, %v10045, %v9860
        %v10058 = vsel %vm1950, %v10046, %v9861
        %v10059 = vsel %vm1950, %v10047, %v9862
        %v10060 = vsel %vm1950, %v10048, %v9863
        %v10061 = vsel %vm1950, %v10049, %v9864
        %v10062 = vsel %vm1950, %v10050, %v9865
        %v10063 = vsel %vm1950, %v10051, %v9866
        %v10064 = vsel %vm1950, %v10052, %v9867
        %v10065 = vsel %vm1950, %v10053, %v9868
        %v10066 = vsel %vm1950, %v10054, %v9869
        %v10067 = vsel %vm1346, %v10055, %v9882
        %v10068 = vsel %vm1346, %v10056, %v9883
        %v10069 = vsel %vm1346, %v10057, %v9884
        %v10070 = vsel %vm1346, %v10058, %v9885
        %v10071 = vsel %vm1346, %v10059, %v9886
        %v10072 = vsel %vm1346, %v10060, %v9887
        %v10073 = vsel %vm1346, %v10061, %v9888
        %v10074 = vsel %vm1346, %v10062, %v9889
        %v10075 = vsel %vm1346, %v10063, %v9890
        %v10076 = vsel %vm1346, %v10064, %v9891
        %v10077 = vsel %vm1346, %v10065, %v9892
        %v10078 = vsel %vm1346, %v10066, %v9893
        %v10079 = vsel %vm9990, %v9702, %v9918
        %v10080 = vsel %vm9990, %v9703, %v9919
        %v10081 = vsel %vm9990, %v9704, %v9920
        %v10082 = vsel %vm9990, %v9705, %v9921
        %v10083 = vsel %vm9990, %v9706, %v9922
        %v10084 = vsel %vm9990, %v9707, %v9923
        %v10085 = vsel %vm9990, %v9708, %v9924
        %v10086 = vsel %vm9990, %v9709, %v9925
        %v10087 = vsel %vm9990, %v9710, %v9926
        %v10088 = vsel %vm9990, %v9711, %v9927
        %v10089 = vsel %vm9990, %v9712, %v9928
        %v10090 = vsel %vm9990, %v9713, %v9929
        %v10091 = vsel %vm10003, %v10079, %v9942
        %v10092 = vsel %vm10003, %v10080, %v9943
        %v10093 = vsel %vm10003, %v10081, %v9944
        %v10094 = vsel %vm10003, %v10082, %v9945
        %v10095 = vsel %vm10003, %v10083, %v9946
        %v10096 = vsel %vm10003, %v10084, %v9947
        %v10097 = vsel %vm10003, %v10085, %v9948
        %v10098 = vsel %vm10003, %v10086, %v9949
        %v10099 = vsel %vm10003, %v10087, %v9950
        %v10100 = vsel %vm10003, %v10088, %v9951
        %v10101 = vsel %vm10003, %v10089, %v9952
        %v10102 = vsel %vm10003, %v10090, %v9953
        %v10103 = vsel %vm10016, %v10091, %v9966
        %v10104 = vsel %vm10016, %v10092, %v9967
        %v10105 = vsel %vm10016, %v10093, %v9968
        %v10106 = vsel %vm10016, %v10094, %v9969
        %v10107 = vsel %vm10016, %v10095, %v9970
        %v10108 = vsel %vm10016, %v10096, %v9971
        %v10109 = vsel %vm10016, %v10097, %v9972
        %v10110 = vsel %vm10016, %v10098, %v9973
        %v10111 = vsel %vm10016, %v10099, %v9974
        %v10112 = vsel %vm10016, %v10100, %v9975
        %v10113 = vsel %vm10016, %v10101, %v9976
        %v10114 = vsel %vm10016, %v10102, %v9977
        %v10115 = vpack.c.bf16 %v10067, %v10067
        %v10116 = vpack.c.bf16 %v10103, %v10103
        %v10117 = vpack.c.bf16 %v10068, %v10068
        %v10118 = vpack.c.bf16 %v10104, %v10104
        %v10119 = vpack.c.bf16 %v10069, %v10069
        %v10120 = vpack.c.bf16 %v10105, %v10105
        %v10121 = vpack.c.bf16 %v10070, %v10070
        %v10122 = vpack.c.bf16 %v10106, %v10106
        %v10123 = vpack.c.bf16 %v10071, %v10071
        %v10124 = vpack.c.bf16 %v10107, %v10107
        %v10125 = vpack.c.bf16 %v10072, %v10072
        %v10126 = vpack.c.bf16 %v10108, %v10108
        %v10127 = vpack.c.bf16 %v10073, %v10073
        %v10128 = vpack.c.bf16 %v10109, %v10109
        %v10129 = vpack.c.bf16 %v10074, %v10074
        %v10130 = vpack.c.bf16 %v10110, %v10110
        %v10131 = vpack.c.bf16 %v10075, %v10075
        %v10132 = vpack.c.bf16 %v10111, %v10111
        %v10133 = vpack.c.bf16 %v10076, %v10076
        %v10134 = vpack.c.bf16 %v10112, %v10112
        %v10135 = vpack.c.bf16 %v10077, %v10077
        %v10136 = vpack.c.bf16 %v10113, %v10113
        %v10137 = vpack.c.bf16 %v10078, %v10078
        %v10138 = vpack.c.bf16 %v10114, %v10114
        %vm10139 = vcmask 519168
        %10140 = vst.msk [vmem:[%s287] sm:$0xf] %vm10139, %v10115
        %vm10141 = vcmask 517120
        %10142 = vst.msk [vmem:[%s287 + $0x4] sm:$0x3] %vm10141, %v10116
        %10143 = vst.msk [vmem:[%s287 + $0x8] sm:$0xf] %vm10139, %v10117
        %10144 = vst.msk [vmem:[%s287 + $0xc] sm:$0x3] %vm10141, %v10118
        %10145 = vst.msk [vmem:[%s287 + $0x10] sm:$0xf] %vm10139, %v10119
        %10146 = vst.msk [vmem:[%s287 + $0x14] sm:$0x3] %vm10141, %v10120
        %10147 = vst.msk [vmem:[%s287 + $0x18] sm:$0xf] %vm10139, %v10121
        %10148 = vst.msk [vmem:[%s287 + $0x1c] sm:$0x3] %vm10141, %v10122
        %10149 = vst.msk [vmem:[%s287 + $0x20] sm:$0xf] %vm10139, %v10123
        %10150 = vst.msk [vmem:[%s287 + $0x24] sm:$0x3] %vm10141, %v10124
        %10151 = vst.msk [vmem:[%s287 + $0x28] sm:$0xf] %vm10139, %v10125
        %10152 = vst.msk [vmem:[%s287 + $0x2c] sm:$0x3] %vm10141, %v10126
        %10153 = vst.msk [vmem:[%s287 + $0x30] sm:$0xf] %vm10139, %v10127
        %10154 = vst.msk [vmem:[%s287 + $0x34] sm:$0x3] %vm10141, %v10128
        %10155 = vst.msk [vmem:[%s287 + $0x38] sm:$0xf] %vm10139, %v10129
        %10156 = vst.msk [vmem:[%s287 + $0x3c] sm:$0x3] %vm10141, %v10130
        %10157 = vst.msk [vmem:[%s287 + $0x40] sm:$0xf] %vm10139, %v10131
        %10158 = vst.msk [vmem:[%s287 + $0x44] sm:$0x3] %vm10141, %v10132
        %10159 = vst.msk [vmem:[%s287 + $0x48] sm:$0xf] %vm10139, %v10133
        %10160 = vst.msk [vmem:[%s287 + $0x4c] sm:$0x3] %vm10141, %v10134
        %10161 = vst.msk [vmem:[%s287 + $0x50] sm:$0xf] %vm10139, %v10135
        %10162 = vst.msk [vmem:[%s287 + $0x54] sm:$0x3] %vm10141, %v10136
        %10163 = vst.msk [vmem:[%s287 + $0x58] sm:$0xf] %vm10139, %v10137
        %10164 = vst.msk [vmem:[%s287 + $0x5c] sm:$0x3] %vm10141, %v10138
        %p10165 = scmp.lt.s32.totalorder %s19, 1
        %s10166 = scalar_select %p10165, %s19, 1
        %s10167 = smul.addr %s10166, 24
        %s10168 = smul.addr %s10167, 4
        %s10169 = scalar_lea.vmem %s5, %s10168
        // Predicated region
        $region57: #{cnn_forward.2} parent=39 // pred_check
          %p10170 = pneg %p147
        $region58: #{cnn_forward.2} parent=39 // pred_check_branch
          %10172 = sbr.rel (%p10170) target = $region60
        $region59: #{cnn_forward.2} parent=39 // pred_region
          _
        $region60: #{cnn_forward.2} parent=39 // pred_fallthru
          _
      $region40: #{cnn_forward.2} parent=5 // pred_fallthru
        _
      %p10173 = scmp.le.s32.totalorder 2, %s14
      // Predicated region
      $region61: #{cnn_forward.2} parent=5 // pred_check
        %p10174 = pneg %p10173
      $region62: #{cnn_forward.2} parent=5 // pred_check_branch
        %10176 = sbr.rel (%p10174) target = $region64
      $region63: #{cnn_forward.2} parent=5 // pred_region
        %s10177 = ssub.s32 %s14, 2
        // Predicated region
        $region65: #{cnn_forward.2} parent=63 // pred_check
          %p10178 = pneg %p153
        $region66: #{cnn_forward.2} parent=63 // pred_check_branch
          %10180 = sbr.rel (%p10178) target = $region68
        $region67: #{cnn_forward.2} parent=63 // pred_region
          %p10181 = scmp.lt.s32.totalorder %s20, 1
          %s10182 = scalar_select %p10181, %s20, 1
          %s10183 = smul.addr %s10182, 24
          %s10184 = smul.addr %s10183, 4
          %s10185 = scalar_lea.vmem %s5, %s10184
        $region68: #{cnn_forward.2} parent=63 // pred_fallthru
          _
      $region64: #{cnn_forward.2} parent=5 // pred_fallthru
        _
    $region6: #{cnn_forward.2} parent=1 // loop_footer
      %s18 = sadd.s32 1, %s14
    $region7: #{cnn_forward.2} parent=1 // loop_footer_branch
      %13 = sbr.rel target = $region3
    $region8: #{cnn_forward.2} parent=1 // loop_exit
      _
    %10186 = vsyncpa [#allocation3], 1
    %s10187 = scalar_lea.sflag [#allocation3], 1
    %10188 = vsyncpa %s10187, 1
    %10189 = vsyncpa [#allocation5], 1
    %10190 = vsyncpa [#allocation8], 1

</llo_original>
